<compile_context>
chip_gen: v6e
topology: v6e:2x2x1
jax: 0.10.0
libtpu: 0.0.40
codegen_flags: <defaults>
</compile_context>

<pallas_src>
import functools

import jax
import jax.numpy as jnp
import numpy as np
from jax.experimental import pallas as pl
from jax.experimental.pallas import tpu as pltpu

EPS = 1e-5
_VMEM_LIMIT = 32 * 1024 * 1024


def _bn_scale_shift(h, gamma, beta):
    """Training-mode BatchNorm1d folded into a single scale/shift (biased batch variance)."""
    m = jnp.mean(h, axis=0, keepdims=True)
    v = jnp.mean((h - m) ** 2, axis=0, keepdims=True)
    s = gamma * jax.lax.rsqrt(v + EPS)      # rsqrt -> EUP slot (otherwise idle)
    t = beta - m * s
    return h * s + t


# -----------------------------------------------------------------------------
# Path 1: fully fused single kernel (1 TensorCore). K-tiled Linear1 + epilogue.
# -----------------------------------------------------------------------------
def _fused_kernel(x_ref, w1_ref, b1_ref, g1_ref, be1_ref,
                  w2_ref, b2_ref, g2_ref, be2_ref,
                  w3_ref, b3_ref, out_ref, acc_ref):
    k = pl.program_id(0)

    @pl.when(k == 0)
    def _init():
        acc_ref[...] = jnp.zeros_like(acc_ref)

    # Linear1 partial products over K tiles (bf16 MXU, f32 accumulation).
    acc_ref[...] += jnp.dot(x_ref[...].astype(jnp.bfloat16), w1_ref[...],
                            preferred_element_type=jnp.float32)

    @pl.when(k == pl.num_programs(0) - 1)
    def _finalize():
        h1 = jnp.maximum(acc_ref[...] + b1_ref[...], 0.0)
        h1 = _bn_scale_shift(h1, g1_ref[...], be1_ref[...]).astype(jnp.bfloat16)

        h2 = jnp.dot(h1, w2_ref[...], preferred_element_type=jnp.float32) + b2_ref[...]
        h2 = jnp.maximum(h2, 0.0)
        h2 = _bn_scale_shift(h2, g2_ref[...], be2_ref[...]).astype(jnp.bfloat16)

        logits = jnp.dot(h2, w3_ref[...], preferred_element_type=jnp.float32) + b3_ref[...]
        out_ref[...] = logits.astype(out_ref.dtype)


# -----------------------------------------------------------------------------
# Path 2 (multi-TC chips, e.g. v7x): Linear1+BN1 split over H1 columns ("parallel")
# so both TensorCores stream W1, plus a tiny fully-resident head kernel.
# -----------------------------------------------------------------------------
def _linear1_bn_kernel(x_ref, w1_ref, b1_ref, g1_ref, be1_ref, h1_ref, acc_ref):
    k = pl.program_id(1)

    @pl.when(k == 0)
    def _init():
        acc_ref[...] = jnp.zeros_like(acc_ref)

    acc_ref[...] += jnp.dot(x_ref[...].astype(jnp.bfloat16), w1_ref[...],
                            preferred_element_type=jnp.float32)

    @pl.when(k == pl.num_programs(1) - 1)
    def _finalize():
        h = jnp.maximum(acc_ref[...] + b1_ref[...], 0.0)
        h1_ref[...] = _bn_scale_shift(h, g1_ref[...], be1_ref[...]).astype(h1_ref.dtype)


def _head_kernel(h1_ref, w2_ref, b2_ref, g2_ref, be2_ref, w3_ref, b3_ref, out_ref):
    h2 = jnp.dot(h1_ref[...], w2_ref[...], preferred_element_type=jnp.float32) + b2_ref[...]
    h2 = jnp.maximum(h2, 0.0)
    h2 = _bn_scale_shift(h2, g2_ref[...], be2_ref[...]).astype(jnp.bfloat16)
    logits = jnp.dot(h2, w3_ref[...], preferred_element_type=jnp.float32) + b3_ref[...]
    out_ref[...] = logits.astype(out_ref.dtype)


# -----------------------------------------------------------------------------
# Wrapper
# -----------------------------------------------------------------------------
@functools.partial(jax.jit, static_argnames=("tk", "split"))
def _forward_impl(x, params, *, tk, split):
    w1, b1, g1, be1, w2, b2, g2, be2, w3, b3 = params
    B, K = x.shape
    H1 = w1.shape[1]
    H2 = w2.shape[1]
    C = w3.shape[1]
    assert K % tk == 0, f"input_dim {K} must be divisible by tk={tk}"
    n_k = K // tk

    # Lane-pad the class dim to a multiple of 128: unmasked stores, non-ragged MXU N dim.
    C_pad = ((C + 127) // 128) * 128
    w3p = jnp.pad(w3, ((0, 0), (0, C_pad - C)))
    b3p = jnp.pad(b3, ((0, 0), (0, C_pad - C)))

    if not split:
        grid_spec = pltpu.PrefetchScalarGridSpec(
            num_scalar_prefetch=0,
            grid=(n_k,),
            in_specs=[
                pl.BlockSpec((B, tk), lambda k: (0, k)),      # x tile
                pl.BlockSpec((tk, H1), lambda k: (k, 0)),     # W1 tile (bf16)
                pl.BlockSpec((1, H1), lambda k: (0, 0)),      # b1
                pl.BlockSpec((1, H1), lambda k: (0, 0)),      # gamma1
                pl.BlockSpec((1, H1), lambda k: (0, 0)),      # beta1
                pl.BlockSpec((H1, H2), lambda k: (0, 0)),     # W2 (bf16, resident)
                pl.BlockSpec((1, H2), lambda k: (0, 0)),      # b2
                pl.BlockSpec((1, H2), lambda k: (0, 0)),      # gamma2
                pl.BlockSpec((1, H2), lambda k: (0, 0)),      # beta2
                pl.BlockSpec((H2, C_pad), lambda k: (0, 0)),  # W3 padded (bf16)
                pl.BlockSpec((1, C_pad), lambda k: (0, 0)),   # b3 padded
            ],
            out_specs=pl.BlockSpec((B, C_pad), lambda k: (0, 0)),
            scratch_shapes=[pltpu.VMEM((B, H1), jnp.float32)],   # x @ W1 accumulator
        )
        out = pl.pallas_call(
            _fused_kernel,
            out_shape=jax.ShapeDtypeStruct((B, C_pad), jnp.float32),
            grid_spec=grid_spec,
            compiler_params=pltpu.CompilerParams(
                dimension_semantics=("arbitrary",),       # K is a reduction axis
                vmem_limit_bytes=_VMEM_LIMIT,
            ),
        )(x, w1, b1, g1, be1, w2, b2, g2, be2, w3p, b3p)
        return out[:, :C]

    # ---- split path: parallel over H1 column halves (uses both TCs on v7x) ----
    n_h1 = 2
    assert H1 % n_h1 == 0
    h1_blk = H1 // n_h1

    grid_spec_a = pltpu.PrefetchScalarGridSpec(
        num_scalar_prefetch=0,
        grid=(n_h1, n_k),
        in_specs=[
            pl.BlockSpec((B, tk), lambda h, k: (0, k)),        # x tile
            pl.BlockSpec((tk, h1_blk), lambda h, k: (k, h)),   # W1 column-block tile
            pl.BlockSpec((1, h1_blk), lambda h, k: (0, h)),    # b1 block
            pl.BlockSpec((1, h1_blk), lambda h, k: (0, h)),    # gamma1 block
            pl.BlockSpec((1, h1_blk), lambda h, k: (0, h)),    # beta1 block
        ],
        out_specs=pl.BlockSpec((B, h1_blk), lambda h, k: (0, h)),
        scratch_shapes=[pltpu.VMEM((B, h1_blk), jnp.float32)],
    )
    h1 = pl.pallas_call(
        _linear1_bn_kernel,
        out_shape=jax.ShapeDtypeStruct((B, H1), jnp.bfloat16),
        grid_spec=grid_spec_a,
        compiler_params=pltpu.CompilerParams(
            dimension_semantics=("parallel", "arbitrary"),
            vmem_limit_bytes=_VMEM_LIMIT,
        ),
    )(x, w1, b1, g1, be1)

    out = pl.pallas_call(
        _head_kernel,
        out_shape=jax.ShapeDtypeStruct((B, C_pad), jnp.float32),
        compiler_params=pltpu.CompilerParams(vmem_limit_bytes=_VMEM_LIMIT),
    )(h1, w2, b2, g2, be2, w3p, b3p)
    return out[:, :C]


def _is_multi_tensorcore_chip():
    """v7x has 2 TensorCores per chip; v5e/v6e have 1 (split only helps on multi-TC)."""
    try:
        kind = jax.devices()[0].device_kind.lower()
    except Exception:
        return False
    return ("v7" in kind) or ("7x" in kind)


def fusion_classifier_forward(x, params, *, tk=2560, split=None):
    if split is None:
        split = _is_multi_tensorcore_chip()
    return _forward_impl(x, params, tk=tk, split=split)


# -----------------------------------------------------------------------------
# Pure-JAX reference (mirrors the bf16 weight storage / bf16 activation casts).
# -----------------------------------------------------------------------------
def ref_forward(x, params):
    w1, b1, g1, be1, w2, b2, g2, be2, w3, b3 = params

    def bn(h, g, be):
        m = jnp.mean(h, axis=0, keepdims=True)
        v = jnp.mean((h - m) ** 2, axis=0, keepdims=True)
        return (h - m) * jax.lax.rsqrt(v + EPS) * g + be

    h = jnp.dot(x.astype(jnp.bfloat16), w1, preferred_element_type=jnp.float32) + b1
    h = jnp.maximum(h, 0.0)
    h = bn(h, g1, be1).astype(jnp.bfloat16)
    h = jnp.dot(h, w2, preferred_element_type=jnp.float32) + b2
    h = jnp.maximum(h, 0.0)
    h = bn(h, g2, be2).astype(jnp.bfloat16)
    return jnp.dot(h, w3, preferred_element_type=jnp.float32) + b3


def init_params(key, input_dim, h1, h2, num_classes):
    ks = jax.random.split(key, 10)
    s1 = 1.0 / np.sqrt(input_dim)
    s2 = 1.0 / np.sqrt(h1)
    s3 = 1.0 / np.sqrt(h2)
    # Weights stored in bf16 (f32 accumulation on the MXU); bias / BN params in f32.
    w1 = jax.random.uniform(ks[0], (input_dim, h1), jnp.float32, -s1, s1).astype(jnp.bfloat16)
    b1 = jax.random.uniform(ks[1], (1, h1), jnp.float32, -s1, s1)
    g1 = 1.0 + 0.1 * jax.random.normal(ks[2], (1, h1), jnp.float32)
    be1 = 0.1 * jax.random.normal(ks[3], (1, h1), jnp.float32)
    w2 = jax.random.uniform(ks[4], (h1, h2), jnp.float32, -s2, s2).astype(jnp.bfloat16)
    b2 = jax.random.uniform(ks[5], (1, h2), jnp.float32, -s2, s2)
    g2 = 1.0 + 0.1 * jax.random.normal(ks[6], (1, h2), jnp.float32)
    be2 = 0.1 * jax.random.normal(ks[7], (1, h2), jnp.float32)
    w3 = jax.random.uniform(ks[8], (h2, num_classes), jnp.float32, -s3, s3).astype(jnp.bfloat16)
    b3 = jax.random.uniform(ks[9], (1, num_classes), jnp.float32, -s3, s3)
    return (w1, b1, g1, be1, w2, b2, g2, be2, w3, b3)


if __name__ == "__main__":
    INPUT_DIM = 5120      # module default
    H1, H2 = 1024, 512    # hard-coded in the Sequential
    NUM_CLASSES = 27      # module default
    BATCH = 8             # BatchNorm needs batch > 1; 8 = one f32 sublane group

    key = jax.random.PRNGKey(0)
    kx, kp = jax.random.split(key)
    x = jax.random.normal(kx, (BATCH, INPUT_DIM), jnp.float32)
    params = init_params(kp, INPUT_DIM, H1, H2, NUM_CLASSES)

    ref = jax.block_until_ready(ref_forward(x, params))

    # Fused single-TensorCore path (default on v5e/v6e).
    out_fused = jax.block_until_ready(fusion_classifier_forward(x, params, split=False))
    np.testing.assert_allclose(np.asarray(out_fused), np.asarray(ref), rtol=5e-2, atol=5e-2)

    # Dual-TensorCore split path (default on v7x); also correct (just serialized) on 1-TC chips.
    out_split = jax.block_until_ready(fusion_classifier_forward(x, params, split=True))
    np.testing.assert_allclose(np.asarray(out_split), np.asarray(ref), rtol=5e-2, atol=5e-2)

    # Default entry point: picks the path from the detected chip generation.
    out = jax.block_until_ready(fusion_classifier_forward(x, params))
    assert out.shape == (BATCH, NUM_CLASSES)

    print("KERNEL_OK")
</pallas_src>

<mosaic_0001>
module attributes {stable_mosaic.version = 11 : i64} {
  func.func @_fused_kernel(%arg0: i32, %arg1: memref<8x2560xf32, #tpu.memory_space<vmem>>, %arg2: memref<2560x1024xbf16, #tpu.memory_space<vmem>>, %arg3: memref<1x1024xf32, #tpu.memory_space<vmem>>, %arg4: memref<1x1024xf32, #tpu.memory_space<vmem>>, %arg5: memref<1x1024xf32, #tpu.memory_space<vmem>>, %arg6: memref<1024x512xbf16, #tpu.memory_space<vmem>>, %arg7: memref<1x512xf32, #tpu.memory_space<vmem>>, %arg8: memref<1x512xf32, #tpu.memory_space<vmem>>, %arg9: memref<1x512xf32, #tpu.memory_space<vmem>>, %arg10: memref<512x128xbf16, #tpu.memory_space<vmem>>, %arg11: memref<1x128xf32, #tpu.memory_space<vmem>>, %arg12: memref<8x128xf32, #tpu.memory_space<vmem>>, %arg13: memref<8x1024xf32, #tpu.memory_space<vmem>>) attributes {dimension_semantics = [#tpu.dimension_semantics<arbitrary>], iteration_bounds = array<i64: 2>, scalar_prefetch = 0 : i64, scratch_operands = 1 : i64, tpu.core_type = #tpu.core_type<tc>, window_params = [{transform_indices = @transform_0, window_bounds = array<i64: 8, 2560>}, {transform_indices = @transform_1, window_bounds = array<i64: 2560, 1024>}, {pipeline_mode = #tpu.pipeline_mode<synchronous>, transform_indices = @transform_2, window_bounds = array<i64: 1, 1024>}, {pipeline_mode = #tpu.pipeline_mode<synchronous>, transform_indices = @transform_3, window_bounds = array<i64: 1, 1024>}, {pipeline_mode = #tpu.pipeline_mode<synchronous>, transform_indices = @transform_4, window_bounds = array<i64: 1, 1024>}, {pipeline_mode = #tpu.pipeline_mode<synchronous>, transform_indices = @transform_5, window_bounds = array<i64: 1024, 512>}, {pipeline_mode = #tpu.pipeline_mode<synchronous>, transform_indices = @transform_6, window_bounds = array<i64: 1, 512>}, {pipeline_mode = #tpu.pipeline_mode<synchronous>, transform_indices = @transform_7, window_bounds = array<i64: 1, 512>}, {pipeline_mode = #tpu.pipeline_mode<synchronous>, transform_indices = @transform_8, window_bounds = array<i64: 1, 512>}, {pipeline_mode = #tpu.pipeline_mode<synchronous>, transform_indices = @transform_9, window_bounds = array<i64: 512, 128>}, {pipeline_mode = #tpu.pipeline_mode<synchronous>, transform_indices = @transform_10, window_bounds = array<i64: 1, 128>}, {pipeline_mode = #tpu.pipeline_mode<synchronous>, transform_indices = @transform_11, window_bounds = array<i64: 8, 128>}]} {
    %c0_i32 = arith.constant 0 : i32
    %0 = arith.cmpi eq, %arg0, %c0_i32 : i32
    %1 = arith.extui %0 : i1 to i32
    %c0_i32_0 = arith.constant 0 : i32
    %2 = arith.cmpi ne, %1, %c0_i32_0 : i32
    scf.if %2 {
      %cst_9 = arith.constant 0.000000e+00 : f32
      %13 = vector.broadcast %cst_9 : f32 to vector<8x1024xf32>
      %c0_10 = arith.constant 0 : index
      %c0_11 = arith.constant 0 : index
      %14 = vector.load %arg13[%c0_10, %c0_11] : memref<8x1024xf32, #tpu.memory_space<vmem>>, vector<8x1024xf32>
      tpu.vector_store %arg13[%c0_10, %c0_11], %13 {strides = array<i32>} : memref<8x1024xf32, #tpu.memory_space<vmem>>, vector<8x1024xf32>,
    } else {
    }
    %c0 = arith.constant 0 : index
    %c0_1 = arith.constant 0 : index
    %3 = vector.load %arg13[%c0, %c0_1] : memref<8x1024xf32, #tpu.memory_space<vmem>>, vector<8x1024xf32>
    %c0_2 = arith.constant 0 : index
    %c0_3 = arith.constant 0 : index
    %4 = vector.load %arg1[%c0_2, %c0_3] : memref<8x2560xf32, #tpu.memory_space<vmem>>, vector<8x2560xf32>
    %5 = arith.truncf %4 : vector<8x2560xf32> to vector<8x2560xbf16>
    %c0_4 = arith.constant 0 : index
    %c0_5 = arith.constant 0 : index
    %6 = vector.load %arg2[%c0_4, %c0_5] : memref<2560x1024xbf16, #tpu.memory_space<vmem>>, vector<2560x1024xbf16>
    %cst = arith.constant dense<0.000000e+00> : vector<8x1024xf32>
    %7 = tpu.matmul %5, %6, %cst {dimension_numbers = #tpu.dot_dimension_numbers<[1], [0], [0], [1], [0, 0, 1, 1], [], []>} : vector<8x2560xbf16>, vector<2560x1024xbf16>, vector<8x1024xf32> -> vector<8x1024xf32>
    %8 = arith.addf %3, %7 : vector<8x1024xf32>
    %c0_6 = arith.constant 0 : index
    %c0_7 = arith.constant 0 : index
    %9 = vector.load %arg13[%c0_6, %c0_7] : memref<8x1024xf32, #tpu.memory_space<vmem>>, vector<8x1024xf32>
    tpu.vector_store %arg13[%c0_6, %c0_7], %8 {strides = array<i32>} : memref<8x1024xf32, #tpu.memory_space<vmem>>, vector<8x1024xf32>,
    %c1_i32 = arith.constant 1 : i32
    %10 = arith.cmpi eq, %arg0, %c1_i32 : i32
    %11 = arith.extui %10 : i1 to i32
    %c0_i32_8 = arith.constant 0 : i32
    %12 = arith.cmpi ne, %11, %c0_i32_8 : i32
    scf.if %12 {
      %c0_9 = arith.constant 0 : index
      %c0_10 = arith.constant 0 : index
      %13 = vector.load %arg13[%c0_9, %c0_10] : memref<8x1024xf32, #tpu.memory_space<vmem>>, vector<8x1024xf32>
      %c0_11 = arith.constant 0 : index
      %c0_12 = arith.constant 0 : index
      %14 = vector.load %arg3[%c0_11, %c0_12] : memref<1x1024xf32, #tpu.memory_space<vmem>>, vector<1x1024xf32>
      %15 = vector.broadcast %14 : vector<1x1024xf32> to vector<8x1024xf32>
      %16 = arith.addf %13, %15 : vector<8x1024xf32>
      %cst_13 = arith.constant 0.000000e+00 : f32
      %17 = vector.broadcast %cst_13 : f32 to vector<8x1024xf32>
      %18 = arith.maximumf %16, %17 : vector<8x1024xf32>
      %c0_14 = arith.constant 0 : index
      %c0_15 = arith.constant 0 : index
      %19 = vector.load %arg4[%c0_14, %c0_15] : memref<1x1024xf32, #tpu.memory_space<vmem>>, vector<1x1024xf32>
      %c0_16 = arith.constant 0 : index
      %c0_17 = arith.constant 0 : index
      %20 = vector.load %arg5[%c0_16, %c0_17] : memref<1x1024xf32, #tpu.memory_space<vmem>>, vector<1x1024xf32>
      %cst_18 = arith.constant dense<0.000000e+00> : vector<1024xf32>
      %21 = vector.multi_reduction <add>, %18, %cst_18 [0] : vector<8x1024xf32> to vector<1024xf32>
      %22 = vector.shape_cast %21 : vector<1024xf32> to vector<1x1024xf32>
      %cst_19 = arith.constant 8.000000e+00 : f32
      %23 = vector.broadcast %cst_19 : f32 to vector<1x1024xf32>
      %24 = arith.divf %22, %23 : vector<1x1024xf32>
      %25 = vector.broadcast %24 : vector<1x1024xf32> to vector<8x1024xf32>
      %26 = arith.subf %18, %25 : vector<8x1024xf32>
      %27 = arith.mulf %26, %26 : vector<8x1024xf32>
      %cst_20 = arith.constant dense<0.000000e+00> : vector<1024xf32>
      %28 = vector.multi_reduction <add>, %27, %cst_20 [0] : vector<8x1024xf32> to vector<1024xf32>
      %29 = vector.shape_cast %28 : vector<1024xf32> to vector<1x1024xf32>
      %cst_21 = arith.constant 8.000000e+00 : f32
      %30 = vector.broadcast %cst_21 : f32 to vector<1x1024xf32>
      %31 = arith.divf %29, %30 : vector<1x1024xf32>
      %cst_22 = arith.constant 9.99999974E-6 : f32
      %32 = vector.broadcast %cst_22 : f32 to vector<1x1024xf32>
      %33 = arith.addf %31, %32 : vector<1x1024xf32>
      %34 = math.rsqrt %33 : vector<1x1024xf32>
      %35 = arith.mulf %19, %34 : vector<1x1024xf32>
      %36 = arith.mulf %24, %35 : vector<1x1024xf32>
      %37 = arith.subf %20, %36 : vector<1x1024xf32>
      %38 = vector.broadcast %35 : vector<1x1024xf32> to vector<8x1024xf32>
      %39 = arith.mulf %18, %38 : vector<8x1024xf32>
      %40 = vector.broadcast %37 : vector<1x1024xf32> to vector<8x1024xf32>
      %41 = arith.addf %39, %40 : vector<8x1024xf32>
      %42 = arith.truncf %41 : vector<8x1024xf32> to vector<8x1024xbf16>
      %c0_23 = arith.constant 0 : index
      %c0_24 = arith.constant 0 : index
      %43 = vector.load %arg6[%c0_23, %c0_24] : memref<1024x512xbf16, #tpu.memory_space<vmem>>, vector<1024x512xbf16>
      %cst_25 = arith.constant dense<0.000000e+00> : vector<8x512xf32>
      %44 = tpu.matmul %42, %43, %cst_25 {dimension_numbers = #tpu.dot_dimension_numbers<[1], [0], [0], [1], [0, 0, 1, 1], [], []>} : vector<8x1024xbf16>, vector<1024x512xbf16>, vector<8x512xf32> -> vector<8x512xf32>
      %c0_26 = arith.constant 0 : index
      %c0_27 = arith.constant 0 : index
      %45 = vector.load %arg7[%c0_26, %c0_27] : memref<1x512xf32, #tpu.memory_space<vmem>>, vector<1x512xf32>
      %46 = vector.broadcast %45 : vector<1x512xf32> to vector<8x512xf32>
      %47 = arith.addf %44, %46 : vector<8x512xf32>
      %cst_28 = arith.constant 0.000000e+00 : f32
      %48 = vector.broadcast %cst_28 : f32 to vector<8x512xf32>
      %49 = arith.maximumf %47, %48 : vector<8x512xf32>
      %c0_29 = arith.constant 0 : index
      %c0_30 = arith.constant 0 : index
      %50 = vector.load %arg8[%c0_29, %c0_30] : memref<1x512xf32, #tpu.memory_space<vmem>>, vector<1x512xf32>
      %c0_31 = arith.constant 0 : index
      %c0_32 = arith.constant 0 : index
      %51 = vector.load %arg9[%c0_31, %c0_32] : memref<1x512xf32, #tpu.memory_space<vmem>>, vector<1x512xf32>
      %cst_33 = arith.constant dense<0.000000e+00> : vector<512xf32>
      %52 = vector.multi_reduction <add>, %49, %cst_33 [0] : vector<8x512xf32> to vector<512xf32>
      %53 = vector.shape_cast %52 : vector<512xf32> to vector<1x512xf32>
      %cst_34 = arith.constant 8.000000e+00 : f32
      %54 = vector.broadcast %cst_34 : f32 to vector<1x512xf32>
      %55 = arith.divf %53, %54 : vector<1x512xf32>
      %56 = vector.broadcast %55 : vector<1x512xf32> to vector<8x512xf32>
      %57 = arith.subf %49, %56 : vector<8x512xf32>
      %58 = arith.mulf %57, %57 : vector<8x512xf32>
      %cst_35 = arith.constant dense<0.000000e+00> : vector<512xf32>
      %59 = vector.multi_reduction <add>, %58, %cst_35 [0] : vector<8x512xf32> to vector<512xf32>
      %60 = vector.shape_cast %59 : vector<512xf32> to vector<1x512xf32>
      %cst_36 = arith.constant 8.000000e+00 : f32
      %61 = vector.broadcast %cst_36 : f32 to vector<1x512xf32>
      %62 = arith.divf %60, %61 : vector<1x512xf32>
      %cst_37 = arith.constant 9.99999974E-6 : f32
      %63 = vector.broadcast %cst_37 : f32 to vector<1x512xf32>
      %64 = arith.addf %62, %63 : vector<1x512xf32>
      %65 = math.rsqrt %64 : vector<1x512xf32>
      %66 = arith.mulf %50, %65 : vector<1x512xf32>
      %67 = arith.mulf %55, %66 : vector<1x512xf32>
      %68 = arith.subf %51, %67 : vector<1x512xf32>
      %69 = vector.broadcast %66 : vector<1x512xf32> to vector<8x512xf32>
      %70 = arith.mulf %49, %69 : vector<8x512xf32>
      %71 = vector.broadcast %68 : vector<1x512xf32> to vector<8x512xf32>
      %72 = arith.addf %70, %71 : vector<8x512xf32>
      %73 = arith.truncf %72 : vector<8x512xf32> to vector<8x512xbf16>
      %c0_38 = arith.constant 0 : index
      %c0_39 = arith.constant 0 : index
      %74 = vector.load %arg10[%c0_38, %c0_39] : memref<512x128xbf16, #tpu.memory_space<vmem>>, vector<512x128xbf16>
      %cst_40 = arith.constant dense<0.000000e+00> : vector<8x128xf32>
      %75 = tpu.matmul %73, %74, %cst_40 {dimension_numbers = #tpu.dot_dimension_numbers<[1], [0], [0], [1], [0, 0, 1, 1], [], []>} : vector<8x512xbf16>, vector<512x128xbf16>, vector<8x128xf32> -> vector<8x128xf32>
      %c0_41 = arith.constant 0 : index
      %c0_42 = arith.constant 0 : index
      %76 = vector.load %arg11[%c0_41, %c0_42] : memref<1x128xf32, #tpu.memory_space<vmem>>, vector<1x128xf32>
      %77 = vector.broadcast %76 : vector<1x128xf32> to vector<8x128xf32>
      %78 = arith.addf %75, %77 : vector<8x128xf32>
      %c0_43 = arith.constant 0 : index
      %c0_44 = arith.constant 0 : index
      %79 = vector.load %arg12[%c0_43, %c0_44] : memref<8x128xf32, #tpu.memory_space<vmem>>, vector<8x128xf32>
      tpu.vector_store %arg12[%c0_43, %c0_44], %78 {strides = array<i32>} : memref<8x128xf32, #tpu.memory_space<vmem>>, vector<8x128xf32>,
    } else {
    }
    return
  }
  func.func @transform_0(%arg0: i32) -> (i32, i32) {
    %c0_i32 = arith.constant 0 : i32
    %c0_i32_0 = arith.constant 0 : i32
    return %c0_i32, %arg0 : i32, i32
  }
  func.func @transform_1(%arg0: i32) -> (i32, i32) {
    %c0_i32 = arith.constant 0 : i32
    %c0_i32_0 = arith.constant 0 : i32
    return %arg0, %c0_i32 : i32, i32
  }
  func.func @transform_2(%arg0: i32) -> (i32, i32) {
    %c0_i32 = arith.constant 0 : i32
    %c0_i32_0 = arith.constant 0 : i32
    %c0_i32_1 = arith.constant 0 : i32
    return %c0_i32, %c0_i32_0 : i32, i32
  }
  func.func @transform_3(%arg0: i32) -> (i32, i32) {
    %c0_i32 = arith.constant 0 : i32
    %c0_i32_0 = arith.constant 0 : i32
    %c0_i32_1 = arith.constant 0 : i32
    return %c0_i32, %c0_i32_0 : i32, i32
  }
  func.func @transform_4(%arg0: i32) -> (i32, i32) {
    %c0_i32 = arith.constant 0 : i32
    %c0_i32_0 = arith.constant 0 : i32
    %c0_i32_1 = arith.constant 0 : i32
    return %c0_i32, %c0_i32_0 : i32, i32
  }
  func.func @transform_5(%arg0: i32) -> (i32, i32) {
    %c0_i32 = arith.constant 0 : i32
    %c0_i32_0 = arith.constant 0 : i32
    %c0_i32_1 = arith.constant 0 : i32
    return %c0_i32, %c0_i32_0 : i32, i32
  }
  func.func @transform_6(%arg0: i32) -> (i32, i32) {
    %c0_i32 = arith.constant 0 : i32
    %c0_i32_0 = arith.constant 0 : i32
    %c0_i32_1 = arith.constant 0 : i32
    return %c0_i32, %c0_i32_0 : i32, i32
  }
  func.func @transform_7(%arg0: i32) -> (i32, i32) {
    %c0_i32 = arith.constant 0 : i32
    %c0_i32_0 = arith.constant 0 : i32
    %c0_i32_1 = arith.constant 0 : i32
    return %c0_i32, %c0_i32_0 : i32, i32
  }
  func.func @transform_8(%arg0: i32) -> (i32, i32) {
    %c0_i32 = arith.constant 0 : i32
    %c0_i32_0 = arith.constant 0 : i32
    %c0_i32_1 = arith.constant 0 : i32
    return %c0_i32, %c0_i32_0 : i32, i32
  }
  func.func @transform_9(%arg0: i32) -> (i32, i32) {
    %c0_i32 = arith.constant 0 : i32
    %c0_i32_0 = arith.constant 0 : i32
    %c0_i32_1 = arith.constant 0 : i32
    return %c0_i32, %c0_i32_0 : i32, i32
  }
  func.func @transform_10(%arg0: i32) -> (i32, i32) {
    %c0_i32 = arith.constant 0 : i32
    %c0_i32_0 = arith.constant 0 : i32
    %c0_i32_1 = arith.constant 0 : i32
    return %c0_i32, %c0_i32_0 : i32, i32
  }
  func.func @transform_11(%arg0: i32) -> (i32, i32) {
    %c0_i32 = arith.constant 0 : i32
    %c0_i32_0 = arith.constant 0 : i32
    %c0_i32_1 = arith.constant 0 : i32
    return %c0_i32, %c0_i32_0 : i32, i32
  }
}

</mosaic_0001>

<llo_original>
// kernel: _forward_impl.1
$region0: #{_forward_impl.1}
  #allocation0 [shape = 'u32[]', space=smem, size = 0x4, offset = 0x4, fixed_abs, tag = 'smem constant byte address 0x4 - core index']
  #allocation1 [shape = 'u32[144,128]{1,0:T(1,128)}', space=vmem, size = 0x12000, scoped, tag = 'internal scratch']
  #allocation2 [shape = 'f32[8,1024]{1,0:T(8,128)}', space=vmem, size = 0x8000, scoped, tag = 'scratch operand']
  %s0 = inlined_call_operand.hbm [shape: f32[8,5120], index: 0, kind: input, shape index: {}]
  %s1 = inlined_call_operand.hbm [shape: bf16[5120,1024], index: 1, kind: input, shape index: {}]
  %s2 = inlined_call_operand.hbm [shape: f32[1,1024], index: 2, kind: input, shape index: {}]
  %s3 = inlined_call_operand.hbm [shape: f32[1,1024], index: 3, kind: input, shape index: {}]
  %s4 = inlined_call_operand.hbm [shape: f32[1,1024], index: 4, kind: input, shape index: {}]
  %s5 = inlined_call_operand.hbm [shape: bf16[1024,512], index: 5, kind: input, shape index: {}]
  %s6 = inlined_call_operand.hbm [shape: f32[1,512], index: 6, kind: input, shape index: {}]
  %s7 = inlined_call_operand.hbm [shape: f32[1,512], index: 7, kind: input, shape index: {}]
  %s8 = inlined_call_operand.hbm [shape: f32[1,512], index: 8, kind: input, shape index: {}]
  %s9 = inlined_call_operand.vmem [shape: bf16[512,128], index: 9, kind: input, shape index: {}]
  %s10 = inlined_call_operand.vmem [shape: f32[1,128], index: 10, kind: input, shape index: {}]
  %s11 = inlined_call_operand.hbm [shape: f32[8,128], index: 11, kind: output, shape index: {}]
  %s12 = sld [smem:[#allocation0]]
  $region121: #{_forward_impl.1} parent=0
    _
  %s14 = ssub.s32 1, %s12
  %s15 = scalar_select 0, %s14, %s12
  $region1: #{_forward_impl.1} parent=0
    #allocation3 [shape = 'u8[163840]{0}', space=vmem, size = 0x28000, scoped, tag = 'input window, operand 0']
    #allocation4 [shape = 's32[2]{0}', space=sflag, size = 0x8, scoped, tag = 'scoped memory for _forward_impl.1']
    #allocation5 [shape = 's32[2]{0}', space=sflag, size = 0x8, scoped, tag = 'scoped memory for _forward_impl.1']
    #allocation6 [shape = 'u8[10485760]{0}', space=vmem, size = 0xa00000, scoped, tag = 'input window, operand 1']
    #allocation7 [shape = 's32[2]{0}', space=sflag, size = 0x8, scoped, tag = 'scoped memory for _forward_impl.1']
    #allocation8 [shape = 'u8[4096]{0}', space=vmem, size = 0x1000, scoped, tag = 'input window, operand 2, single buffered']
    #allocation9 [shape = 'u8[4096]{0}', space=vmem, size = 0x1000, scoped, tag = 'input window, operand 3, single buffered']
    #allocation10 [shape = 's32[1]{0}', space=sflag, size = 0x4, scoped, tag = 'scoped memory for _forward_impl.1']
    #allocation11 [shape = 'u8[4096]{0}', space=vmem, size = 0x1000, scoped, tag = 'input window, operand 4, single buffered']
    #allocation12 [shape = 'u8[1048576]{0}', space=vmem, size = 0x100000, scoped, tag = 'input window, operand 5, single buffered']
    #allocation13 [shape = 's32[1]{0}', space=sflag, size = 0x4, scoped, tag = 'scoped memory for _forward_impl.1']
    #allocation14 [shape = 'u8[2048]{0}', space=vmem, size = 0x800, scoped, tag = 'input window, operand 6, single buffered']
    #allocation15 [shape = 'u8[2048]{0}', space=vmem, size = 0x800, scoped, tag = 'input window, operand 7, single buffered']
    #allocation16 [shape = 's32[1]{0}', space=sflag, size = 0x4, scoped, tag = 'scoped memory for _forward_impl.1']
    #allocation17 [shape = 'u8[2048]{0}', space=vmem, size = 0x800, scoped, tag = 'input window, operand 8, single buffered']
    #allocation18 [shape = 'u8[4096]{0}', space=vmem, size = 0x1000, scoped, tag = 'output window, operand 0, single buffered']
    %16 = vsyncpa [#allocation4], 0
    %s17 = scalar_lea.sflag [#allocation4], 1
    %18 = vsyncpa %s17, 0
    %19 = vsyncpa [#allocation7], 0
    %s20 = scalar_lea.sflag [#allocation7], 1
    %21 = vsyncpa %s20, 0
    %22 = vsyncpa [#allocation10], 0
    %23 = vsyncpa [#allocation13], 0
    %24 = vsyncpa [#allocation16], 0
    %25 = vsyncpa [#allocation5], 0
    loop: start=0, step=1, limit=4
    $region2: #{_forward_impl.1} parent=1 // loop_pre_header
      _
    $region3: #{_forward_impl.1} parent=1 // loop_header
      %s27 = sphi 0, %s31
      %p28 = scmp.ge.s32.totalorder %s27, 4
      %s37 = sphi 0, %s39
      %s40 = sphi 0, %s37
      %s41 = sphi 0, %s40
      %s57 = sphi 0, %s41
      %s63 = sphi 0, %s65
      %s66 = sphi 0, %s63
      %s67 = sphi 0, %s66
      %s83 = sphi 0, %s67
      %s87 = sphi 0, %s87
      %s89 = sphi 0, %s87
      %s90 = sphi 0, %s89
      %s104 = sphi 0, %s90
      %s108 = sphi 0, %s108
      %s110 = sphi 0, %s108
      %s111 = sphi 0, %s110
      %s125 = sphi 0, %s111
      %s129 = sphi 0, %s129
      %s131 = sphi 0, %s129
      %s132 = sphi 0, %s131
      %s146 = sphi 0, %s132
      %s150 = sphi 0, %s150
      %s152 = sphi 0, %s150
      %s153 = sphi 0, %s152
      %s167 = sphi 0, %s153
      %s171 = sphi 0, %s171
      %s173 = sphi 0, %s171
      %s174 = sphi 0, %s173
      %s188 = sphi 0, %s174
      %s192 = sphi 0, %s192
      %s194 = sphi 0, %s192
      %s195 = sphi 0, %s194
      %s209 = sphi 0, %s195
      %s213 = sphi 0, %s213
      %s215 = sphi 0, %s213
      %s216 = sphi 0, %s215
      %s230 = sphi 0, %s216
      %s234 = sphi 0, %s234
      %s236 = sphi 0, %s234
      %s237 = sphi 0, %s236
      %s251 = sphi 0, %s237
      %s255 = sphi 0, %s255
      %s257 = sphi 0, %s255
      %s258 = sphi 0, %s257
      %s272 = sphi 0, %s258
      %s276 = sphi 0, %s276
      %s278 = sphi 0, %s276
      %s279 = sphi 0, %s278
      %s293 = sphi 0, %s279
    $region4: #{_forward_impl.1} parent=1 // loop_header_branch
      %30 = sbr.rel (%p28) target = $region8
    $region5: #{_forward_impl.1} parent=1 // loop_body
      %s32 = ssub.s32 %s27, 1
      %s33 = ssub.s32 %s27, 2
      %s34 = sadd.s32 %s27, 1
      %s35 = ssub.s32 %s27, %s34
      %p36 = scmp.eq.s32.totalorder %s35, 0
      %s38 = sadd.s32 %s37, 1
      %s39 = scalar_select %p36, %s37, %s38
      %p42 = pneg %p36
      %p43 = scmp.eq.s32.totalorder %s27, 1
      %p44 = por %p42, %p43
      %p45 = scmp.ne.s32.totalorder %s37, %s40
      %p46 = scmp.eq.s32.totalorder %s27, 0
      %p47 = por %p45, %p46
      %p48 = scmp.ne.s32.totalorder %s37, %s40
      %p49 = scmp.eq.s32.totalorder %s32, 1
      %p50 = por %p48, %p49
      %p51 = scmp.ne.s32.totalorder %s40, %s41
      %p52 = scmp.eq.s32.totalorder %s32, 0
      %p53 = por %p51, %p52
      %p54 = scmp.ne.s32.totalorder %s40, %s41
      %p55 = scmp.eq.s32.totalorder %s33, 1
      %p56 = por %p54, %p55
      %p58 = scmp.ne.s32.totalorder %s41, %s57
      %p59 = scmp.eq.s32.totalorder %s33, 0
      %p60 = por %p58, %p59
      %s61 = ssub.s32 %s27, %s34
      %p62 = scmp.eq.s32.totalorder %s61, 0
      %s64 = sadd.s32 %s63, 1
      %s65 = scalar_select %p62, %s63, %s64
      %p68 = pneg %p62
      %p69 = scmp.eq.s32.totalorder %s27, 1
      %p70 = por %p68, %p69
      %p71 = scmp.ne.s32.totalorder %s63, %s66
      %p72 = scmp.eq.s32.totalorder %s27, 0
      %p73 = por %p71, %p72
      %p74 = scmp.ne.s32.totalorder %s63, %s66
      %p75 = scmp.eq.s32.totalorder %s32, 1
      %p76 = por %p74, %p75
      %p77 = scmp.ne.s32.totalorder %s66, %s67
      %p78 = scmp.eq.s32.totalorder %s32, 0
      %p79 = por %p77, %p78
      %p80 = scmp.ne.s32.totalorder %s66, %s67
      %p81 = scmp.eq.s32.totalorder %s33, 1
      %p82 = por %p80, %p81
      %p84 = scmp.ne.s32.totalorder %s67, %s83
      %p85 = scmp.eq.s32.totalorder %s33, 0
      %p86 = por %p84, %p85
      %s88 = sadd.s32 %s87, 1
      %p91 = scmp.eq.s32.totalorder %s27, 1
      %p92 = scmp.ne.s32.totalorder %s87, %s89
      %p93 = scmp.eq.s32.totalorder %s27, 0
      %p94 = por %p92, %p93
      %p95 = scmp.ne.s32.totalorder %s87, %s89
      %p96 = scmp.eq.s32.totalorder %s32, 1
      %p97 = por %p95, %p96
      %p98 = scmp.ne.s32.totalorder %s89, %s90
      %p99 = scmp.eq.s32.totalorder %s32, 0
      %p100 = por %p98, %p99
      %p101 = scmp.ne.s32.totalorder %s89, %s90
      %p102 = scmp.eq.s32.totalorder %s33, 1
      %p103 = por %p101, %p102
      %p105 = scmp.ne.s32.totalorder %s90, %s104
      %p106 = scmp.eq.s32.totalorder %s33, 0
      %p107 = por %p105, %p106
      %s109 = sadd.s32 %s108, 1
      %p112 = scmp.eq.s32.totalorder %s27, 1
      %p113 = scmp.ne.s32.totalorder %s108, %s110
      %p114 = scmp.eq.s32.totalorder %s27, 0
      %p115 = por %p113, %p114
      %p116 = scmp.ne.s32.totalorder %s108, %s110
      %p117 = scmp.eq.s32.totalorder %s32, 1
      %p118 = por %p116, %p117
      %p119 = scmp.ne.s32.totalorder %s110, %s111
      %p120 = scmp.eq.s32.totalorder %s32, 0
      %p121 = por %p119, %p120
      %p122 = scmp.ne.s32.totalorder %s110, %s111
      %p123 = scmp.eq.s32.totalorder %s33, 1
      %p124 = por %p122, %p123
      %p126 = scmp.ne.s32.totalorder %s111, %s125
      %p127 = scmp.eq.s32.totalorder %s33, 0
      %p128 = por %p126, %p127
      %s130 = sadd.s32 %s129, 1
      %p133 = scmp.eq.s32.totalorder %s27, 1
      %p134 = scmp.ne.s32.totalorder %s129, %s131
      %p135 = scmp.eq.s32.totalorder %s27, 0
      %p136 = por %p134, %p135
      %p137 = scmp.ne.s32.totalorder %s129, %s131
      %p138 = scmp.eq.s32.totalorder %s32, 1
      %p139 = por %p137, %p138
      %p140 = scmp.ne.s32.totalorder %s131, %s132
      %p141 = scmp.eq.s32.totalorder %s32, 0
      %p142 = por %p140, %p141
      %p143 = scmp.ne.s32.totalorder %s131, %s132
      %p144 = scmp.eq.s32.totalorder %s33, 1
      %p145 = por %p143, %p144
      %p147 = scmp.ne.s32.totalorder %s132, %s146
      %p148 = scmp.eq.s32.totalorder %s33, 0
      %p149 = por %p147, %p148
      %s151 = sadd.s32 %s150, 1
      %p154 = scmp.eq.s32.totalorder %s27, 1
      %p155 = scmp.ne.s32.totalorder %s150, %s152
      %p156 = scmp.eq.s32.totalorder %s27, 0
      %p157 = por %p155, %p156
      %p158 = scmp.ne.s32.totalorder %s150, %s152
      %p159 = scmp.eq.s32.totalorder %s32, 1
      %p160 = por %p158, %p159
      %p161 = scmp.ne.s32.totalorder %s152, %s153
      %p162 = scmp.eq.s32.totalorder %s32, 0
      %p163 = por %p161, %p162
      %p164 = scmp.ne.s32.totalorder %s152, %s153
      %p165 = scmp.eq.s32.totalorder %s33, 1
      %p166 = por %p164, %p165
      %p168 = scmp.ne.s32.totalorder %s153, %s167
      %p169 = scmp.eq.s32.totalorder %s33, 0
      %p170 = por %p168, %p169
      %s172 = sadd.s32 %s171, 1
      %p175 = scmp.eq.s32.totalorder %s27, 1
      %p176 = scmp.ne.s32.totalorder %s171, %s173
      %p177 = scmp.eq.s32.totalorder %s27, 0
      %p178 = por %p176, %p177
      %p179 = scmp.ne.s32.totalorder %s171, %s173
      %p180 = scmp.eq.s32.totalorder %s32, 1
      %p181 = por %p179, %p180
      %p182 = scmp.ne.s32.totalorder %s173, %s174
      %p183 = scmp.eq.s32.totalorder %s32, 0
      %p184 = por %p182, %p183
      %p185 = scmp.ne.s32.totalorder %s173, %s174
      %p186 = scmp.eq.s32.totalorder %s33, 1
      %p187 = por %p185, %p186
      %p189 = scmp.ne.s32.totalorder %s174, %s188
      %p190 = scmp.eq.s32.totalorder %s33, 0
      %p191 = por %p189, %p190
      %s193 = sadd.s32 %s192, 1
      %p196 = scmp.eq.s32.totalorder %s27, 1
      %p197 = scmp.ne.s32.totalorder %s192, %s194
      %p198 = scmp.eq.s32.totalorder %s27, 0
      %p199 = por %p197, %p198
      %p200 = scmp.ne.s32.totalorder %s192, %s194
      %p201 = scmp.eq.s32.totalorder %s32, 1
      %p202 = por %p200, %p201
      %p203 = scmp.ne.s32.totalorder %s194, %s195
      %p204 = scmp.eq.s32.totalorder %s32, 0
      %p205 = por %p203, %p204
      %p206 = scmp.ne.s32.totalorder %s194, %s195
      %p207 = scmp.eq.s32.totalorder %s33, 1
      %p208 = por %p206, %p207
      %p210 = scmp.ne.s32.totalorder %s195, %s209
      %p211 = scmp.eq.s32.totalorder %s33, 0
      %p212 = por %p210, %p211
      %s214 = sadd.s32 %s213, 1
      %p217 = scmp.eq.s32.totalorder %s27, 1
      %p218 = scmp.ne.s32.totalorder %s213, %s215
      %p219 = scmp.eq.s32.totalorder %s27, 0
      %p220 = por %p218, %p219
      %p221 = scmp.ne.s32.totalorder %s213, %s215
      %p222 = scmp.eq.s32.totalorder %s32, 1
      %p223 = por %p221, %p222
      %p224 = scmp.ne.s32.totalorder %s215, %s216
      %p225 = scmp.eq.s32.totalorder %s32, 0
      %p226 = por %p224, %p225
      %p227 = scmp.ne.s32.totalorder %s215, %s216
      %p228 = scmp.eq.s32.totalorder %s33, 1
      %p229 = por %p227, %p228
      %p231 = scmp.ne.s32.totalorder %s216, %s230
      %p232 = scmp.eq.s32.totalorder %s33, 0
      %p233 = por %p231, %p232
      %s235 = sadd.s32 %s234, 1
      %p238 = scmp.eq.s32.totalorder %s27, 1
      %p239 = scmp.ne.s32.totalorder %s234, %s236
      %p240 = scmp.eq.s32.totalorder %s27, 0
      %p241 = por %p239, %p240
      %p242 = scmp.ne.s32.totalorder %s234, %s236
      %p243 = scmp.eq.s32.totalorder %s32, 1
      %p244 = por %p242, %p243
      %p245 = scmp.ne.s32.totalorder %s236, %s237
      %p246 = scmp.eq.s32.totalorder %s32, 0
      %p247 = por %p245, %p246
      %p248 = scmp.ne.s32.totalorder %s236, %s237
      %p249 = scmp.eq.s32.totalorder %s33, 1
      %p250 = por %p248, %p249
      %p252 = scmp.ne.s32.totalorder %s237, %s251
      %p253 = scmp.eq.s32.totalorder %s33, 0
      %p254 = por %p252, %p253
      %s256 = sadd.s32 %s255, 1
      %p259 = scmp.eq.s32.totalorder %s27, 1
      %p260 = scmp.ne.s32.totalorder %s255, %s257
      %p261 = scmp.eq.s32.totalorder %s27, 0
      %p262 = por %p260, %p261
      %p263 = scmp.ne.s32.totalorder %s255, %s257
      %p264 = scmp.eq.s32.totalorder %s32, 1
      %p265 = por %p263, %p264
      %p266 = scmp.ne.s32.totalorder %s257, %s258
      %p267 = scmp.eq.s32.totalorder %s32, 0
      %p268 = por %p266, %p267
      %p269 = scmp.ne.s32.totalorder %s257, %s258
      %p270 = scmp.eq.s32.totalorder %s33, 1
      %p271 = por %p269, %p270
      %p273 = scmp.ne.s32.totalorder %s258, %s272
      %p274 = scmp.eq.s32.totalorder %s33, 0
      %p275 = por %p273, %p274
      %s277 = sadd.s32 %s276, 1
      %p280 = scmp.eq.s32.totalorder %s27, 1
      %p281 = scmp.ne.s32.totalorder %s276, %s278
      %p282 = scmp.eq.s32.totalorder %s27, 0
      %p283 = por %p281, %p282
      %p284 = scmp.ne.s32.totalorder %s276, %s278
      %p285 = scmp.eq.s32.totalorder %s32, 1
      %p286 = por %p284, %p285
      %p287 = scmp.ne.s32.totalorder %s278, %s279
      %p288 = scmp.eq.s32.totalorder %s32, 0
      %p289 = por %p287, %p288
      %p290 = scmp.ne.s32.totalorder %s278, %s279
      %p291 = scmp.eq.s32.totalorder %s33, 1
      %p292 = por %p290, %p291
      %p294 = scmp.ne.s32.totalorder %s279, %s293
      %p295 = scmp.eq.s32.totalorder %s33, 0
      %p296 = por %p294, %p295
      %p297 = scmp.le.s32.totalorder 1, %s27
      %p298 = scmp.lt.s32.totalorder %s27, 3
      %p299 = pnand %p297, %p298
      %p300 = pneg %p299
      // Predicated region
      $region9: #{_forward_impl.1} parent=5 // pred_check
        _
      $region10: #{_forward_impl.1} parent=5 // pred_check_branch
        %302 = sbr.rel (%p299) target = $region12
      $region11: #{_forward_impl.1} parent=5 // pred_region
        %s303 = ssub.s32 %s27, 1
        // Predicated region
        $region13: #{_forward_impl.1} parent=11 // pred_check
          %p304 = pneg %p100
        $region14: #{_forward_impl.1} parent=11 // pred_check_branch
          %306 = sbr.rel (%p304) target = $region16
        $region15: #{_forward_impl.1} parent=11 // pred_region
          %s308 = ssub.s32 128, 128
          %309 = vsyncadd [#allocation7], %s308
          %s311 = sshll.u32 [#allocation8], 4
          %s312 = int_to_ptr.vmem [resolvable:$true] %s311
          %314 = dma.hbm_to_vmem [thread:$0]  %s2, 128, %s312, [#allocation7]
        $region16: #{_forward_impl.1} parent=11 // pred_fallthru
          _
        // Predicated region
        $region17: #{_forward_impl.1} parent=11 // pred_check
          %p315 = pneg %p121
        $region18: #{_forward_impl.1} parent=11 // pred_check_branch
          %317 = sbr.rel (%p315) target = $region20
        $region19: #{_forward_impl.1} parent=11 // pred_region
          %s319 = ssub.s32 128, 128
          %320 = vsyncadd [#allocation10], %s319
          %s322 = sshll.u32 [#allocation9], 4
          %s323 = int_to_ptr.vmem [resolvable:$true] %s322
          %325 = dma.hbm_to_vmem [thread:$0]  %s3, 128, %s323, [#allocation10]
        $region20: #{_forward_impl.1} parent=11 // pred_fallthru
          _
        // Predicated region
        $region21: #{_forward_impl.1} parent=11 // pred_check
          %p326 = pneg %p142
        $region22: #{_forward_impl.1} parent=11 // pred_check_branch
          %328 = sbr.rel (%p326) target = $region24
        $region23: #{_forward_impl.1} parent=11 // pred_region
          %s330 = ssub.s32 128, 128
          %331 = vsyncadd [#allocation10], %s330
          %s333 = sshll.u32 [#allocation11], 4
          %s334 = int_to_ptr.vmem [resolvable:$true] %s333
          %336 = dma.hbm_to_vmem [thread:$0]  %s4, 128, %s334, [#allocation10]
        $region24: #{_forward_impl.1} parent=11 // pred_fallthru
          _
        // Predicated region
        $region25: #{_forward_impl.1} parent=11 // pred_check
          %p337 = pneg %p163
        $region26: #{_forward_impl.1} parent=11 // pred_check_branch
          %339 = sbr.rel (%p337) target = $region28
        $region27: #{_forward_impl.1} parent=11 // pred_region
          %s341 = ssub.s32 32768, 32768
          %342 = vsyncadd [#allocation13], %s341
          %s343 = sshll.u32 [#allocation12], 4
          %s344 = int_to_ptr.vmem [resolvable:$true] %s343
          %349 = dma.hbm_to_vmem [thread:$0]  %s5, 32768, %s344, [#allocation13], 256, 256, 16
        $region28: #{_forward_impl.1} parent=11 // pred_fallthru
          _
        // Predicated region
        $region29: #{_forward_impl.1} parent=11 // pred_check
          %p350 = pneg %p184
        $region30: #{_forward_impl.1} parent=11 // pred_check_branch
          %352 = sbr.rel (%p350) target = $region32
        $region31: #{_forward_impl.1} parent=11 // pred_region
          %s354 = ssub.s32 64, 64
          %355 = vsyncadd [#allocation13], %s354
          %s357 = sshll.u32 [#allocation14], 4
          %s358 = int_to_ptr.vmem [resolvable:$true] %s357
          %360 = dma.hbm_to_vmem [thread:$0]  %s6, 64, %s358, [#allocation13]
        $region32: #{_forward_impl.1} parent=11 // pred_fallthru
          _
        // Predicated region
        $region33: #{_forward_impl.1} parent=11 // pred_check
          %p361 = pneg %p205
        $region34: #{_forward_impl.1} parent=11 // pred_check_branch
          %363 = sbr.rel (%p361) target = $region36
        $region35: #{_forward_impl.1} parent=11 // pred_region
          %s365 = ssub.s32 64, 64
          %366 = vsyncadd [#allocation16], %s365
          %s368 = sshll.u32 [#allocation15], 4
          %s369 = int_to_ptr.vmem [resolvable:$true] %s368
          %371 = dma.hbm_to_vmem [thread:$0]  %s7, 64, %s369, [#allocation16]
        $region36: #{_forward_impl.1} parent=11 // pred_fallthru
          _
        // Predicated region
        $region37: #{_forward_impl.1} parent=11 // pred_check
          %p372 = pneg %p226
        $region38: #{_forward_impl.1} parent=11 // pred_check_branch
          %374 = sbr.rel (%p372) target = $region40
        $region39: #{_forward_impl.1} parent=11 // pred_region
          %s376 = ssub.s32 64, 64
          %377 = vsyncadd [#allocation16], %s376
          %s379 = sshll.u32 [#allocation17], 4
          %s380 = int_to_ptr.vmem [resolvable:$true] %s379
          %382 = dma.hbm_to_vmem [thread:$0]  %s8, 64, %s380, [#allocation16]
        $region40: #{_forward_impl.1} parent=11 // pred_fallthru
          _
        // Predicated region
        $region41: #{_forward_impl.1} parent=11 // pred_check
          %p383 = pneg %p247
        $region42: #{_forward_impl.1} parent=11 // pred_check_branch
          %385 = sbr.rel (%p383) target = $region44
        $region43: #{_forward_impl.1} parent=11 // pred_region
          _
        $region44: #{_forward_impl.1} parent=11 // pred_fallthru
          _
        // Predicated region
        $region45: #{_forward_impl.1} parent=11 // pred_check
          %p386 = pneg %p268
        $region46: #{_forward_impl.1} parent=11 // pred_check_branch
          %388 = sbr.rel (%p386) target = $region48
        $region47: #{_forward_impl.1} parent=11 // pred_region
          _
        $region48: #{_forward_impl.1} parent=11 // pred_fallthru
          _
      $region12: #{_forward_impl.1} parent=5 // pred_fallthru
        _
      %p389 = scmp.lt.s32.totalorder %s27, 2
      // Predicated region
      $region49: #{_forward_impl.1} parent=5 // pred_check
        %p390 = pneg %p389
      $region50: #{_forward_impl.1} parent=5 // pred_check_branch
        %392 = sbr.rel (%p390) target = $region52
      $region51: #{_forward_impl.1} parent=5 // pred_region
        // Predicated region
        $region53: #{_forward_impl.1} parent=51 // pred_check
          %p393 = pneg %p47
        $region54: #{_forward_impl.1} parent=51 // pred_check_branch
          %395 = sbr.rel (%p393) target = $region56
        $region55: #{_forward_impl.1} parent=51 // pred_region
          %s396 = sand.u32 %s37, 1
          %s397 = scalar_lea.sflag [#allocation4], %s396
          %s398 = sand.u32 %s37, 1
          %s399 = smul.addr %s398, 160
          %s400 = scalar_lea.vmem [#allocation3], %s399
          %s401 = smul.u32 20, %s27
          %s403 = ssub.s32 2560, 2560
          %404 = vsyncadd %s397, %s403
          %s405 = smul.addr %s401, 128
          %s406 = scalar_lea.hbm %s0, %s405
          %s408 = sshll.u32 %s400, 4
          %s409 = int_to_ptr.vmem [resolvable:$true] %s408
          %411 = dma.hbm_to_vmem [thread:$0]  %s406, 2560, %s409, %s397
        $region56: #{_forward_impl.1} parent=51 // pred_fallthru
          _
        // Predicated region
        $region57: #{_forward_impl.1} parent=51 // pred_check
          %p412 = pneg %p73
        $region58: #{_forward_impl.1} parent=51 // pred_check_branch
          %414 = sbr.rel (%p412) target = $region60
        $region59: #{_forward_impl.1} parent=51 // pred_region
          %s415 = sand.u32 %s27, 1
          %s416 = scalar_lea.sflag [#allocation7], %s415
          %s417 = sand.u32 %s63, 1
          %s418 = smul.addr %s417, 10240
          %s419 = scalar_lea.vmem [#allocation6], %s418
          %s420 = smul.u32 320, %s27
          %s422 = ssub.s32 163840, 163840
          %423 = vsyncadd %s416, %s422
          %s424 = smul.addr %s420, 8
          %s425 = smul.addr %s424, 64
          %s426 = scalar_lea.hbm %s1, %s425
          %s427 = sshll.u32 %s419, 4
          %s428 = int_to_ptr.vmem [resolvable:$true] %s427
          %433 = dma.hbm_to_vmem [thread:$0]  %s426, 163840, %s428, %s416, 512, 512, 32
        $region60: #{_forward_impl.1} parent=51 // pred_fallthru
          _
      $region52: #{_forward_impl.1} parent=5 // pred_fallthru
        _
      %p434 = scmp.le.s32.totalorder 1, %s27
      %p435 = scmp.lt.s32.totalorder %s27, 3
      %p436 = pnand %p434, %p435
      %p437 = pneg %p436
      // Predicated region
      $region61: #{_forward_impl.1} parent=5 // pred_check
        _
      $region62: #{_forward_impl.1} parent=5 // pred_check_branch
        %439 = sbr.rel (%p436) target = $region64
      $region63: #{_forward_impl.1} parent=5 // pred_region
        %s440 = ssub.s32 %s27, 1
        %s441 = sand.u32 %s40, 1
        %s442 = scalar_lea.sflag [#allocation4], %s441
        %s443 = sand.u32 %s40, 1
        %s444 = smul.addr %s443, 160
        %s445 = scalar_lea.vmem [#allocation3], %s444
        // Predicated region
        $region65: #{_forward_impl.1} parent=63 // pred_check
          %p446 = pneg %p53
        $region66: #{_forward_impl.1} parent=63 // pred_check_branch
          %448 = sbr.rel (%p446) target = $region68
        $region67: #{_forward_impl.1} parent=63 // pred_region
          %449 = dma.done %s442, 2560
        $region68: #{_forward_impl.1} parent=63 // pred_fallthru
          _
        %s450 = sand.u32 %s32, 1
        %s451 = scalar_lea.sflag [#allocation7], %s450
        %s452 = sand.u32 %s66, 1
        %s453 = smul.addr %s452, 10240
        %s454 = scalar_lea.vmem [#allocation6], %s453
        // Predicated region
        $region69: #{_forward_impl.1} parent=63 // pred_check
          %p455 = pneg %p79
        $region70: #{_forward_impl.1} parent=63 // pred_check_branch
          %457 = sbr.rel (%p455) target = $region72
        $region71: #{_forward_impl.1} parent=63 // pred_region
          %458 = dma.done %s451, 163840
        $region72: #{_forward_impl.1} parent=63 // pred_fallthru
          _
        // Predicated region
        $region73: #{_forward_impl.1} parent=63 // pred_check
          %p459 = pneg %p100
        $region74: #{_forward_impl.1} parent=63 // pred_check_branch
          %461 = sbr.rel (%p459) target = $region76
        $region75: #{_forward_impl.1} parent=63 // pred_region
          %462 = dma.done [#allocation7], 128
        $region76: #{_forward_impl.1} parent=63 // pred_fallthru
          _
        // Predicated region
        $region77: #{_forward_impl.1} parent=63 // pred_check
          %p463 = pneg %p121
        $region78: #{_forward_impl.1} parent=63 // pred_check_branch
          %465 = sbr.rel (%p463) target = $region80
        $region79: #{_forward_impl.1} parent=63 // pred_region
          %466 = dma.done [#allocation10], 128
        $region80: #{_forward_impl.1} parent=63 // pred_fallthru
          _
        // Predicated region
        $region81: #{_forward_impl.1} parent=63 // pred_check
          %p467 = pneg %p142
        $region82: #{_forward_impl.1} parent=63 // pred_check_branch
          %469 = sbr.rel (%p467) target = $region84
        $region83: #{_forward_impl.1} parent=63 // pred_region
          %470 = dma.done [#allocation10], 128
        $region84: #{_forward_impl.1} parent=63 // pred_fallthru
          _
        // Predicated region
        $region85: #{_forward_impl.1} parent=63 // pred_check
          %p471 = pneg %p163
        $region86: #{_forward_impl.1} parent=63 // pred_check_branch
          %473 = sbr.rel (%p471) target = $region88
        $region87: #{_forward_impl.1} parent=63 // pred_region
          %474 = dma.done [#allocation13], 32768
        $region88: #{_forward_impl.1} parent=63 // pred_fallthru
          _
        // Predicated region
        $region89: #{_forward_impl.1} parent=63 // pred_check
          %p475 = pneg %p184
        $region90: #{_forward_impl.1} parent=63 // pred_check_branch
          %477 = sbr.rel (%p475) target = $region92
        $region91: #{_forward_impl.1} parent=63 // pred_region
          %478 = dma.done [#allocation13], 64
        $region92: #{_forward_impl.1} parent=63 // pred_fallthru
          _
        // Predicated region
        $region93: #{_forward_impl.1} parent=63 // pred_check
          %p479 = pneg %p205
        $region94: #{_forward_impl.1} parent=63 // pred_check_branch
          %481 = sbr.rel (%p479) target = $region96
        $region95: #{_forward_impl.1} parent=63 // pred_region
          %482 = dma.done [#allocation16], 64
        $region96: #{_forward_impl.1} parent=63 // pred_fallthru
          _
        // Predicated region
        $region97: #{_forward_impl.1} parent=63 // pred_check
          %p483 = pneg %p226
        $region98: #{_forward_impl.1} parent=63 // pred_check_branch
          %485 = sbr.rel (%p483) target = $region100
        $region99: #{_forward_impl.1} parent=63 // pred_region
          %486 = dma.done [#allocation16], 64
        $region100: #{_forward_impl.1} parent=63 // pred_fallthru
          _
        %s487 = sand.u32 %s40, 1
        %s488 = scalar_lea.sflag [#allocation4], %s487
        %s489 = sand.u32 %s40, 1
        %s490 = smul.addr %s489, 160
        %s491 = scalar_lea.vmem [#allocation3], %s490
        %p492 = pneg %p53
        %p493 = pneg %p50
        %s494 = sand.u32 %s32, 1
        %s495 = scalar_lea.sflag [#allocation7], %s494
        %s496 = sand.u32 %s66, 1
        %s497 = smul.addr %s496, 10240
        %s498 = scalar_lea.vmem [#allocation6], %s497
        %p499 = pneg %p79
        %p500 = pneg %p76
        %p501 = pneg %p100
        %p502 = pneg %p97
        %p503 = pneg %p121
        %p504 = pneg %p118
        %p505 = pneg %p142
        %p506 = pneg %p139
        %p507 = pneg %p163
        %p508 = pneg %p160
        %p509 = pneg %p184
        %p510 = pneg %p181
        %p511 = pneg %p205
        %p512 = pneg %p202
        %p513 = pneg %p226
        %p514 = pneg %p223
        %p515 = pneg %p247
        %p516 = pneg %p244
        %p517 = pneg %p268
        %p518 = pneg %p265
        %p519 = pneg %p289
        %p520 = pneg %p286
        %s521 = smul.u32 20, %s32
        %s522 = smul.u32 320, %s32
        %p524 = scmp.eq.s32.totalorder %s32, 0
        // Predicated region
        $region101: #{_forward_impl.1} parent=63 // pred_check
          %p525 = pneg %p524
        $region102: #{_forward_impl.1} parent=63 // pred_check_branch
          %527 = sbr.rel (%p525) target = $region104
        $region103: #{_forward_impl.1} parent=63 // pred_region
          %528 = vst [vmem:[#allocation2] sm:$0xff] 0.0
          %529 = vst [vmem:[#allocation2 + $0x8] sm:$0xff] 0.0
          %530 = vst [vmem:[#allocation2 + $0x10] sm:$0xff] 0.0
          %531 = vst [vmem:[#allocation2 + $0x18] sm:$0xff] 0.0
          %532 = vst [vmem:[#allocation2 + $0x20] sm:$0xff] 0.0
          %533 = vst [vmem:[#allocation2 + $0x28] sm:$0xff] 0.0
          %534 = vst [vmem:[#allocation2 + $0x30] sm:$0xff] 0.0
          %535 = vst [vmem:[#allocation2 + $0x38] sm:$0xff] 0.0
        $region104: #{_forward_impl.1} parent=63 // pred_fallthru
          _
        %v536 = vld [vmem:[#allocation2] sm:$0xff]
        %v537 = vld [vmem:[#allocation2 + $0x8] sm:$0xff]
        %v538 = vld [vmem:[#allocation2 + $0x10] sm:$0xff]
        %v539 = vld [vmem:[#allocation2 + $0x18] sm:$0xff]
        %v540 = vld [vmem:[#allocation2 + $0x20] sm:$0xff]
        %v541 = vld [vmem:[#allocation2 + $0x28] sm:$0xff]
        %v542 = vld [vmem:[#allocation2 + $0x30] sm:$0xff]
        %v543 = vld [vmem:[#allocation2 + $0x38] sm:$0xff]
        %v544 = vld [vmem:[%s445] sm:$0xff]
        %v545 = vld [vmem:[%s445 + $0x8] sm:$0xff]
        %v546 = vld [vmem:[%s445 + $0x10] sm:$0xff]
        %v547 = vld [vmem:[%s445 + $0x18] sm:$0xff]
        %v548 = vld [vmem:[%s445 + $0x20] sm:$0xff]
        %v549 = vld [vmem:[%s445 + $0x28] sm:$0xff]
        %v550 = vld [vmem:[%s445 + $0x30] sm:$0xff]
        %v551 = vld [vmem:[%s445 + $0x38] sm:$0xff]
        %v552 = vld [vmem:[%s445 + $0x40] sm:$0xff]
        %v553 = vld [vmem:[%s445 + $0x48] sm:$0xff]
        %v554 = vld [vmem:[%s445 + $0x50] sm:$0xff]
        %v555 = vld [vmem:[%s445 + $0x58] sm:$0xff]
        %v556 = vld [vmem:[%s445 + $0x60] sm:$0xff]
        %v557 = vld [vmem:[%s445 + $0x68] sm:$0xff]
        %v558 = vld [vmem:[%s445 + $0x70] sm:$0xff]
        %v559 = vld [vmem:[%s445 + $0x78] sm:$0xff]
        %v560 = vld [vmem:[%s445 + $0x80] sm:$0xff]
        %v561 = vld [vmem:[%s445 + $0x88] sm:$0xff]
        %v562 = vld [vmem:[%s445 + $0x90] sm:$0xff]
        %v563 = vld [vmem:[%s445 + $0x98] sm:$0xff]
        %v564 = vpack.c.bf16 %v544, %v544
        %v565 = vpack.c.bf16 %v545, %v545
        %v566 = vpack.c.bf16 %v546, %v546
        %v567 = vpack.c.bf16 %v547, %v547
        %v568 = vpack.c.bf16 %v548, %v548
        %v569 = vpack.c.bf16 %v549, %v549
        %v570 = vpack.c.bf16 %v550, %v550
        %v571 = vpack.c.bf16 %v551, %v551
        %v572 = vpack.c.bf16 %v552, %v552
        %v573 = vpack.c.bf16 %v553, %v553
        %v574 = vpack.c.bf16 %v554, %v554
        %v575 = vpack.c.bf16 %v555, %v555
        %v576 = vpack.c.bf16 %v556, %v556
        %v577 = vpack.c.bf16 %v557, %v557
        %v578 = vpack.c.bf16 %v558, %v558
        %v579 = vpack.c.bf16 %v559, %v559
        %v580 = vpack.c.bf16 %v560, %v560
        %v581 = vpack.c.bf16 %v561, %v561
        %v582 = vpack.c.bf16 %v562, %v562
        %v583 = vpack.c.bf16 %v563, %v563
        %v584 = vld [vmem:[%s454] sm:$0xff]
        %v585 = vld [vmem:[%s454 + $0x8] sm:$0xff]
        %v586 = vld [vmem:[%s454 + $0x10] sm:$0xff]
        %v587 = vld [vmem:[%s454 + $0x18] sm:$0xff]
        %v588 = vld [vmem:[%s454 + $0x20] sm:$0xff]
        %v589 = vld [vmem:[%s454 + $0x28] sm:$0xff]
        %v590 = vld [vmem:[%s454 + $0x30] sm:$0xff]
        %v591 = vld [vmem:[%s454 + $0x38] sm:$0xff]
        %v592 = vld [vmem:[%s454 + $0x40] sm:$0xff]
        %v593 = vld [vmem:[%s454 + $0x48] sm:$0xff]
        %v594 = vld [vmem:[%s454 + $0x50] sm:$0xff]
        %v595 = vld [vmem:[%s454 + $0x58] sm:$0xff]
        %v596 = vld [vmem:[%s454 + $0x60] sm:$0xff]
        %v597 = vld [vmem:[%s454 + $0x68] sm:$0xff]
        %v598 = vld [vmem:[%s454 + $0x70] sm:$0xff]
        %v599 = vld [vmem:[%s454 + $0x78] sm:$0xff]
        %v600 = vld [vmem:[%s454 + $0x80] sm:$0xff]
        %v601 = vld [vmem:[%s454 + $0x88] sm:$0xff]
        %v602 = vld [vmem:[%s454 + $0x90] sm:$0xff]
        %v603 = vld [vmem:[%s454 + $0x98] sm:$0xff]
        %v604 = vld [vmem:[%s454 + $0xa0] sm:$0xff]
        %v605 = vld [vmem:[%s454 + $0xa8] sm:$0xff]
        %v606 = vld [vmem:[%s454 + $0xb0] sm:$0xff]
        %v607 = vld [vmem:[%s454 + $0xb8] sm:$0xff]
        %v608 = vld [vmem:[%s454 + $0xc0] sm:$0xff]
        %v609 = vld [vmem:[%s454 + $0xc8] sm:$0xff]
        %v610 = vld [vmem:[%s454 + $0xd0] sm:$0xff]
        %v611 = vld [vmem:[%s454 + $0xd8] sm:$0xff]
        %v612 = vld [vmem:[%s454 + $0xe0] sm:$0xff]
        %v613 = vld [vmem:[%s454 + $0xe8] sm:$0xff]
        %v614 = vld [vmem:[%s454 + $0xf0] sm:$0xff]
        %v615 = vld [vmem:[%s454 + $0xf8] sm:$0xff]
        %v616 = vld [vmem:[%s454 + $0x100] sm:$0xff]
        %v617 = vld [vmem:[%s454 + $0x108] sm:$0xff]
        %v618 = vld [vmem:[%s454 + $0x110] sm:$0xff]
        %v619 = vld [vmem:[%s454 + $0x118] sm:$0xff]
        %v620 = vld [vmem:[%s454 + $0x120] sm:$0xff]
        %v621 = vld [vmem:[%s454 + $0x128] sm:$0xff]
        %v622 = vld [vmem:[%s454 + $0x130] sm:$0xff]
        %v623 = vld [vmem:[%s454 + $0x138] sm:$0xff]
        %v624 = vld [vmem:[%s454 + $0x140] sm:$0xff]
        %v625 = vld [vmem:[%s454 + $0x148] sm:$0xff]
        %v626 = vld [vmem:[%s454 + $0x150] sm:$0xff]
        %v627 = vld [vmem:[%s454 + $0x158] sm:$0xff]
        %v628 = vld [vmem:[%s454 + $0x160] sm:$0xff]
        %v629 = vld [vmem:[%s454 + $0x168] sm:$0xff]
        %v630 = vld [vmem:[%s454 + $0x170] sm:$0xff]
        %v631 = vld [vmem:[%s454 + $0x178] sm:$0xff]
        %v632 = vld [vmem:[%s454 + $0x180] sm:$0xff]
        %v633 = vld [vmem:[%s454 + $0x188] sm:$0xff]
        %v634 = vld [vmem:[%s454 + $0x190] sm:$0xff]
        %v635 = vld [vmem:[%s454 + $0x198] sm:$0xff]
        %v636 = vld [vmem:[%s454 + $0x1a0] sm:$0xff]
        %v637 = vld [vmem:[%s454 + $0x1a8] sm:$0xff]
        %v638 = vld [vmem:[%s454 + $0x1b0] sm:$0xff]
        %v639 = vld [vmem:[%s454 + $0x1b8] sm:$0xff]
        %v640 = vld [vmem:[%s454 + $0x1c0] sm:$0xff]
        %v641 = vld [vmem:[%s454 + $0x1c8] sm:$0xff]
        %v642 = vld [vmem:[%s454 + $0x1d0] sm:$0xff]
        %v643 = vld [vmem:[%s454 + $0x1d8] sm:$0xff]
        %v644 = vld [vmem:[%s454 + $0x1e0] sm:$0xff]
        %v645 = vld [vmem:[%s454 + $0x1e8] sm:$0xff]
        %v646 = vld [vmem:[%s454 + $0x1f0] sm:$0xff]
        %v647 = vld [vmem:[%s454 + $0x1f8] sm:$0xff]
        %v648 = vld [vmem:[%s454 + $0x200] sm:$0xff]
        %v649 = vld [vmem:[%s454 + $0x208] sm:$0xff]
        %v650 = vld [vmem:[%s454 + $0x210] sm:$0xff]
        %v651 = vld [vmem:[%s454 + $0x218] sm:$0xff]
        %v652 = vld [vmem:[%s454 + $0x220] sm:$0xff]
        %v653 = vld [vmem:[%s454 + $0x228] sm:$0xff]
        %v654 = vld [vmem:[%s454 + $0x230] sm:$0xff]
        %v655 = vld [vmem:[%s454 + $0x238] sm:$0xff]
        %v656 = vld [vmem:[%s454 + $0x240] sm:$0xff]
        %v657 = vld [vmem:[%s454 + $0x248] sm:$0xff]
        %v658 = vld [vmem:[%s454 + $0x250] sm:$0xff]
        %v659 = vld [vmem:[%s454 + $0x258] sm:$0xff]
        %v660 = vld [vmem:[%s454 + $0x260] sm:$0xff]
        %v661 = vld [vmem:[%s454 + $0x268] sm:$0xff]
        %v662 = vld [vmem:[%s454 + $0x270] sm:$0xff]
        %v663 = vld [vmem:[%s454 + $0x278] sm:$0xff]
        %v664 = vld [vmem:[%s454 + $0x280] sm:$0xff]
        %v665 = vld [vmem:[%s454 + $0x288] sm:$0xff]
        %v666 = vld [vmem:[%s454 + $0x290] sm:$0xff]
        %v667 = vld [vmem:[%s454 + $0x298] sm:$0xff]
        %v668 = vld [vmem:[%s454 + $0x2a0] sm:$0xff]
        %v669 = vld [vmem:[%s454 + $0x2a8] sm:$0xff]
        %v670 = vld [vmem:[%s454 + $0x2b0] sm:$0xff]
        %v671 = vld [vmem:[%s454 + $0x2b8] sm:$0xff]
        %v672 = vld [vmem:[%s454 + $0x2c0] sm:$0xff]
        %v673 = vld [vmem:[%s454 + $0x2c8] sm:$0xff]
        %v674 = vld [vmem:[%s454 + $0x2d0] sm:$0xff]
        %v675 = vld [vmem:[%s454 + $0x2d8] sm:$0xff]
        %v676 = vld [vmem:[%s454 + $0x2e0] sm:$0xff]
        %v677 = vld [vmem:[%s454 + $0x2e8] sm:$0xff]
        %v678 = vld [vmem:[%s454 + $0x2f0] sm:$0xff]
        %v679 = vld [vmem:[%s454 + $0x2f8] sm:$0xff]
        %v680 = vld [vmem:[%s454 + $0x300] sm:$0xff]
        %v681 = vld [vmem:[%s454 + $0x308] sm:$0xff]
        %v682 = vld [vmem:[%s454 + $0x310] sm:$0xff]
        %v683 = vld [vmem:[%s454 + $0x318] sm:$0xff]
        %v684 = vld [vmem:[%s454 + $0x320] sm:$0xff]
        %v685 = vld [vmem:[%s454 + $0x328] sm:$0xff]
        %v686 = vld [vmem:[%s454 + $0x330] sm:$0xff]
        %v687 = vld [vmem:[%s454 + $0x338] sm:$0xff]
        %v688 = vld [vmem:[%s454 + $0x340] sm:$0xff]
        %v689 = vld [vmem:[%s454 + $0x348] sm:$0xff]
        %v690 = vld [vmem:[%s454 + $0x350] sm:$0xff]
        %v691 = vld [vmem:[%s454 + $0x358] sm:$0xff]
        %v692 = vld [vmem:[%s454 + $0x360] sm:$0xff]
        %v693 = vld [vmem:[%s454 + $0x368] sm:$0xff]
        %v694 = vld [vmem:[%s454 + $0x370] sm:$0xff]
        %v695 = vld [vmem:[%s454 + $0x378] sm:$0xff]
        %v696 = vld [vmem:[%s454 + $0x380] sm:$0xff]
        %v697 = vld [vmem:[%s454 + $0x388] sm:$0xff]
        %v698 = vld [vmem:[%s454 + $0x390] sm:$0xff]
        %v699 = vld [vmem:[%s454 + $0x398] sm:$0xff]
        %v700 = vld [vmem:[%s454 + $0x3a0] sm:$0xff]
        %v701 = vld [vmem:[%s454 + $0x3a8] sm:$0xff]
        %v702 = vld [vmem:[%s454 + $0x3b0] sm:$0xff]
        %v703 = vld [vmem:[%s454 + $0x3b8] sm:$0xff]
        %v704 = vld [vmem:[%s454 + $0x3c0] sm:$0xff]
        %v705 = vld [vmem:[%s454 + $0x3c8] sm:$0xff]
        %v706 = vld [vmem:[%s454 + $0x3d0] sm:$0xff]
        %v707 = vld [vmem:[%s454 + $0x3d8] sm:$0xff]
        %v708 = vld [vmem:[%s454 + $0x3e0] sm:$0xff]
        %v709 = vld [vmem:[%s454 + $0x3e8] sm:$0xff]
        %v710 = vld [vmem:[%s454 + $0x3f0] sm:$0xff]
        %v711 = vld [vmem:[%s454 + $0x3f8] sm:$0xff]
        %v712 = vld [vmem:[%s454 + $0x400] sm:$0xff]
        %v713 = vld [vmem:[%s454 + $0x408] sm:$0xff]
        %v714 = vld [vmem:[%s454 + $0x410] sm:$0xff]
        %v715 = vld [vmem:[%s454 + $0x418] sm:$0xff]
        %v716 = vld [vmem:[%s454 + $0x420] sm:$0xff]
        %v717 = vld [vmem:[%s454 + $0x428] sm:$0xff]
        %v718 = vld [vmem:[%s454 + $0x430] sm:$0xff]
        %v719 = vld [vmem:[%s454 + $0x438] sm:$0xff]
        %v720 = vld [vmem:[%s454 + $0x440] sm:$0xff]
        %v721 = vld [vmem:[%s454 + $0x448] sm:$0xff]
        %v722 = vld [vmem:[%s454 + $0x450] sm:$0xff]
        %v723 = vld [vmem:[%s454 + $0x458] sm:$0xff]
        %v724 = vld [vmem:[%s454 + $0x460] sm:$0xff]
        %v725 = vld [vmem:[%s454 + $0x468] sm:$0xff]
        %v726 = vld [vmem:[%s454 + $0x470] sm:$0xff]
        %v727 = vld [vmem:[%s454 + $0x478] sm:$0xff]
        %v728 = vld [vmem:[%s454 + $0x480] sm:$0xff]
        %v729 = vld [vmem:[%s454 + $0x488] sm:$0xff]
        %v730 = vld [vmem:[%s454 + $0x490] sm:$0xff]
        %v731 = vld [vmem:[%s454 + $0x498] sm:$0xff]
        %v732 = vld [vmem:[%s454 + $0x4a0] sm:$0xff]
        %v733 = vld [vmem:[%s454 + $0x4a8] sm:$0xff]
        %v734 = vld [vmem:[%s454 + $0x4b0] sm:$0xff]
        %v735 = vld [vmem:[%s454 + $0x4b8] sm:$0xff]
        %v736 = vld [vmem:[%s454 + $0x4c0] sm:$0xff]
        %v737 = vld [vmem:[%s454 + $0x4c8] sm:$0xff]
        %v738 = vld [vmem:[%s454 + $0x4d0] sm:$0xff]
        %v739 = vld [vmem:[%s454 + $0x4d8] sm:$0xff]
        %v740 = vld [vmem:[%s454 + $0x4e0] sm:$0xff]
        %v741 = vld [vmem:[%s454 + $0x4e8] sm:$0xff]
        %v742 = vld [vmem:[%s454 + $0x4f0] sm:$0xff]
        %v743 = vld [vmem:[%s454 + $0x4f8] sm:$0xff]
        %v744 = vld [vmem:[%s454 + $0x500] sm:$0xff]
        %v745 = vld [vmem:[%s454 + $0x508] sm:$0xff]
        %v746 = vld [vmem:[%s454 + $0x510] sm:$0xff]
        %v747 = vld [vmem:[%s454 + $0x518] sm:$0xff]
        %v748 = vld [vmem:[%s454 + $0x520] sm:$0xff]
        %v749 = vld [vmem:[%s454 + $0x528] sm:$0xff]
        %v750 = vld [vmem:[%s454 + $0x530] sm:$0xff]
        %v751 = vld [vmem:[%s454 + $0x538] sm:$0xff]
        %v752 = vld [vmem:[%s454 + $0x540] sm:$0xff]
        %v753 = vld [vmem:[%s454 + $0x548] sm:$0xff]
        %v754 = vld [vmem:[%s454 + $0x550] sm:$0xff]
        %v755 = vld [vmem:[%s454 + $0x558] sm:$0xff]
        %v756 = vld [vmem:[%s454 + $0x560] sm:$0xff]
        %v757 = vld [vmem:[%s454 + $0x568] sm:$0xff]
        %v758 = vld [vmem:[%s454 + $0x570] sm:$0xff]
        %v759 = vld [vmem:[%s454 + $0x578] sm:$0xff]
        %v760 = vld [vmem:[%s454 + $0x580] sm:$0xff]
        %v761 = vld [vmem:[%s454 + $0x588] sm:$0xff]
        %v762 = vld [vmem:[%s454 + $0x590] sm:$0xff]
        %v763 = vld [vmem:[%s454 + $0x598] sm:$0xff]
        %v764 = vld [vmem:[%s454 + $0x5a0] sm:$0xff]
        %v765 = vld [vmem:[%s454 + $0x5a8] sm:$0xff]
        %v766 = vld [vmem:[%s454 + $0x5b0] sm:$0xff]
        %v767 = vld [vmem:[%s454 + $0x5b8] sm:$0xff]
        %v768 = vld [vmem:[%s454 + $0x5c0] sm:$0xff]
        %v769 = vld [vmem:[%s454 + $0x5c8] sm:$0xff]
        %v770 = vld [vmem:[%s454 + $0x5d0] sm:$0xff]
        %v771 = vld [vmem:[%s454 + $0x5d8] sm:$0xff]
        %v772 = vld [vmem:[%s454 + $0x5e0] sm:$0xff]
        %v773 = vld [vmem:[%s454 + $0x5e8] sm:$0xff]
        %v774 = vld [vmem:[%s454 + $0x5f0] sm:$0xff]
        %v775 = vld [vmem:[%s454 + $0x5f8] sm:$0xff]
        %v776 = vld [vmem:[%s454 + $0x600] sm:$0xff]
        %v777 = vld [vmem:[%s454 + $0x608] sm:$0xff]
        %v778 = vld [vmem:[%s454 + $0x610] sm:$0xff]
        %v779 = vld [vmem:[%s454 + $0x618] sm:$0xff]
        %v780 = vld [vmem:[%s454 + $0x620] sm:$0xff]
        %v781 = vld [vmem:[%s454 + $0x628] sm:$0xff]
        %v782 = vld [vmem:[%s454 + $0x630] sm:$0xff]
        %v783 = vld [vmem:[%s454 + $0x638] sm:$0xff]
        %v784 = vld [vmem:[%s454 + $0x640] sm:$0xff]
        %v785 = vld [vmem:[%s454 + $0x648] sm:$0xff]
        %v786 = vld [vmem:[%s454 + $0x650] sm:$0xff]
        %v787 = vld [vmem:[%s454 + $0x658] sm:$0xff]
        %v788 = vld [vmem:[%s454 + $0x660] sm:$0xff]
        %v789 = vld [vmem:[%s454 + $0x668] sm:$0xff]
        %v790 = vld [vmem:[%s454 + $0x670] sm:$0xff]
        %v791 = vld [vmem:[%s454 + $0x678] sm:$0xff]
        %v792 = vld [vmem:[%s454 + $0x680] sm:$0xff]
        %v793 = vld [vmem:[%s454 + $0x688] sm:$0xff]
        %v794 = vld [vmem:[%s454 + $0x690] sm:$0xff]
        %v795 = vld [vmem:[%s454 + $0x698] sm:$0xff]
        %v796 = vld [vmem:[%s454 + $0x6a0] sm:$0xff]
        %v797 = vld [vmem:[%s454 + $0x6a8] sm:$0xff]
        %v798 = vld [vmem:[%s454 + $0x6b0] sm:$0xff]
        %v799 = vld [vmem:[%s454 + $0x6b8] sm:$0xff]
        %v800 = vld [vmem:[%s454 + $0x6c0] sm:$0xff]
        %v801 = vld [vmem:[%s454 + $0x6c8] sm:$0xff]
        %v802 = vld [vmem:[%s454 + $0x6d0] sm:$0xff]
        %v803 = vld [vmem:[%s454 + $0x6d8] sm:$0xff]
        %v804 = vld [vmem:[%s454 + $0x6e0] sm:$0xff]
        %v805 = vld [vmem:[%s454 + $0x6e8] sm:$0xff]
        %v806 = vld [vmem:[%s454 + $0x6f0] sm:$0xff]
        %v807 = vld [vmem:[%s454 + $0x6f8] sm:$0xff]
        %v808 = vld [vmem:[%s454 + $0x700] sm:$0xff]
        %v809 = vld [vmem:[%s454 + $0x708] sm:$0xff]
        %v810 = vld [vmem:[%s454 + $0x710] sm:$0xff]
        %v811 = vld [vmem:[%s454 + $0x718] sm:$0xff]
        %v812 = vld [vmem:[%s454 + $0x720] sm:$0xff]
        %v813 = vld [vmem:[%s454 + $0x728] sm:$0xff]
        %v814 = vld [vmem:[%s454 + $0x730] sm:$0xff]
        %v815 = vld [vmem:[%s454 + $0x738] sm:$0xff]
        %v816 = vld [vmem:[%s454 + $0x740] sm:$0xff]
        %v817 = vld [vmem:[%s454 + $0x748] sm:$0xff]
        %v818 = vld [vmem:[%s454 + $0x750] sm:$0xff]
        %v819 = vld [vmem:[%s454 + $0x758] sm:$0xff]
        %v820 = vld [vmem:[%s454 + $0x760] sm:$0xff]
        %v821 = vld [vmem:[%s454 + $0x768] sm:$0xff]
        %v822 = vld [vmem:[%s454 + $0x770] sm:$0xff]
        %v823 = vld [vmem:[%s454 + $0x778] sm:$0xff]
        %v824 = vld [vmem:[%s454 + $0x780] sm:$0xff]
        %v825 = vld [vmem:[%s454 + $0x788] sm:$0xff]
        %v826 = vld [vmem:[%s454 + $0x790] sm:$0xff]
        %v827 = vld [vmem:[%s454 + $0x798] sm:$0xff]
        %v828 = vld [vmem:[%s454 + $0x7a0] sm:$0xff]
        %v829 = vld [vmem:[%s454 + $0x7a8] sm:$0xff]
        %v830 = vld [vmem:[%s454 + $0x7b0] sm:$0xff]
        %v831 = vld [vmem:[%s454 + $0x7b8] sm:$0xff]
        %v832 = vld [vmem:[%s454 + $0x7c0] sm:$0xff]
        %v833 = vld [vmem:[%s454 + $0x7c8] sm:$0xff]
        %v834 = vld [vmem:[%s454 + $0x7d0] sm:$0xff]
        %v835 = vld [vmem:[%s454 + $0x7d8] sm:$0xff]
        %v836 = vld [vmem:[%s454 + $0x7e0] sm:$0xff]
        %v837 = vld [vmem:[%s454 + $0x7e8] sm:$0xff]
        %v838 = vld [vmem:[%s454 + $0x7f0] sm:$0xff]
        %v839 = vld [vmem:[%s454 + $0x7f8] sm:$0xff]
        %v840 = vld [vmem:[%s454 + $0x800] sm:$0xff]
        %v841 = vld [vmem:[%s454 + $0x808] sm:$0xff]
        %v842 = vld [vmem:[%s454 + $0x810] sm:$0xff]
        %v843 = vld [vmem:[%s454 + $0x818] sm:$0xff]
        %v844 = vld [vmem:[%s454 + $0x820] sm:$0xff]
        %v845 = vld [vmem:[%s454 + $0x828] sm:$0xff]
        %v846 = vld [vmem:[%s454 + $0x830] sm:$0xff]
        %v847 = vld [vmem:[%s454 + $0x838] sm:$0xff]
        %v848 = vld [vmem:[%s454 + $0x840] sm:$0xff]
        %v849 = vld [vmem:[%s454 + $0x848] sm:$0xff]
        %v850 = vld [vmem:[%s454 + $0x850] sm:$0xff]
        %v851 = vld [vmem:[%s454 + $0x858] sm:$0xff]
        %v852 = vld [vmem:[%s454 + $0x860] sm:$0xff]
        %v853 = vld [vmem:[%s454 + $0x868] sm:$0xff]
        %v854 = vld [vmem:[%s454 + $0x870] sm:$0xff]
        %v855 = vld [vmem:[%s454 + $0x878] sm:$0xff]
        %v856 = vld [vmem:[%s454 + $0x880] sm:$0xff]
        %v857 = vld [vmem:[%s454 + $0x888] sm:$0xff]
        %v858 = vld [vmem:[%s454 + $0x890] sm:$0xff]
        %v859 = vld [vmem:[%s454 + $0x898] sm:$0xff]
        %v860 = vld [vmem:[%s454 + $0x8a0] sm:$0xff]
        %v861 = vld [vmem:[%s454 + $0x8a8] sm:$0xff]
        %v862 = vld [vmem:[%s454 + $0x8b0] sm:$0xff]
        %v863 = vld [vmem:[%s454 + $0x8b8] sm:$0xff]
        %v864 = vld [vmem:[%s454 + $0x8c0] sm:$0xff]
        %v865 = vld [vmem:[%s454 + $0x8c8] sm:$0xff]
        %v866 = vld [vmem:[%s454 + $0x8d0] sm:$0xff]
        %v867 = vld [vmem:[%s454 + $0x8d8] sm:$0xff]
        %v868 = vld [vmem:[%s454 + $0x8e0] sm:$0xff]
        %v869 = vld [vmem:[%s454 + $0x8e8] sm:$0xff]
        %v870 = vld [vmem:[%s454 + $0x8f0] sm:$0xff]
        %v871 = vld [vmem:[%s454 + $0x8f8] sm:$0xff]
        %v872 = vld [vmem:[%s454 + $0x900] sm:$0xff]
        %v873 = vld [vmem:[%s454 + $0x908] sm:$0xff]
        %v874 = vld [vmem:[%s454 + $0x910] sm:$0xff]
        %v875 = vld [vmem:[%s454 + $0x918] sm:$0xff]
        %v876 = vld [vmem:[%s454 + $0x920] sm:$0xff]
        %v877 = vld [vmem:[%s454 + $0x928] sm:$0xff]
        %v878 = vld [vmem:[%s454 + $0x930] sm:$0xff]
        %v879 = vld [vmem:[%s454 + $0x938] sm:$0xff]
        %v880 = vld [vmem:[%s454 + $0x940] sm:$0xff]
        %v881 = vld [vmem:[%s454 + $0x948] sm:$0xff]
        %v882 = vld [vmem:[%s454 + $0x950] sm:$0xff]
        %v883 = vld [vmem:[%s454 + $0x958] sm:$0xff]
        %v884 = vld [vmem:[%s454 + $0x960] sm:$0xff]
        %v885 = vld [vmem:[%s454 + $0x968] sm:$0xff]
        %v886 = vld [vmem:[%s454 + $0x970] sm:$0xff]
        %v887 = vld [vmem:[%s454 + $0x978] sm:$0xff]
        %v888 = vld [vmem:[%s454 + $0x980] sm:$0xff]
        %v889 = vld [vmem:[%s454 + $0x988] sm:$0xff]
        %v890 = vld [vmem:[%s454 + $0x990] sm:$0xff]
        %v891 = vld [vmem:[%s454 + $0x998] sm:$0xff]
        %v892 = vld [vmem:[%s454 + $0x9a0] sm:$0xff]
        %v893 = vld [vmem:[%s454 + $0x9a8] sm:$0xff]
        %v894 = vld [vmem:[%s454 + $0x9b0] sm:$0xff]
        %v895 = vld [vmem:[%s454 + $0x9b8] sm:$0xff]
        %v896 = vld [vmem:[%s454 + $0x9c0] sm:$0xff]
        %v897 = vld [vmem:[%s454 + $0x9c8] sm:$0xff]
        %v898 = vld [vmem:[%s454 + $0x9d0] sm:$0xff]
        %v899 = vld [vmem:[%s454 + $0x9d8] sm:$0xff]
        %v900 = vld [vmem:[%s454 + $0x9e0] sm:$0xff]
        %v901 = vld [vmem:[%s454 + $0x9e8] sm:$0xff]
        %v902 = vld [vmem:[%s454 + $0x9f0] sm:$0xff]
        %v903 = vld [vmem:[%s454 + $0x9f8] sm:$0xff]
        %v904 = vld [vmem:[%s454 + $0xa00] sm:$0xff]
        %v905 = vld [vmem:[%s454 + $0xa08] sm:$0xff]
        %v906 = vld [vmem:[%s454 + $0xa10] sm:$0xff]
        %v907 = vld [vmem:[%s454 + $0xa18] sm:$0xff]
        %v908 = vld [vmem:[%s454 + $0xa20] sm:$0xff]
        %v909 = vld [vmem:[%s454 + $0xa28] sm:$0xff]
        %v910 = vld [vmem:[%s454 + $0xa30] sm:$0xff]
        %v911 = vld [vmem:[%s454 + $0xa38] sm:$0xff]
        %v912 = vld [vmem:[%s454 + $0xa40] sm:$0xff]
        %v913 = vld [vmem:[%s454 + $0xa48] sm:$0xff]
        %v914 = vld [vmem:[%s454 + $0xa50] sm:$0xff]
        %v915 = vld [vmem:[%s454 + $0xa58] sm:$0xff]
        %v916 = vld [vmem:[%s454 + $0xa60] sm:$0xff]
        %v917 = vld [vmem:[%s454 + $0xa68] sm:$0xff]
        %v918 = vld [vmem:[%s454 + $0xa70] sm:$0xff]
        %v919 = vld [vmem:[%s454 + $0xa78] sm:$0xff]
        %v920 = vld [vmem:[%s454 + $0xa80] sm:$0xff]
        %v921 = vld [vmem:[%s454 + $0xa88] sm:$0xff]
        %v922 = vld [vmem:[%s454 + $0xa90] sm:$0xff]
        %v923 = vld [vmem:[%s454 + $0xa98] sm:$0xff]
        %v924 = vld [vmem:[%s454 + $0xaa0] sm:$0xff]
        %v925 = vld [vmem:[%s454 + $0xaa8] sm:$0xff]
        %v926 = vld [vmem:[%s454 + $0xab0] sm:$0xff]
        %v927 = vld [vmem:[%s454 + $0xab8] sm:$0xff]
        %v928 = vld [vmem:[%s454 + $0xac0] sm:$0xff]
        %v929 = vld [vmem:[%s454 + $0xac8] sm:$0xff]
        %v930 = vld [vmem:[%s454 + $0xad0] sm:$0xff]
        %v931 = vld [vmem:[%s454 + $0xad8] sm:$0xff]
        %v932 = vld [vmem:[%s454 + $0xae0] sm:$0xff]
        %v933 = vld [vmem:[%s454 + $0xae8] sm:$0xff]
        %v934 = vld [vmem:[%s454 + $0xaf0] sm:$0xff]
        %v935 = vld [vmem:[%s454 + $0xaf8] sm:$0xff]
        %v936 = vld [vmem:[%s454 + $0xb00] sm:$0xff]
        %v937 = vld [vmem:[%s454 + $0xb08] sm:$0xff]
        %v938 = vld [vmem:[%s454 + $0xb10] sm:$0xff]
        %v939 = vld [vmem:[%s454 + $0xb18] sm:$0xff]
        %v940 = vld [vmem:[%s454 + $0xb20] sm:$0xff]
        %v941 = vld [vmem:[%s454 + $0xb28] sm:$0xff]
        %v942 = vld [vmem:[%s454 + $0xb30] sm:$0xff]
        %v943 = vld [vmem:[%s454 + $0xb38] sm:$0xff]
        %v944 = vld [vmem:[%s454 + $0xb40] sm:$0xff]
        %v945 = vld [vmem:[%s454 + $0xb48] sm:$0xff]
        %v946 = vld [vmem:[%s454 + $0xb50] sm:$0xff]
        %v947 = vld [vmem:[%s454 + $0xb58] sm:$0xff]
        %v948 = vld [vmem:[%s454 + $0xb60] sm:$0xff]
        %v949 = vld [vmem:[%s454 + $0xb68] sm:$0xff]
        %v950 = vld [vmem:[%s454 + $0xb70] sm:$0xff]
        %v951 = vld [vmem:[%s454 + $0xb78] sm:$0xff]
        %v952 = vld [vmem:[%s454 + $0xb80] sm:$0xff]
        %v953 = vld [vmem:[%s454 + $0xb88] sm:$0xff]
        %v954 = vld [vmem:[%s454 + $0xb90] sm:$0xff]
        %v955 = vld [vmem:[%s454 + $0xb98] sm:$0xff]
        %v956 = vld [vmem:[%s454 + $0xba0] sm:$0xff]
        %v957 = vld [vmem:[%s454 + $0xba8] sm:$0xff]
        %v958 = vld [vmem:[%s454 + $0xbb0] sm:$0xff]
        %v959 = vld [vmem:[%s454 + $0xbb8] sm:$0xff]
        %v960 = vld [vmem:[%s454 + $0xbc0] sm:$0xff]
        %v961 = vld [vmem:[%s454 + $0xbc8] sm:$0xff]
        %v962 = vld [vmem:[%s454 + $0xbd0] sm:$0xff]
        %v963 = vld [vmem:[%s454 + $0xbd8] sm:$0xff]
        %v964 = vld [vmem:[%s454 + $0xbe0] sm:$0xff]
        %v965 = vld [vmem:[%s454 + $0xbe8] sm:$0xff]
        %v966 = vld [vmem:[%s454 + $0xbf0] sm:$0xff]
        %v967 = vld [vmem:[%s454 + $0xbf8] sm:$0xff]
        %v968 = vld [vmem:[%s454 + $0xc00] sm:$0xff]
        %v969 = vld [vmem:[%s454 + $0xc08] sm:$0xff]
        %v970 = vld [vmem:[%s454 + $0xc10] sm:$0xff]
        %v971 = vld [vmem:[%s454 + $0xc18] sm:$0xff]
        %v972 = vld [vmem:[%s454 + $0xc20] sm:$0xff]
        %v973 = vld [vmem:[%s454 + $0xc28] sm:$0xff]
        %v974 = vld [vmem:[%s454 + $0xc30] sm:$0xff]
        %v975 = vld [vmem:[%s454 + $0xc38] sm:$0xff]
        %v976 = vld [vmem:[%s454 + $0xc40] sm:$0xff]
        %v977 = vld [vmem:[%s454 + $0xc48] sm:$0xff]
        %v978 = vld [vmem:[%s454 + $0xc50] sm:$0xff]
        %v979 = vld [vmem:[%s454 + $0xc58] sm:$0xff]
        %v980 = vld [vmem:[%s454 + $0xc60] sm:$0xff]
        %v981 = vld [vmem:[%s454 + $0xc68] sm:$0xff]
        %v982 = vld [vmem:[%s454 + $0xc70] sm:$0xff]
        %v983 = vld [vmem:[%s454 + $0xc78] sm:$0xff]
        %v984 = vld [vmem:[%s454 + $0xc80] sm:$0xff]
        %v985 = vld [vmem:[%s454 + $0xc88] sm:$0xff]
        %v986 = vld [vmem:[%s454 + $0xc90] sm:$0xff]
        %v987 = vld [vmem:[%s454 + $0xc98] sm:$0xff]
        %v988 = vld [vmem:[%s454 + $0xca0] sm:$0xff]
        %v989 = vld [vmem:[%s454 + $0xca8] sm:$0xff]
        %v990 = vld [vmem:[%s454 + $0xcb0] sm:$0xff]
        %v991 = vld [vmem:[%s454 + $0xcb8] sm:$0xff]
        %v992 = vld [vmem:[%s454 + $0xcc0] sm:$0xff]
        %v993 = vld [vmem:[%s454 + $0xcc8] sm:$0xff]
        %v994 = vld [vmem:[%s454 + $0xcd0] sm:$0xff]
        %v995 = vld [vmem:[%s454 + $0xcd8] sm:$0xff]
        %v996 = vld [vmem:[%s454 + $0xce0] sm:$0xff]
        %v997 = vld [vmem:[%s454 + $0xce8] sm:$0xff]
        %v998 = vld [vmem:[%s454 + $0xcf0] sm:$0xff]
        %v999 = vld [vmem:[%s454 + $0xcf8] sm:$0xff]
        %v1000 = vld [vmem:[%s454 + $0xd00] sm:$0xff]
        %v1001 = vld [vmem:[%s454 + $0xd08] sm:$0xff]
        %v1002 = vld [vmem:[%s454 + $0xd10] sm:$0xff]
        %v1003 = vld [vmem:[%s454 + $0xd18] sm:$0xff]
        %v1004 = vld [vmem:[%s454 + $0xd20] sm:$0xff]
        %v1005 = vld [vmem:[%s454 + $0xd28] sm:$0xff]
        %v1006 = vld [vmem:[%s454 + $0xd30] sm:$0xff]
        %v1007 = vld [vmem:[%s454 + $0xd38] sm:$0xff]
        %v1008 = vld [vmem:[%s454 + $0xd40] sm:$0xff]
        %v1009 = vld [vmem:[%s454 + $0xd48] sm:$0xff]
        %v1010 = vld [vmem:[%s454 + $0xd50] sm:$0xff]
        %v1011 = vld [vmem:[%s454 + $0xd58] sm:$0xff]
        %v1012 = vld [vmem:[%s454 + $0xd60] sm:$0xff]
        %v1013 = vld [vmem:[%s454 + $0xd68] sm:$0xff]
        %v1014 = vld [vmem:[%s454 + $0xd70] sm:$0xff]
        %v1015 = vld [vmem:[%s454 + $0xd78] sm:$0xff]
        %v1016 = vld [vmem:[%s454 + $0xd80] sm:$0xff]
        %v1017 = vld [vmem:[%s454 + $0xd88] sm:$0xff]
        %v1018 = vld [vmem:[%s454 + $0xd90] sm:$0xff]
        %v1019 = vld [vmem:[%s454 + $0xd98] sm:$0xff]
        %v1020 = vld [vmem:[%s454 + $0xda0] sm:$0xff]
        %v1021 = vld [vmem:[%s454 + $0xda8] sm:$0xff]
        %v1022 = vld [vmem:[%s454 + $0xdb0] sm:$0xff]
        %v1023 = vld [vmem:[%s454 + $0xdb8] sm:$0xff]
        %v1024 = vld [vmem:[%s454 + $0xdc0] sm:$0xff]
        %v1025 = vld [vmem:[%s454 + $0xdc8] sm:$0xff]
        %v1026 = vld [vmem:[%s454 + $0xdd0] sm:$0xff]
        %v1027 = vld [vmem:[%s454 + $0xdd8] sm:$0xff]
        %v1028 = vld [vmem:[%s454 + $0xde0] sm:$0xff]
        %v1029 = vld [vmem:[%s454 + $0xde8] sm:$0xff]
        %v1030 = vld [vmem:[%s454 + $0xdf0] sm:$0xff]
        %v1031 = vld [vmem:[%s454 + $0xdf8] sm:$0xff]
        %v1032 = vld [vmem:[%s454 + $0xe00] sm:$0xff]
        %v1033 = vld [vmem:[%s454 + $0xe08] sm:$0xff]
        %v1034 = vld [vmem:[%s454 + $0xe10] sm:$0xff]
        %v1035 = vld [vmem:[%s454 + $0xe18] sm:$0xff]
        %v1036 = vld [vmem:[%s454 + $0xe20] sm:$0xff]
        %v1037 = vld [vmem:[%s454 + $0xe28] sm:$0xff]
        %v1038 = vld [vmem:[%s454 + $0xe30] sm:$0xff]
        %v1039 = vld [vmem:[%s454 + $0xe38] sm:$0xff]
        %v1040 = vld [vmem:[%s454 + $0xe40] sm:$0xff]
        %v1041 = vld [vmem:[%s454 + $0xe48] sm:$0xff]
        %v1042 = vld [vmem:[%s454 + $0xe50] sm:$0xff]
        %v1043 = vld [vmem:[%s454 + $0xe58] sm:$0xff]
        %v1044 = vld [vmem:[%s454 + $0xe60] sm:$0xff]
        %v1045 = vld [vmem:[%s454 + $0xe68] sm:$0xff]
        %v1046 = vld [vmem:[%s454 + $0xe70] sm:$0xff]
        %v1047 = vld [vmem:[%s454 + $0xe78] sm:$0xff]
        %v1048 = vld [vmem:[%s454 + $0xe80] sm:$0xff]
        %v1049 = vld [vmem:[%s454 + $0xe88] sm:$0xff]
        %v1050 = vld [vmem:[%s454 + $0xe90] sm:$0xff]
        %v1051 = vld [vmem:[%s454 + $0xe98] sm:$0xff]
        %v1052 = vld [vmem:[%s454 + $0xea0] sm:$0xff]
        %v1053 = vld [vmem:[%s454 + $0xea8] sm:$0xff]
        %v1054 = vld [vmem:[%s454 + $0xeb0] sm:$0xff]
        %v1055 = vld [vmem:[%s454 + $0xeb8] sm:$0xff]
        %v1056 = vld [vmem:[%s454 + $0xec0] sm:$0xff]
        %v1057 = vld [vmem:[%s454 + $0xec8] sm:$0xff]
        %v1058 = vld [vmem:[%s454 + $0xed0] sm:$0xff]
        %v1059 = vld [vmem:[%s454 + $0xed8] sm:$0xff]
        %v1060 = vld [vmem:[%s454 + $0xee0] sm:$0xff]
        %v1061 = vld [vmem:[%s454 + $0xee8] sm:$0xff]
        %v1062 = vld [vmem:[%s454 + $0xef0] sm:$0xff]
        %v1063 = vld [vmem:[%s454 + $0xef8] sm:$0xff]
        %v1064 = vld [vmem:[%s454 + $0xf00] sm:$0xff]
        %v1065 = vld [vmem:[%s454 + $0xf08] sm:$0xff]
        %v1066 = vld [vmem:[%s454 + $0xf10] sm:$0xff]
        %v1067 = vld [vmem:[%s454 + $0xf18] sm:$0xff]
        %v1068 = vld [vmem:[%s454 + $0xf20] sm:$0xff]
        %v1069 = vld [vmem:[%s454 + $0xf28] sm:$0xff]
        %v1070 = vld [vmem:[%s454 + $0xf30] sm:$0xff]
        %v1071 = vld [vmem:[%s454 + $0xf38] sm:$0xff]
        %v1072 = vld [vmem:[%s454 + $0xf40] sm:$0xff]
        %v1073 = vld [vmem:[%s454 + $0xf48] sm:$0xff]
        %v1074 = vld [vmem:[%s454 + $0xf50] sm:$0xff]
        %v1075 = vld [vmem:[%s454 + $0xf58] sm:$0xff]
        %v1076 = vld [vmem:[%s454 + $0xf60] sm:$0xff]
        %v1077 = vld [vmem:[%s454 + $0xf68] sm:$0xff]
        %v1078 = vld [vmem:[%s454 + $0xf70] sm:$0xff]
        %v1079 = vld [vmem:[%s454 + $0xf78] sm:$0xff]
        %v1080 = vld [vmem:[%s454 + $0xf80] sm:$0xff]
        %v1081 = vld [vmem:[%s454 + $0xf88] sm:$0xff]
        %v1082 = vld [vmem:[%s454 + $0xf90] sm:$0xff]
        %v1083 = vld [vmem:[%s454 + $0xf98] sm:$0xff]
        %v1084 = vld [vmem:[%s454 + $0xfa0] sm:$0xff]
        %v1085 = vld [vmem:[%s454 + $0xfa8] sm:$0xff]
        %v1086 = vld [vmem:[%s454 + $0xfb0] sm:$0xff]
        %v1087 = vld [vmem:[%s454 + $0xfb8] sm:$0xff]
        %v1088 = vld [vmem:[%s454 + $0xfc0] sm:$0xff]
        %v1089 = vld [vmem:[%s454 + $0xfc8] sm:$0xff]
        %v1090 = vld [vmem:[%s454 + $0xfd0] sm:$0xff]
        %v1091 = vld [vmem:[%s454 + $0xfd8] sm:$0xff]
        %v1092 = vld [vmem:[%s454 + $0xfe0] sm:$0xff]
        %v1093 = vld [vmem:[%s454 + $0xfe8] sm:$0xff]
        %v1094 = vld [vmem:[%s454 + $0xff0] sm:$0xff]
        %v1095 = vld [vmem:[%s454 + $0xff8] sm:$0xff]
        %v1096 = vld [vmem:[%s454 + $0x1000] sm:$0xff]
        %v1097 = vld [vmem:[%s454 + $0x1008] sm:$0xff]
        %v1098 = vld [vmem:[%s454 + $0x1010] sm:$0xff]
        %v1099 = vld [vmem:[%s454 + $0x1018] sm:$0xff]
        %v1100 = vld [vmem:[%s454 + $0x1020] sm:$0xff]
        %v1101 = vld [vmem:[%s454 + $0x1028] sm:$0xff]
        %v1102 = vld [vmem:[%s454 + $0x1030] sm:$0xff]
        %v1103 = vld [vmem:[%s454 + $0x1038] sm:$0xff]
        %v1104 = vld [vmem:[%s454 + $0x1040] sm:$0xff]
        %v1105 = vld [vmem:[%s454 + $0x1048] sm:$0xff]
        %v1106 = vld [vmem:[%s454 + $0x1050] sm:$0xff]
        %v1107 = vld [vmem:[%s454 + $0x1058] sm:$0xff]
        %v1108 = vld [vmem:[%s454 + $0x1060] sm:$0xff]
        %v1109 = vld [vmem:[%s454 + $0x1068] sm:$0xff]
        %v1110 = vld [vmem:[%s454 + $0x1070] sm:$0xff]
        %v1111 = vld [vmem:[%s454 + $0x1078] sm:$0xff]
        %v1112 = vld [vmem:[%s454 + $0x1080] sm:$0xff]
        %v1113 = vld [vmem:[%s454 + $0x1088] sm:$0xff]
        %v1114 = vld [vmem:[%s454 + $0x1090] sm:$0xff]
        %v1115 = vld [vmem:[%s454 + $0x1098] sm:$0xff]
        %v1116 = vld [vmem:[%s454 + $0x10a0] sm:$0xff]
        %v1117 = vld [vmem:[%s454 + $0x10a8] sm:$0xff]
        %v1118 = vld [vmem:[%s454 + $0x10b0] sm:$0xff]
        %v1119 = vld [vmem:[%s454 + $0x10b8] sm:$0xff]
        %v1120 = vld [vmem:[%s454 + $0x10c0] sm:$0xff]
        %v1121 = vld [vmem:[%s454 + $0x10c8] sm:$0xff]
        %v1122 = vld [vmem:[%s454 + $0x10d0] sm:$0xff]
        %v1123 = vld [vmem:[%s454 + $0x10d8] sm:$0xff]
        %v1124 = vld [vmem:[%s454 + $0x10e0] sm:$0xff]
        %v1125 = vld [vmem:[%s454 + $0x10e8] sm:$0xff]
        %v1126 = vld [vmem:[%s454 + $0x10f0] sm:$0xff]
        %v1127 = vld [vmem:[%s454 + $0x10f8] sm:$0xff]
        %v1128 = vld [vmem:[%s454 + $0x1100] sm:$0xff]
        %v1129 = vld [vmem:[%s454 + $0x1108] sm:$0xff]
        %v1130 = vld [vmem:[%s454 + $0x1110] sm:$0xff]
        %v1131 = vld [vmem:[%s454 + $0x1118] sm:$0xff]
        %v1132 = vld [vmem:[%s454 + $0x1120] sm:$0xff]
        %v1133 = vld [vmem:[%s454 + $0x1128] sm:$0xff]
        %v1134 = vld [vmem:[%s454 + $0x1130] sm:$0xff]
        %v1135 = vld [vmem:[%s454 + $0x1138] sm:$0xff]
        %v1136 = vld [vmem:[%s454 + $0x1140] sm:$0xff]
        %v1137 = vld [vmem:[%s454 + $0x1148] sm:$0xff]
        %v1138 = vld [vmem:[%s454 + $0x1150] sm:$0xff]
        %v1139 = vld [vmem:[%s454 + $0x1158] sm:$0xff]
        %v1140 = vld [vmem:[%s454 + $0x1160] sm:$0xff]
        %v1141 = vld [vmem:[%s454 + $0x1168] sm:$0xff]
        %v1142 = vld [vmem:[%s454 + $0x1170] sm:$0xff]
        %v1143 = vld [vmem:[%s454 + $0x1178] sm:$0xff]
        %v1144 = vld [vmem:[%s454 + $0x1180] sm:$0xff]
        %v1145 = vld [vmem:[%s454 + $0x1188] sm:$0xff]
        %v1146 = vld [vmem:[%s454 + $0x1190] sm:$0xff]
        %v1147 = vld [vmem:[%s454 + $0x1198] sm:$0xff]
        %v1148 = vld [vmem:[%s454 + $0x11a0] sm:$0xff]
        %v1149 = vld [vmem:[%s454 + $0x11a8] sm:$0xff]
        %v1150 = vld [vmem:[%s454 + $0x11b0] sm:$0xff]
        %v1151 = vld [vmem:[%s454 + $0x11b8] sm:$0xff]
        %v1152 = vld [vmem:[%s454 + $0x11c0] sm:$0xff]
        %v1153 = vld [vmem:[%s454 + $0x11c8] sm:$0xff]
        %v1154 = vld [vmem:[%s454 + $0x11d0] sm:$0xff]
        %v1155 = vld [vmem:[%s454 + $0x11d8] sm:$0xff]
        %v1156 = vld [vmem:[%s454 + $0x11e0] sm:$0xff]
        %v1157 = vld [vmem:[%s454 + $0x11e8] sm:$0xff]
        %v1158 = vld [vmem:[%s454 + $0x11f0] sm:$0xff]
        %v1159 = vld [vmem:[%s454 + $0x11f8] sm:$0xff]
        %v1160 = vld [vmem:[%s454 + $0x1200] sm:$0xff]
        %v1161 = vld [vmem:[%s454 + $0x1208] sm:$0xff]
        %v1162 = vld [vmem:[%s454 + $0x1210] sm:$0xff]
        %v1163 = vld [vmem:[%s454 + $0x1218] sm:$0xff]
        %v1164 = vld [vmem:[%s454 + $0x1220] sm:$0xff]
        %v1165 = vld [vmem:[%s454 + $0x1228] sm:$0xff]
        %v1166 = vld [vmem:[%s454 + $0x1230] sm:$0xff]
        %v1167 = vld [vmem:[%s454 + $0x1238] sm:$0xff]
        %v1168 = vld [vmem:[%s454 + $0x1240] sm:$0xff]
        %v1169 = vld [vmem:[%s454 + $0x1248] sm:$0xff]
        %v1170 = vld [vmem:[%s454 + $0x1250] sm:$0xff]
        %v1171 = vld [vmem:[%s454 + $0x1258] sm:$0xff]
        %v1172 = vld [vmem:[%s454 + $0x1260] sm:$0xff]
        %v1173 = vld [vmem:[%s454 + $0x1268] sm:$0xff]
        %v1174 = vld [vmem:[%s454 + $0x1270] sm:$0xff]
        %v1175 = vld [vmem:[%s454 + $0x1278] sm:$0xff]
        %v1176 = vld [vmem:[%s454 + $0x1280] sm:$0xff]
        %v1177 = vld [vmem:[%s454 + $0x1288] sm:$0xff]
        %v1178 = vld [vmem:[%s454 + $0x1290] sm:$0xff]
        %v1179 = vld [vmem:[%s454 + $0x1298] sm:$0xff]
        %v1180 = vld [vmem:[%s454 + $0x12a0] sm:$0xff]
        %v1181 = vld [vmem:[%s454 + $0x12a8] sm:$0xff]
        %v1182 = vld [vmem:[%s454 + $0x12b0] sm:$0xff]
        %v1183 = vld [vmem:[%s454 + $0x12b8] sm:$0xff]
        %v1184 = vld [vmem:[%s454 + $0x12c0] sm:$0xff]
        %v1185 = vld [vmem:[%s454 + $0x12c8] sm:$0xff]
        %v1186 = vld [vmem:[%s454 + $0x12d0] sm:$0xff]
        %v1187 = vld [vmem:[%s454 + $0x12d8] sm:$0xff]
        %v1188 = vld [vmem:[%s454 + $0x12e0] sm:$0xff]
        %v1189 = vld [vmem:[%s454 + $0x12e8] sm:$0xff]
        %v1190 = vld [vmem:[%s454 + $0x12f0] sm:$0xff]
        %v1191 = vld [vmem:[%s454 + $0x12f8] sm:$0xff]
        %v1192 = vld [vmem:[%s454 + $0x1300] sm:$0xff]
        %v1193 = vld [vmem:[%s454 + $0x1308] sm:$0xff]
        %v1194 = vld [vmem:[%s454 + $0x1310] sm:$0xff]
        %v1195 = vld [vmem:[%s454 + $0x1318] sm:$0xff]
        %v1196 = vld [vmem:[%s454 + $0x1320] sm:$0xff]
        %v1197 = vld [vmem:[%s454 + $0x1328] sm:$0xff]
        %v1198 = vld [vmem:[%s454 + $0x1330] sm:$0xff]
        %v1199 = vld [vmem:[%s454 + $0x1338] sm:$0xff]
        %v1200 = vld [vmem:[%s454 + $0x1340] sm:$0xff]
        %v1201 = vld [vmem:[%s454 + $0x1348] sm:$0xff]
        %v1202 = vld [vmem:[%s454 + $0x1350] sm:$0xff]
        %v1203 = vld [vmem:[%s454 + $0x1358] sm:$0xff]
        %v1204 = vld [vmem:[%s454 + $0x1360] sm:$0xff]
        %v1205 = vld [vmem:[%s454 + $0x1368] sm:$0xff]
        %v1206 = vld [vmem:[%s454 + $0x1370] sm:$0xff]
        %v1207 = vld [vmem:[%s454 + $0x1378] sm:$0xff]
        %v1208 = vld [vmem:[%s454 + $0x1380] sm:$0xff]
        %v1209 = vld [vmem:[%s454 + $0x1388] sm:$0xff]
        %v1210 = vld [vmem:[%s454 + $0x1390] sm:$0xff]
        %v1211 = vld [vmem:[%s454 + $0x1398] sm:$0xff]
        %v1212 = vld [vmem:[%s454 + $0x13a0] sm:$0xff]
        %v1213 = vld [vmem:[%s454 + $0x13a8] sm:$0xff]
        %v1214 = vld [vmem:[%s454 + $0x13b0] sm:$0xff]
        %v1215 = vld [vmem:[%s454 + $0x13b8] sm:$0xff]
        %v1216 = vld [vmem:[%s454 + $0x13c0] sm:$0xff]
        %v1217 = vld [vmem:[%s454 + $0x13c8] sm:$0xff]
        %v1218 = vld [vmem:[%s454 + $0x13d0] sm:$0xff]
        %v1219 = vld [vmem:[%s454 + $0x13d8] sm:$0xff]
        %v1220 = vld [vmem:[%s454 + $0x13e0] sm:$0xff]
        %v1221 = vld [vmem:[%s454 + $0x13e8] sm:$0xff]
        %v1222 = vld [vmem:[%s454 + $0x13f0] sm:$0xff]
        %v1223 = vld [vmem:[%s454 + $0x13f8] sm:$0xff]
        %v1224 = vld [vmem:[%s454 + $0x1400] sm:$0xff]
        %v1225 = vld [vmem:[%s454 + $0x1408] sm:$0xff]
        %v1226 = vld [vmem:[%s454 + $0x1410] sm:$0xff]
        %v1227 = vld [vmem:[%s454 + $0x1418] sm:$0xff]
        %v1228 = vld [vmem:[%s454 + $0x1420] sm:$0xff]
        %v1229 = vld [vmem:[%s454 + $0x1428] sm:$0xff]
        %v1230 = vld [vmem:[%s454 + $0x1430] sm:$0xff]
        %v1231 = vld [vmem:[%s454 + $0x1438] sm:$0xff]
        %v1232 = vld [vmem:[%s454 + $0x1440] sm:$0xff]
        %v1233 = vld [vmem:[%s454 + $0x1448] sm:$0xff]
        %v1234 = vld [vmem:[%s454 + $0x1450] sm:$0xff]
        %v1235 = vld [vmem:[%s454 + $0x1458] sm:$0xff]
        %v1236 = vld [vmem:[%s454 + $0x1460] sm:$0xff]
        %v1237 = vld [vmem:[%s454 + $0x1468] sm:$0xff]
        %v1238 = vld [vmem:[%s454 + $0x1470] sm:$0xff]
        %v1239 = vld [vmem:[%s454 + $0x1478] sm:$0xff]
        %v1240 = vld [vmem:[%s454 + $0x1480] sm:$0xff]
        %v1241 = vld [vmem:[%s454 + $0x1488] sm:$0xff]
        %v1242 = vld [vmem:[%s454 + $0x1490] sm:$0xff]
        %v1243 = vld [vmem:[%s454 + $0x1498] sm:$0xff]
        %v1244 = vld [vmem:[%s454 + $0x14a0] sm:$0xff]
        %v1245 = vld [vmem:[%s454 + $0x14a8] sm:$0xff]
        %v1246 = vld [vmem:[%s454 + $0x14b0] sm:$0xff]
        %v1247 = vld [vmem:[%s454 + $0x14b8] sm:$0xff]
        %v1248 = vld [vmem:[%s454 + $0x14c0] sm:$0xff]
        %v1249 = vld [vmem:[%s454 + $0x14c8] sm:$0xff]
        %v1250 = vld [vmem:[%s454 + $0x14d0] sm:$0xff]
        %v1251 = vld [vmem:[%s454 + $0x14d8] sm:$0xff]
        %v1252 = vld [vmem:[%s454 + $0x14e0] sm:$0xff]
        %v1253 = vld [vmem:[%s454 + $0x14e8] sm:$0xff]
        %v1254 = vld [vmem:[%s454 + $0x14f0] sm:$0xff]
        %v1255 = vld [vmem:[%s454 + $0x14f8] sm:$0xff]
        %v1256 = vld [vmem:[%s454 + $0x1500] sm:$0xff]
        %v1257 = vld [vmem:[%s454 + $0x1508] sm:$0xff]
        %v1258 = vld [vmem:[%s454 + $0x1510] sm:$0xff]
        %v1259 = vld [vmem:[%s454 + $0x1518] sm:$0xff]
        %v1260 = vld [vmem:[%s454 + $0x1520] sm:$0xff]
        %v1261 = vld [vmem:[%s454 + $0x1528] sm:$0xff]
        %v1262 = vld [vmem:[%s454 + $0x1530] sm:$0xff]
        %v1263 = vld [vmem:[%s454 + $0x1538] sm:$0xff]
        %v1264 = vld [vmem:[%s454 + $0x1540] sm:$0xff]
        %v1265 = vld [vmem:[%s454 + $0x1548] sm:$0xff]
        %v1266 = vld [vmem:[%s454 + $0x1550] sm:$0xff]
        %v1267 = vld [vmem:[%s454 + $0x1558] sm:$0xff]
        %v1268 = vld [vmem:[%s454 + $0x1560] sm:$0xff]
        %v1269 = vld [vmem:[%s454 + $0x1568] sm:$0xff]
        %v1270 = vld [vmem:[%s454 + $0x1570] sm:$0xff]
        %v1271 = vld [vmem:[%s454 + $0x1578] sm:$0xff]
        %v1272 = vld [vmem:[%s454 + $0x1580] sm:$0xff]
        %v1273 = vld [vmem:[%s454 + $0x1588] sm:$0xff]
        %v1274 = vld [vmem:[%s454 + $0x1590] sm:$0xff]
        %v1275 = vld [vmem:[%s454 + $0x1598] sm:$0xff]
        %v1276 = vld [vmem:[%s454 + $0x15a0] sm:$0xff]
        %v1277 = vld [vmem:[%s454 + $0x15a8] sm:$0xff]
        %v1278 = vld [vmem:[%s454 + $0x15b0] sm:$0xff]
        %v1279 = vld [vmem:[%s454 + $0x15b8] sm:$0xff]
        %v1280 = vld [vmem:[%s454 + $0x15c0] sm:$0xff]
        %v1281 = vld [vmem:[%s454 + $0x15c8] sm:$0xff]
        %v1282 = vld [vmem:[%s454 + $0x15d0] sm:$0xff]
        %v1283 = vld [vmem:[%s454 + $0x15d8] sm:$0xff]
        %v1284 = vld [vmem:[%s454 + $0x15e0] sm:$0xff]
        %v1285 = vld [vmem:[%s454 + $0x15e8] sm:$0xff]
        %v1286 = vld [vmem:[%s454 + $0x15f0] sm:$0xff]
        %v1287 = vld [vmem:[%s454 + $0x15f8] sm:$0xff]
        %v1288 = vld [vmem:[%s454 + $0x1600] sm:$0xff]
        %v1289 = vld [vmem:[%s454 + $0x1608] sm:$0xff]
        %v1290 = vld [vmem:[%s454 + $0x1610] sm:$0xff]
        %v1291 = vld [vmem:[%s454 + $0x1618] sm:$0xff]
        %v1292 = vld [vmem:[%s454 + $0x1620] sm:$0xff]
        %v1293 = vld [vmem:[%s454 + $0x1628] sm:$0xff]
        %v1294 = vld [vmem:[%s454 + $0x1630] sm:$0xff]
        %v1295 = vld [vmem:[%s454 + $0x1638] sm:$0xff]
        %v1296 = vld [vmem:[%s454 + $0x1640] sm:$0xff]
        %v1297 = vld [vmem:[%s454 + $0x1648] sm:$0xff]
        %v1298 = vld [vmem:[%s454 + $0x1650] sm:$0xff]
        %v1299 = vld [vmem:[%s454 + $0x1658] sm:$0xff]
        %v1300 = vld [vmem:[%s454 + $0x1660] sm:$0xff]
        %v1301 = vld [vmem:[%s454 + $0x1668] sm:$0xff]
        %v1302 = vld [vmem:[%s454 + $0x1670] sm:$0xff]
        %v1303 = vld [vmem:[%s454 + $0x1678] sm:$0xff]
        %v1304 = vld [vmem:[%s454 + $0x1680] sm:$0xff]
        %v1305 = vld [vmem:[%s454 + $0x1688] sm:$0xff]
        %v1306 = vld [vmem:[%s454 + $0x1690] sm:$0xff]
        %v1307 = vld [vmem:[%s454 + $0x1698] sm:$0xff]
        %v1308 = vld [vmem:[%s454 + $0x16a0] sm:$0xff]
        %v1309 = vld [vmem:[%s454 + $0x16a8] sm:$0xff]
        %v1310 = vld [vmem:[%s454 + $0x16b0] sm:$0xff]
        %v1311 = vld [vmem:[%s454 + $0x16b8] sm:$0xff]
        %v1312 = vld [vmem:[%s454 + $0x16c0] sm:$0xff]
        %v1313 = vld [vmem:[%s454 + $0x16c8] sm:$0xff]
        %v1314 = vld [vmem:[%s454 + $0x16d0] sm:$0xff]
        %v1315 = vld [vmem:[%s454 + $0x16d8] sm:$0xff]
        %v1316 = vld [vmem:[%s454 + $0x16e0] sm:$0xff]
        %v1317 = vld [vmem:[%s454 + $0x16e8] sm:$0xff]
        %v1318 = vld [vmem:[%s454 + $0x16f0] sm:$0xff]
        %v1319 = vld [vmem:[%s454 + $0x16f8] sm:$0xff]
        %v1320 = vld [vmem:[%s454 + $0x1700] sm:$0xff]
        %v1321 = vld [vmem:[%s454 + $0x1708] sm:$0xff]
        %v1322 = vld [vmem:[%s454 + $0x1710] sm:$0xff]
        %v1323 = vld [vmem:[%s454 + $0x1718] sm:$0xff]
        %v1324 = vld [vmem:[%s454 + $0x1720] sm:$0xff]
        %v1325 = vld [vmem:[%s454 + $0x1728] sm:$0xff]
        %v1326 = vld [vmem:[%s454 + $0x1730] sm:$0xff]
        %v1327 = vld [vmem:[%s454 + $0x1738] sm:$0xff]
        %v1328 = vld [vmem:[%s454 + $0x1740] sm:$0xff]
        %v1329 = vld [vmem:[%s454 + $0x1748] sm:$0xff]
        %v1330 = vld [vmem:[%s454 + $0x1750] sm:$0xff]
        %v1331 = vld [vmem:[%s454 + $0x1758] sm:$0xff]
        %v1332 = vld [vmem:[%s454 + $0x1760] sm:$0xff]
        %v1333 = vld [vmem:[%s454 + $0x1768] sm:$0xff]
        %v1334 = vld [vmem:[%s454 + $0x1770] sm:$0xff]
        %v1335 = vld [vmem:[%s454 + $0x1778] sm:$0xff]
        %v1336 = vld [vmem:[%s454 + $0x1780] sm:$0xff]
        %v1337 = vld [vmem:[%s454 + $0x1788] sm:$0xff]
        %v1338 = vld [vmem:[%s454 + $0x1790] sm:$0xff]
        %v1339 = vld [vmem:[%s454 + $0x1798] sm:$0xff]
        %v1340 = vld [vmem:[%s454 + $0x17a0] sm:$0xff]
        %v1341 = vld [vmem:[%s454 + $0x17a8] sm:$0xff]
        %v1342 = vld [vmem:[%s454 + $0x17b0] sm:$0xff]
        %v1343 = vld [vmem:[%s454 + $0x17b8] sm:$0xff]
        %v1344 = vld [vmem:[%s454 + $0x17c0] sm:$0xff]
        %v1345 = vld [vmem:[%s454 + $0x17c8] sm:$0xff]
        %v1346 = vld [vmem:[%s454 + $0x17d0] sm:$0xff]
        %v1347 = vld [vmem:[%s454 + $0x17d8] sm:$0xff]
        %v1348 = vld [vmem:[%s454 + $0x17e0] sm:$0xff]
        %v1349 = vld [vmem:[%s454 + $0x17e8] sm:$0xff]
        %v1350 = vld [vmem:[%s454 + $0x17f0] sm:$0xff]
        %v1351 = vld [vmem:[%s454 + $0x17f8] sm:$0xff]
        %v1352 = vld [vmem:[%s454 + $0x1800] sm:$0xff]
        %v1353 = vld [vmem:[%s454 + $0x1808] sm:$0xff]
        %v1354 = vld [vmem:[%s454 + $0x1810] sm:$0xff]
        %v1355 = vld [vmem:[%s454 + $0x1818] sm:$0xff]
        %v1356 = vld [vmem:[%s454 + $0x1820] sm:$0xff]
        %v1357 = vld [vmem:[%s454 + $0x1828] sm:$0xff]
        %v1358 = vld [vmem:[%s454 + $0x1830] sm:$0xff]
        %v1359 = vld [vmem:[%s454 + $0x1838] sm:$0xff]
        %v1360 = vld [vmem:[%s454 + $0x1840] sm:$0xff]
        %v1361 = vld [vmem:[%s454 + $0x1848] sm:$0xff]
        %v1362 = vld [vmem:[%s454 + $0x1850] sm:$0xff]
        %v1363 = vld [vmem:[%s454 + $0x1858] sm:$0xff]
        %v1364 = vld [vmem:[%s454 + $0x1860] sm:$0xff]
        %v1365 = vld [vmem:[%s454 + $0x1868] sm:$0xff]
        %v1366 = vld [vmem:[%s454 + $0x1870] sm:$0xff]
        %v1367 = vld [vmem:[%s454 + $0x1878] sm:$0xff]
        %v1368 = vld [vmem:[%s454 + $0x1880] sm:$0xff]
        %v1369 = vld [vmem:[%s454 + $0x1888] sm:$0xff]
        %v1370 = vld [vmem:[%s454 + $0x1890] sm:$0xff]
        %v1371 = vld [vmem:[%s454 + $0x1898] sm:$0xff]
        %v1372 = vld [vmem:[%s454 + $0x18a0] sm:$0xff]
        %v1373 = vld [vmem:[%s454 + $0x18a8] sm:$0xff]
        %v1374 = vld [vmem:[%s454 + $0x18b0] sm:$0xff]
        %v1375 = vld [vmem:[%s454 + $0x18b8] sm:$0xff]
        %v1376 = vld [vmem:[%s454 + $0x18c0] sm:$0xff]
        %v1377 = vld [vmem:[%s454 + $0x18c8] sm:$0xff]
        %v1378 = vld [vmem:[%s454 + $0x18d0] sm:$0xff]
        %v1379 = vld [vmem:[%s454 + $0x18d8] sm:$0xff]
        %v1380 = vld [vmem:[%s454 + $0x18e0] sm:$0xff]
        %v1381 = vld [vmem:[%s454 + $0x18e8] sm:$0xff]
        %v1382 = vld [vmem:[%s454 + $0x18f0] sm:$0xff]
        %v1383 = vld [vmem:[%s454 + $0x18f8] sm:$0xff]
        %v1384 = vld [vmem:[%s454 + $0x1900] sm:$0xff]
        %v1385 = vld [vmem:[%s454 + $0x1908] sm:$0xff]
        %v1386 = vld [vmem:[%s454 + $0x1910] sm:$0xff]
        %v1387 = vld [vmem:[%s454 + $0x1918] sm:$0xff]
        %v1388 = vld [vmem:[%s454 + $0x1920] sm:$0xff]
        %v1389 = vld [vmem:[%s454 + $0x1928] sm:$0xff]
        %v1390 = vld [vmem:[%s454 + $0x1930] sm:$0xff]
        %v1391 = vld [vmem:[%s454 + $0x1938] sm:$0xff]
        %v1392 = vld [vmem:[%s454 + $0x1940] sm:$0xff]
        %v1393 = vld [vmem:[%s454 + $0x1948] sm:$0xff]
        %v1394 = vld [vmem:[%s454 + $0x1950] sm:$0xff]
        %v1395 = vld [vmem:[%s454 + $0x1958] sm:$0xff]
        %v1396 = vld [vmem:[%s454 + $0x1960] sm:$0xff]
        %v1397 = vld [vmem:[%s454 + $0x1968] sm:$0xff]
        %v1398 = vld [vmem:[%s454 + $0x1970] sm:$0xff]
        %v1399 = vld [vmem:[%s454 + $0x1978] sm:$0xff]
        %v1400 = vld [vmem:[%s454 + $0x1980] sm:$0xff]
        %v1401 = vld [vmem:[%s454 + $0x1988] sm:$0xff]
        %v1402 = vld [vmem:[%s454 + $0x1990] sm:$0xff]
        %v1403 = vld [vmem:[%s454 + $0x1998] sm:$0xff]
        %v1404 = vld [vmem:[%s454 + $0x19a0] sm:$0xff]
        %v1405 = vld [vmem:[%s454 + $0x19a8] sm:$0xff]
        %v1406 = vld [vmem:[%s454 + $0x19b0] sm:$0xff]
        %v1407 = vld [vmem:[%s454 + $0x19b8] sm:$0xff]
        %v1408 = vld [vmem:[%s454 + $0x19c0] sm:$0xff]
        %v1409 = vld [vmem:[%s454 + $0x19c8] sm:$0xff]
        %v1410 = vld [vmem:[%s454 + $0x19d0] sm:$0xff]
        %v1411 = vld [vmem:[%s454 + $0x19d8] sm:$0xff]
        %v1412 = vld [vmem:[%s454 + $0x19e0] sm:$0xff]
        %v1413 = vld [vmem:[%s454 + $0x19e8] sm:$0xff]
        %v1414 = vld [vmem:[%s454 + $0x19f0] sm:$0xff]
        %v1415 = vld [vmem:[%s454 + $0x19f8] sm:$0xff]
        %v1416 = vld [vmem:[%s454 + $0x1a00] sm:$0xff]
        %v1417 = vld [vmem:[%s454 + $0x1a08] sm:$0xff]
        %v1418 = vld [vmem:[%s454 + $0x1a10] sm:$0xff]
        %v1419 = vld [vmem:[%s454 + $0x1a18] sm:$0xff]
        %v1420 = vld [vmem:[%s454 + $0x1a20] sm:$0xff]
        %v1421 = vld [vmem:[%s454 + $0x1a28] sm:$0xff]
        %v1422 = vld [vmem:[%s454 + $0x1a30] sm:$0xff]
        %v1423 = vld [vmem:[%s454 + $0x1a38] sm:$0xff]
        %v1424 = vld [vmem:[%s454 + $0x1a40] sm:$0xff]
        %v1425 = vld [vmem:[%s454 + $0x1a48] sm:$0xff]
        %v1426 = vld [vmem:[%s454 + $0x1a50] sm:$0xff]
        %v1427 = vld [vmem:[%s454 + $0x1a58] sm:$0xff]
        %v1428 = vld [vmem:[%s454 + $0x1a60] sm:$0xff]
        %v1429 = vld [vmem:[%s454 + $0x1a68] sm:$0xff]
        %v1430 = vld [vmem:[%s454 + $0x1a70] sm:$0xff]
        %v1431 = vld [vmem:[%s454 + $0x1a78] sm:$0xff]
        %v1432 = vld [vmem:[%s454 + $0x1a80] sm:$0xff]
        %v1433 = vld [vmem:[%s454 + $0x1a88] sm:$0xff]
        %v1434 = vld [vmem:[%s454 + $0x1a90] sm:$0xff]
        %v1435 = vld [vmem:[%s454 + $0x1a98] sm:$0xff]
        %v1436 = vld [vmem:[%s454 + $0x1aa0] sm:$0xff]
        %v1437 = vld [vmem:[%s454 + $0x1aa8] sm:$0xff]
        %v1438 = vld [vmem:[%s454 + $0x1ab0] sm:$0xff]
        %v1439 = vld [vmem:[%s454 + $0x1ab8] sm:$0xff]
        %v1440 = vld [vmem:[%s454 + $0x1ac0] sm:$0xff]
        %v1441 = vld [vmem:[%s454 + $0x1ac8] sm:$0xff]
        %v1442 = vld [vmem:[%s454 + $0x1ad0] sm:$0xff]
        %v1443 = vld [vmem:[%s454 + $0x1ad8] sm:$0xff]
        %v1444 = vld [vmem:[%s454 + $0x1ae0] sm:$0xff]
        %v1445 = vld [vmem:[%s454 + $0x1ae8] sm:$0xff]
        %v1446 = vld [vmem:[%s454 + $0x1af0] sm:$0xff]
        %v1447 = vld [vmem:[%s454 + $0x1af8] sm:$0xff]
        %v1448 = vld [vmem:[%s454 + $0x1b00] sm:$0xff]
        %v1449 = vld [vmem:[%s454 + $0x1b08] sm:$0xff]
        %v1450 = vld [vmem:[%s454 + $0x1b10] sm:$0xff]
        %v1451 = vld [vmem:[%s454 + $0x1b18] sm:$0xff]
        %v1452 = vld [vmem:[%s454 + $0x1b20] sm:$0xff]
        %v1453 = vld [vmem:[%s454 + $0x1b28] sm:$0xff]
        %v1454 = vld [vmem:[%s454 + $0x1b30] sm:$0xff]
        %v1455 = vld [vmem:[%s454 + $0x1b38] sm:$0xff]
        %v1456 = vld [vmem:[%s454 + $0x1b40] sm:$0xff]
        %v1457 = vld [vmem:[%s454 + $0x1b48] sm:$0xff]
        %v1458 = vld [vmem:[%s454 + $0x1b50] sm:$0xff]
        %v1459 = vld [vmem:[%s454 + $0x1b58] sm:$0xff]
        %v1460 = vld [vmem:[%s454 + $0x1b60] sm:$0xff]
        %v1461 = vld [vmem:[%s454 + $0x1b68] sm:$0xff]
        %v1462 = vld [vmem:[%s454 + $0x1b70] sm:$0xff]
        %v1463 = vld [vmem:[%s454 + $0x1b78] sm:$0xff]
        %v1464 = vld [vmem:[%s454 + $0x1b80] sm:$0xff]
        %v1465 = vld [vmem:[%s454 + $0x1b88] sm:$0xff]
        %v1466 = vld [vmem:[%s454 + $0x1b90] sm:$0xff]
        %v1467 = vld [vmem:[%s454 + $0x1b98] sm:$0xff]
        %v1468 = vld [vmem:[%s454 + $0x1ba0] sm:$0xff]
        %v1469 = vld [vmem:[%s454 + $0x1ba8] sm:$0xff]
        %v1470 = vld [vmem:[%s454 + $0x1bb0] sm:$0xff]
        %v1471 = vld [vmem:[%s454 + $0x1bb8] sm:$0xff]
        %v1472 = vld [vmem:[%s454 + $0x1bc0] sm:$0xff]
        %v1473 = vld [vmem:[%s454 + $0x1bc8] sm:$0xff]
        %v1474 = vld [vmem:[%s454 + $0x1bd0] sm:$0xff]
        %v1475 = vld [vmem:[%s454 + $0x1bd8] sm:$0xff]
        %v1476 = vld [vmem:[%s454 + $0x1be0] sm:$0xff]
        %v1477 = vld [vmem:[%s454 + $0x1be8] sm:$0xff]
        %v1478 = vld [vmem:[%s454 + $0x1bf0] sm:$0xff]
        %v1479 = vld [vmem:[%s454 + $0x1bf8] sm:$0xff]
        %v1480 = vld [vmem:[%s454 + $0x1c00] sm:$0xff]
        %v1481 = vld [vmem:[%s454 + $0x1c08] sm:$0xff]
        %v1482 = vld [vmem:[%s454 + $0x1c10] sm:$0xff]
        %v1483 = vld [vmem:[%s454 + $0x1c18] sm:$0xff]
        %v1484 = vld [vmem:[%s454 + $0x1c20] sm:$0xff]
        %v1485 = vld [vmem:[%s454 + $0x1c28] sm:$0xff]
        %v1486 = vld [vmem:[%s454 + $0x1c30] sm:$0xff]
        %v1487 = vld [vmem:[%s454 + $0x1c38] sm:$0xff]
        %v1488 = vld [vmem:[%s454 + $0x1c40] sm:$0xff]
        %v1489 = vld [vmem:[%s454 + $0x1c48] sm:$0xff]
        %v1490 = vld [vmem:[%s454 + $0x1c50] sm:$0xff]
        %v1491 = vld [vmem:[%s454 + $0x1c58] sm:$0xff]
        %v1492 = vld [vmem:[%s454 + $0x1c60] sm:$0xff]
        %v1493 = vld [vmem:[%s454 + $0x1c68] sm:$0xff]
        %v1494 = vld [vmem:[%s454 + $0x1c70] sm:$0xff]
        %v1495 = vld [vmem:[%s454 + $0x1c78] sm:$0xff]
        %v1496 = vld [vmem:[%s454 + $0x1c80] sm:$0xff]
        %v1497 = vld [vmem:[%s454 + $0x1c88] sm:$0xff]
        %v1498 = vld [vmem:[%s454 + $0x1c90] sm:$0xff]
        %v1499 = vld [vmem:[%s454 + $0x1c98] sm:$0xff]
        %v1500 = vld [vmem:[%s454 + $0x1ca0] sm:$0xff]
        %v1501 = vld [vmem:[%s454 + $0x1ca8] sm:$0xff]
        %v1502 = vld [vmem:[%s454 + $0x1cb0] sm:$0xff]
        %v1503 = vld [vmem:[%s454 + $0x1cb8] sm:$0xff]
        %v1504 = vld [vmem:[%s454 + $0x1cc0] sm:$0xff]
        %v1505 = vld [vmem:[%s454 + $0x1cc8] sm:$0xff]
        %v1506 = vld [vmem:[%s454 + $0x1cd0] sm:$0xff]
        %v1507 = vld [vmem:[%s454 + $0x1cd8] sm:$0xff]
        %v1508 = vld [vmem:[%s454 + $0x1ce0] sm:$0xff]
        %v1509 = vld [vmem:[%s454 + $0x1ce8] sm:$0xff]
        %v1510 = vld [vmem:[%s454 + $0x1cf0] sm:$0xff]
        %v1511 = vld [vmem:[%s454 + $0x1cf8] sm:$0xff]
        %v1512 = vld [vmem:[%s454 + $0x1d00] sm:$0xff]
        %v1513 = vld [vmem:[%s454 + $0x1d08] sm:$0xff]
        %v1514 = vld [vmem:[%s454 + $0x1d10] sm:$0xff]
        %v1515 = vld [vmem:[%s454 + $0x1d18] sm:$0xff]
        %v1516 = vld [vmem:[%s454 + $0x1d20] sm:$0xff]
        %v1517 = vld [vmem:[%s454 + $0x1d28] sm:$0xff]
        %v1518 = vld [vmem:[%s454 + $0x1d30] sm:$0xff]
        %v1519 = vld [vmem:[%s454 + $0x1d38] sm:$0xff]
        %v1520 = vld [vmem:[%s454 + $0x1d40] sm:$0xff]
        %v1521 = vld [vmem:[%s454 + $0x1d48] sm:$0xff]
        %v1522 = vld [vmem:[%s454 + $0x1d50] sm:$0xff]
        %v1523 = vld [vmem:[%s454 + $0x1d58] sm:$0xff]
        %v1524 = vld [vmem:[%s454 + $0x1d60] sm:$0xff]
        %v1525 = vld [vmem:[%s454 + $0x1d68] sm:$0xff]
        %v1526 = vld [vmem:[%s454 + $0x1d70] sm:$0xff]
        %v1527 = vld [vmem:[%s454 + $0x1d78] sm:$0xff]
        %v1528 = vld [vmem:[%s454 + $0x1d80] sm:$0xff]
        %v1529 = vld [vmem:[%s454 + $0x1d88] sm:$0xff]
        %v1530 = vld [vmem:[%s454 + $0x1d90] sm:$0xff]
        %v1531 = vld [vmem:[%s454 + $0x1d98] sm:$0xff]
        %v1532 = vld [vmem:[%s454 + $0x1da0] sm:$0xff]
        %v1533 = vld [vmem:[%s454 + $0x1da8] sm:$0xff]
        %v1534 = vld [vmem:[%s454 + $0x1db0] sm:$0xff]
        %v1535 = vld [vmem:[%s454 + $0x1db8] sm:$0xff]
        %v1536 = vld [vmem:[%s454 + $0x1dc0] sm:$0xff]
        %v1537 = vld [vmem:[%s454 + $0x1dc8] sm:$0xff]
        %v1538 = vld [vmem:[%s454 + $0x1dd0] sm:$0xff]
        %v1539 = vld [vmem:[%s454 + $0x1dd8] sm:$0xff]
        %v1540 = vld [vmem:[%s454 + $0x1de0] sm:$0xff]
        %v1541 = vld [vmem:[%s454 + $0x1de8] sm:$0xff]
        %v1542 = vld [vmem:[%s454 + $0x1df0] sm:$0xff]
        %v1543 = vld [vmem:[%s454 + $0x1df8] sm:$0xff]
        %v1544 = vld [vmem:[%s454 + $0x1e00] sm:$0xff]
        %v1545 = vld [vmem:[%s454 + $0x1e08] sm:$0xff]
        %v1546 = vld [vmem:[%s454 + $0x1e10] sm:$0xff]
        %v1547 = vld [vmem:[%s454 + $0x1e18] sm:$0xff]
        %v1548 = vld [vmem:[%s454 + $0x1e20] sm:$0xff]
        %v1549 = vld [vmem:[%s454 + $0x1e28] sm:$0xff]
        %v1550 = vld [vmem:[%s454 + $0x1e30] sm:$0xff]
        %v1551 = vld [vmem:[%s454 + $0x1e38] sm:$0xff]
        %v1552 = vld [vmem:[%s454 + $0x1e40] sm:$0xff]
        %v1553 = vld [vmem:[%s454 + $0x1e48] sm:$0xff]
        %v1554 = vld [vmem:[%s454 + $0x1e50] sm:$0xff]
        %v1555 = vld [vmem:[%s454 + $0x1e58] sm:$0xff]
        %v1556 = vld [vmem:[%s454 + $0x1e60] sm:$0xff]
        %v1557 = vld [vmem:[%s454 + $0x1e68] sm:$0xff]
        %v1558 = vld [vmem:[%s454 + $0x1e70] sm:$0xff]
        %v1559 = vld [vmem:[%s454 + $0x1e78] sm:$0xff]
        %v1560 = vld [vmem:[%s454 + $0x1e80] sm:$0xff]
        %v1561 = vld [vmem:[%s454 + $0x1e88] sm:$0xff]
        %v1562 = vld [vmem:[%s454 + $0x1e90] sm:$0xff]
        %v1563 = vld [vmem:[%s454 + $0x1e98] sm:$0xff]
        %v1564 = vld [vmem:[%s454 + $0x1ea0] sm:$0xff]
        %v1565 = vld [vmem:[%s454 + $0x1ea8] sm:$0xff]
        %v1566 = vld [vmem:[%s454 + $0x1eb0] sm:$0xff]
        %v1567 = vld [vmem:[%s454 + $0x1eb8] sm:$0xff]
        %v1568 = vld [vmem:[%s454 + $0x1ec0] sm:$0xff]
        %v1569 = vld [vmem:[%s454 + $0x1ec8] sm:$0xff]
        %v1570 = vld [vmem:[%s454 + $0x1ed0] sm:$0xff]
        %v1571 = vld [vmem:[%s454 + $0x1ed8] sm:$0xff]
        %v1572 = vld [vmem:[%s454 + $0x1ee0] sm:$0xff]
        %v1573 = vld [vmem:[%s454 + $0x1ee8] sm:$0xff]
        %v1574 = vld [vmem:[%s454 + $0x1ef0] sm:$0xff]
        %v1575 = vld [vmem:[%s454 + $0x1ef8] sm:$0xff]
        %v1576 = vld [vmem:[%s454 + $0x1f00] sm:$0xff]
        %v1577 = vld [vmem:[%s454 + $0x1f08] sm:$0xff]
        %v1578 = vld [vmem:[%s454 + $0x1f10] sm:$0xff]
        %v1579 = vld [vmem:[%s454 + $0x1f18] sm:$0xff]
        %v1580 = vld [vmem:[%s454 + $0x1f20] sm:$0xff]
        %v1581 = vld [vmem:[%s454 + $0x1f28] sm:$0xff]
        %v1582 = vld [vmem:[%s454 + $0x1f30] sm:$0xff]
        %v1583 = vld [vmem:[%s454 + $0x1f38] sm:$0xff]
        %v1584 = vld [vmem:[%s454 + $0x1f40] sm:$0xff]
        %v1585 = vld [vmem:[%s454 + $0x1f48] sm:$0xff]
        %v1586 = vld [vmem:[%s454 + $0x1f50] sm:$0xff]
        %v1587 = vld [vmem:[%s454 + $0x1f58] sm:$0xff]
        %v1588 = vld [vmem:[%s454 + $0x1f60] sm:$0xff]
        %v1589 = vld [vmem:[%s454 + $0x1f68] sm:$0xff]
        %v1590 = vld [vmem:[%s454 + $0x1f70] sm:$0xff]
        %v1591 = vld [vmem:[%s454 + $0x1f78] sm:$0xff]
        %v1592 = vld [vmem:[%s454 + $0x1f80] sm:$0xff]
        %v1593 = vld [vmem:[%s454 + $0x1f88] sm:$0xff]
        %v1594 = vld [vmem:[%s454 + $0x1f90] sm:$0xff]
        %v1595 = vld [vmem:[%s454 + $0x1f98] sm:$0xff]
        %v1596 = vld [vmem:[%s454 + $0x1fa0] sm:$0xff]
        %v1597 = vld [vmem:[%s454 + $0x1fa8] sm:$0xff]
        %v1598 = vld [vmem:[%s454 + $0x1fb0] sm:$0xff]
        %v1599 = vld [vmem:[%s454 + $0x1fb8] sm:$0xff]
        %v1600 = vld [vmem:[%s454 + $0x1fc0] sm:$0xff]
        %v1601 = vld [vmem:[%s454 + $0x1fc8] sm:$0xff]
        %v1602 = vld [vmem:[%s454 + $0x1fd0] sm:$0xff]
        %v1603 = vld [vmem:[%s454 + $0x1fd8] sm:$0xff]
        %v1604 = vld [vmem:[%s454 + $0x1fe0] sm:$0xff]
        %v1605 = vld [vmem:[%s454 + $0x1fe8] sm:$0xff]
        %v1606 = vld [vmem:[%s454 + $0x1ff0] sm:$0xff]
        %v1607 = vld [vmem:[%s454 + $0x1ff8] sm:$0xff]
        %v1608 = vld [vmem:[%s454 + $0x2000] sm:$0xff]
        %v1609 = vld [vmem:[%s454 + $0x2008] sm:$0xff]
        %v1610 = vld [vmem:[%s454 + $0x2010] sm:$0xff]
        %v1611 = vld [vmem:[%s454 + $0x2018] sm:$0xff]
        %v1612 = vld [vmem:[%s454 + $0x2020] sm:$0xff]
        %v1613 = vld [vmem:[%s454 + $0x2028] sm:$0xff]
        %v1614 = vld [vmem:[%s454 + $0x2030] sm:$0xff]
        %v1615 = vld [vmem:[%s454 + $0x2038] sm:$0xff]
        %v1616 = vld [vmem:[%s454 + $0x2040] sm:$0xff]
        %v1617 = vld [vmem:[%s454 + $0x2048] sm:$0xff]
        %v1618 = vld [vmem:[%s454 + $0x2050] sm:$0xff]
        %v1619 = vld [vmem:[%s454 + $0x2058] sm:$0xff]
        %v1620 = vld [vmem:[%s454 + $0x2060] sm:$0xff]
        %v1621 = vld [vmem:[%s454 + $0x2068] sm:$0xff]
        %v1622 = vld [vmem:[%s454 + $0x2070] sm:$0xff]
        %v1623 = vld [vmem:[%s454 + $0x2078] sm:$0xff]
        %v1624 = vld [vmem:[%s454 + $0x2080] sm:$0xff]
        %v1625 = vld [vmem:[%s454 + $0x2088] sm:$0xff]
        %v1626 = vld [vmem:[%s454 + $0x2090] sm:$0xff]
        %v1627 = vld [vmem:[%s454 + $0x2098] sm:$0xff]
        %v1628 = vld [vmem:[%s454 + $0x20a0] sm:$0xff]
        %v1629 = vld [vmem:[%s454 + $0x20a8] sm:$0xff]
        %v1630 = vld [vmem:[%s454 + $0x20b0] sm:$0xff]
        %v1631 = vld [vmem:[%s454 + $0x20b8] sm:$0xff]
        %v1632 = vld [vmem:[%s454 + $0x20c0] sm:$0xff]
        %v1633 = vld [vmem:[%s454 + $0x20c8] sm:$0xff]
        %v1634 = vld [vmem:[%s454 + $0x20d0] sm:$0xff]
        %v1635 = vld [vmem:[%s454 + $0x20d8] sm:$0xff]
        %v1636 = vld [vmem:[%s454 + $0x20e0] sm:$0xff]
        %v1637 = vld [vmem:[%s454 + $0x20e8] sm:$0xff]
        %v1638 = vld [vmem:[%s454 + $0x20f0] sm:$0xff]
        %v1639 = vld [vmem:[%s454 + $0x20f8] sm:$0xff]
        %v1640 = vld [vmem:[%s454 + $0x2100] sm:$0xff]
        %v1641 = vld [vmem:[%s454 + $0x2108] sm:$0xff]
        %v1642 = vld [vmem:[%s454 + $0x2110] sm:$0xff]
        %v1643 = vld [vmem:[%s454 + $0x2118] sm:$0xff]
        %v1644 = vld [vmem:[%s454 + $0x2120] sm:$0xff]
        %v1645 = vld [vmem:[%s454 + $0x2128] sm:$0xff]
        %v1646 = vld [vmem:[%s454 + $0x2130] sm:$0xff]
        %v1647 = vld [vmem:[%s454 + $0x2138] sm:$0xff]
        %v1648 = vld [vmem:[%s454 + $0x2140] sm:$0xff]
        %v1649 = vld [vmem:[%s454 + $0x2148] sm:$0xff]
        %v1650 = vld [vmem:[%s454 + $0x2150] sm:$0xff]
        %v1651 = vld [vmem:[%s454 + $0x2158] sm:$0xff]
        %v1652 = vld [vmem:[%s454 + $0x2160] sm:$0xff]
        %v1653 = vld [vmem:[%s454 + $0x2168] sm:$0xff]
        %v1654 = vld [vmem:[%s454 + $0x2170] sm:$0xff]
        %v1655 = vld [vmem:[%s454 + $0x2178] sm:$0xff]
        %v1656 = vld [vmem:[%s454 + $0x2180] sm:$0xff]
        %v1657 = vld [vmem:[%s454 + $0x2188] sm:$0xff]
        %v1658 = vld [vmem:[%s454 + $0x2190] sm:$0xff]
        %v1659 = vld [vmem:[%s454 + $0x2198] sm:$0xff]
        %v1660 = vld [vmem:[%s454 + $0x21a0] sm:$0xff]
        %v1661 = vld [vmem:[%s454 + $0x21a8] sm:$0xff]
        %v1662 = vld [vmem:[%s454 + $0x21b0] sm:$0xff]
        %v1663 = vld [vmem:[%s454 + $0x21b8] sm:$0xff]
        %v1664 = vld [vmem:[%s454 + $0x21c0] sm:$0xff]
        %v1665 = vld [vmem:[%s454 + $0x21c8] sm:$0xff]
        %v1666 = vld [vmem:[%s454 + $0x21d0] sm:$0xff]
        %v1667 = vld [vmem:[%s454 + $0x21d8] sm:$0xff]
        %v1668 = vld [vmem:[%s454 + $0x21e0] sm:$0xff]
        %v1669 = vld [vmem:[%s454 + $0x21e8] sm:$0xff]
        %v1670 = vld [vmem:[%s454 + $0x21f0] sm:$0xff]
        %v1671 = vld [vmem:[%s454 + $0x21f8] sm:$0xff]
        %v1672 = vld [vmem:[%s454 + $0x2200] sm:$0xff]
        %v1673 = vld [vmem:[%s454 + $0x2208] sm:$0xff]
        %v1674 = vld [vmem:[%s454 + $0x2210] sm:$0xff]
        %v1675 = vld [vmem:[%s454 + $0x2218] sm:$0xff]
        %v1676 = vld [vmem:[%s454 + $0x2220] sm:$0xff]
        %v1677 = vld [vmem:[%s454 + $0x2228] sm:$0xff]
        %v1678 = vld [vmem:[%s454 + $0x2230] sm:$0xff]
        %v1679 = vld [vmem:[%s454 + $0x2238] sm:$0xff]
        %v1680 = vld [vmem:[%s454 + $0x2240] sm:$0xff]
        %v1681 = vld [vmem:[%s454 + $0x2248] sm:$0xff]
        %v1682 = vld [vmem:[%s454 + $0x2250] sm:$0xff]
        %v1683 = vld [vmem:[%s454 + $0x2258] sm:$0xff]
        %v1684 = vld [vmem:[%s454 + $0x2260] sm:$0xff]
        %v1685 = vld [vmem:[%s454 + $0x2268] sm:$0xff]
        %v1686 = vld [vmem:[%s454 + $0x2270] sm:$0xff]
        %v1687 = vld [vmem:[%s454 + $0x2278] sm:$0xff]
        %v1688 = vld [vmem:[%s454 + $0x2280] sm:$0xff]
        %v1689 = vld [vmem:[%s454 + $0x2288] sm:$0xff]
        %v1690 = vld [vmem:[%s454 + $0x2290] sm:$0xff]
        %v1691 = vld [vmem:[%s454 + $0x2298] sm:$0xff]
        %v1692 = vld [vmem:[%s454 + $0x22a0] sm:$0xff]
        %v1693 = vld [vmem:[%s454 + $0x22a8] sm:$0xff]
        %v1694 = vld [vmem:[%s454 + $0x22b0] sm:$0xff]
        %v1695 = vld [vmem:[%s454 + $0x22b8] sm:$0xff]
        %v1696 = vld [vmem:[%s454 + $0x22c0] sm:$0xff]
        %v1697 = vld [vmem:[%s454 + $0x22c8] sm:$0xff]
        %v1698 = vld [vmem:[%s454 + $0x22d0] sm:$0xff]
        %v1699 = vld [vmem:[%s454 + $0x22d8] sm:$0xff]
        %v1700 = vld [vmem:[%s454 + $0x22e0] sm:$0xff]
        %v1701 = vld [vmem:[%s454 + $0x22e8] sm:$0xff]
        %v1702 = vld [vmem:[%s454 + $0x22f0] sm:$0xff]
        %v1703 = vld [vmem:[%s454 + $0x22f8] sm:$0xff]
        %v1704 = vld [vmem:[%s454 + $0x2300] sm:$0xff]
        %v1705 = vld [vmem:[%s454 + $0x2308] sm:$0xff]
        %v1706 = vld [vmem:[%s454 + $0x2310] sm:$0xff]
        %v1707 = vld [vmem:[%s454 + $0x2318] sm:$0xff]
        %v1708 = vld [vmem:[%s454 + $0x2320] sm:$0xff]
        %v1709 = vld [vmem:[%s454 + $0x2328] sm:$0xff]
        %v1710 = vld [vmem:[%s454 + $0x2330] sm:$0xff]
        %v1711 = vld [vmem:[%s454 + $0x2338] sm:$0xff]
        %v1712 = vld [vmem:[%s454 + $0x2340] sm:$0xff]
        %v1713 = vld [vmem:[%s454 + $0x2348] sm:$0xff]
        %v1714 = vld [vmem:[%s454 + $0x2350] sm:$0xff]
        %v1715 = vld [vmem:[%s454 + $0x2358] sm:$0xff]
        %v1716 = vld [vmem:[%s454 + $0x2360] sm:$0xff]
        %v1717 = vld [vmem:[%s454 + $0x2368] sm:$0xff]
        %v1718 = vld [vmem:[%s454 + $0x2370] sm:$0xff]
        %v1719 = vld [vmem:[%s454 + $0x2378] sm:$0xff]
        %v1720 = vld [vmem:[%s454 + $0x2380] sm:$0xff]
        %v1721 = vld [vmem:[%s454 + $0x2388] sm:$0xff]
        %v1722 = vld [vmem:[%s454 + $0x2390] sm:$0xff]
        %v1723 = vld [vmem:[%s454 + $0x2398] sm:$0xff]
        %v1724 = vld [vmem:[%s454 + $0x23a0] sm:$0xff]
        %v1725 = vld [vmem:[%s454 + $0x23a8] sm:$0xff]
        %v1726 = vld [vmem:[%s454 + $0x23b0] sm:$0xff]
        %v1727 = vld [vmem:[%s454 + $0x23b8] sm:$0xff]
        %v1728 = vld [vmem:[%s454 + $0x23c0] sm:$0xff]
        %v1729 = vld [vmem:[%s454 + $0x23c8] sm:$0xff]
        %v1730 = vld [vmem:[%s454 + $0x23d0] sm:$0xff]
        %v1731 = vld [vmem:[%s454 + $0x23d8] sm:$0xff]
        %v1732 = vld [vmem:[%s454 + $0x23e0] sm:$0xff]
        %v1733 = vld [vmem:[%s454 + $0x23e8] sm:$0xff]
        %v1734 = vld [vmem:[%s454 + $0x23f0] sm:$0xff]
        %v1735 = vld [vmem:[%s454 + $0x23f8] sm:$0xff]
        %v1736 = vld [vmem:[%s454 + $0x2400] sm:$0xff]
        %v1737 = vld [vmem:[%s454 + $0x2408] sm:$0xff]
        %v1738 = vld [vmem:[%s454 + $0x2410] sm:$0xff]
        %v1739 = vld [vmem:[%s454 + $0x2418] sm:$0xff]
        %v1740 = vld [vmem:[%s454 + $0x2420] sm:$0xff]
        %v1741 = vld [vmem:[%s454 + $0x2428] sm:$0xff]
        %v1742 = vld [vmem:[%s454 + $0x2430] sm:$0xff]
        %v1743 = vld [vmem:[%s454 + $0x2438] sm:$0xff]
        %v1744 = vld [vmem:[%s454 + $0x2440] sm:$0xff]
        %v1745 = vld [vmem:[%s454 + $0x2448] sm:$0xff]
        %v1746 = vld [vmem:[%s454 + $0x2450] sm:$0xff]
        %v1747 = vld [vmem:[%s454 + $0x2458] sm:$0xff]
        %v1748 = vld [vmem:[%s454 + $0x2460] sm:$0xff]
        %v1749 = vld [vmem:[%s454 + $0x2468] sm:$0xff]
        %v1750 = vld [vmem:[%s454 + $0x2470] sm:$0xff]
        %v1751 = vld [vmem:[%s454 + $0x2478] sm:$0xff]
        %v1752 = vld [vmem:[%s454 + $0x2480] sm:$0xff]
        %v1753 = vld [vmem:[%s454 + $0x2488] sm:$0xff]
        %v1754 = vld [vmem:[%s454 + $0x2490] sm:$0xff]
        %v1755 = vld [vmem:[%s454 + $0x2498] sm:$0xff]
        %v1756 = vld [vmem:[%s454 + $0x24a0] sm:$0xff]
        %v1757 = vld [vmem:[%s454 + $0x24a8] sm:$0xff]
        %v1758 = vld [vmem:[%s454 + $0x24b0] sm:$0xff]
        %v1759 = vld [vmem:[%s454 + $0x24b8] sm:$0xff]
        %v1760 = vld [vmem:[%s454 + $0x24c0] sm:$0xff]
        %v1761 = vld [vmem:[%s454 + $0x24c8] sm:$0xff]
        %v1762 = vld [vmem:[%s454 + $0x24d0] sm:$0xff]
        %v1763 = vld [vmem:[%s454 + $0x24d8] sm:$0xff]
        %v1764 = vld [vmem:[%s454 + $0x24e0] sm:$0xff]
        %v1765 = vld [vmem:[%s454 + $0x24e8] sm:$0xff]
        %v1766 = vld [vmem:[%s454 + $0x24f0] sm:$0xff]
        %v1767 = vld [vmem:[%s454 + $0x24f8] sm:$0xff]
        %v1768 = vld [vmem:[%s454 + $0x2500] sm:$0xff]
        %v1769 = vld [vmem:[%s454 + $0x2508] sm:$0xff]
        %v1770 = vld [vmem:[%s454 + $0x2510] sm:$0xff]
        %v1771 = vld [vmem:[%s454 + $0x2518] sm:$0xff]
        %v1772 = vld [vmem:[%s454 + $0x2520] sm:$0xff]
        %v1773 = vld [vmem:[%s454 + $0x2528] sm:$0xff]
        %v1774 = vld [vmem:[%s454 + $0x2530] sm:$0xff]
        %v1775 = vld [vmem:[%s454 + $0x2538] sm:$0xff]
        %v1776 = vld [vmem:[%s454 + $0x2540] sm:$0xff]
        %v1777 = vld [vmem:[%s454 + $0x2548] sm:$0xff]
        %v1778 = vld [vmem:[%s454 + $0x2550] sm:$0xff]
        %v1779 = vld [vmem:[%s454 + $0x2558] sm:$0xff]
        %v1780 = vld [vmem:[%s454 + $0x2560] sm:$0xff]
        %v1781 = vld [vmem:[%s454 + $0x2568] sm:$0xff]
        %v1782 = vld [vmem:[%s454 + $0x2570] sm:$0xff]
        %v1783 = vld [vmem:[%s454 + $0x2578] sm:$0xff]
        %v1784 = vld [vmem:[%s454 + $0x2580] sm:$0xff]
        %v1785 = vld [vmem:[%s454 + $0x2588] sm:$0xff]
        %v1786 = vld [vmem:[%s454 + $0x2590] sm:$0xff]
        %v1787 = vld [vmem:[%s454 + $0x2598] sm:$0xff]
        %v1788 = vld [vmem:[%s454 + $0x25a0] sm:$0xff]
        %v1789 = vld [vmem:[%s454 + $0x25a8] sm:$0xff]
        %v1790 = vld [vmem:[%s454 + $0x25b0] sm:$0xff]
        %v1791 = vld [vmem:[%s454 + $0x25b8] sm:$0xff]
        %v1792 = vld [vmem:[%s454 + $0x25c0] sm:$0xff]
        %v1793 = vld [vmem:[%s454 + $0x25c8] sm:$0xff]
        %v1794 = vld [vmem:[%s454 + $0x25d0] sm:$0xff]
        %v1795 = vld [vmem:[%s454 + $0x25d8] sm:$0xff]
        %v1796 = vld [vmem:[%s454 + $0x25e0] sm:$0xff]
        %v1797 = vld [vmem:[%s454 + $0x25e8] sm:$0xff]
        %v1798 = vld [vmem:[%s454 + $0x25f0] sm:$0xff]
        %v1799 = vld [vmem:[%s454 + $0x25f8] sm:$0xff]
        %v1800 = vld [vmem:[%s454 + $0x2600] sm:$0xff]
        %v1801 = vld [vmem:[%s454 + $0x2608] sm:$0xff]
        %v1802 = vld [vmem:[%s454 + $0x2610] sm:$0xff]
        %v1803 = vld [vmem:[%s454 + $0x2618] sm:$0xff]
        %v1804 = vld [vmem:[%s454 + $0x2620] sm:$0xff]
        %v1805 = vld [vmem:[%s454 + $0x2628] sm:$0xff]
        %v1806 = vld [vmem:[%s454 + $0x2630] sm:$0xff]
        %v1807 = vld [vmem:[%s454 + $0x2638] sm:$0xff]
        %v1808 = vld [vmem:[%s454 + $0x2640] sm:$0xff]
        %v1809 = vld [vmem:[%s454 + $0x2648] sm:$0xff]
        %v1810 = vld [vmem:[%s454 + $0x2650] sm:$0xff]
        %v1811 = vld [vmem:[%s454 + $0x2658] sm:$0xff]
        %v1812 = vld [vmem:[%s454 + $0x2660] sm:$0xff]
        %v1813 = vld [vmem:[%s454 + $0x2668] sm:$0xff]
        %v1814 = vld [vmem:[%s454 + $0x2670] sm:$0xff]
        %v1815 = vld [vmem:[%s454 + $0x2678] sm:$0xff]
        %v1816 = vld [vmem:[%s454 + $0x2680] sm:$0xff]
        %v1817 = vld [vmem:[%s454 + $0x2688] sm:$0xff]
        %v1818 = vld [vmem:[%s454 + $0x2690] sm:$0xff]
        %v1819 = vld [vmem:[%s454 + $0x2698] sm:$0xff]
        %v1820 = vld [vmem:[%s454 + $0x26a0] sm:$0xff]
        %v1821 = vld [vmem:[%s454 + $0x26a8] sm:$0xff]
        %v1822 = vld [vmem:[%s454 + $0x26b0] sm:$0xff]
        %v1823 = vld [vmem:[%s454 + $0x26b8] sm:$0xff]
        %v1824 = vld [vmem:[%s454 + $0x26c0] sm:$0xff]
        %v1825 = vld [vmem:[%s454 + $0x26c8] sm:$0xff]
        %v1826 = vld [vmem:[%s454 + $0x26d0] sm:$0xff]
        %v1827 = vld [vmem:[%s454 + $0x26d8] sm:$0xff]
        %v1828 = vld [vmem:[%s454 + $0x26e0] sm:$0xff]
        %v1829 = vld [vmem:[%s454 + $0x26e8] sm:$0xff]
        %v1830 = vld [vmem:[%s454 + $0x26f0] sm:$0xff]
        %v1831 = vld [vmem:[%s454 + $0x26f8] sm:$0xff]
        %v1832 = vld [vmem:[%s454 + $0x2700] sm:$0xff]
        %v1833 = vld [vmem:[%s454 + $0x2708] sm:$0xff]
        %v1834 = vld [vmem:[%s454 + $0x2710] sm:$0xff]
        %v1835 = vld [vmem:[%s454 + $0x2718] sm:$0xff]
        %v1836 = vld [vmem:[%s454 + $0x2720] sm:$0xff]
        %v1837 = vld [vmem:[%s454 + $0x2728] sm:$0xff]
        %v1838 = vld [vmem:[%s454 + $0x2730] sm:$0xff]
        %v1839 = vld [vmem:[%s454 + $0x2738] sm:$0xff]
        %v1840 = vld [vmem:[%s454 + $0x2740] sm:$0xff]
        %v1841 = vld [vmem:[%s454 + $0x2748] sm:$0xff]
        %v1842 = vld [vmem:[%s454 + $0x2750] sm:$0xff]
        %v1843 = vld [vmem:[%s454 + $0x2758] sm:$0xff]
        %v1844 = vld [vmem:[%s454 + $0x2760] sm:$0xff]
        %v1845 = vld [vmem:[%s454 + $0x2768] sm:$0xff]
        %v1846 = vld [vmem:[%s454 + $0x2770] sm:$0xff]
        %v1847 = vld [vmem:[%s454 + $0x2778] sm:$0xff]
        %v1848 = vld [vmem:[%s454 + $0x2780] sm:$0xff]
        %v1849 = vld [vmem:[%s454 + $0x2788] sm:$0xff]
        %v1850 = vld [vmem:[%s454 + $0x2790] sm:$0xff]
        %v1851 = vld [vmem:[%s454 + $0x2798] sm:$0xff]
        %v1852 = vld [vmem:[%s454 + $0x27a0] sm:$0xff]
        %v1853 = vld [vmem:[%s454 + $0x27a8] sm:$0xff]
        %v1854 = vld [vmem:[%s454 + $0x27b0] sm:$0xff]
        %v1855 = vld [vmem:[%s454 + $0x27b8] sm:$0xff]
        %v1856 = vld [vmem:[%s454 + $0x27c0] sm:$0xff]
        %v1857 = vld [vmem:[%s454 + $0x27c8] sm:$0xff]
        %v1858 = vld [vmem:[%s454 + $0x27d0] sm:$0xff]
        %v1859 = vld [vmem:[%s454 + $0x27d8] sm:$0xff]
        %v1860 = vld [vmem:[%s454 + $0x27e0] sm:$0xff]
        %v1861 = vld [vmem:[%s454 + $0x27e8] sm:$0xff]
        %v1862 = vld [vmem:[%s454 + $0x27f0] sm:$0xff]
        %v1863 = vld [vmem:[%s454 + $0x27f8] sm:$0xff]
        %v3144 = vunpack.c.l.b16 %v584
        %v3145 = vunpack.c.h.b16 %v584
        %v3146 = vunpack.c.l.b16 %v585
        %v3147 = vunpack.c.h.b16 %v585
        %v3148 = vunpack.c.l.b16 %v586
        %v3149 = vunpack.c.h.b16 %v586
        %v3150 = vunpack.c.l.b16 %v587
        %v3151 = vunpack.c.h.b16 %v587
        %v3152 = vunpack.c.l.b16 %v588
        %v3153 = vunpack.c.h.b16 %v588
        %v3154 = vunpack.c.l.b16 %v589
        %v3155 = vunpack.c.h.b16 %v589
        %v3156 = vunpack.c.l.b16 %v590
        %v3157 = vunpack.c.h.b16 %v590
        %v3158 = vunpack.c.l.b16 %v591
        %v3159 = vunpack.c.h.b16 %v591
        %v3160 = vunpack.c.l.b16 %v592
        %v3161 = vunpack.c.h.b16 %v592
        %v3162 = vunpack.c.l.b16 %v593
        %v3163 = vunpack.c.h.b16 %v593
        %v3164 = vunpack.c.l.b16 %v594
        %v3165 = vunpack.c.h.b16 %v594
        %v3166 = vunpack.c.l.b16 %v595
        %v3167 = vunpack.c.h.b16 %v595
        %v3168 = vunpack.c.l.b16 %v596
        %v3169 = vunpack.c.h.b16 %v596
        %v3170 = vunpack.c.l.b16 %v597
        %v3171 = vunpack.c.h.b16 %v597
        %v3172 = vunpack.c.l.b16 %v598
        %v3173 = vunpack.c.h.b16 %v598
        %v3174 = vunpack.c.l.b16 %v599
        %v3175 = vunpack.c.h.b16 %v599
        %v3176 = vunpack.c.l.b16 %v600
        %v3177 = vunpack.c.h.b16 %v600
        %v3178 = vunpack.c.l.b16 %v601
        %v3179 = vunpack.c.h.b16 %v601
        %v3180 = vunpack.c.l.b16 %v602
        %v3181 = vunpack.c.h.b16 %v602
        %v3182 = vunpack.c.l.b16 %v603
        %v3183 = vunpack.c.h.b16 %v603
        %v3184 = vunpack.c.l.b16 %v604
        %v3185 = vunpack.c.h.b16 %v604
        %v3186 = vunpack.c.l.b16 %v605
        %v3187 = vunpack.c.h.b16 %v605
        %v3188 = vunpack.c.l.b16 %v606
        %v3189 = vunpack.c.h.b16 %v606
        %v3190 = vunpack.c.l.b16 %v607
        %v3191 = vunpack.c.h.b16 %v607
        %v3192 = vunpack.c.l.b16 %v608
        %v3193 = vunpack.c.h.b16 %v608
        %v3194 = vunpack.c.l.b16 %v609
        %v3195 = vunpack.c.h.b16 %v609
        %v3196 = vunpack.c.l.b16 %v610
        %v3197 = vunpack.c.h.b16 %v610
        %v3198 = vunpack.c.l.b16 %v611
        %v3199 = vunpack.c.h.b16 %v611
        %v3200 = vunpack.c.l.b16 %v612
        %v3201 = vunpack.c.h.b16 %v612
        %v3202 = vunpack.c.l.b16 %v613
        %v3203 = vunpack.c.h.b16 %v613
        %v3204 = vunpack.c.l.b16 %v614
        %v3205 = vunpack.c.h.b16 %v614
        %v3206 = vunpack.c.l.b16 %v615
        %v3207 = vunpack.c.h.b16 %v615
        %v3208 = vunpack.c.l.b16 %v616
        %v3209 = vunpack.c.h.b16 %v616
        %v3210 = vunpack.c.l.b16 %v617
        %v3211 = vunpack.c.h.b16 %v617
        %v3212 = vunpack.c.l.b16 %v618
        %v3213 = vunpack.c.h.b16 %v618
        %v3214 = vunpack.c.l.b16 %v619
        %v3215 = vunpack.c.h.b16 %v619
        %v3216 = vunpack.c.l.b16 %v620
        %v3217 = vunpack.c.h.b16 %v620
        %v3218 = vunpack.c.l.b16 %v621
        %v3219 = vunpack.c.h.b16 %v621
        %v3220 = vunpack.c.l.b16 %v622
        %v3221 = vunpack.c.h.b16 %v622
        %v3222 = vunpack.c.l.b16 %v623
        %v3223 = vunpack.c.h.b16 %v623
        %v3224 = vunpack.c.l.b16 %v624
        %v3225 = vunpack.c.h.b16 %v624
        %v3226 = vunpack.c.l.b16 %v625
        %v3227 = vunpack.c.h.b16 %v625
        %v3228 = vunpack.c.l.b16 %v626
        %v3229 = vunpack.c.h.b16 %v626
        %v3230 = vunpack.c.l.b16 %v627
        %v3231 = vunpack.c.h.b16 %v627
        %v3232 = vunpack.c.l.b16 %v628
        %v3233 = vunpack.c.h.b16 %v628
        %v3234 = vunpack.c.l.b16 %v629
        %v3235 = vunpack.c.h.b16 %v629
        %v3236 = vunpack.c.l.b16 %v630
        %v3237 = vunpack.c.h.b16 %v630
        %v3238 = vunpack.c.l.b16 %v631
        %v3239 = vunpack.c.h.b16 %v631
        %v3240 = vunpack.c.l.b16 %v632
        %v3241 = vunpack.c.h.b16 %v632
        %v3242 = vunpack.c.l.b16 %v633
        %v3243 = vunpack.c.h.b16 %v633
        %v3244 = vunpack.c.l.b16 %v634
        %v3245 = vunpack.c.h.b16 %v634
        %v3246 = vunpack.c.l.b16 %v635
        %v3247 = vunpack.c.h.b16 %v635
        %v3248 = vunpack.c.l.b16 %v636
        %v3249 = vunpack.c.h.b16 %v636
        %v3250 = vunpack.c.l.b16 %v637
        %v3251 = vunpack.c.h.b16 %v637
        %v3252 = vunpack.c.l.b16 %v638
        %v3253 = vunpack.c.h.b16 %v638
        %v3254 = vunpack.c.l.b16 %v639
        %v3255 = vunpack.c.h.b16 %v639
        %v3256 = vunpack.c.l.b16 %v640
        %v3257 = vunpack.c.h.b16 %v640
        %v3258 = vunpack.c.l.b16 %v641
        %v3259 = vunpack.c.h.b16 %v641
        %v3260 = vunpack.c.l.b16 %v642
        %v3261 = vunpack.c.h.b16 %v642
        %v3262 = vunpack.c.l.b16 %v643
        %v3263 = vunpack.c.h.b16 %v643
        %v3264 = vunpack.c.l.b16 %v644
        %v3265 = vunpack.c.h.b16 %v644
        %v3266 = vunpack.c.l.b16 %v645
        %v3267 = vunpack.c.h.b16 %v645
        %v3268 = vunpack.c.l.b16 %v646
        %v3269 = vunpack.c.h.b16 %v646
        %v3270 = vunpack.c.l.b16 %v647
        %v3271 = vunpack.c.h.b16 %v647
        %v3272 = vunpack.c.l.b16 %v648
        %v3273 = vunpack.c.h.b16 %v648
        %v3274 = vunpack.c.l.b16 %v649
        %v3275 = vunpack.c.h.b16 %v649
        %v3276 = vunpack.c.l.b16 %v650
        %v3277 = vunpack.c.h.b16 %v650
        %v3278 = vunpack.c.l.b16 %v651
        %v3279 = vunpack.c.h.b16 %v651
        %v3280 = vunpack.c.l.b16 %v652
        %v3281 = vunpack.c.h.b16 %v652
        %v3282 = vunpack.c.l.b16 %v653
        %v3283 = vunpack.c.h.b16 %v653
        %v3284 = vunpack.c.l.b16 %v654
        %v3285 = vunpack.c.h.b16 %v654
        %v3286 = vunpack.c.l.b16 %v655
        %v3287 = vunpack.c.h.b16 %v655
        %v3288 = vunpack.c.l.b16 %v656
        %v3289 = vunpack.c.h.b16 %v656
        %v3290 = vunpack.c.l.b16 %v657
        %v3291 = vunpack.c.h.b16 %v657
        %v3292 = vunpack.c.l.b16 %v658
        %v3293 = vunpack.c.h.b16 %v658
        %v3294 = vunpack.c.l.b16 %v659
        %v3295 = vunpack.c.h.b16 %v659
        %v3296 = vunpack.c.l.b16 %v660
        %v3297 = vunpack.c.h.b16 %v660
        %v3298 = vunpack.c.l.b16 %v661
        %v3299 = vunpack.c.h.b16 %v661
        %v3300 = vunpack.c.l.b16 %v662
        %v3301 = vunpack.c.h.b16 %v662
        %v3302 = vunpack.c.l.b16 %v663
        %v3303 = vunpack.c.h.b16 %v663
        %v3304 = vunpack.c.l.b16 %v664
        %v3305 = vunpack.c.h.b16 %v664
        %v3306 = vunpack.c.l.b16 %v665
        %v3307 = vunpack.c.h.b16 %v665
        %v3308 = vunpack.c.l.b16 %v666
        %v3309 = vunpack.c.h.b16 %v666
        %v3310 = vunpack.c.l.b16 %v667
        %v3311 = vunpack.c.h.b16 %v667
        %v3312 = vunpack.c.l.b16 %v668
        %v3313 = vunpack.c.h.b16 %v668
        %v3314 = vunpack.c.l.b16 %v669
        %v3315 = vunpack.c.h.b16 %v669
        %v3316 = vunpack.c.l.b16 %v670
        %v3317 = vunpack.c.h.b16 %v670
        %v3318 = vunpack.c.l.b16 %v671
        %v3319 = vunpack.c.h.b16 %v671
        %v3320 = vunpack.c.l.b16 %v672
        %v3321 = vunpack.c.h.b16 %v672
        %v3322 = vunpack.c.l.b16 %v673
        %v3323 = vunpack.c.h.b16 %v673
        %v3324 = vunpack.c.l.b16 %v674
        %v3325 = vunpack.c.h.b16 %v674
        %v3326 = vunpack.c.l.b16 %v675
        %v3327 = vunpack.c.h.b16 %v675
        %v3328 = vunpack.c.l.b16 %v676
        %v3329 = vunpack.c.h.b16 %v676
        %v3330 = vunpack.c.l.b16 %v677
        %v3331 = vunpack.c.h.b16 %v677
        %v3332 = vunpack.c.l.b16 %v678
        %v3333 = vunpack.c.h.b16 %v678
        %v3334 = vunpack.c.l.b16 %v679
        %v3335 = vunpack.c.h.b16 %v679
        %v3336 = vunpack.c.l.b16 %v680
        %v3337 = vunpack.c.h.b16 %v680
        %v3338 = vunpack.c.l.b16 %v681
        %v3339 = vunpack.c.h.b16 %v681
        %v3340 = vunpack.c.l.b16 %v682
        %v3341 = vunpack.c.h.b16 %v682
        %v3342 = vunpack.c.l.b16 %v683
        %v3343 = vunpack.c.h.b16 %v683
        %v3344 = vunpack.c.l.b16 %v684
        %v3345 = vunpack.c.h.b16 %v684
        %v3346 = vunpack.c.l.b16 %v685
        %v3347 = vunpack.c.h.b16 %v685
        %v3348 = vunpack.c.l.b16 %v686
        %v3349 = vunpack.c.h.b16 %v686
        %v3350 = vunpack.c.l.b16 %v687
        %v3351 = vunpack.c.h.b16 %v687
        %v3352 = vunpack.c.l.b16 %v688
        %v3353 = vunpack.c.h.b16 %v688
        %v3354 = vunpack.c.l.b16 %v689
        %v3355 = vunpack.c.h.b16 %v689
        %v3356 = vunpack.c.l.b16 %v690
        %v3357 = vunpack.c.h.b16 %v690
        %v3358 = vunpack.c.l.b16 %v691
        %v3359 = vunpack.c.h.b16 %v691
        %v3360 = vunpack.c.l.b16 %v692
        %v3361 = vunpack.c.h.b16 %v692
        %v3362 = vunpack.c.l.b16 %v693
        %v3363 = vunpack.c.h.b16 %v693
        %v3364 = vunpack.c.l.b16 %v694
        %v3365 = vunpack.c.h.b16 %v694
        %v3366 = vunpack.c.l.b16 %v695
        %v3367 = vunpack.c.h.b16 %v695
        %v3368 = vunpack.c.l.b16 %v696
        %v3369 = vunpack.c.h.b16 %v696
        %v3370 = vunpack.c.l.b16 %v697
        %v3371 = vunpack.c.h.b16 %v697
        %v3372 = vunpack.c.l.b16 %v698
        %v3373 = vunpack.c.h.b16 %v698
        %v3374 = vunpack.c.l.b16 %v699
        %v3375 = vunpack.c.h.b16 %v699
        %v3376 = vunpack.c.l.b16 %v700
        %v3377 = vunpack.c.h.b16 %v700
        %v3378 = vunpack.c.l.b16 %v701
        %v3379 = vunpack.c.h.b16 %v701
        %v3380 = vunpack.c.l.b16 %v702
        %v3381 = vunpack.c.h.b16 %v702
        %v3382 = vunpack.c.l.b16 %v703
        %v3383 = vunpack.c.h.b16 %v703
        %v3384 = vunpack.c.l.b16 %v704
        %v3385 = vunpack.c.h.b16 %v704
        %v3386 = vunpack.c.l.b16 %v705
        %v3387 = vunpack.c.h.b16 %v705
        %v3388 = vunpack.c.l.b16 %v706
        %v3389 = vunpack.c.h.b16 %v706
        %v3390 = vunpack.c.l.b16 %v707
        %v3391 = vunpack.c.h.b16 %v707
        %v3392 = vunpack.c.l.b16 %v708
        %v3393 = vunpack.c.h.b16 %v708
        %v3394 = vunpack.c.l.b16 %v709
        %v3395 = vunpack.c.h.b16 %v709
        %v3396 = vunpack.c.l.b16 %v710
        %v3397 = vunpack.c.h.b16 %v710
        %v3398 = vunpack.c.l.b16 %v711
        %v3399 = vunpack.c.h.b16 %v711
        %v3400 = vunpack.c.l.b16 %v712
        %v3401 = vunpack.c.h.b16 %v712
        %v3402 = vunpack.c.l.b16 %v713
        %v3403 = vunpack.c.h.b16 %v713
        %v3404 = vunpack.c.l.b16 %v714
        %v3405 = vunpack.c.h.b16 %v714
        %v3406 = vunpack.c.l.b16 %v715
        %v3407 = vunpack.c.h.b16 %v715
        %v3408 = vunpack.c.l.b16 %v716
        %v3409 = vunpack.c.h.b16 %v716
        %v3410 = vunpack.c.l.b16 %v717
        %v3411 = vunpack.c.h.b16 %v717
        %v3412 = vunpack.c.l.b16 %v718
        %v3413 = vunpack.c.h.b16 %v718
        %v3414 = vunpack.c.l.b16 %v719
        %v3415 = vunpack.c.h.b16 %v719
        %v3416 = vunpack.c.l.b16 %v720
        %v3417 = vunpack.c.h.b16 %v720
        %v3418 = vunpack.c.l.b16 %v721
        %v3419 = vunpack.c.h.b16 %v721
        %v3420 = vunpack.c.l.b16 %v722
        %v3421 = vunpack.c.h.b16 %v722
        %v3422 = vunpack.c.l.b16 %v723
        %v3423 = vunpack.c.h.b16 %v723
        %v3424 = vunpack.c.l.b16 %v724
        %v3425 = vunpack.c.h.b16 %v724
        %v3426 = vunpack.c.l.b16 %v725
        %v3427 = vunpack.c.h.b16 %v725
        %v3428 = vunpack.c.l.b16 %v726
        %v3429 = vunpack.c.h.b16 %v726
        %v3430 = vunpack.c.l.b16 %v727
        %v3431 = vunpack.c.h.b16 %v727
        %v3432 = vunpack.c.l.b16 %v728
        %v3433 = vunpack.c.h.b16 %v728
        %v3434 = vunpack.c.l.b16 %v729
        %v3435 = vunpack.c.h.b16 %v729
        %v3436 = vunpack.c.l.b16 %v730
        %v3437 = vunpack.c.h.b16 %v730
        %v3438 = vunpack.c.l.b16 %v731
        %v3439 = vunpack.c.h.b16 %v731
        %v3440 = vunpack.c.l.b16 %v732
        %v3441 = vunpack.c.h.b16 %v732
        %v3442 = vunpack.c.l.b16 %v733
        %v3443 = vunpack.c.h.b16 %v733
        %v3444 = vunpack.c.l.b16 %v734
        %v3445 = vunpack.c.h.b16 %v734
        %v3446 = vunpack.c.l.b16 %v735
        %v3447 = vunpack.c.h.b16 %v735
        %v3448 = vunpack.c.l.b16 %v736
        %v3449 = vunpack.c.h.b16 %v736
        %v3450 = vunpack.c.l.b16 %v737
        %v3451 = vunpack.c.h.b16 %v737
        %v3452 = vunpack.c.l.b16 %v738
        %v3453 = vunpack.c.h.b16 %v738
        %v3454 = vunpack.c.l.b16 %v739
        %v3455 = vunpack.c.h.b16 %v739
        %v3456 = vunpack.c.l.b16 %v740
        %v3457 = vunpack.c.h.b16 %v740
        %v3458 = vunpack.c.l.b16 %v741
        %v3459 = vunpack.c.h.b16 %v741
        %v3460 = vunpack.c.l.b16 %v742
        %v3461 = vunpack.c.h.b16 %v742
        %v3462 = vunpack.c.l.b16 %v743
        %v3463 = vunpack.c.h.b16 %v743
        %v3464 = vunpack.c.l.b16 %v744
        %v3465 = vunpack.c.h.b16 %v744
        %v3466 = vunpack.c.l.b16 %v745
        %v3467 = vunpack.c.h.b16 %v745
        %v3468 = vunpack.c.l.b16 %v746
        %v3469 = vunpack.c.h.b16 %v746
        %v3470 = vunpack.c.l.b16 %v747
        %v3471 = vunpack.c.h.b16 %v747
        %v3472 = vunpack.c.l.b16 %v748
        %v3473 = vunpack.c.h.b16 %v748
        %v3474 = vunpack.c.l.b16 %v749
        %v3475 = vunpack.c.h.b16 %v749
        %v3476 = vunpack.c.l.b16 %v750
        %v3477 = vunpack.c.h.b16 %v750
        %v3478 = vunpack.c.l.b16 %v751
        %v3479 = vunpack.c.h.b16 %v751
        %v3480 = vunpack.c.l.b16 %v752
        %v3481 = vunpack.c.h.b16 %v752
        %v3482 = vunpack.c.l.b16 %v753
        %v3483 = vunpack.c.h.b16 %v753
        %v3484 = vunpack.c.l.b16 %v754
        %v3485 = vunpack.c.h.b16 %v754
        %v3486 = vunpack.c.l.b16 %v755
        %v3487 = vunpack.c.h.b16 %v755
        %v3488 = vunpack.c.l.b16 %v756
        %v3489 = vunpack.c.h.b16 %v756
        %v3490 = vunpack.c.l.b16 %v757
        %v3491 = vunpack.c.h.b16 %v757
        %v3492 = vunpack.c.l.b16 %v758
        %v3493 = vunpack.c.h.b16 %v758
        %v3494 = vunpack.c.l.b16 %v759
        %v3495 = vunpack.c.h.b16 %v759
        %v3496 = vunpack.c.l.b16 %v760
        %v3497 = vunpack.c.h.b16 %v760
        %v3498 = vunpack.c.l.b16 %v761
        %v3499 = vunpack.c.h.b16 %v761
        %v3500 = vunpack.c.l.b16 %v762
        %v3501 = vunpack.c.h.b16 %v762
        %v3502 = vunpack.c.l.b16 %v763
        %v3503 = vunpack.c.h.b16 %v763
        %v3504 = vunpack.c.l.b16 %v764
        %v3505 = vunpack.c.h.b16 %v764
        %v3506 = vunpack.c.l.b16 %v765
        %v3507 = vunpack.c.h.b16 %v765
        %v3508 = vunpack.c.l.b16 %v766
        %v3509 = vunpack.c.h.b16 %v766
        %v3510 = vunpack.c.l.b16 %v767
        %v3511 = vunpack.c.h.b16 %v767
        %v3512 = vunpack.c.l.b16 %v768
        %v3513 = vunpack.c.h.b16 %v768
        %v3514 = vunpack.c.l.b16 %v769
        %v3515 = vunpack.c.h.b16 %v769
        %v3516 = vunpack.c.l.b16 %v770
        %v3517 = vunpack.c.h.b16 %v770
        %v3518 = vunpack.c.l.b16 %v771
        %v3519 = vunpack.c.h.b16 %v771
        %v3520 = vunpack.c.l.b16 %v772
        %v3521 = vunpack.c.h.b16 %v772
        %v3522 = vunpack.c.l.b16 %v773
        %v3523 = vunpack.c.h.b16 %v773
        %v3524 = vunpack.c.l.b16 %v774
        %v3525 = vunpack.c.h.b16 %v774
        %v3526 = vunpack.c.l.b16 %v775
        %v3527 = vunpack.c.h.b16 %v775
        %v3528 = vunpack.c.l.b16 %v776
        %v3529 = vunpack.c.h.b16 %v776
        %v3530 = vunpack.c.l.b16 %v777
        %v3531 = vunpack.c.h.b16 %v777
        %v3532 = vunpack.c.l.b16 %v778
        %v3533 = vunpack.c.h.b16 %v778
        %v3534 = vunpack.c.l.b16 %v779
        %v3535 = vunpack.c.h.b16 %v779
        %v3536 = vunpack.c.l.b16 %v780
        %v3537 = vunpack.c.h.b16 %v780
        %v3538 = vunpack.c.l.b16 %v781
        %v3539 = vunpack.c.h.b16 %v781
        %v3540 = vunpack.c.l.b16 %v782
        %v3541 = vunpack.c.h.b16 %v782
        %v3542 = vunpack.c.l.b16 %v783
        %v3543 = vunpack.c.h.b16 %v783
        %v3544 = vunpack.c.l.b16 %v784
        %v3545 = vunpack.c.h.b16 %v784
        %v3546 = vunpack.c.l.b16 %v785
        %v3547 = vunpack.c.h.b16 %v785
        %v3548 = vunpack.c.l.b16 %v786
        %v3549 = vunpack.c.h.b16 %v786
        %v3550 = vunpack.c.l.b16 %v787
        %v3551 = vunpack.c.h.b16 %v787
        %v3552 = vunpack.c.l.b16 %v788
        %v3553 = vunpack.c.h.b16 %v788
        %v3554 = vunpack.c.l.b16 %v789
        %v3555 = vunpack.c.h.b16 %v789
        %v3556 = vunpack.c.l.b16 %v790
        %v3557 = vunpack.c.h.b16 %v790
        %v3558 = vunpack.c.l.b16 %v791
        %v3559 = vunpack.c.h.b16 %v791
        %v3560 = vunpack.c.l.b16 %v792
        %v3561 = vunpack.c.h.b16 %v792
        %v3562 = vunpack.c.l.b16 %v793
        %v3563 = vunpack.c.h.b16 %v793
        %v3564 = vunpack.c.l.b16 %v794
        %v3565 = vunpack.c.h.b16 %v794
        %v3566 = vunpack.c.l.b16 %v795
        %v3567 = vunpack.c.h.b16 %v795
        %v3568 = vunpack.c.l.b16 %v796
        %v3569 = vunpack.c.h.b16 %v796
        %v3570 = vunpack.c.l.b16 %v797
        %v3571 = vunpack.c.h.b16 %v797
        %v3572 = vunpack.c.l.b16 %v798
        %v3573 = vunpack.c.h.b16 %v798
        %v3574 = vunpack.c.l.b16 %v799
        %v3575 = vunpack.c.h.b16 %v799
        %v3576 = vunpack.c.l.b16 %v800
        %v3577 = vunpack.c.h.b16 %v800
        %v3578 = vunpack.c.l.b16 %v801
        %v3579 = vunpack.c.h.b16 %v801
        %v3580 = vunpack.c.l.b16 %v802
        %v3581 = vunpack.c.h.b16 %v802
        %v3582 = vunpack.c.l.b16 %v803
        %v3583 = vunpack.c.h.b16 %v803
        %v3584 = vunpack.c.l.b16 %v804
        %v3585 = vunpack.c.h.b16 %v804
        %v3586 = vunpack.c.l.b16 %v805
        %v3587 = vunpack.c.h.b16 %v805
        %v3588 = vunpack.c.l.b16 %v806
        %v3589 = vunpack.c.h.b16 %v806
        %v3590 = vunpack.c.l.b16 %v807
        %v3591 = vunpack.c.h.b16 %v807
        %v3592 = vunpack.c.l.b16 %v808
        %v3593 = vunpack.c.h.b16 %v808
        %v3594 = vunpack.c.l.b16 %v809
        %v3595 = vunpack.c.h.b16 %v809
        %v3596 = vunpack.c.l.b16 %v810
        %v3597 = vunpack.c.h.b16 %v810
        %v3598 = vunpack.c.l.b16 %v811
        %v3599 = vunpack.c.h.b16 %v811
        %v3600 = vunpack.c.l.b16 %v812
        %v3601 = vunpack.c.h.b16 %v812
        %v3602 = vunpack.c.l.b16 %v813
        %v3603 = vunpack.c.h.b16 %v813
        %v3604 = vunpack.c.l.b16 %v814
        %v3605 = vunpack.c.h.b16 %v814
        %v3606 = vunpack.c.l.b16 %v815
        %v3607 = vunpack.c.h.b16 %v815
        %v3608 = vunpack.c.l.b16 %v816
        %v3609 = vunpack.c.h.b16 %v816
        %v3610 = vunpack.c.l.b16 %v817
        %v3611 = vunpack.c.h.b16 %v817
        %v3612 = vunpack.c.l.b16 %v818
        %v3613 = vunpack.c.h.b16 %v818
        %v3614 = vunpack.c.l.b16 %v819
        %v3615 = vunpack.c.h.b16 %v819
        %v3616 = vunpack.c.l.b16 %v820
        %v3617 = vunpack.c.h.b16 %v820
        %v3618 = vunpack.c.l.b16 %v821
        %v3619 = vunpack.c.h.b16 %v821
        %v3620 = vunpack.c.l.b16 %v822
        %v3621 = vunpack.c.h.b16 %v822
        %v3622 = vunpack.c.l.b16 %v823
        %v3623 = vunpack.c.h.b16 %v823
        %v3624 = vunpack.c.l.b16 %v824
        %v3625 = vunpack.c.h.b16 %v824
        %v3626 = vunpack.c.l.b16 %v825
        %v3627 = vunpack.c.h.b16 %v825
        %v3628 = vunpack.c.l.b16 %v826
        %v3629 = vunpack.c.h.b16 %v826
        %v3630 = vunpack.c.l.b16 %v827
        %v3631 = vunpack.c.h.b16 %v827
        %v3632 = vunpack.c.l.b16 %v828
        %v3633 = vunpack.c.h.b16 %v828
        %v3634 = vunpack.c.l.b16 %v829
        %v3635 = vunpack.c.h.b16 %v829
        %v3636 = vunpack.c.l.b16 %v830
        %v3637 = vunpack.c.h.b16 %v830
        %v3638 = vunpack.c.l.b16 %v831
        %v3639 = vunpack.c.h.b16 %v831
        %v3640 = vunpack.c.l.b16 %v832
        %v3641 = vunpack.c.h.b16 %v832
        %v3642 = vunpack.c.l.b16 %v833
        %v3643 = vunpack.c.h.b16 %v833
        %v3644 = vunpack.c.l.b16 %v834
        %v3645 = vunpack.c.h.b16 %v834
        %v3646 = vunpack.c.l.b16 %v835
        %v3647 = vunpack.c.h.b16 %v835
        %v3648 = vunpack.c.l.b16 %v836
        %v3649 = vunpack.c.h.b16 %v836
        %v3650 = vunpack.c.l.b16 %v837
        %v3651 = vunpack.c.h.b16 %v837
        %v3652 = vunpack.c.l.b16 %v838
        %v3653 = vunpack.c.h.b16 %v838
        %v3654 = vunpack.c.l.b16 %v839
        %v3655 = vunpack.c.h.b16 %v839
        %v3656 = vunpack.c.l.b16 %v840
        %v3657 = vunpack.c.h.b16 %v840
        %v3658 = vunpack.c.l.b16 %v841
        %v3659 = vunpack.c.h.b16 %v841
        %v3660 = vunpack.c.l.b16 %v842
        %v3661 = vunpack.c.h.b16 %v842
        %v3662 = vunpack.c.l.b16 %v843
        %v3663 = vunpack.c.h.b16 %v843
        %v3664 = vunpack.c.l.b16 %v844
        %v3665 = vunpack.c.h.b16 %v844
        %v3666 = vunpack.c.l.b16 %v845
        %v3667 = vunpack.c.h.b16 %v845
        %v3668 = vunpack.c.l.b16 %v846
        %v3669 = vunpack.c.h.b16 %v846
        %v3670 = vunpack.c.l.b16 %v847
        %v3671 = vunpack.c.h.b16 %v847
        %v3672 = vunpack.c.l.b16 %v848
        %v3673 = vunpack.c.h.b16 %v848
        %v3674 = vunpack.c.l.b16 %v849
        %v3675 = vunpack.c.h.b16 %v849
        %v3676 = vunpack.c.l.b16 %v850
        %v3677 = vunpack.c.h.b16 %v850
        %v3678 = vunpack.c.l.b16 %v851
        %v3679 = vunpack.c.h.b16 %v851
        %v3680 = vunpack.c.l.b16 %v852
        %v3681 = vunpack.c.h.b16 %v852
        %v3682 = vunpack.c.l.b16 %v853
        %v3683 = vunpack.c.h.b16 %v853
        %v3684 = vunpack.c.l.b16 %v854
        %v3685 = vunpack.c.h.b16 %v854
        %v3686 = vunpack.c.l.b16 %v855
        %v3687 = vunpack.c.h.b16 %v855
        %v3688 = vunpack.c.l.b16 %v856
        %v3689 = vunpack.c.h.b16 %v856
        %v3690 = vunpack.c.l.b16 %v857
        %v3691 = vunpack.c.h.b16 %v857
        %v3692 = vunpack.c.l.b16 %v858
        %v3693 = vunpack.c.h.b16 %v858
        %v3694 = vunpack.c.l.b16 %v859
        %v3695 = vunpack.c.h.b16 %v859
        %v3696 = vunpack.c.l.b16 %v860
        %v3697 = vunpack.c.h.b16 %v860
        %v3698 = vunpack.c.l.b16 %v861
        %v3699 = vunpack.c.h.b16 %v861
        %v3700 = vunpack.c.l.b16 %v862
        %v3701 = vunpack.c.h.b16 %v862
        %v3702 = vunpack.c.l.b16 %v863
        %v3703 = vunpack.c.h.b16 %v863
        %v3704 = vunpack.c.l.b16 %v864
        %v3705 = vunpack.c.h.b16 %v864
        %v3706 = vunpack.c.l.b16 %v865
        %v3707 = vunpack.c.h.b16 %v865
        %v3708 = vunpack.c.l.b16 %v866
        %v3709 = vunpack.c.h.b16 %v866
        %v3710 = vunpack.c.l.b16 %v867
        %v3711 = vunpack.c.h.b16 %v867
        %v3712 = vunpack.c.l.b16 %v868
        %v3713 = vunpack.c.h.b16 %v868
        %v3714 = vunpack.c.l.b16 %v869
        %v3715 = vunpack.c.h.b16 %v869
        %v3716 = vunpack.c.l.b16 %v870
        %v3717 = vunpack.c.h.b16 %v870
        %v3718 = vunpack.c.l.b16 %v871
        %v3719 = vunpack.c.h.b16 %v871
        %v3720 = vunpack.c.l.b16 %v872
        %v3721 = vunpack.c.h.b16 %v872
        %v3722 = vunpack.c.l.b16 %v873
        %v3723 = vunpack.c.h.b16 %v873
        %v3724 = vunpack.c.l.b16 %v874
        %v3725 = vunpack.c.h.b16 %v874
        %v3726 = vunpack.c.l.b16 %v875
        %v3727 = vunpack.c.h.b16 %v875
        %v3728 = vunpack.c.l.b16 %v876
        %v3729 = vunpack.c.h.b16 %v876
        %v3730 = vunpack.c.l.b16 %v877
        %v3731 = vunpack.c.h.b16 %v877
        %v3732 = vunpack.c.l.b16 %v878
        %v3733 = vunpack.c.h.b16 %v878
        %v3734 = vunpack.c.l.b16 %v879
        %v3735 = vunpack.c.h.b16 %v879
        %v3736 = vunpack.c.l.b16 %v880
        %v3737 = vunpack.c.h.b16 %v880
        %v3738 = vunpack.c.l.b16 %v881
        %v3739 = vunpack.c.h.b16 %v881
        %v3740 = vunpack.c.l.b16 %v882
        %v3741 = vunpack.c.h.b16 %v882
        %v3742 = vunpack.c.l.b16 %v883
        %v3743 = vunpack.c.h.b16 %v883
        %v3744 = vunpack.c.l.b16 %v884
        %v3745 = vunpack.c.h.b16 %v884
        %v3746 = vunpack.c.l.b16 %v885
        %v3747 = vunpack.c.h.b16 %v885
        %v3748 = vunpack.c.l.b16 %v886
        %v3749 = vunpack.c.h.b16 %v886
        %v3750 = vunpack.c.l.b16 %v887
        %v3751 = vunpack.c.h.b16 %v887
        %v3752 = vunpack.c.l.b16 %v888
        %v3753 = vunpack.c.h.b16 %v888
        %v3754 = vunpack.c.l.b16 %v889
        %v3755 = vunpack.c.h.b16 %v889
        %v3756 = vunpack.c.l.b16 %v890
        %v3757 = vunpack.c.h.b16 %v890
        %v3758 = vunpack.c.l.b16 %v891
        %v3759 = vunpack.c.h.b16 %v891
        %v3760 = vunpack.c.l.b16 %v892
        %v3761 = vunpack.c.h.b16 %v892
        %v3762 = vunpack.c.l.b16 %v893
        %v3763 = vunpack.c.h.b16 %v893
        %v3764 = vunpack.c.l.b16 %v894
        %v3765 = vunpack.c.h.b16 %v894
        %v3766 = vunpack.c.l.b16 %v895
        %v3767 = vunpack.c.h.b16 %v895
        %v3768 = vunpack.c.l.b16 %v896
        %v3769 = vunpack.c.h.b16 %v896
        %v3770 = vunpack.c.l.b16 %v897
        %v3771 = vunpack.c.h.b16 %v897
        %v3772 = vunpack.c.l.b16 %v898
        %v3773 = vunpack.c.h.b16 %v898
        %v3774 = vunpack.c.l.b16 %v899
        %v3775 = vunpack.c.h.b16 %v899
        %v3776 = vunpack.c.l.b16 %v900
        %v3777 = vunpack.c.h.b16 %v900
        %v3778 = vunpack.c.l.b16 %v901
        %v3779 = vunpack.c.h.b16 %v901
        %v3780 = vunpack.c.l.b16 %v902
        %v3781 = vunpack.c.h.b16 %v902
        %v3782 = vunpack.c.l.b16 %v903
        %v3783 = vunpack.c.h.b16 %v903
        %v3784 = vunpack.c.l.b16 %v904
        %v3785 = vunpack.c.h.b16 %v904
        %v3786 = vunpack.c.l.b16 %v905
        %v3787 = vunpack.c.h.b16 %v905
        %v3788 = vunpack.c.l.b16 %v906
        %v3789 = vunpack.c.h.b16 %v906
        %v3790 = vunpack.c.l.b16 %v907
        %v3791 = vunpack.c.h.b16 %v907
        %v3792 = vunpack.c.l.b16 %v908
        %v3793 = vunpack.c.h.b16 %v908
        %v3794 = vunpack.c.l.b16 %v909
        %v3795 = vunpack.c.h.b16 %v909
        %v3796 = vunpack.c.l.b16 %v910
        %v3797 = vunpack.c.h.b16 %v910
        %v3798 = vunpack.c.l.b16 %v911
        %v3799 = vunpack.c.h.b16 %v911
        %v3800 = vunpack.c.l.b16 %v912
        %v3801 = vunpack.c.h.b16 %v912
        %v3802 = vunpack.c.l.b16 %v913
        %v3803 = vunpack.c.h.b16 %v913
        %v3804 = vunpack.c.l.b16 %v914
        %v3805 = vunpack.c.h.b16 %v914
        %v3806 = vunpack.c.l.b16 %v915
        %v3807 = vunpack.c.h.b16 %v915
        %v3808 = vunpack.c.l.b16 %v916
        %v3809 = vunpack.c.h.b16 %v916
        %v3810 = vunpack.c.l.b16 %v917
        %v3811 = vunpack.c.h.b16 %v917
        %v3812 = vunpack.c.l.b16 %v918
        %v3813 = vunpack.c.h.b16 %v918
        %v3814 = vunpack.c.l.b16 %v919
        %v3815 = vunpack.c.h.b16 %v919
        %v3816 = vunpack.c.l.b16 %v920
        %v3817 = vunpack.c.h.b16 %v920
        %v3818 = vunpack.c.l.b16 %v921
        %v3819 = vunpack.c.h.b16 %v921
        %v3820 = vunpack.c.l.b16 %v922
        %v3821 = vunpack.c.h.b16 %v922
        %v3822 = vunpack.c.l.b16 %v923
        %v3823 = vunpack.c.h.b16 %v923
        %v3824 = vunpack.c.l.b16 %v924
        %v3825 = vunpack.c.h.b16 %v924
        %v3826 = vunpack.c.l.b16 %v925
        %v3827 = vunpack.c.h.b16 %v925
        %v3828 = vunpack.c.l.b16 %v926
        %v3829 = vunpack.c.h.b16 %v926
        %v3830 = vunpack.c.l.b16 %v927
        %v3831 = vunpack.c.h.b16 %v927
        %v3832 = vunpack.c.l.b16 %v928
        %v3833 = vunpack.c.h.b16 %v928
        %v3834 = vunpack.c.l.b16 %v929
        %v3835 = vunpack.c.h.b16 %v929
        %v3836 = vunpack.c.l.b16 %v930
        %v3837 = vunpack.c.h.b16 %v930
        %v3838 = vunpack.c.l.b16 %v931
        %v3839 = vunpack.c.h.b16 %v931
        %v3840 = vunpack.c.l.b16 %v932
        %v3841 = vunpack.c.h.b16 %v932
        %v3842 = vunpack.c.l.b16 %v933
        %v3843 = vunpack.c.h.b16 %v933
        %v3844 = vunpack.c.l.b16 %v934
        %v3845 = vunpack.c.h.b16 %v934
        %v3846 = vunpack.c.l.b16 %v935
        %v3847 = vunpack.c.h.b16 %v935
        %v3848 = vunpack.c.l.b16 %v936
        %v3849 = vunpack.c.h.b16 %v936
        %v3850 = vunpack.c.l.b16 %v937
        %v3851 = vunpack.c.h.b16 %v937
        %v3852 = vunpack.c.l.b16 %v938
        %v3853 = vunpack.c.h.b16 %v938
        %v3854 = vunpack.c.l.b16 %v939
        %v3855 = vunpack.c.h.b16 %v939
        %v3856 = vunpack.c.l.b16 %v940
        %v3857 = vunpack.c.h.b16 %v940
        %v3858 = vunpack.c.l.b16 %v941
        %v3859 = vunpack.c.h.b16 %v941
        %v3860 = vunpack.c.l.b16 %v942
        %v3861 = vunpack.c.h.b16 %v942
        %v3862 = vunpack.c.l.b16 %v943
        %v3863 = vunpack.c.h.b16 %v943
        %v3864 = vunpack.c.l.b16 %v944
        %v3865 = vunpack.c.h.b16 %v944
        %v3866 = vunpack.c.l.b16 %v945
        %v3867 = vunpack.c.h.b16 %v945
        %v3868 = vunpack.c.l.b16 %v946
        %v3869 = vunpack.c.h.b16 %v946
        %v3870 = vunpack.c.l.b16 %v947
        %v3871 = vunpack.c.h.b16 %v947
        %v3872 = vunpack.c.l.b16 %v948
        %v3873 = vunpack.c.h.b16 %v948
        %v3874 = vunpack.c.l.b16 %v949
        %v3875 = vunpack.c.h.b16 %v949
        %v3876 = vunpack.c.l.b16 %v950
        %v3877 = vunpack.c.h.b16 %v950
        %v3878 = vunpack.c.l.b16 %v951
        %v3879 = vunpack.c.h.b16 %v951
        %v3880 = vunpack.c.l.b16 %v952
        %v3881 = vunpack.c.h.b16 %v952
        %v3882 = vunpack.c.l.b16 %v953
        %v3883 = vunpack.c.h.b16 %v953
        %v3884 = vunpack.c.l.b16 %v954
        %v3885 = vunpack.c.h.b16 %v954
        %v3886 = vunpack.c.l.b16 %v955
        %v3887 = vunpack.c.h.b16 %v955
        %v3888 = vunpack.c.l.b16 %v956
        %v3889 = vunpack.c.h.b16 %v956
        %v3890 = vunpack.c.l.b16 %v957
        %v3891 = vunpack.c.h.b16 %v957
        %v3892 = vunpack.c.l.b16 %v958
        %v3893 = vunpack.c.h.b16 %v958
        %v3894 = vunpack.c.l.b16 %v959
        %v3895 = vunpack.c.h.b16 %v959
        %v3896 = vunpack.c.l.b16 %v960
        %v3897 = vunpack.c.h.b16 %v960
        %v3898 = vunpack.c.l.b16 %v961
        %v3899 = vunpack.c.h.b16 %v961
        %v3900 = vunpack.c.l.b16 %v962
        %v3901 = vunpack.c.h.b16 %v962
        %v3902 = vunpack.c.l.b16 %v963
        %v3903 = vunpack.c.h.b16 %v963
        %v3904 = vunpack.c.l.b16 %v964
        %v3905 = vunpack.c.h.b16 %v964
        %v3906 = vunpack.c.l.b16 %v965
        %v3907 = vunpack.c.h.b16 %v965
        %v3908 = vunpack.c.l.b16 %v966
        %v3909 = vunpack.c.h.b16 %v966
        %v3910 = vunpack.c.l.b16 %v967
        %v3911 = vunpack.c.h.b16 %v967
        %v3912 = vunpack.c.l.b16 %v968
        %v3913 = vunpack.c.h.b16 %v968
        %v3914 = vunpack.c.l.b16 %v969
        %v3915 = vunpack.c.h.b16 %v969
        %v3916 = vunpack.c.l.b16 %v970
        %v3917 = vunpack.c.h.b16 %v970
        %v3918 = vunpack.c.l.b16 %v971
        %v3919 = vunpack.c.h.b16 %v971
        %v3920 = vunpack.c.l.b16 %v972
        %v3921 = vunpack.c.h.b16 %v972
        %v3922 = vunpack.c.l.b16 %v973
        %v3923 = vunpack.c.h.b16 %v973
        %v3924 = vunpack.c.l.b16 %v974
        %v3925 = vunpack.c.h.b16 %v974
        %v3926 = vunpack.c.l.b16 %v975
        %v3927 = vunpack.c.h.b16 %v975
        %v3928 = vunpack.c.l.b16 %v976
        %v3929 = vunpack.c.h.b16 %v976
        %v3930 = vunpack.c.l.b16 %v977
        %v3931 = vunpack.c.h.b16 %v977
        %v3932 = vunpack.c.l.b16 %v978
        %v3933 = vunpack.c.h.b16 %v978
        %v3934 = vunpack.c.l.b16 %v979
        %v3935 = vunpack.c.h.b16 %v979
        %v3936 = vunpack.c.l.b16 %v980
        %v3937 = vunpack.c.h.b16 %v980
        %v3938 = vunpack.c.l.b16 %v981
        %v3939 = vunpack.c.h.b16 %v981
        %v3940 = vunpack.c.l.b16 %v982
        %v3941 = vunpack.c.h.b16 %v982
        %v3942 = vunpack.c.l.b16 %v983
        %v3943 = vunpack.c.h.b16 %v983
        %v3944 = vunpack.c.l.b16 %v984
        %v3945 = vunpack.c.h.b16 %v984
        %v3946 = vunpack.c.l.b16 %v985
        %v3947 = vunpack.c.h.b16 %v985
        %v3948 = vunpack.c.l.b16 %v986
        %v3949 = vunpack.c.h.b16 %v986
        %v3950 = vunpack.c.l.b16 %v987
        %v3951 = vunpack.c.h.b16 %v987
        %v3952 = vunpack.c.l.b16 %v988
        %v3953 = vunpack.c.h.b16 %v988
        %v3954 = vunpack.c.l.b16 %v989
        %v3955 = vunpack.c.h.b16 %v989
        %v3956 = vunpack.c.l.b16 %v990
        %v3957 = vunpack.c.h.b16 %v990
        %v3958 = vunpack.c.l.b16 %v991
        %v3959 = vunpack.c.h.b16 %v991
        %v3960 = vunpack.c.l.b16 %v992
        %v3961 = vunpack.c.h.b16 %v992
        %v3962 = vunpack.c.l.b16 %v993
        %v3963 = vunpack.c.h.b16 %v993
        %v3964 = vunpack.c.l.b16 %v994
        %v3965 = vunpack.c.h.b16 %v994
        %v3966 = vunpack.c.l.b16 %v995
        %v3967 = vunpack.c.h.b16 %v995
        %v3968 = vunpack.c.l.b16 %v996
        %v3969 = vunpack.c.h.b16 %v996
        %v3970 = vunpack.c.l.b16 %v997
        %v3971 = vunpack.c.h.b16 %v997
        %v3972 = vunpack.c.l.b16 %v998
        %v3973 = vunpack.c.h.b16 %v998
        %v3974 = vunpack.c.l.b16 %v999
        %v3975 = vunpack.c.h.b16 %v999
        %v3976 = vunpack.c.l.b16 %v1000
        %v3977 = vunpack.c.h.b16 %v1000
        %v3978 = vunpack.c.l.b16 %v1001
        %v3979 = vunpack.c.h.b16 %v1001
        %v3980 = vunpack.c.l.b16 %v1002
        %v3981 = vunpack.c.h.b16 %v1002
        %v3982 = vunpack.c.l.b16 %v1003
        %v3983 = vunpack.c.h.b16 %v1003
        %v3984 = vunpack.c.l.b16 %v1004
        %v3985 = vunpack.c.h.b16 %v1004
        %v3986 = vunpack.c.l.b16 %v1005
        %v3987 = vunpack.c.h.b16 %v1005
        %v3988 = vunpack.c.l.b16 %v1006
        %v3989 = vunpack.c.h.b16 %v1006
        %v3990 = vunpack.c.l.b16 %v1007
        %v3991 = vunpack.c.h.b16 %v1007
        %v3992 = vunpack.c.l.b16 %v1008
        %v3993 = vunpack.c.h.b16 %v1008
        %v3994 = vunpack.c.l.b16 %v1009
        %v3995 = vunpack.c.h.b16 %v1009
        %v3996 = vunpack.c.l.b16 %v1010
        %v3997 = vunpack.c.h.b16 %v1010
        %v3998 = vunpack.c.l.b16 %v1011
        %v3999 = vunpack.c.h.b16 %v1011
        %v4000 = vunpack.c.l.b16 %v1012
        %v4001 = vunpack.c.h.b16 %v1012
        %v4002 = vunpack.c.l.b16 %v1013
        %v4003 = vunpack.c.h.b16 %v1013
        %v4004 = vunpack.c.l.b16 %v1014
        %v4005 = vunpack.c.h.b16 %v1014
        %v4006 = vunpack.c.l.b16 %v1015
        %v4007 = vunpack.c.h.b16 %v1015
        %v4008 = vunpack.c.l.b16 %v1016
        %v4009 = vunpack.c.h.b16 %v1016
        %v4010 = vunpack.c.l.b16 %v1017
        %v4011 = vunpack.c.h.b16 %v1017
        %v4012 = vunpack.c.l.b16 %v1018
        %v4013 = vunpack.c.h.b16 %v1018
        %v4014 = vunpack.c.l.b16 %v1019
        %v4015 = vunpack.c.h.b16 %v1019
        %v4016 = vunpack.c.l.b16 %v1020
        %v4017 = vunpack.c.h.b16 %v1020
        %v4018 = vunpack.c.l.b16 %v1021
        %v4019 = vunpack.c.h.b16 %v1021
        %v4020 = vunpack.c.l.b16 %v1022
        %v4021 = vunpack.c.h.b16 %v1022
        %v4022 = vunpack.c.l.b16 %v1023
        %v4023 = vunpack.c.h.b16 %v1023
        %v4024 = vunpack.c.l.b16 %v1024
        %v4025 = vunpack.c.h.b16 %v1024
        %v4026 = vunpack.c.l.b16 %v1025
        %v4027 = vunpack.c.h.b16 %v1025
        %v4028 = vunpack.c.l.b16 %v1026
        %v4029 = vunpack.c.h.b16 %v1026
        %v4030 = vunpack.c.l.b16 %v1027
        %v4031 = vunpack.c.h.b16 %v1027
        %v4032 = vunpack.c.l.b16 %v1028
        %v4033 = vunpack.c.h.b16 %v1028
        %v4034 = vunpack.c.l.b16 %v1029
        %v4035 = vunpack.c.h.b16 %v1029
        %v4036 = vunpack.c.l.b16 %v1030
        %v4037 = vunpack.c.h.b16 %v1030
        %v4038 = vunpack.c.l.b16 %v1031
        %v4039 = vunpack.c.h.b16 %v1031
        %v4040 = vunpack.c.l.b16 %v1032
        %v4041 = vunpack.c.h.b16 %v1032
        %v4042 = vunpack.c.l.b16 %v1033
        %v4043 = vunpack.c.h.b16 %v1033
        %v4044 = vunpack.c.l.b16 %v1034
        %v4045 = vunpack.c.h.b16 %v1034
        %v4046 = vunpack.c.l.b16 %v1035
        %v4047 = vunpack.c.h.b16 %v1035
        %v4048 = vunpack.c.l.b16 %v1036
        %v4049 = vunpack.c.h.b16 %v1036
        %v4050 = vunpack.c.l.b16 %v1037
        %v4051 = vunpack.c.h.b16 %v1037
        %v4052 = vunpack.c.l.b16 %v1038
        %v4053 = vunpack.c.h.b16 %v1038
        %v4054 = vunpack.c.l.b16 %v1039
        %v4055 = vunpack.c.h.b16 %v1039
        %v4056 = vunpack.c.l.b16 %v1040
        %v4057 = vunpack.c.h.b16 %v1040
        %v4058 = vunpack.c.l.b16 %v1041
        %v4059 = vunpack.c.h.b16 %v1041
        %v4060 = vunpack.c.l.b16 %v1042
        %v4061 = vunpack.c.h.b16 %v1042
        %v4062 = vunpack.c.l.b16 %v1043
        %v4063 = vunpack.c.h.b16 %v1043
        %v4064 = vunpack.c.l.b16 %v1044
        %v4065 = vunpack.c.h.b16 %v1044
        %v4066 = vunpack.c.l.b16 %v1045
        %v4067 = vunpack.c.h.b16 %v1045
        %v4068 = vunpack.c.l.b16 %v1046
        %v4069 = vunpack.c.h.b16 %v1046
        %v4070 = vunpack.c.l.b16 %v1047
        %v4071 = vunpack.c.h.b16 %v1047
        %v4072 = vunpack.c.l.b16 %v1048
        %v4073 = vunpack.c.h.b16 %v1048
        %v4074 = vunpack.c.l.b16 %v1049
        %v4075 = vunpack.c.h.b16 %v1049
        %v4076 = vunpack.c.l.b16 %v1050
        %v4077 = vunpack.c.h.b16 %v1050
        %v4078 = vunpack.c.l.b16 %v1051
        %v4079 = vunpack.c.h.b16 %v1051
        %v4080 = vunpack.c.l.b16 %v1052
        %v4081 = vunpack.c.h.b16 %v1052
        %v4082 = vunpack.c.l.b16 %v1053
        %v4083 = vunpack.c.h.b16 %v1053
        %v4084 = vunpack.c.l.b16 %v1054
        %v4085 = vunpack.c.h.b16 %v1054
        %v4086 = vunpack.c.l.b16 %v1055
        %v4087 = vunpack.c.h.b16 %v1055
        %v4088 = vunpack.c.l.b16 %v1056
        %v4089 = vunpack.c.h.b16 %v1056
        %v4090 = vunpack.c.l.b16 %v1057
        %v4091 = vunpack.c.h.b16 %v1057
        %v4092 = vunpack.c.l.b16 %v1058
        %v4093 = vunpack.c.h.b16 %v1058
        %v4094 = vunpack.c.l.b16 %v1059
        %v4095 = vunpack.c.h.b16 %v1059
        %v4096 = vunpack.c.l.b16 %v1060
        %v4097 = vunpack.c.h.b16 %v1060
        %v4098 = vunpack.c.l.b16 %v1061
        %v4099 = vunpack.c.h.b16 %v1061
        %v4100 = vunpack.c.l.b16 %v1062
        %v4101 = vunpack.c.h.b16 %v1062
        %v4102 = vunpack.c.l.b16 %v1063
        %v4103 = vunpack.c.h.b16 %v1063
        %v4104 = vunpack.c.l.b16 %v1064
        %v4105 = vunpack.c.h.b16 %v1064
        %v4106 = vunpack.c.l.b16 %v1065
        %v4107 = vunpack.c.h.b16 %v1065
        %v4108 = vunpack.c.l.b16 %v1066
        %v4109 = vunpack.c.h.b16 %v1066
        %v4110 = vunpack.c.l.b16 %v1067
        %v4111 = vunpack.c.h.b16 %v1067
        %v4112 = vunpack.c.l.b16 %v1068
        %v4113 = vunpack.c.h.b16 %v1068
        %v4114 = vunpack.c.l.b16 %v1069
        %v4115 = vunpack.c.h.b16 %v1069
        %v4116 = vunpack.c.l.b16 %v1070
        %v4117 = vunpack.c.h.b16 %v1070
        %v4118 = vunpack.c.l.b16 %v1071
        %v4119 = vunpack.c.h.b16 %v1071
        %v4120 = vunpack.c.l.b16 %v1072
        %v4121 = vunpack.c.h.b16 %v1072
        %v4122 = vunpack.c.l.b16 %v1073
        %v4123 = vunpack.c.h.b16 %v1073
        %v4124 = vunpack.c.l.b16 %v1074
        %v4125 = vunpack.c.h.b16 %v1074
        %v4126 = vunpack.c.l.b16 %v1075
        %v4127 = vunpack.c.h.b16 %v1075
        %v4128 = vunpack.c.l.b16 %v1076
        %v4129 = vunpack.c.h.b16 %v1076
        %v4130 = vunpack.c.l.b16 %v1077
        %v4131 = vunpack.c.h.b16 %v1077
        %v4132 = vunpack.c.l.b16 %v1078
        %v4133 = vunpack.c.h.b16 %v1078
        %v4134 = vunpack.c.l.b16 %v1079
        %v4135 = vunpack.c.h.b16 %v1079
        %v4136 = vunpack.c.l.b16 %v1080
        %v4137 = vunpack.c.h.b16 %v1080
        %v4138 = vunpack.c.l.b16 %v1081
        %v4139 = vunpack.c.h.b16 %v1081
        %v4140 = vunpack.c.l.b16 %v1082
        %v4141 = vunpack.c.h.b16 %v1082
        %v4142 = vunpack.c.l.b16 %v1083
        %v4143 = vunpack.c.h.b16 %v1083
        %v4144 = vunpack.c.l.b16 %v1084
        %v4145 = vunpack.c.h.b16 %v1084
        %v4146 = vunpack.c.l.b16 %v1085
        %v4147 = vunpack.c.h.b16 %v1085
        %v4148 = vunpack.c.l.b16 %v1086
        %v4149 = vunpack.c.h.b16 %v1086
        %v4150 = vunpack.c.l.b16 %v1087
        %v4151 = vunpack.c.h.b16 %v1087
        %v4152 = vunpack.c.l.b16 %v1088
        %v4153 = vunpack.c.h.b16 %v1088
        %v4154 = vunpack.c.l.b16 %v1089
        %v4155 = vunpack.c.h.b16 %v1089
        %v4156 = vunpack.c.l.b16 %v1090
        %v4157 = vunpack.c.h.b16 %v1090
        %v4158 = vunpack.c.l.b16 %v1091
        %v4159 = vunpack.c.h.b16 %v1091
        %v4160 = vunpack.c.l.b16 %v1092
        %v4161 = vunpack.c.h.b16 %v1092
        %v4162 = vunpack.c.l.b16 %v1093
        %v4163 = vunpack.c.h.b16 %v1093
        %v4164 = vunpack.c.l.b16 %v1094
        %v4165 = vunpack.c.h.b16 %v1094
        %v4166 = vunpack.c.l.b16 %v1095
        %v4167 = vunpack.c.h.b16 %v1095
        %v4168 = vunpack.c.l.b16 %v1096
        %v4169 = vunpack.c.h.b16 %v1096
        %v4170 = vunpack.c.l.b16 %v1097
        %v4171 = vunpack.c.h.b16 %v1097
        %v4172 = vunpack.c.l.b16 %v1098
        %v4173 = vunpack.c.h.b16 %v1098
        %v4174 = vunpack.c.l.b16 %v1099
        %v4175 = vunpack.c.h.b16 %v1099
        %v4176 = vunpack.c.l.b16 %v1100
        %v4177 = vunpack.c.h.b16 %v1100
        %v4178 = vunpack.c.l.b16 %v1101
        %v4179 = vunpack.c.h.b16 %v1101
        %v4180 = vunpack.c.l.b16 %v1102
        %v4181 = vunpack.c.h.b16 %v1102
        %v4182 = vunpack.c.l.b16 %v1103
        %v4183 = vunpack.c.h.b16 %v1103
        %v4184 = vunpack.c.l.b16 %v1104
        %v4185 = vunpack.c.h.b16 %v1104
        %v4186 = vunpack.c.l.b16 %v1105
        %v4187 = vunpack.c.h.b16 %v1105
        %v4188 = vunpack.c.l.b16 %v1106
        %v4189 = vunpack.c.h.b16 %v1106
        %v4190 = vunpack.c.l.b16 %v1107
        %v4191 = vunpack.c.h.b16 %v1107
        %v4192 = vunpack.c.l.b16 %v1108
        %v4193 = vunpack.c.h.b16 %v1108
        %v4194 = vunpack.c.l.b16 %v1109
        %v4195 = vunpack.c.h.b16 %v1109
        %v4196 = vunpack.c.l.b16 %v1110
        %v4197 = vunpack.c.h.b16 %v1110
        %v4198 = vunpack.c.l.b16 %v1111
        %v4199 = vunpack.c.h.b16 %v1111
        %v4200 = vunpack.c.l.b16 %v1112
        %v4201 = vunpack.c.h.b16 %v1112
        %v4202 = vunpack.c.l.b16 %v1113
        %v4203 = vunpack.c.h.b16 %v1113
        %v4204 = vunpack.c.l.b16 %v1114
        %v4205 = vunpack.c.h.b16 %v1114
        %v4206 = vunpack.c.l.b16 %v1115
        %v4207 = vunpack.c.h.b16 %v1115
        %v4208 = vunpack.c.l.b16 %v1116
        %v4209 = vunpack.c.h.b16 %v1116
        %v4210 = vunpack.c.l.b16 %v1117
        %v4211 = vunpack.c.h.b16 %v1117
        %v4212 = vunpack.c.l.b16 %v1118
        %v4213 = vunpack.c.h.b16 %v1118
        %v4214 = vunpack.c.l.b16 %v1119
        %v4215 = vunpack.c.h.b16 %v1119
        %v4216 = vunpack.c.l.b16 %v1120
        %v4217 = vunpack.c.h.b16 %v1120
        %v4218 = vunpack.c.l.b16 %v1121
        %v4219 = vunpack.c.h.b16 %v1121
        %v4220 = vunpack.c.l.b16 %v1122
        %v4221 = vunpack.c.h.b16 %v1122
        %v4222 = vunpack.c.l.b16 %v1123
        %v4223 = vunpack.c.h.b16 %v1123
        %v4224 = vunpack.c.l.b16 %v1124
        %v4225 = vunpack.c.h.b16 %v1124
        %v4226 = vunpack.c.l.b16 %v1125
        %v4227 = vunpack.c.h.b16 %v1125
        %v4228 = vunpack.c.l.b16 %v1126
        %v4229 = vunpack.c.h.b16 %v1126
        %v4230 = vunpack.c.l.b16 %v1127
        %v4231 = vunpack.c.h.b16 %v1127
        %v4232 = vunpack.c.l.b16 %v1128
        %v4233 = vunpack.c.h.b16 %v1128
        %v4234 = vunpack.c.l.b16 %v1129
        %v4235 = vunpack.c.h.b16 %v1129
        %v4236 = vunpack.c.l.b16 %v1130
        %v4237 = vunpack.c.h.b16 %v1130
        %v4238 = vunpack.c.l.b16 %v1131
        %v4239 = vunpack.c.h.b16 %v1131
        %v4240 = vunpack.c.l.b16 %v1132
        %v4241 = vunpack.c.h.b16 %v1132
        %v4242 = vunpack.c.l.b16 %v1133
        %v4243 = vunpack.c.h.b16 %v1133
        %v4244 = vunpack.c.l.b16 %v1134
        %v4245 = vunpack.c.h.b16 %v1134
        %v4246 = vunpack.c.l.b16 %v1135
        %v4247 = vunpack.c.h.b16 %v1135
        %v4248 = vunpack.c.l.b16 %v1136
        %v4249 = vunpack.c.h.b16 %v1136
        %v4250 = vunpack.c.l.b16 %v1137
        %v4251 = vunpack.c.h.b16 %v1137
        %v4252 = vunpack.c.l.b16 %v1138
        %v4253 = vunpack.c.h.b16 %v1138
        %v4254 = vunpack.c.l.b16 %v1139
        %v4255 = vunpack.c.h.b16 %v1139
        %v4256 = vunpack.c.l.b16 %v1140
        %v4257 = vunpack.c.h.b16 %v1140
        %v4258 = vunpack.c.l.b16 %v1141
        %v4259 = vunpack.c.h.b16 %v1141
        %v4260 = vunpack.c.l.b16 %v1142
        %v4261 = vunpack.c.h.b16 %v1142
        %v4262 = vunpack.c.l.b16 %v1143
        %v4263 = vunpack.c.h.b16 %v1143
        %v4264 = vunpack.c.l.b16 %v1144
        %v4265 = vunpack.c.h.b16 %v1144
        %v4266 = vunpack.c.l.b16 %v1145
        %v4267 = vunpack.c.h.b16 %v1145
        %v4268 = vunpack.c.l.b16 %v1146
        %v4269 = vunpack.c.h.b16 %v1146
        %v4270 = vunpack.c.l.b16 %v1147
        %v4271 = vunpack.c.h.b16 %v1147
        %v4272 = vunpack.c.l.b16 %v1148
        %v4273 = vunpack.c.h.b16 %v1148
        %v4274 = vunpack.c.l.b16 %v1149
        %v4275 = vunpack.c.h.b16 %v1149
        %v4276 = vunpack.c.l.b16 %v1150
        %v4277 = vunpack.c.h.b16 %v1150
        %v4278 = vunpack.c.l.b16 %v1151
        %v4279 = vunpack.c.h.b16 %v1151
        %v4280 = vunpack.c.l.b16 %v1152
        %v4281 = vunpack.c.h.b16 %v1152
        %v4282 = vunpack.c.l.b16 %v1153
        %v4283 = vunpack.c.h.b16 %v1153
        %v4284 = vunpack.c.l.b16 %v1154
        %v4285 = vunpack.c.h.b16 %v1154
        %v4286 = vunpack.c.l.b16 %v1155
        %v4287 = vunpack.c.h.b16 %v1155
        %v4288 = vunpack.c.l.b16 %v1156
        %v4289 = vunpack.c.h.b16 %v1156
        %v4290 = vunpack.c.l.b16 %v1157
        %v4291 = vunpack.c.h.b16 %v1157
        %v4292 = vunpack.c.l.b16 %v1158
        %v4293 = vunpack.c.h.b16 %v1158
        %v4294 = vunpack.c.l.b16 %v1159
        %v4295 = vunpack.c.h.b16 %v1159
        %v4296 = vunpack.c.l.b16 %v1160
        %v4297 = vunpack.c.h.b16 %v1160
        %v4298 = vunpack.c.l.b16 %v1161
        %v4299 = vunpack.c.h.b16 %v1161
        %v4300 = vunpack.c.l.b16 %v1162
        %v4301 = vunpack.c.h.b16 %v1162
        %v4302 = vunpack.c.l.b16 %v1163
        %v4303 = vunpack.c.h.b16 %v1163
        %v4304 = vunpack.c.l.b16 %v1164
        %v4305 = vunpack.c.h.b16 %v1164
        %v4306 = vunpack.c.l.b16 %v1165
        %v4307 = vunpack.c.h.b16 %v1165
        %v4308 = vunpack.c.l.b16 %v1166
        %v4309 = vunpack.c.h.b16 %v1166
        %v4310 = vunpack.c.l.b16 %v1167
        %v4311 = vunpack.c.h.b16 %v1167
        %v4312 = vunpack.c.l.b16 %v1168
        %v4313 = vunpack.c.h.b16 %v1168
        %v4314 = vunpack.c.l.b16 %v1169
        %v4315 = vunpack.c.h.b16 %v1169
        %v4316 = vunpack.c.l.b16 %v1170
        %v4317 = vunpack.c.h.b16 %v1170
        %v4318 = vunpack.c.l.b16 %v1171
        %v4319 = vunpack.c.h.b16 %v1171
        %v4320 = vunpack.c.l.b16 %v1172
        %v4321 = vunpack.c.h.b16 %v1172
        %v4322 = vunpack.c.l.b16 %v1173
        %v4323 = vunpack.c.h.b16 %v1173
        %v4324 = vunpack.c.l.b16 %v1174
        %v4325 = vunpack.c.h.b16 %v1174
        %v4326 = vunpack.c.l.b16 %v1175
        %v4327 = vunpack.c.h.b16 %v1175
        %v4328 = vunpack.c.l.b16 %v1176
        %v4329 = vunpack.c.h.b16 %v1176
        %v4330 = vunpack.c.l.b16 %v1177
        %v4331 = vunpack.c.h.b16 %v1177
        %v4332 = vunpack.c.l.b16 %v1178
        %v4333 = vunpack.c.h.b16 %v1178
        %v4334 = vunpack.c.l.b16 %v1179
        %v4335 = vunpack.c.h.b16 %v1179
        %v4336 = vunpack.c.l.b16 %v1180
        %v4337 = vunpack.c.h.b16 %v1180
        %v4338 = vunpack.c.l.b16 %v1181
        %v4339 = vunpack.c.h.b16 %v1181
        %v4340 = vunpack.c.l.b16 %v1182
        %v4341 = vunpack.c.h.b16 %v1182
        %v4342 = vunpack.c.l.b16 %v1183
        %v4343 = vunpack.c.h.b16 %v1183
        %v4344 = vunpack.c.l.b16 %v1184
        %v4345 = vunpack.c.h.b16 %v1184
        %v4346 = vunpack.c.l.b16 %v1185
        %v4347 = vunpack.c.h.b16 %v1185
        %v4348 = vunpack.c.l.b16 %v1186
        %v4349 = vunpack.c.h.b16 %v1186
        %v4350 = vunpack.c.l.b16 %v1187
        %v4351 = vunpack.c.h.b16 %v1187
        %v4352 = vunpack.c.l.b16 %v1188
        %v4353 = vunpack.c.h.b16 %v1188
        %v4354 = vunpack.c.l.b16 %v1189
        %v4355 = vunpack.c.h.b16 %v1189
        %v4356 = vunpack.c.l.b16 %v1190
        %v4357 = vunpack.c.h.b16 %v1190
        %v4358 = vunpack.c.l.b16 %v1191
        %v4359 = vunpack.c.h.b16 %v1191
        %v4360 = vunpack.c.l.b16 %v1192
        %v4361 = vunpack.c.h.b16 %v1192
        %v4362 = vunpack.c.l.b16 %v1193
        %v4363 = vunpack.c.h.b16 %v1193
        %v4364 = vunpack.c.l.b16 %v1194
        %v4365 = vunpack.c.h.b16 %v1194
        %v4366 = vunpack.c.l.b16 %v1195
        %v4367 = vunpack.c.h.b16 %v1195
        %v4368 = vunpack.c.l.b16 %v1196
        %v4369 = vunpack.c.h.b16 %v1196
        %v4370 = vunpack.c.l.b16 %v1197
        %v4371 = vunpack.c.h.b16 %v1197
        %v4372 = vunpack.c.l.b16 %v1198
        %v4373 = vunpack.c.h.b16 %v1198
        %v4374 = vunpack.c.l.b16 %v1199
        %v4375 = vunpack.c.h.b16 %v1199
        %v4376 = vunpack.c.l.b16 %v1200
        %v4377 = vunpack.c.h.b16 %v1200
        %v4378 = vunpack.c.l.b16 %v1201
        %v4379 = vunpack.c.h.b16 %v1201
        %v4380 = vunpack.c.l.b16 %v1202
        %v4381 = vunpack.c.h.b16 %v1202
        %v4382 = vunpack.c.l.b16 %v1203
        %v4383 = vunpack.c.h.b16 %v1203
        %v4384 = vunpack.c.l.b16 %v1204
        %v4385 = vunpack.c.h.b16 %v1204
        %v4386 = vunpack.c.l.b16 %v1205
        %v4387 = vunpack.c.h.b16 %v1205
        %v4388 = vunpack.c.l.b16 %v1206
        %v4389 = vunpack.c.h.b16 %v1206
        %v4390 = vunpack.c.l.b16 %v1207
        %v4391 = vunpack.c.h.b16 %v1207
        %v4392 = vunpack.c.l.b16 %v1208
        %v4393 = vunpack.c.h.b16 %v1208
        %v4394 = vunpack.c.l.b16 %v1209
        %v4395 = vunpack.c.h.b16 %v1209
        %v4396 = vunpack.c.l.b16 %v1210
        %v4397 = vunpack.c.h.b16 %v1210
        %v4398 = vunpack.c.l.b16 %v1211
        %v4399 = vunpack.c.h.b16 %v1211
        %v4400 = vunpack.c.l.b16 %v1212
        %v4401 = vunpack.c.h.b16 %v1212
        %v4402 = vunpack.c.l.b16 %v1213
        %v4403 = vunpack.c.h.b16 %v1213
        %v4404 = vunpack.c.l.b16 %v1214
        %v4405 = vunpack.c.h.b16 %v1214
        %v4406 = vunpack.c.l.b16 %v1215
        %v4407 = vunpack.c.h.b16 %v1215
        %v4408 = vunpack.c.l.b16 %v1216
        %v4409 = vunpack.c.h.b16 %v1216
        %v4410 = vunpack.c.l.b16 %v1217
        %v4411 = vunpack.c.h.b16 %v1217
        %v4412 = vunpack.c.l.b16 %v1218
        %v4413 = vunpack.c.h.b16 %v1218
        %v4414 = vunpack.c.l.b16 %v1219
        %v4415 = vunpack.c.h.b16 %v1219
        %v4416 = vunpack.c.l.b16 %v1220
        %v4417 = vunpack.c.h.b16 %v1220
        %v4418 = vunpack.c.l.b16 %v1221
        %v4419 = vunpack.c.h.b16 %v1221
        %v4420 = vunpack.c.l.b16 %v1222
        %v4421 = vunpack.c.h.b16 %v1222
        %v4422 = vunpack.c.l.b16 %v1223
        %v4423 = vunpack.c.h.b16 %v1223
        %v4424 = vunpack.c.l.b16 %v1224
        %v4425 = vunpack.c.h.b16 %v1224
        %v4426 = vunpack.c.l.b16 %v1225
        %v4427 = vunpack.c.h.b16 %v1225
        %v4428 = vunpack.c.l.b16 %v1226
        %v4429 = vunpack.c.h.b16 %v1226
        %v4430 = vunpack.c.l.b16 %v1227
        %v4431 = vunpack.c.h.b16 %v1227
        %v4432 = vunpack.c.l.b16 %v1228
        %v4433 = vunpack.c.h.b16 %v1228
        %v4434 = vunpack.c.l.b16 %v1229
        %v4435 = vunpack.c.h.b16 %v1229
        %v4436 = vunpack.c.l.b16 %v1230
        %v4437 = vunpack.c.h.b16 %v1230
        %v4438 = vunpack.c.l.b16 %v1231
        %v4439 = vunpack.c.h.b16 %v1231
        %v4440 = vunpack.c.l.b16 %v1232
        %v4441 = vunpack.c.h.b16 %v1232
        %v4442 = vunpack.c.l.b16 %v1233
        %v4443 = vunpack.c.h.b16 %v1233
        %v4444 = vunpack.c.l.b16 %v1234
        %v4445 = vunpack.c.h.b16 %v1234
        %v4446 = vunpack.c.l.b16 %v1235
        %v4447 = vunpack.c.h.b16 %v1235
        %v4448 = vunpack.c.l.b16 %v1236
        %v4449 = vunpack.c.h.b16 %v1236
        %v4450 = vunpack.c.l.b16 %v1237
        %v4451 = vunpack.c.h.b16 %v1237
        %v4452 = vunpack.c.l.b16 %v1238
        %v4453 = vunpack.c.h.b16 %v1238
        %v4454 = vunpack.c.l.b16 %v1239
        %v4455 = vunpack.c.h.b16 %v1239
        %v4456 = vunpack.c.l.b16 %v1240
        %v4457 = vunpack.c.h.b16 %v1240
        %v4458 = vunpack.c.l.b16 %v1241
        %v4459 = vunpack.c.h.b16 %v1241
        %v4460 = vunpack.c.l.b16 %v1242
        %v4461 = vunpack.c.h.b16 %v1242
        %v4462 = vunpack.c.l.b16 %v1243
        %v4463 = vunpack.c.h.b16 %v1243
        %v4464 = vunpack.c.l.b16 %v1244
        %v4465 = vunpack.c.h.b16 %v1244
        %v4466 = vunpack.c.l.b16 %v1245
        %v4467 = vunpack.c.h.b16 %v1245
        %v4468 = vunpack.c.l.b16 %v1246
        %v4469 = vunpack.c.h.b16 %v1246
        %v4470 = vunpack.c.l.b16 %v1247
        %v4471 = vunpack.c.h.b16 %v1247
        %v4472 = vunpack.c.l.b16 %v1248
        %v4473 = vunpack.c.h.b16 %v1248
        %v4474 = vunpack.c.l.b16 %v1249
        %v4475 = vunpack.c.h.b16 %v1249
        %v4476 = vunpack.c.l.b16 %v1250
        %v4477 = vunpack.c.h.b16 %v1250
        %v4478 = vunpack.c.l.b16 %v1251
        %v4479 = vunpack.c.h.b16 %v1251
        %v4480 = vunpack.c.l.b16 %v1252
        %v4481 = vunpack.c.h.b16 %v1252
        %v4482 = vunpack.c.l.b16 %v1253
        %v4483 = vunpack.c.h.b16 %v1253
        %v4484 = vunpack.c.l.b16 %v1254
        %v4485 = vunpack.c.h.b16 %v1254
        %v4486 = vunpack.c.l.b16 %v1255
        %v4487 = vunpack.c.h.b16 %v1255
        %v4488 = vunpack.c.l.b16 %v1256
        %v4489 = vunpack.c.h.b16 %v1256
        %v4490 = vunpack.c.l.b16 %v1257
        %v4491 = vunpack.c.h.b16 %v1257
        %v4492 = vunpack.c.l.b16 %v1258
        %v4493 = vunpack.c.h.b16 %v1258
        %v4494 = vunpack.c.l.b16 %v1259
        %v4495 = vunpack.c.h.b16 %v1259
        %v4496 = vunpack.c.l.b16 %v1260
        %v4497 = vunpack.c.h.b16 %v1260
        %v4498 = vunpack.c.l.b16 %v1261
        %v4499 = vunpack.c.h.b16 %v1261
        %v4500 = vunpack.c.l.b16 %v1262
        %v4501 = vunpack.c.h.b16 %v1262
        %v4502 = vunpack.c.l.b16 %v1263
        %v4503 = vunpack.c.h.b16 %v1263
        %v4504 = vunpack.c.l.b16 %v1264
        %v4505 = vunpack.c.h.b16 %v1264
        %v4506 = vunpack.c.l.b16 %v1265
        %v4507 = vunpack.c.h.b16 %v1265
        %v4508 = vunpack.c.l.b16 %v1266
        %v4509 = vunpack.c.h.b16 %v1266
        %v4510 = vunpack.c.l.b16 %v1267
        %v4511 = vunpack.c.h.b16 %v1267
        %v4512 = vunpack.c.l.b16 %v1268
        %v4513 = vunpack.c.h.b16 %v1268
        %v4514 = vunpack.c.l.b16 %v1269
        %v4515 = vunpack.c.h.b16 %v1269
        %v4516 = vunpack.c.l.b16 %v1270
        %v4517 = vunpack.c.h.b16 %v1270
        %v4518 = vunpack.c.l.b16 %v1271
        %v4519 = vunpack.c.h.b16 %v1271
        %v4520 = vunpack.c.l.b16 %v1272
        %v4521 = vunpack.c.h.b16 %v1272
        %v4522 = vunpack.c.l.b16 %v1273
        %v4523 = vunpack.c.h.b16 %v1273
        %v4524 = vunpack.c.l.b16 %v1274
        %v4525 = vunpack.c.h.b16 %v1274
        %v4526 = vunpack.c.l.b16 %v1275
        %v4527 = vunpack.c.h.b16 %v1275
        %v4528 = vunpack.c.l.b16 %v1276
        %v4529 = vunpack.c.h.b16 %v1276
        %v4530 = vunpack.c.l.b16 %v1277
        %v4531 = vunpack.c.h.b16 %v1277
        %v4532 = vunpack.c.l.b16 %v1278
        %v4533 = vunpack.c.h.b16 %v1278
        %v4534 = vunpack.c.l.b16 %v1279
        %v4535 = vunpack.c.h.b16 %v1279
        %v4536 = vunpack.c.l.b16 %v1280
        %v4537 = vunpack.c.h.b16 %v1280
        %v4538 = vunpack.c.l.b16 %v1281
        %v4539 = vunpack.c.h.b16 %v1281
        %v4540 = vunpack.c.l.b16 %v1282
        %v4541 = vunpack.c.h.b16 %v1282
        %v4542 = vunpack.c.l.b16 %v1283
        %v4543 = vunpack.c.h.b16 %v1283
        %v4544 = vunpack.c.l.b16 %v1284
        %v4545 = vunpack.c.h.b16 %v1284
        %v4546 = vunpack.c.l.b16 %v1285
        %v4547 = vunpack.c.h.b16 %v1285
        %v4548 = vunpack.c.l.b16 %v1286
        %v4549 = vunpack.c.h.b16 %v1286
        %v4550 = vunpack.c.l.b16 %v1287
        %v4551 = vunpack.c.h.b16 %v1287
        %v4552 = vunpack.c.l.b16 %v1288
        %v4553 = vunpack.c.h.b16 %v1288
        %v4554 = vunpack.c.l.b16 %v1289
        %v4555 = vunpack.c.h.b16 %v1289
        %v4556 = vunpack.c.l.b16 %v1290
        %v4557 = vunpack.c.h.b16 %v1290
        %v4558 = vunpack.c.l.b16 %v1291
        %v4559 = vunpack.c.h.b16 %v1291
        %v4560 = vunpack.c.l.b16 %v1292
        %v4561 = vunpack.c.h.b16 %v1292
        %v4562 = vunpack.c.l.b16 %v1293
        %v4563 = vunpack.c.h.b16 %v1293
        %v4564 = vunpack.c.l.b16 %v1294
        %v4565 = vunpack.c.h.b16 %v1294
        %v4566 = vunpack.c.l.b16 %v1295
        %v4567 = vunpack.c.h.b16 %v1295
        %v4568 = vunpack.c.l.b16 %v1296
        %v4569 = vunpack.c.h.b16 %v1296
        %v4570 = vunpack.c.l.b16 %v1297
        %v4571 = vunpack.c.h.b16 %v1297
        %v4572 = vunpack.c.l.b16 %v1298
        %v4573 = vunpack.c.h.b16 %v1298
        %v4574 = vunpack.c.l.b16 %v1299
        %v4575 = vunpack.c.h.b16 %v1299
        %v4576 = vunpack.c.l.b16 %v1300
        %v4577 = vunpack.c.h.b16 %v1300
        %v4578 = vunpack.c.l.b16 %v1301
        %v4579 = vunpack.c.h.b16 %v1301
        %v4580 = vunpack.c.l.b16 %v1302
        %v4581 = vunpack.c.h.b16 %v1302
        %v4582 = vunpack.c.l.b16 %v1303
        %v4583 = vunpack.c.h.b16 %v1303
        %v4584 = vunpack.c.l.b16 %v1304
        %v4585 = vunpack.c.h.b16 %v1304
        %v4586 = vunpack.c.l.b16 %v1305
        %v4587 = vunpack.c.h.b16 %v1305
        %v4588 = vunpack.c.l.b16 %v1306
        %v4589 = vunpack.c.h.b16 %v1306
        %v4590 = vunpack.c.l.b16 %v1307
        %v4591 = vunpack.c.h.b16 %v1307
        %v4592 = vunpack.c.l.b16 %v1308
        %v4593 = vunpack.c.h.b16 %v1308
        %v4594 = vunpack.c.l.b16 %v1309
        %v4595 = vunpack.c.h.b16 %v1309
        %v4596 = vunpack.c.l.b16 %v1310
        %v4597 = vunpack.c.h.b16 %v1310
        %v4598 = vunpack.c.l.b16 %v1311
        %v4599 = vunpack.c.h.b16 %v1311
        %v4600 = vunpack.c.l.b16 %v1312
        %v4601 = vunpack.c.h.b16 %v1312
        %v4602 = vunpack.c.l.b16 %v1313
        %v4603 = vunpack.c.h.b16 %v1313
        %v4604 = vunpack.c.l.b16 %v1314
        %v4605 = vunpack.c.h.b16 %v1314
        %v4606 = vunpack.c.l.b16 %v1315
        %v4607 = vunpack.c.h.b16 %v1315
        %v4608 = vunpack.c.l.b16 %v1316
        %v4609 = vunpack.c.h.b16 %v1316
        %v4610 = vunpack.c.l.b16 %v1317
        %v4611 = vunpack.c.h.b16 %v1317
        %v4612 = vunpack.c.l.b16 %v1318
        %v4613 = vunpack.c.h.b16 %v1318
        %v4614 = vunpack.c.l.b16 %v1319
        %v4615 = vunpack.c.h.b16 %v1319
        %v4616 = vunpack.c.l.b16 %v1320
        %v4617 = vunpack.c.h.b16 %v1320
        %v4618 = vunpack.c.l.b16 %v1321
        %v4619 = vunpack.c.h.b16 %v1321
        %v4620 = vunpack.c.l.b16 %v1322
        %v4621 = vunpack.c.h.b16 %v1322
        %v4622 = vunpack.c.l.b16 %v1323
        %v4623 = vunpack.c.h.b16 %v1323
        %v4624 = vunpack.c.l.b16 %v1324
        %v4625 = vunpack.c.h.b16 %v1324
        %v4626 = vunpack.c.l.b16 %v1325
        %v4627 = vunpack.c.h.b16 %v1325
        %v4628 = vunpack.c.l.b16 %v1326
        %v4629 = vunpack.c.h.b16 %v1326
        %v4630 = vunpack.c.l.b16 %v1327
        %v4631 = vunpack.c.h.b16 %v1327
        %v4632 = vunpack.c.l.b16 %v1328
        %v4633 = vunpack.c.h.b16 %v1328
        %v4634 = vunpack.c.l.b16 %v1329
        %v4635 = vunpack.c.h.b16 %v1329
        %v4636 = vunpack.c.l.b16 %v1330
        %v4637 = vunpack.c.h.b16 %v1330
        %v4638 = vunpack.c.l.b16 %v1331
        %v4639 = vunpack.c.h.b16 %v1331
        %v4640 = vunpack.c.l.b16 %v1332
        %v4641 = vunpack.c.h.b16 %v1332
        %v4642 = vunpack.c.l.b16 %v1333
        %v4643 = vunpack.c.h.b16 %v1333
        %v4644 = vunpack.c.l.b16 %v1334
        %v4645 = vunpack.c.h.b16 %v1334
        %v4646 = vunpack.c.l.b16 %v1335
        %v4647 = vunpack.c.h.b16 %v1335
        %v4648 = vunpack.c.l.b16 %v1336
        %v4649 = vunpack.c.h.b16 %v1336
        %v4650 = vunpack.c.l.b16 %v1337
        %v4651 = vunpack.c.h.b16 %v1337
        %v4652 = vunpack.c.l.b16 %v1338
        %v4653 = vunpack.c.h.b16 %v1338
        %v4654 = vunpack.c.l.b16 %v1339
        %v4655 = vunpack.c.h.b16 %v1339
        %v4656 = vunpack.c.l.b16 %v1340
        %v4657 = vunpack.c.h.b16 %v1340
        %v4658 = vunpack.c.l.b16 %v1341
        %v4659 = vunpack.c.h.b16 %v1341
        %v4660 = vunpack.c.l.b16 %v1342
        %v4661 = vunpack.c.h.b16 %v1342
        %v4662 = vunpack.c.l.b16 %v1343
        %v4663 = vunpack.c.h.b16 %v1343
        %v4664 = vunpack.c.l.b16 %v1344
        %v4665 = vunpack.c.h.b16 %v1344
        %v4666 = vunpack.c.l.b16 %v1345
        %v4667 = vunpack.c.h.b16 %v1345
        %v4668 = vunpack.c.l.b16 %v1346
        %v4669 = vunpack.c.h.b16 %v1346
        %v4670 = vunpack.c.l.b16 %v1347
        %v4671 = vunpack.c.h.b16 %v1347
        %v4672 = vunpack.c.l.b16 %v1348
        %v4673 = vunpack.c.h.b16 %v1348
        %v4674 = vunpack.c.l.b16 %v1349
        %v4675 = vunpack.c.h.b16 %v1349
        %v4676 = vunpack.c.l.b16 %v1350
        %v4677 = vunpack.c.h.b16 %v1350
        %v4678 = vunpack.c.l.b16 %v1351
        %v4679 = vunpack.c.h.b16 %v1351
        %v4680 = vunpack.c.l.b16 %v1352
        %v4681 = vunpack.c.h.b16 %v1352
        %v4682 = vunpack.c.l.b16 %v1353
        %v4683 = vunpack.c.h.b16 %v1353
        %v4684 = vunpack.c.l.b16 %v1354
        %v4685 = vunpack.c.h.b16 %v1354
        %v4686 = vunpack.c.l.b16 %v1355
        %v4687 = vunpack.c.h.b16 %v1355
        %v4688 = vunpack.c.l.b16 %v1356
        %v4689 = vunpack.c.h.b16 %v1356
        %v4690 = vunpack.c.l.b16 %v1357
        %v4691 = vunpack.c.h.b16 %v1357
        %v4692 = vunpack.c.l.b16 %v1358
        %v4693 = vunpack.c.h.b16 %v1358
        %v4694 = vunpack.c.l.b16 %v1359
        %v4695 = vunpack.c.h.b16 %v1359
        %v4696 = vunpack.c.l.b16 %v1360
        %v4697 = vunpack.c.h.b16 %v1360
        %v4698 = vunpack.c.l.b16 %v1361
        %v4699 = vunpack.c.h.b16 %v1361
        %v4700 = vunpack.c.l.b16 %v1362
        %v4701 = vunpack.c.h.b16 %v1362
        %v4702 = vunpack.c.l.b16 %v1363
        %v4703 = vunpack.c.h.b16 %v1363
        %v4704 = vunpack.c.l.b16 %v1364
        %v4705 = vunpack.c.h.b16 %v1364
        %v4706 = vunpack.c.l.b16 %v1365
        %v4707 = vunpack.c.h.b16 %v1365
        %v4708 = vunpack.c.l.b16 %v1366
        %v4709 = vunpack.c.h.b16 %v1366
        %v4710 = vunpack.c.l.b16 %v1367
        %v4711 = vunpack.c.h.b16 %v1367
        %v4712 = vunpack.c.l.b16 %v1368
        %v4713 = vunpack.c.h.b16 %v1368
        %v4714 = vunpack.c.l.b16 %v1369
        %v4715 = vunpack.c.h.b16 %v1369
        %v4716 = vunpack.c.l.b16 %v1370
        %v4717 = vunpack.c.h.b16 %v1370
        %v4718 = vunpack.c.l.b16 %v1371
        %v4719 = vunpack.c.h.b16 %v1371
        %v4720 = vunpack.c.l.b16 %v1372
        %v4721 = vunpack.c.h.b16 %v1372
        %v4722 = vunpack.c.l.b16 %v1373
        %v4723 = vunpack.c.h.b16 %v1373
        %v4724 = vunpack.c.l.b16 %v1374
        %v4725 = vunpack.c.h.b16 %v1374
        %v4726 = vunpack.c.l.b16 %v1375
        %v4727 = vunpack.c.h.b16 %v1375
        %v4728 = vunpack.c.l.b16 %v1376
        %v4729 = vunpack.c.h.b16 %v1376
        %v4730 = vunpack.c.l.b16 %v1377
        %v4731 = vunpack.c.h.b16 %v1377
        %v4732 = vunpack.c.l.b16 %v1378
        %v4733 = vunpack.c.h.b16 %v1378
        %v4734 = vunpack.c.l.b16 %v1379
        %v4735 = vunpack.c.h.b16 %v1379
        %v4736 = vunpack.c.l.b16 %v1380
        %v4737 = vunpack.c.h.b16 %v1380
        %v4738 = vunpack.c.l.b16 %v1381
        %v4739 = vunpack.c.h.b16 %v1381
        %v4740 = vunpack.c.l.b16 %v1382
        %v4741 = vunpack.c.h.b16 %v1382
        %v4742 = vunpack.c.l.b16 %v1383
        %v4743 = vunpack.c.h.b16 %v1383
        %v4744 = vunpack.c.l.b16 %v1384
        %v4745 = vunpack.c.h.b16 %v1384
        %v4746 = vunpack.c.l.b16 %v1385
        %v4747 = vunpack.c.h.b16 %v1385
        %v4748 = vunpack.c.l.b16 %v1386
        %v4749 = vunpack.c.h.b16 %v1386
        %v4750 = vunpack.c.l.b16 %v1387
        %v4751 = vunpack.c.h.b16 %v1387
        %v4752 = vunpack.c.l.b16 %v1388
        %v4753 = vunpack.c.h.b16 %v1388
        %v4754 = vunpack.c.l.b16 %v1389
        %v4755 = vunpack.c.h.b16 %v1389
        %v4756 = vunpack.c.l.b16 %v1390
        %v4757 = vunpack.c.h.b16 %v1390
        %v4758 = vunpack.c.l.b16 %v1391
        %v4759 = vunpack.c.h.b16 %v1391
        %v4760 = vunpack.c.l.b16 %v1392
        %v4761 = vunpack.c.h.b16 %v1392
        %v4762 = vunpack.c.l.b16 %v1393
        %v4763 = vunpack.c.h.b16 %v1393
        %v4764 = vunpack.c.l.b16 %v1394
        %v4765 = vunpack.c.h.b16 %v1394
        %v4766 = vunpack.c.l.b16 %v1395
        %v4767 = vunpack.c.h.b16 %v1395
        %v4768 = vunpack.c.l.b16 %v1396
        %v4769 = vunpack.c.h.b16 %v1396
        %v4770 = vunpack.c.l.b16 %v1397
        %v4771 = vunpack.c.h.b16 %v1397
        %v4772 = vunpack.c.l.b16 %v1398
        %v4773 = vunpack.c.h.b16 %v1398
        %v4774 = vunpack.c.l.b16 %v1399
        %v4775 = vunpack.c.h.b16 %v1399
        %v4776 = vunpack.c.l.b16 %v1400
        %v4777 = vunpack.c.h.b16 %v1400
        %v4778 = vunpack.c.l.b16 %v1401
        %v4779 = vunpack.c.h.b16 %v1401
        %v4780 = vunpack.c.l.b16 %v1402
        %v4781 = vunpack.c.h.b16 %v1402
        %v4782 = vunpack.c.l.b16 %v1403
        %v4783 = vunpack.c.h.b16 %v1403
        %v4784 = vunpack.c.l.b16 %v1404
        %v4785 = vunpack.c.h.b16 %v1404
        %v4786 = vunpack.c.l.b16 %v1405
        %v4787 = vunpack.c.h.b16 %v1405
        %v4788 = vunpack.c.l.b16 %v1406
        %v4789 = vunpack.c.h.b16 %v1406
        %v4790 = vunpack.c.l.b16 %v1407
        %v4791 = vunpack.c.h.b16 %v1407
        %v4792 = vunpack.c.l.b16 %v1408
        %v4793 = vunpack.c.h.b16 %v1408
        %v4794 = vunpack.c.l.b16 %v1409
        %v4795 = vunpack.c.h.b16 %v1409
        %v4796 = vunpack.c.l.b16 %v1410
        %v4797 = vunpack.c.h.b16 %v1410
        %v4798 = vunpack.c.l.b16 %v1411
        %v4799 = vunpack.c.h.b16 %v1411
        %v4800 = vunpack.c.l.b16 %v1412
        %v4801 = vunpack.c.h.b16 %v1412
        %v4802 = vunpack.c.l.b16 %v1413
        %v4803 = vunpack.c.h.b16 %v1413
        %v4804 = vunpack.c.l.b16 %v1414
        %v4805 = vunpack.c.h.b16 %v1414
        %v4806 = vunpack.c.l.b16 %v1415
        %v4807 = vunpack.c.h.b16 %v1415
        %v4808 = vunpack.c.l.b16 %v1416
        %v4809 = vunpack.c.h.b16 %v1416
        %v4810 = vunpack.c.l.b16 %v1417
        %v4811 = vunpack.c.h.b16 %v1417
        %v4812 = vunpack.c.l.b16 %v1418
        %v4813 = vunpack.c.h.b16 %v1418
        %v4814 = vunpack.c.l.b16 %v1419
        %v4815 = vunpack.c.h.b16 %v1419
        %v4816 = vunpack.c.l.b16 %v1420
        %v4817 = vunpack.c.h.b16 %v1420
        %v4818 = vunpack.c.l.b16 %v1421
        %v4819 = vunpack.c.h.b16 %v1421
        %v4820 = vunpack.c.l.b16 %v1422
        %v4821 = vunpack.c.h.b16 %v1422
        %v4822 = vunpack.c.l.b16 %v1423
        %v4823 = vunpack.c.h.b16 %v1423
        %v4824 = vunpack.c.l.b16 %v1424
        %v4825 = vunpack.c.h.b16 %v1424
        %v4826 = vunpack.c.l.b16 %v1425
        %v4827 = vunpack.c.h.b16 %v1425
        %v4828 = vunpack.c.l.b16 %v1426
        %v4829 = vunpack.c.h.b16 %v1426
        %v4830 = vunpack.c.l.b16 %v1427
        %v4831 = vunpack.c.h.b16 %v1427
        %v4832 = vunpack.c.l.b16 %v1428
        %v4833 = vunpack.c.h.b16 %v1428
        %v4834 = vunpack.c.l.b16 %v1429
        %v4835 = vunpack.c.h.b16 %v1429
        %v4836 = vunpack.c.l.b16 %v1430
        %v4837 = vunpack.c.h.b16 %v1430
        %v4838 = vunpack.c.l.b16 %v1431
        %v4839 = vunpack.c.h.b16 %v1431
        %v4840 = vunpack.c.l.b16 %v1432
        %v4841 = vunpack.c.h.b16 %v1432
        %v4842 = vunpack.c.l.b16 %v1433
        %v4843 = vunpack.c.h.b16 %v1433
        %v4844 = vunpack.c.l.b16 %v1434
        %v4845 = vunpack.c.h.b16 %v1434
        %v4846 = vunpack.c.l.b16 %v1435
        %v4847 = vunpack.c.h.b16 %v1435
        %v4848 = vunpack.c.l.b16 %v1436
        %v4849 = vunpack.c.h.b16 %v1436
        %v4850 = vunpack.c.l.b16 %v1437
        %v4851 = vunpack.c.h.b16 %v1437
        %v4852 = vunpack.c.l.b16 %v1438
        %v4853 = vunpack.c.h.b16 %v1438
        %v4854 = vunpack.c.l.b16 %v1439
        %v4855 = vunpack.c.h.b16 %v1439
        %v4856 = vunpack.c.l.b16 %v1440
        %v4857 = vunpack.c.h.b16 %v1440
        %v4858 = vunpack.c.l.b16 %v1441
        %v4859 = vunpack.c.h.b16 %v1441
        %v4860 = vunpack.c.l.b16 %v1442
        %v4861 = vunpack.c.h.b16 %v1442
        %v4862 = vunpack.c.l.b16 %v1443
        %v4863 = vunpack.c.h.b16 %v1443
        %v4864 = vunpack.c.l.b16 %v1444
        %v4865 = vunpack.c.h.b16 %v1444
        %v4866 = vunpack.c.l.b16 %v1445
        %v4867 = vunpack.c.h.b16 %v1445
        %v4868 = vunpack.c.l.b16 %v1446
        %v4869 = vunpack.c.h.b16 %v1446
        %v4870 = vunpack.c.l.b16 %v1447
        %v4871 = vunpack.c.h.b16 %v1447
        %v4872 = vunpack.c.l.b16 %v1448
        %v4873 = vunpack.c.h.b16 %v1448
        %v4874 = vunpack.c.l.b16 %v1449
        %v4875 = vunpack.c.h.b16 %v1449
        %v4876 = vunpack.c.l.b16 %v1450
        %v4877 = vunpack.c.h.b16 %v1450
        %v4878 = vunpack.c.l.b16 %v1451
        %v4879 = vunpack.c.h.b16 %v1451
        %v4880 = vunpack.c.l.b16 %v1452
        %v4881 = vunpack.c.h.b16 %v1452
        %v4882 = vunpack.c.l.b16 %v1453
        %v4883 = vunpack.c.h.b16 %v1453
        %v4884 = vunpack.c.l.b16 %v1454
        %v4885 = vunpack.c.h.b16 %v1454
        %v4886 = vunpack.c.l.b16 %v1455
        %v4887 = vunpack.c.h.b16 %v1455
        %v4888 = vunpack.c.l.b16 %v1456
        %v4889 = vunpack.c.h.b16 %v1456
        %v4890 = vunpack.c.l.b16 %v1457
        %v4891 = vunpack.c.h.b16 %v1457
        %v4892 = vunpack.c.l.b16 %v1458
        %v4893 = vunpack.c.h.b16 %v1458
        %v4894 = vunpack.c.l.b16 %v1459
        %v4895 = vunpack.c.h.b16 %v1459
        %v4896 = vunpack.c.l.b16 %v1460
        %v4897 = vunpack.c.h.b16 %v1460
        %v4898 = vunpack.c.l.b16 %v1461
        %v4899 = vunpack.c.h.b16 %v1461
        %v4900 = vunpack.c.l.b16 %v1462
        %v4901 = vunpack.c.h.b16 %v1462
        %v4902 = vunpack.c.l.b16 %v1463
        %v4903 = vunpack.c.h.b16 %v1463
        %v4904 = vunpack.c.l.b16 %v1464
        %v4905 = vunpack.c.h.b16 %v1464
        %v4906 = vunpack.c.l.b16 %v1465
        %v4907 = vunpack.c.h.b16 %v1465
        %v4908 = vunpack.c.l.b16 %v1466
        %v4909 = vunpack.c.h.b16 %v1466
        %v4910 = vunpack.c.l.b16 %v1467
        %v4911 = vunpack.c.h.b16 %v1467
        %v4912 = vunpack.c.l.b16 %v1468
        %v4913 = vunpack.c.h.b16 %v1468
        %v4914 = vunpack.c.l.b16 %v1469
        %v4915 = vunpack.c.h.b16 %v1469
        %v4916 = vunpack.c.l.b16 %v1470
        %v4917 = vunpack.c.h.b16 %v1470
        %v4918 = vunpack.c.l.b16 %v1471
        %v4919 = vunpack.c.h.b16 %v1471
        %v4920 = vunpack.c.l.b16 %v1472
        %v4921 = vunpack.c.h.b16 %v1472
        %v4922 = vunpack.c.l.b16 %v1473
        %v4923 = vunpack.c.h.b16 %v1473
        %v4924 = vunpack.c.l.b16 %v1474
        %v4925 = vunpack.c.h.b16 %v1474
        %v4926 = vunpack.c.l.b16 %v1475
        %v4927 = vunpack.c.h.b16 %v1475
        %v4928 = vunpack.c.l.b16 %v1476
        %v4929 = vunpack.c.h.b16 %v1476
        %v4930 = vunpack.c.l.b16 %v1477
        %v4931 = vunpack.c.h.b16 %v1477
        %v4932 = vunpack.c.l.b16 %v1478
        %v4933 = vunpack.c.h.b16 %v1478
        %v4934 = vunpack.c.l.b16 %v1479
        %v4935 = vunpack.c.h.b16 %v1479
        %v4936 = vunpack.c.l.b16 %v1480
        %v4937 = vunpack.c.h.b16 %v1480
        %v4938 = vunpack.c.l.b16 %v1481
        %v4939 = vunpack.c.h.b16 %v1481
        %v4940 = vunpack.c.l.b16 %v1482
        %v4941 = vunpack.c.h.b16 %v1482
        %v4942 = vunpack.c.l.b16 %v1483
        %v4943 = vunpack.c.h.b16 %v1483
        %v4944 = vunpack.c.l.b16 %v1484
        %v4945 = vunpack.c.h.b16 %v1484
        %v4946 = vunpack.c.l.b16 %v1485
        %v4947 = vunpack.c.h.b16 %v1485
        %v4948 = vunpack.c.l.b16 %v1486
        %v4949 = vunpack.c.h.b16 %v1486
        %v4950 = vunpack.c.l.b16 %v1487
        %v4951 = vunpack.c.h.b16 %v1487
        %v4952 = vunpack.c.l.b16 %v1488
        %v4953 = vunpack.c.h.b16 %v1488
        %v4954 = vunpack.c.l.b16 %v1489
        %v4955 = vunpack.c.h.b16 %v1489
        %v4956 = vunpack.c.l.b16 %v1490
        %v4957 = vunpack.c.h.b16 %v1490
        %v4958 = vunpack.c.l.b16 %v1491
        %v4959 = vunpack.c.h.b16 %v1491
        %v4960 = vunpack.c.l.b16 %v1492
        %v4961 = vunpack.c.h.b16 %v1492
        %v4962 = vunpack.c.l.b16 %v1493
        %v4963 = vunpack.c.h.b16 %v1493
        %v4964 = vunpack.c.l.b16 %v1494
        %v4965 = vunpack.c.h.b16 %v1494
        %v4966 = vunpack.c.l.b16 %v1495
        %v4967 = vunpack.c.h.b16 %v1495
        %v4968 = vunpack.c.l.b16 %v1496
        %v4969 = vunpack.c.h.b16 %v1496
        %v4970 = vunpack.c.l.b16 %v1497
        %v4971 = vunpack.c.h.b16 %v1497
        %v4972 = vunpack.c.l.b16 %v1498
        %v4973 = vunpack.c.h.b16 %v1498
        %v4974 = vunpack.c.l.b16 %v1499
        %v4975 = vunpack.c.h.b16 %v1499
        %v4976 = vunpack.c.l.b16 %v1500
        %v4977 = vunpack.c.h.b16 %v1500
        %v4978 = vunpack.c.l.b16 %v1501
        %v4979 = vunpack.c.h.b16 %v1501
        %v4980 = vunpack.c.l.b16 %v1502
        %v4981 = vunpack.c.h.b16 %v1502
        %v4982 = vunpack.c.l.b16 %v1503
        %v4983 = vunpack.c.h.b16 %v1503
        %v4984 = vunpack.c.l.b16 %v1504
        %v4985 = vunpack.c.h.b16 %v1504
        %v4986 = vunpack.c.l.b16 %v1505
        %v4987 = vunpack.c.h.b16 %v1505
        %v4988 = vunpack.c.l.b16 %v1506
        %v4989 = vunpack.c.h.b16 %v1506
        %v4990 = vunpack.c.l.b16 %v1507
        %v4991 = vunpack.c.h.b16 %v1507
        %v4992 = vunpack.c.l.b16 %v1508
        %v4993 = vunpack.c.h.b16 %v1508
        %v4994 = vunpack.c.l.b16 %v1509
        %v4995 = vunpack.c.h.b16 %v1509
        %v4996 = vunpack.c.l.b16 %v1510
        %v4997 = vunpack.c.h.b16 %v1510
        %v4998 = vunpack.c.l.b16 %v1511
        %v4999 = vunpack.c.h.b16 %v1511
        %v5000 = vunpack.c.l.b16 %v1512
        %v5001 = vunpack.c.h.b16 %v1512
        %v5002 = vunpack.c.l.b16 %v1513
        %v5003 = vunpack.c.h.b16 %v1513
        %v5004 = vunpack.c.l.b16 %v1514
        %v5005 = vunpack.c.h.b16 %v1514
        %v5006 = vunpack.c.l.b16 %v1515
        %v5007 = vunpack.c.h.b16 %v1515
        %v5008 = vunpack.c.l.b16 %v1516
        %v5009 = vunpack.c.h.b16 %v1516
        %v5010 = vunpack.c.l.b16 %v1517
        %v5011 = vunpack.c.h.b16 %v1517
        %v5012 = vunpack.c.l.b16 %v1518
        %v5013 = vunpack.c.h.b16 %v1518
        %v5014 = vunpack.c.l.b16 %v1519
        %v5015 = vunpack.c.h.b16 %v1519
        %v5016 = vunpack.c.l.b16 %v1520
        %v5017 = vunpack.c.h.b16 %v1520
        %v5018 = vunpack.c.l.b16 %v1521
        %v5019 = vunpack.c.h.b16 %v1521
        %v5020 = vunpack.c.l.b16 %v1522
        %v5021 = vunpack.c.h.b16 %v1522
        %v5022 = vunpack.c.l.b16 %v1523
        %v5023 = vunpack.c.h.b16 %v1523
        %v5024 = vunpack.c.l.b16 %v1524
        %v5025 = vunpack.c.h.b16 %v1524
        %v5026 = vunpack.c.l.b16 %v1525
        %v5027 = vunpack.c.h.b16 %v1525
        %v5028 = vunpack.c.l.b16 %v1526
        %v5029 = vunpack.c.h.b16 %v1526
        %v5030 = vunpack.c.l.b16 %v1527
        %v5031 = vunpack.c.h.b16 %v1527
        %v5032 = vunpack.c.l.b16 %v1528
        %v5033 = vunpack.c.h.b16 %v1528
        %v5034 = vunpack.c.l.b16 %v1529
        %v5035 = vunpack.c.h.b16 %v1529
        %v5036 = vunpack.c.l.b16 %v1530
        %v5037 = vunpack.c.h.b16 %v1530
        %v5038 = vunpack.c.l.b16 %v1531
        %v5039 = vunpack.c.h.b16 %v1531
        %v5040 = vunpack.c.l.b16 %v1532
        %v5041 = vunpack.c.h.b16 %v1532
        %v5042 = vunpack.c.l.b16 %v1533
        %v5043 = vunpack.c.h.b16 %v1533
        %v5044 = vunpack.c.l.b16 %v1534
        %v5045 = vunpack.c.h.b16 %v1534
        %v5046 = vunpack.c.l.b16 %v1535
        %v5047 = vunpack.c.h.b16 %v1535
        %v5048 = vunpack.c.l.b16 %v1536
        %v5049 = vunpack.c.h.b16 %v1536
        %v5050 = vunpack.c.l.b16 %v1537
        %v5051 = vunpack.c.h.b16 %v1537
        %v5052 = vunpack.c.l.b16 %v1538
        %v5053 = vunpack.c.h.b16 %v1538
        %v5054 = vunpack.c.l.b16 %v1539
        %v5055 = vunpack.c.h.b16 %v1539
        %v5056 = vunpack.c.l.b16 %v1540
        %v5057 = vunpack.c.h.b16 %v1540
        %v5058 = vunpack.c.l.b16 %v1541
        %v5059 = vunpack.c.h.b16 %v1541
        %v5060 = vunpack.c.l.b16 %v1542
        %v5061 = vunpack.c.h.b16 %v1542
        %v5062 = vunpack.c.l.b16 %v1543
        %v5063 = vunpack.c.h.b16 %v1543
        %v5064 = vunpack.c.l.b16 %v1544
        %v5065 = vunpack.c.h.b16 %v1544
        %v5066 = vunpack.c.l.b16 %v1545
        %v5067 = vunpack.c.h.b16 %v1545
        %v5068 = vunpack.c.l.b16 %v1546
        %v5069 = vunpack.c.h.b16 %v1546
        %v5070 = vunpack.c.l.b16 %v1547
        %v5071 = vunpack.c.h.b16 %v1547
        %v5072 = vunpack.c.l.b16 %v1548
        %v5073 = vunpack.c.h.b16 %v1548
        %v5074 = vunpack.c.l.b16 %v1549
        %v5075 = vunpack.c.h.b16 %v1549
        %v5076 = vunpack.c.l.b16 %v1550
        %v5077 = vunpack.c.h.b16 %v1550
        %v5078 = vunpack.c.l.b16 %v1551
        %v5079 = vunpack.c.h.b16 %v1551
        %v5080 = vunpack.c.l.b16 %v1552
        %v5081 = vunpack.c.h.b16 %v1552
        %v5082 = vunpack.c.l.b16 %v1553
        %v5083 = vunpack.c.h.b16 %v1553
        %v5084 = vunpack.c.l.b16 %v1554
        %v5085 = vunpack.c.h.b16 %v1554
        %v5086 = vunpack.c.l.b16 %v1555
        %v5087 = vunpack.c.h.b16 %v1555
        %v5088 = vunpack.c.l.b16 %v1556
        %v5089 = vunpack.c.h.b16 %v1556
        %v5090 = vunpack.c.l.b16 %v1557
        %v5091 = vunpack.c.h.b16 %v1557
        %v5092 = vunpack.c.l.b16 %v1558
        %v5093 = vunpack.c.h.b16 %v1558
        %v5094 = vunpack.c.l.b16 %v1559
        %v5095 = vunpack.c.h.b16 %v1559
        %v5096 = vunpack.c.l.b16 %v1560
        %v5097 = vunpack.c.h.b16 %v1560
        %v5098 = vunpack.c.l.b16 %v1561
        %v5099 = vunpack.c.h.b16 %v1561
        %v5100 = vunpack.c.l.b16 %v1562
        %v5101 = vunpack.c.h.b16 %v1562
        %v5102 = vunpack.c.l.b16 %v1563
        %v5103 = vunpack.c.h.b16 %v1563
        %v5104 = vunpack.c.l.b16 %v1564
        %v5105 = vunpack.c.h.b16 %v1564
        %v5106 = vunpack.c.l.b16 %v1565
        %v5107 = vunpack.c.h.b16 %v1565
        %v5108 = vunpack.c.l.b16 %v1566
        %v5109 = vunpack.c.h.b16 %v1566
        %v5110 = vunpack.c.l.b16 %v1567
        %v5111 = vunpack.c.h.b16 %v1567
        %v5112 = vunpack.c.l.b16 %v1568
        %v5113 = vunpack.c.h.b16 %v1568
        %v5114 = vunpack.c.l.b16 %v1569
        %v5115 = vunpack.c.h.b16 %v1569
        %v5116 = vunpack.c.l.b16 %v1570
        %v5117 = vunpack.c.h.b16 %v1570
        %v5118 = vunpack.c.l.b16 %v1571
        %v5119 = vunpack.c.h.b16 %v1571
        %v5120 = vunpack.c.l.b16 %v1572
        %v5121 = vunpack.c.h.b16 %v1572
        %v5122 = vunpack.c.l.b16 %v1573
        %v5123 = vunpack.c.h.b16 %v1573
        %v5124 = vunpack.c.l.b16 %v1574
        %v5125 = vunpack.c.h.b16 %v1574
        %v5126 = vunpack.c.l.b16 %v1575
        %v5127 = vunpack.c.h.b16 %v1575
        %v5128 = vunpack.c.l.b16 %v1576
        %v5129 = vunpack.c.h.b16 %v1576
        %v5130 = vunpack.c.l.b16 %v1577
        %v5131 = vunpack.c.h.b16 %v1577
        %v5132 = vunpack.c.l.b16 %v1578
        %v5133 = vunpack.c.h.b16 %v1578
        %v5134 = vunpack.c.l.b16 %v1579
        %v5135 = vunpack.c.h.b16 %v1579
        %v5136 = vunpack.c.l.b16 %v1580
        %v5137 = vunpack.c.h.b16 %v1580
        %v5138 = vunpack.c.l.b16 %v1581
        %v5139 = vunpack.c.h.b16 %v1581
        %v5140 = vunpack.c.l.b16 %v1582
        %v5141 = vunpack.c.h.b16 %v1582
        %v5142 = vunpack.c.l.b16 %v1583
        %v5143 = vunpack.c.h.b16 %v1583
        %v5144 = vunpack.c.l.b16 %v1584
        %v5145 = vunpack.c.h.b16 %v1584
        %v5146 = vunpack.c.l.b16 %v1585
        %v5147 = vunpack.c.h.b16 %v1585
        %v5148 = vunpack.c.l.b16 %v1586
        %v5149 = vunpack.c.h.b16 %v1586
        %v5150 = vunpack.c.l.b16 %v1587
        %v5151 = vunpack.c.h.b16 %v1587
        %v5152 = vunpack.c.l.b16 %v1588
        %v5153 = vunpack.c.h.b16 %v1588
        %v5154 = vunpack.c.l.b16 %v1589
        %v5155 = vunpack.c.h.b16 %v1589
        %v5156 = vunpack.c.l.b16 %v1590
        %v5157 = vunpack.c.h.b16 %v1590
        %v5158 = vunpack.c.l.b16 %v1591
        %v5159 = vunpack.c.h.b16 %v1591
        %v5160 = vunpack.c.l.b16 %v1592
        %v5161 = vunpack.c.h.b16 %v1592
        %v5162 = vunpack.c.l.b16 %v1593
        %v5163 = vunpack.c.h.b16 %v1593
        %v5164 = vunpack.c.l.b16 %v1594
        %v5165 = vunpack.c.h.b16 %v1594
        %v5166 = vunpack.c.l.b16 %v1595
        %v5167 = vunpack.c.h.b16 %v1595
        %v5168 = vunpack.c.l.b16 %v1596
        %v5169 = vunpack.c.h.b16 %v1596
        %v5170 = vunpack.c.l.b16 %v1597
        %v5171 = vunpack.c.h.b16 %v1597
        %v5172 = vunpack.c.l.b16 %v1598
        %v5173 = vunpack.c.h.b16 %v1598
        %v5174 = vunpack.c.l.b16 %v1599
        %v5175 = vunpack.c.h.b16 %v1599
        %v5176 = vunpack.c.l.b16 %v1600
        %v5177 = vunpack.c.h.b16 %v1600
        %v5178 = vunpack.c.l.b16 %v1601
        %v5179 = vunpack.c.h.b16 %v1601
        %v5180 = vunpack.c.l.b16 %v1602
        %v5181 = vunpack.c.h.b16 %v1602
        %v5182 = vunpack.c.l.b16 %v1603
        %v5183 = vunpack.c.h.b16 %v1603
        %v5184 = vunpack.c.l.b16 %v1604
        %v5185 = vunpack.c.h.b16 %v1604
        %v5186 = vunpack.c.l.b16 %v1605
        %v5187 = vunpack.c.h.b16 %v1605
        %v5188 = vunpack.c.l.b16 %v1606
        %v5189 = vunpack.c.h.b16 %v1606
        %v5190 = vunpack.c.l.b16 %v1607
        %v5191 = vunpack.c.h.b16 %v1607
        %v5192 = vunpack.c.l.b16 %v1608
        %v5193 = vunpack.c.h.b16 %v1608
        %v5194 = vunpack.c.l.b16 %v1609
        %v5195 = vunpack.c.h.b16 %v1609
        %v5196 = vunpack.c.l.b16 %v1610
        %v5197 = vunpack.c.h.b16 %v1610
        %v5198 = vunpack.c.l.b16 %v1611
        %v5199 = vunpack.c.h.b16 %v1611
        %v5200 = vunpack.c.l.b16 %v1612
        %v5201 = vunpack.c.h.b16 %v1612
        %v5202 = vunpack.c.l.b16 %v1613
        %v5203 = vunpack.c.h.b16 %v1613
        %v5204 = vunpack.c.l.b16 %v1614
        %v5205 = vunpack.c.h.b16 %v1614
        %v5206 = vunpack.c.l.b16 %v1615
        %v5207 = vunpack.c.h.b16 %v1615
        %v5208 = vunpack.c.l.b16 %v1616
        %v5209 = vunpack.c.h.b16 %v1616
        %v5210 = vunpack.c.l.b16 %v1617
        %v5211 = vunpack.c.h.b16 %v1617
        %v5212 = vunpack.c.l.b16 %v1618
        %v5213 = vunpack.c.h.b16 %v1618
        %v5214 = vunpack.c.l.b16 %v1619
        %v5215 = vunpack.c.h.b16 %v1619
        %v5216 = vunpack.c.l.b16 %v1620
        %v5217 = vunpack.c.h.b16 %v1620
        %v5218 = vunpack.c.l.b16 %v1621
        %v5219 = vunpack.c.h.b16 %v1621
        %v5220 = vunpack.c.l.b16 %v1622
        %v5221 = vunpack.c.h.b16 %v1622
        %v5222 = vunpack.c.l.b16 %v1623
        %v5223 = vunpack.c.h.b16 %v1623
        %v5224 = vunpack.c.l.b16 %v1624
        %v5225 = vunpack.c.h.b16 %v1624
        %v5226 = vunpack.c.l.b16 %v1625
        %v5227 = vunpack.c.h.b16 %v1625
        %v5228 = vunpack.c.l.b16 %v1626
        %v5229 = vunpack.c.h.b16 %v1626
        %v5230 = vunpack.c.l.b16 %v1627
        %v5231 = vunpack.c.h.b16 %v1627
        %v5232 = vunpack.c.l.b16 %v1628
        %v5233 = vunpack.c.h.b16 %v1628
        %v5234 = vunpack.c.l.b16 %v1629
        %v5235 = vunpack.c.h.b16 %v1629
        %v5236 = vunpack.c.l.b16 %v1630
        %v5237 = vunpack.c.h.b16 %v1630
        %v5238 = vunpack.c.l.b16 %v1631
        %v5239 = vunpack.c.h.b16 %v1631
        %v5240 = vunpack.c.l.b16 %v1632
        %v5241 = vunpack.c.h.b16 %v1632
        %v5242 = vunpack.c.l.b16 %v1633
        %v5243 = vunpack.c.h.b16 %v1633
        %v5244 = vunpack.c.l.b16 %v1634
        %v5245 = vunpack.c.h.b16 %v1634
        %v5246 = vunpack.c.l.b16 %v1635
        %v5247 = vunpack.c.h.b16 %v1635
        %v5248 = vunpack.c.l.b16 %v1636
        %v5249 = vunpack.c.h.b16 %v1636
        %v5250 = vunpack.c.l.b16 %v1637
        %v5251 = vunpack.c.h.b16 %v1637
        %v5252 = vunpack.c.l.b16 %v1638
        %v5253 = vunpack.c.h.b16 %v1638
        %v5254 = vunpack.c.l.b16 %v1639
        %v5255 = vunpack.c.h.b16 %v1639
        %v5256 = vunpack.c.l.b16 %v1640
        %v5257 = vunpack.c.h.b16 %v1640
        %v5258 = vunpack.c.l.b16 %v1641
        %v5259 = vunpack.c.h.b16 %v1641
        %v5260 = vunpack.c.l.b16 %v1642
        %v5261 = vunpack.c.h.b16 %v1642
        %v5262 = vunpack.c.l.b16 %v1643
        %v5263 = vunpack.c.h.b16 %v1643
        %v5264 = vunpack.c.l.b16 %v1644
        %v5265 = vunpack.c.h.b16 %v1644
        %v5266 = vunpack.c.l.b16 %v1645
        %v5267 = vunpack.c.h.b16 %v1645
        %v5268 = vunpack.c.l.b16 %v1646
        %v5269 = vunpack.c.h.b16 %v1646
        %v5270 = vunpack.c.l.b16 %v1647
        %v5271 = vunpack.c.h.b16 %v1647
        %v5272 = vunpack.c.l.b16 %v1648
        %v5273 = vunpack.c.h.b16 %v1648
        %v5274 = vunpack.c.l.b16 %v1649
        %v5275 = vunpack.c.h.b16 %v1649
        %v5276 = vunpack.c.l.b16 %v1650
        %v5277 = vunpack.c.h.b16 %v1650
        %v5278 = vunpack.c.l.b16 %v1651
        %v5279 = vunpack.c.h.b16 %v1651
        %v5280 = vunpack.c.l.b16 %v1652
        %v5281 = vunpack.c.h.b16 %v1652
        %v5282 = vunpack.c.l.b16 %v1653
        %v5283 = vunpack.c.h.b16 %v1653
        %v5284 = vunpack.c.l.b16 %v1654
        %v5285 = vunpack.c.h.b16 %v1654
        %v5286 = vunpack.c.l.b16 %v1655
        %v5287 = vunpack.c.h.b16 %v1655
        %v5288 = vunpack.c.l.b16 %v1656
        %v5289 = vunpack.c.h.b16 %v1656
        %v5290 = vunpack.c.l.b16 %v1657
        %v5291 = vunpack.c.h.b16 %v1657
        %v5292 = vunpack.c.l.b16 %v1658
        %v5293 = vunpack.c.h.b16 %v1658
        %v5294 = vunpack.c.l.b16 %v1659
        %v5295 = vunpack.c.h.b16 %v1659
        %v5296 = vunpack.c.l.b16 %v1660
        %v5297 = vunpack.c.h.b16 %v1660
        %v5298 = vunpack.c.l.b16 %v1661
        %v5299 = vunpack.c.h.b16 %v1661
        %v5300 = vunpack.c.l.b16 %v1662
        %v5301 = vunpack.c.h.b16 %v1662
        %v5302 = vunpack.c.l.b16 %v1663
        %v5303 = vunpack.c.h.b16 %v1663
        %v5304 = vunpack.c.l.b16 %v1664
        %v5305 = vunpack.c.h.b16 %v1664
        %v5306 = vunpack.c.l.b16 %v1665
        %v5307 = vunpack.c.h.b16 %v1665
        %v5308 = vunpack.c.l.b16 %v1666
        %v5309 = vunpack.c.h.b16 %v1666
        %v5310 = vunpack.c.l.b16 %v1667
        %v5311 = vunpack.c.h.b16 %v1667
        %v5312 = vunpack.c.l.b16 %v1668
        %v5313 = vunpack.c.h.b16 %v1668
        %v5314 = vunpack.c.l.b16 %v1669
        %v5315 = vunpack.c.h.b16 %v1669
        %v5316 = vunpack.c.l.b16 %v1670
        %v5317 = vunpack.c.h.b16 %v1670
        %v5318 = vunpack.c.l.b16 %v1671
        %v5319 = vunpack.c.h.b16 %v1671
        %v5320 = vunpack.c.l.b16 %v1672
        %v5321 = vunpack.c.h.b16 %v1672
        %v5322 = vunpack.c.l.b16 %v1673
        %v5323 = vunpack.c.h.b16 %v1673
        %v5324 = vunpack.c.l.b16 %v1674
        %v5325 = vunpack.c.h.b16 %v1674
        %v5326 = vunpack.c.l.b16 %v1675
        %v5327 = vunpack.c.h.b16 %v1675
        %v5328 = vunpack.c.l.b16 %v1676
        %v5329 = vunpack.c.h.b16 %v1676
        %v5330 = vunpack.c.l.b16 %v1677
        %v5331 = vunpack.c.h.b16 %v1677
        %v5332 = vunpack.c.l.b16 %v1678
        %v5333 = vunpack.c.h.b16 %v1678
        %v5334 = vunpack.c.l.b16 %v1679
        %v5335 = vunpack.c.h.b16 %v1679
        %v5336 = vunpack.c.l.b16 %v1680
        %v5337 = vunpack.c.h.b16 %v1680
        %v5338 = vunpack.c.l.b16 %v1681
        %v5339 = vunpack.c.h.b16 %v1681
        %v5340 = vunpack.c.l.b16 %v1682
        %v5341 = vunpack.c.h.b16 %v1682
        %v5342 = vunpack.c.l.b16 %v1683
        %v5343 = vunpack.c.h.b16 %v1683
        %v5344 = vunpack.c.l.b16 %v1684
        %v5345 = vunpack.c.h.b16 %v1684
        %v5346 = vunpack.c.l.b16 %v1685
        %v5347 = vunpack.c.h.b16 %v1685
        %v5348 = vunpack.c.l.b16 %v1686
        %v5349 = vunpack.c.h.b16 %v1686
        %v5350 = vunpack.c.l.b16 %v1687
        %v5351 = vunpack.c.h.b16 %v1687
        %v5352 = vunpack.c.l.b16 %v1688
        %v5353 = vunpack.c.h.b16 %v1688
        %v5354 = vunpack.c.l.b16 %v1689
        %v5355 = vunpack.c.h.b16 %v1689
        %v5356 = vunpack.c.l.b16 %v1690
        %v5357 = vunpack.c.h.b16 %v1690
        %v5358 = vunpack.c.l.b16 %v1691
        %v5359 = vunpack.c.h.b16 %v1691
        %v5360 = vunpack.c.l.b16 %v1692
        %v5361 = vunpack.c.h.b16 %v1692
        %v5362 = vunpack.c.l.b16 %v1693
        %v5363 = vunpack.c.h.b16 %v1693
        %v5364 = vunpack.c.l.b16 %v1694
        %v5365 = vunpack.c.h.b16 %v1694
        %v5366 = vunpack.c.l.b16 %v1695
        %v5367 = vunpack.c.h.b16 %v1695
        %v5368 = vunpack.c.l.b16 %v1696
        %v5369 = vunpack.c.h.b16 %v1696
        %v5370 = vunpack.c.l.b16 %v1697
        %v5371 = vunpack.c.h.b16 %v1697
        %v5372 = vunpack.c.l.b16 %v1698
        %v5373 = vunpack.c.h.b16 %v1698
        %v5374 = vunpack.c.l.b16 %v1699
        %v5375 = vunpack.c.h.b16 %v1699
        %v5376 = vunpack.c.l.b16 %v1700
        %v5377 = vunpack.c.h.b16 %v1700
        %v5378 = vunpack.c.l.b16 %v1701
        %v5379 = vunpack.c.h.b16 %v1701
        %v5380 = vunpack.c.l.b16 %v1702
        %v5381 = vunpack.c.h.b16 %v1702
        %v5382 = vunpack.c.l.b16 %v1703
        %v5383 = vunpack.c.h.b16 %v1703
        %v5384 = vunpack.c.l.b16 %v1704
        %v5385 = vunpack.c.h.b16 %v1704
        %v5386 = vunpack.c.l.b16 %v1705
        %v5387 = vunpack.c.h.b16 %v1705
        %v5388 = vunpack.c.l.b16 %v1706
        %v5389 = vunpack.c.h.b16 %v1706
        %v5390 = vunpack.c.l.b16 %v1707
        %v5391 = vunpack.c.h.b16 %v1707
        %v5392 = vunpack.c.l.b16 %v1708
        %v5393 = vunpack.c.h.b16 %v1708
        %v5394 = vunpack.c.l.b16 %v1709
        %v5395 = vunpack.c.h.b16 %v1709
        %v5396 = vunpack.c.l.b16 %v1710
        %v5397 = vunpack.c.h.b16 %v1710
        %v5398 = vunpack.c.l.b16 %v1711
        %v5399 = vunpack.c.h.b16 %v1711
        %v5400 = vunpack.c.l.b16 %v1712
        %v5401 = vunpack.c.h.b16 %v1712
        %v5402 = vunpack.c.l.b16 %v1713
        %v5403 = vunpack.c.h.b16 %v1713
        %v5404 = vunpack.c.l.b16 %v1714
        %v5405 = vunpack.c.h.b16 %v1714
        %v5406 = vunpack.c.l.b16 %v1715
        %v5407 = vunpack.c.h.b16 %v1715
        %v5408 = vunpack.c.l.b16 %v1716
        %v5409 = vunpack.c.h.b16 %v1716
        %v5410 = vunpack.c.l.b16 %v1717
        %v5411 = vunpack.c.h.b16 %v1717
        %v5412 = vunpack.c.l.b16 %v1718
        %v5413 = vunpack.c.h.b16 %v1718
        %v5414 = vunpack.c.l.b16 %v1719
        %v5415 = vunpack.c.h.b16 %v1719
        %v5416 = vunpack.c.l.b16 %v1720
        %v5417 = vunpack.c.h.b16 %v1720
        %v5418 = vunpack.c.l.b16 %v1721
        %v5419 = vunpack.c.h.b16 %v1721
        %v5420 = vunpack.c.l.b16 %v1722
        %v5421 = vunpack.c.h.b16 %v1722
        %v5422 = vunpack.c.l.b16 %v1723
        %v5423 = vunpack.c.h.b16 %v1723
        %v5424 = vunpack.c.l.b16 %v1724
        %v5425 = vunpack.c.h.b16 %v1724
        %v5426 = vunpack.c.l.b16 %v1725
        %v5427 = vunpack.c.h.b16 %v1725
        %v5428 = vunpack.c.l.b16 %v1726
        %v5429 = vunpack.c.h.b16 %v1726
        %v5430 = vunpack.c.l.b16 %v1727
        %v5431 = vunpack.c.h.b16 %v1727
        %v5432 = vunpack.c.l.b16 %v1728
        %v5433 = vunpack.c.h.b16 %v1728
        %v5434 = vunpack.c.l.b16 %v1729
        %v5435 = vunpack.c.h.b16 %v1729
        %v5436 = vunpack.c.l.b16 %v1730
        %v5437 = vunpack.c.h.b16 %v1730
        %v5438 = vunpack.c.l.b16 %v1731
        %v5439 = vunpack.c.h.b16 %v1731
        %v5440 = vunpack.c.l.b16 %v1732
        %v5441 = vunpack.c.h.b16 %v1732
        %v5442 = vunpack.c.l.b16 %v1733
        %v5443 = vunpack.c.h.b16 %v1733
        %v5444 = vunpack.c.l.b16 %v1734
        %v5445 = vunpack.c.h.b16 %v1734
        %v5446 = vunpack.c.l.b16 %v1735
        %v5447 = vunpack.c.h.b16 %v1735
        %v5448 = vunpack.c.l.b16 %v1736
        %v5449 = vunpack.c.h.b16 %v1736
        %v5450 = vunpack.c.l.b16 %v1737
        %v5451 = vunpack.c.h.b16 %v1737
        %v5452 = vunpack.c.l.b16 %v1738
        %v5453 = vunpack.c.h.b16 %v1738
        %v5454 = vunpack.c.l.b16 %v1739
        %v5455 = vunpack.c.h.b16 %v1739
        %v5456 = vunpack.c.l.b16 %v1740
        %v5457 = vunpack.c.h.b16 %v1740
        %v5458 = vunpack.c.l.b16 %v1741
        %v5459 = vunpack.c.h.b16 %v1741
        %v5460 = vunpack.c.l.b16 %v1742
        %v5461 = vunpack.c.h.b16 %v1742
        %v5462 = vunpack.c.l.b16 %v1743
        %v5463 = vunpack.c.h.b16 %v1743
        %v5464 = vunpack.c.l.b16 %v1744
        %v5465 = vunpack.c.h.b16 %v1744
        %v5466 = vunpack.c.l.b16 %v1745
        %v5467 = vunpack.c.h.b16 %v1745
        %v5468 = vunpack.c.l.b16 %v1746
        %v5469 = vunpack.c.h.b16 %v1746
        %v5470 = vunpack.c.l.b16 %v1747
        %v5471 = vunpack.c.h.b16 %v1747
        %v5472 = vunpack.c.l.b16 %v1748
        %v5473 = vunpack.c.h.b16 %v1748
        %v5474 = vunpack.c.l.b16 %v1749
        %v5475 = vunpack.c.h.b16 %v1749
        %v5476 = vunpack.c.l.b16 %v1750
        %v5477 = vunpack.c.h.b16 %v1750
        %v5478 = vunpack.c.l.b16 %v1751
        %v5479 = vunpack.c.h.b16 %v1751
        %v5480 = vunpack.c.l.b16 %v1752
        %v5481 = vunpack.c.h.b16 %v1752
        %v5482 = vunpack.c.l.b16 %v1753
        %v5483 = vunpack.c.h.b16 %v1753
        %v5484 = vunpack.c.l.b16 %v1754
        %v5485 = vunpack.c.h.b16 %v1754
        %v5486 = vunpack.c.l.b16 %v1755
        %v5487 = vunpack.c.h.b16 %v1755
        %v5488 = vunpack.c.l.b16 %v1756
        %v5489 = vunpack.c.h.b16 %v1756
        %v5490 = vunpack.c.l.b16 %v1757
        %v5491 = vunpack.c.h.b16 %v1757
        %v5492 = vunpack.c.l.b16 %v1758
        %v5493 = vunpack.c.h.b16 %v1758
        %v5494 = vunpack.c.l.b16 %v1759
        %v5495 = vunpack.c.h.b16 %v1759
        %v5496 = vunpack.c.l.b16 %v1760
        %v5497 = vunpack.c.h.b16 %v1760
        %v5498 = vunpack.c.l.b16 %v1761
        %v5499 = vunpack.c.h.b16 %v1761
        %v5500 = vunpack.c.l.b16 %v1762
        %v5501 = vunpack.c.h.b16 %v1762
        %v5502 = vunpack.c.l.b16 %v1763
        %v5503 = vunpack.c.h.b16 %v1763
        %v5504 = vunpack.c.l.b16 %v1764
        %v5505 = vunpack.c.h.b16 %v1764
        %v5506 = vunpack.c.l.b16 %v1765
        %v5507 = vunpack.c.h.b16 %v1765
        %v5508 = vunpack.c.l.b16 %v1766
        %v5509 = vunpack.c.h.b16 %v1766
        %v5510 = vunpack.c.l.b16 %v1767
        %v5511 = vunpack.c.h.b16 %v1767
        %v5512 = vunpack.c.l.b16 %v1768
        %v5513 = vunpack.c.h.b16 %v1768
        %v5514 = vunpack.c.l.b16 %v1769
        %v5515 = vunpack.c.h.b16 %v1769
        %v5516 = vunpack.c.l.b16 %v1770
        %v5517 = vunpack.c.h.b16 %v1770
        %v5518 = vunpack.c.l.b16 %v1771
        %v5519 = vunpack.c.h.b16 %v1771
        %v5520 = vunpack.c.l.b16 %v1772
        %v5521 = vunpack.c.h.b16 %v1772
        %v5522 = vunpack.c.l.b16 %v1773
        %v5523 = vunpack.c.h.b16 %v1773
        %v5524 = vunpack.c.l.b16 %v1774
        %v5525 = vunpack.c.h.b16 %v1774
        %v5526 = vunpack.c.l.b16 %v1775
        %v5527 = vunpack.c.h.b16 %v1775
        %v5528 = vunpack.c.l.b16 %v1776
        %v5529 = vunpack.c.h.b16 %v1776
        %v5530 = vunpack.c.l.b16 %v1777
        %v5531 = vunpack.c.h.b16 %v1777
        %v5532 = vunpack.c.l.b16 %v1778
        %v5533 = vunpack.c.h.b16 %v1778
        %v5534 = vunpack.c.l.b16 %v1779
        %v5535 = vunpack.c.h.b16 %v1779
        %v5536 = vunpack.c.l.b16 %v1780
        %v5537 = vunpack.c.h.b16 %v1780
        %v5538 = vunpack.c.l.b16 %v1781
        %v5539 = vunpack.c.h.b16 %v1781
        %v5540 = vunpack.c.l.b16 %v1782
        %v5541 = vunpack.c.h.b16 %v1782
        %v5542 = vunpack.c.l.b16 %v1783
        %v5543 = vunpack.c.h.b16 %v1783
        %v5544 = vunpack.c.l.b16 %v1784
        %v5545 = vunpack.c.h.b16 %v1784
        %v5546 = vunpack.c.l.b16 %v1785
        %v5547 = vunpack.c.h.b16 %v1785
        %v5548 = vunpack.c.l.b16 %v1786
        %v5549 = vunpack.c.h.b16 %v1786
        %v5550 = vunpack.c.l.b16 %v1787
        %v5551 = vunpack.c.h.b16 %v1787
        %v5552 = vunpack.c.l.b16 %v1788
        %v5553 = vunpack.c.h.b16 %v1788
        %v5554 = vunpack.c.l.b16 %v1789
        %v5555 = vunpack.c.h.b16 %v1789
        %v5556 = vunpack.c.l.b16 %v1790
        %v5557 = vunpack.c.h.b16 %v1790
        %v5558 = vunpack.c.l.b16 %v1791
        %v5559 = vunpack.c.h.b16 %v1791
        %v5560 = vunpack.c.l.b16 %v1792
        %v5561 = vunpack.c.h.b16 %v1792
        %v5562 = vunpack.c.l.b16 %v1793
        %v5563 = vunpack.c.h.b16 %v1793
        %v5564 = vunpack.c.l.b16 %v1794
        %v5565 = vunpack.c.h.b16 %v1794
        %v5566 = vunpack.c.l.b16 %v1795
        %v5567 = vunpack.c.h.b16 %v1795
        %v5568 = vunpack.c.l.b16 %v1796
        %v5569 = vunpack.c.h.b16 %v1796
        %v5570 = vunpack.c.l.b16 %v1797
        %v5571 = vunpack.c.h.b16 %v1797
        %v5572 = vunpack.c.l.b16 %v1798
        %v5573 = vunpack.c.h.b16 %v1798
        %v5574 = vunpack.c.l.b16 %v1799
        %v5575 = vunpack.c.h.b16 %v1799
        %v5576 = vunpack.c.l.b16 %v1800
        %v5577 = vunpack.c.h.b16 %v1800
        %v5578 = vunpack.c.l.b16 %v1801
        %v5579 = vunpack.c.h.b16 %v1801
        %v5580 = vunpack.c.l.b16 %v1802
        %v5581 = vunpack.c.h.b16 %v1802
        %v5582 = vunpack.c.l.b16 %v1803
        %v5583 = vunpack.c.h.b16 %v1803
        %v5584 = vunpack.c.l.b16 %v1804
        %v5585 = vunpack.c.h.b16 %v1804
        %v5586 = vunpack.c.l.b16 %v1805
        %v5587 = vunpack.c.h.b16 %v1805
        %v5588 = vunpack.c.l.b16 %v1806
        %v5589 = vunpack.c.h.b16 %v1806
        %v5590 = vunpack.c.l.b16 %v1807
        %v5591 = vunpack.c.h.b16 %v1807
        %v5592 = vunpack.c.l.b16 %v1808
        %v5593 = vunpack.c.h.b16 %v1808
        %v5594 = vunpack.c.l.b16 %v1809
        %v5595 = vunpack.c.h.b16 %v1809
        %v5596 = vunpack.c.l.b16 %v1810
        %v5597 = vunpack.c.h.b16 %v1810
        %v5598 = vunpack.c.l.b16 %v1811
        %v5599 = vunpack.c.h.b16 %v1811
        %v5600 = vunpack.c.l.b16 %v1812
        %v5601 = vunpack.c.h.b16 %v1812
        %v5602 = vunpack.c.l.b16 %v1813
        %v5603 = vunpack.c.h.b16 %v1813
        %v5604 = vunpack.c.l.b16 %v1814
        %v5605 = vunpack.c.h.b16 %v1814
        %v5606 = vunpack.c.l.b16 %v1815
        %v5607 = vunpack.c.h.b16 %v1815
        %v5608 = vunpack.c.l.b16 %v1816
        %v5609 = vunpack.c.h.b16 %v1816
        %v5610 = vunpack.c.l.b16 %v1817
        %v5611 = vunpack.c.h.b16 %v1817
        %v5612 = vunpack.c.l.b16 %v1818
        %v5613 = vunpack.c.h.b16 %v1818
        %v5614 = vunpack.c.l.b16 %v1819
        %v5615 = vunpack.c.h.b16 %v1819
        %v5616 = vunpack.c.l.b16 %v1820
        %v5617 = vunpack.c.h.b16 %v1820
        %v5618 = vunpack.c.l.b16 %v1821
        %v5619 = vunpack.c.h.b16 %v1821
        %v5620 = vunpack.c.l.b16 %v1822
        %v5621 = vunpack.c.h.b16 %v1822
        %v5622 = vunpack.c.l.b16 %v1823
        %v5623 = vunpack.c.h.b16 %v1823
        %v5624 = vunpack.c.l.b16 %v1824
        %v5625 = vunpack.c.h.b16 %v1824
        %v5626 = vunpack.c.l.b16 %v1825
        %v5627 = vunpack.c.h.b16 %v1825
        %v5628 = vunpack.c.l.b16 %v1826
        %v5629 = vunpack.c.h.b16 %v1826
        %v5630 = vunpack.c.l.b16 %v1827
        %v5631 = vunpack.c.h.b16 %v1827
        %v5632 = vunpack.c.l.b16 %v1828
        %v5633 = vunpack.c.h.b16 %v1828
        %v5634 = vunpack.c.l.b16 %v1829
        %v5635 = vunpack.c.h.b16 %v1829
        %v5636 = vunpack.c.l.b16 %v1830
        %v5637 = vunpack.c.h.b16 %v1830
        %v5638 = vunpack.c.l.b16 %v1831
        %v5639 = vunpack.c.h.b16 %v1831
        %v5640 = vunpack.c.l.b16 %v1832
        %v5641 = vunpack.c.h.b16 %v1832
        %v5642 = vunpack.c.l.b16 %v1833
        %v5643 = vunpack.c.h.b16 %v1833
        %v5644 = vunpack.c.l.b16 %v1834
        %v5645 = vunpack.c.h.b16 %v1834
        %v5646 = vunpack.c.l.b16 %v1835
        %v5647 = vunpack.c.h.b16 %v1835
        %v5648 = vunpack.c.l.b16 %v1836
        %v5649 = vunpack.c.h.b16 %v1836
        %v5650 = vunpack.c.l.b16 %v1837
        %v5651 = vunpack.c.h.b16 %v1837
        %v5652 = vunpack.c.l.b16 %v1838
        %v5653 = vunpack.c.h.b16 %v1838
        %v5654 = vunpack.c.l.b16 %v1839
        %v5655 = vunpack.c.h.b16 %v1839
        %v5656 = vunpack.c.l.b16 %v1840
        %v5657 = vunpack.c.h.b16 %v1840
        %v5658 = vunpack.c.l.b16 %v1841
        %v5659 = vunpack.c.h.b16 %v1841
        %v5660 = vunpack.c.l.b16 %v1842
        %v5661 = vunpack.c.h.b16 %v1842
        %v5662 = vunpack.c.l.b16 %v1843
        %v5663 = vunpack.c.h.b16 %v1843
        %v5664 = vunpack.c.l.b16 %v1844
        %v5665 = vunpack.c.h.b16 %v1844
        %v5666 = vunpack.c.l.b16 %v1845
        %v5667 = vunpack.c.h.b16 %v1845
        %v5668 = vunpack.c.l.b16 %v1846
        %v5669 = vunpack.c.h.b16 %v1846
        %v5670 = vunpack.c.l.b16 %v1847
        %v5671 = vunpack.c.h.b16 %v1847
        %v5672 = vunpack.c.l.b16 %v1848
        %v5673 = vunpack.c.h.b16 %v1848
        %v5674 = vunpack.c.l.b16 %v1849
        %v5675 = vunpack.c.h.b16 %v1849
        %v5676 = vunpack.c.l.b16 %v1850
        %v5677 = vunpack.c.h.b16 %v1850
        %v5678 = vunpack.c.l.b16 %v1851
        %v5679 = vunpack.c.h.b16 %v1851
        %v5680 = vunpack.c.l.b16 %v1852
        %v5681 = vunpack.c.h.b16 %v1852
        %v5682 = vunpack.c.l.b16 %v1853
        %v5683 = vunpack.c.h.b16 %v1853
        %v5684 = vunpack.c.l.b16 %v1854
        %v5685 = vunpack.c.h.b16 %v1854
        %v5686 = vunpack.c.l.b16 %v1855
        %v5687 = vunpack.c.h.b16 %v1855
        %v5688 = vunpack.c.l.b16 %v1856
        %v5689 = vunpack.c.h.b16 %v1856
        %v5690 = vunpack.c.l.b16 %v1857
        %v5691 = vunpack.c.h.b16 %v1857
        %v5692 = vunpack.c.l.b16 %v1858
        %v5693 = vunpack.c.h.b16 %v1858
        %v5694 = vunpack.c.l.b16 %v1859
        %v5695 = vunpack.c.h.b16 %v1859
        %v5696 = vunpack.c.l.b16 %v1860
        %v5697 = vunpack.c.h.b16 %v1860
        %v5698 = vunpack.c.l.b16 %v1861
        %v5699 = vunpack.c.h.b16 %v1861
        %v5700 = vunpack.c.l.b16 %v1862
        %v5701 = vunpack.c.h.b16 %v1862
        %v5702 = vunpack.c.l.b16 %v1863
        %v5703 = vunpack.c.h.b16 %v1863
        %v5704 = vpack.c.b16 %v3152, %v3144
        %v5705 = vpack.c.b16 %v3153, %v3145
        %v5706 = vpack.c.b16 %v3154, %v3146
        %v5707 = vpack.c.b16 %v3155, %v3147
        %v5708 = vpack.c.b16 %v3156, %v3148
        %v5709 = vpack.c.b16 %v3157, %v3149
        %v5710 = vpack.c.b16 %v3158, %v3150
        %v5711 = vpack.c.b16 %v3159, %v3151
        %v5712 = vpack.c.b16 %v3168, %v3160
        %v5713 = vpack.c.b16 %v3169, %v3161
        %v5714 = vpack.c.b16 %v3170, %v3162
        %v5715 = vpack.c.b16 %v3171, %v3163
        %v5716 = vpack.c.b16 %v3172, %v3164
        %v5717 = vpack.c.b16 %v3173, %v3165
        %v5718 = vpack.c.b16 %v3174, %v3166
        %v5719 = vpack.c.b16 %v3175, %v3167
        %v5720 = vpack.c.b16 %v3184, %v3176
        %v5721 = vpack.c.b16 %v3185, %v3177
        %v5722 = vpack.c.b16 %v3186, %v3178
        %v5723 = vpack.c.b16 %v3187, %v3179
        %v5724 = vpack.c.b16 %v3188, %v3180
        %v5725 = vpack.c.b16 %v3189, %v3181
        %v5726 = vpack.c.b16 %v3190, %v3182
        %v5727 = vpack.c.b16 %v3191, %v3183
        %v5728 = vpack.c.b16 %v3200, %v3192
        %v5729 = vpack.c.b16 %v3201, %v3193
        %v5730 = vpack.c.b16 %v3202, %v3194
        %v5731 = vpack.c.b16 %v3203, %v3195
        %v5732 = vpack.c.b16 %v3204, %v3196
        %v5733 = vpack.c.b16 %v3205, %v3197
        %v5734 = vpack.c.b16 %v3206, %v3198
        %v5735 = vpack.c.b16 %v3207, %v3199
        %v5736 = vpack.c.b16 %v3216, %v3208
        %v5737 = vpack.c.b16 %v3217, %v3209
        %v5738 = vpack.c.b16 %v3218, %v3210
        %v5739 = vpack.c.b16 %v3219, %v3211
        %v5740 = vpack.c.b16 %v3220, %v3212
        %v5741 = vpack.c.b16 %v3221, %v3213
        %v5742 = vpack.c.b16 %v3222, %v3214
        %v5743 = vpack.c.b16 %v3223, %v3215
        %v5744 = vpack.c.b16 %v3232, %v3224
        %v5745 = vpack.c.b16 %v3233, %v3225
        %v5746 = vpack.c.b16 %v3234, %v3226
        %v5747 = vpack.c.b16 %v3235, %v3227
        %v5748 = vpack.c.b16 %v3236, %v3228
        %v5749 = vpack.c.b16 %v3237, %v3229
        %v5750 = vpack.c.b16 %v3238, %v3230
        %v5751 = vpack.c.b16 %v3239, %v3231
        %v5752 = vpack.c.b16 %v3248, %v3240
        %v5753 = vpack.c.b16 %v3249, %v3241
        %v5754 = vpack.c.b16 %v3250, %v3242
        %v5755 = vpack.c.b16 %v3251, %v3243
        %v5756 = vpack.c.b16 %v3252, %v3244
        %v5757 = vpack.c.b16 %v3253, %v3245
        %v5758 = vpack.c.b16 %v3254, %v3246
        %v5759 = vpack.c.b16 %v3255, %v3247
        %v5760 = vpack.c.b16 %v3264, %v3256
        %v5761 = vpack.c.b16 %v3265, %v3257
        %v5762 = vpack.c.b16 %v3266, %v3258
        %v5763 = vpack.c.b16 %v3267, %v3259
        %v5764 = vpack.c.b16 %v3268, %v3260
        %v5765 = vpack.c.b16 %v3269, %v3261
        %v5766 = vpack.c.b16 %v3270, %v3262
        %v5767 = vpack.c.b16 %v3271, %v3263
        %v5768 = vpack.c.b16 %v3280, %v3272
        %v5769 = vpack.c.b16 %v3281, %v3273
        %v5770 = vpack.c.b16 %v3282, %v3274
        %v5771 = vpack.c.b16 %v3283, %v3275
        %v5772 = vpack.c.b16 %v3284, %v3276
        %v5773 = vpack.c.b16 %v3285, %v3277
        %v5774 = vpack.c.b16 %v3286, %v3278
        %v5775 = vpack.c.b16 %v3287, %v3279
        %v5776 = vpack.c.b16 %v3296, %v3288
        %v5777 = vpack.c.b16 %v3297, %v3289
        %v5778 = vpack.c.b16 %v3298, %v3290
        %v5779 = vpack.c.b16 %v3299, %v3291
        %v5780 = vpack.c.b16 %v3300, %v3292
        %v5781 = vpack.c.b16 %v3301, %v3293
        %v5782 = vpack.c.b16 %v3302, %v3294
        %v5783 = vpack.c.b16 %v3303, %v3295
        %v5784 = vpack.c.b16 %v3312, %v3304
        %v5785 = vpack.c.b16 %v3313, %v3305
        %v5786 = vpack.c.b16 %v3314, %v3306
        %v5787 = vpack.c.b16 %v3315, %v3307
        %v5788 = vpack.c.b16 %v3316, %v3308
        %v5789 = vpack.c.b16 %v3317, %v3309
        %v5790 = vpack.c.b16 %v3318, %v3310
        %v5791 = vpack.c.b16 %v3319, %v3311
        %v5792 = vpack.c.b16 %v3328, %v3320
        %v5793 = vpack.c.b16 %v3329, %v3321
        %v5794 = vpack.c.b16 %v3330, %v3322
        %v5795 = vpack.c.b16 %v3331, %v3323
        %v5796 = vpack.c.b16 %v3332, %v3324
        %v5797 = vpack.c.b16 %v3333, %v3325
        %v5798 = vpack.c.b16 %v3334, %v3326
        %v5799 = vpack.c.b16 %v3335, %v3327
        %v5800 = vpack.c.b16 %v3344, %v3336
        %v5801 = vpack.c.b16 %v3345, %v3337
        %v5802 = vpack.c.b16 %v3346, %v3338
        %v5803 = vpack.c.b16 %v3347, %v3339
        %v5804 = vpack.c.b16 %v3348, %v3340
        %v5805 = vpack.c.b16 %v3349, %v3341
        %v5806 = vpack.c.b16 %v3350, %v3342
        %v5807 = vpack.c.b16 %v3351, %v3343
        %v5808 = vpack.c.b16 %v3360, %v3352
        %v5809 = vpack.c.b16 %v3361, %v3353
        %v5810 = vpack.c.b16 %v3362, %v3354
        %v5811 = vpack.c.b16 %v3363, %v3355
        %v5812 = vpack.c.b16 %v3364, %v3356
        %v5813 = vpack.c.b16 %v3365, %v3357
        %v5814 = vpack.c.b16 %v3366, %v3358
        %v5815 = vpack.c.b16 %v3367, %v3359
        %v5816 = vpack.c.b16 %v3376, %v3368
        %v5817 = vpack.c.b16 %v3377, %v3369
        %v5818 = vpack.c.b16 %v3378, %v3370
        %v5819 = vpack.c.b16 %v3379, %v3371
        %v5820 = vpack.c.b16 %v3380, %v3372
        %v5821 = vpack.c.b16 %v3381, %v3373
        %v5822 = vpack.c.b16 %v3382, %v3374
        %v5823 = vpack.c.b16 %v3383, %v3375
        %v5824 = vpack.c.b16 %v3392, %v3384
        %v5825 = vpack.c.b16 %v3393, %v3385
        %v5826 = vpack.c.b16 %v3394, %v3386
        %v5827 = vpack.c.b16 %v3395, %v3387
        %v5828 = vpack.c.b16 %v3396, %v3388
        %v5829 = vpack.c.b16 %v3397, %v3389
        %v5830 = vpack.c.b16 %v3398, %v3390
        %v5831 = vpack.c.b16 %v3399, %v3391
        %v5832 = vpack.c.b16 %v3408, %v3400
        %v5833 = vpack.c.b16 %v3409, %v3401
        %v5834 = vpack.c.b16 %v3410, %v3402
        %v5835 = vpack.c.b16 %v3411, %v3403
        %v5836 = vpack.c.b16 %v3412, %v3404
        %v5837 = vpack.c.b16 %v3413, %v3405
        %v5838 = vpack.c.b16 %v3414, %v3406
        %v5839 = vpack.c.b16 %v3415, %v3407
        %v5840 = vpack.c.b16 %v3424, %v3416
        %v5841 = vpack.c.b16 %v3425, %v3417
        %v5842 = vpack.c.b16 %v3426, %v3418
        %v5843 = vpack.c.b16 %v3427, %v3419
        %v5844 = vpack.c.b16 %v3428, %v3420
        %v5845 = vpack.c.b16 %v3429, %v3421
        %v5846 = vpack.c.b16 %v3430, %v3422
        %v5847 = vpack.c.b16 %v3431, %v3423
        %v5848 = vpack.c.b16 %v3440, %v3432
        %v5849 = vpack.c.b16 %v3441, %v3433
        %v5850 = vpack.c.b16 %v3442, %v3434
        %v5851 = vpack.c.b16 %v3443, %v3435
        %v5852 = vpack.c.b16 %v3444, %v3436
        %v5853 = vpack.c.b16 %v3445, %v3437
        %v5854 = vpack.c.b16 %v3446, %v3438
        %v5855 = vpack.c.b16 %v3447, %v3439
        %v5856 = vpack.c.b16 %v3456, %v3448
        %v5857 = vpack.c.b16 %v3457, %v3449
        %v5858 = vpack.c.b16 %v3458, %v3450
        %v5859 = vpack.c.b16 %v3459, %v3451
        %v5860 = vpack.c.b16 %v3460, %v3452
        %v5861 = vpack.c.b16 %v3461, %v3453
        %v5862 = vpack.c.b16 %v3462, %v3454
        %v5863 = vpack.c.b16 %v3463, %v3455
        %v5864 = vpack.c.b16 %v3472, %v3464
        %v5865 = vpack.c.b16 %v3473, %v3465
        %v5866 = vpack.c.b16 %v3474, %v3466
        %v5867 = vpack.c.b16 %v3475, %v3467
        %v5868 = vpack.c.b16 %v3476, %v3468
        %v5869 = vpack.c.b16 %v3477, %v3469
        %v5870 = vpack.c.b16 %v3478, %v3470
        %v5871 = vpack.c.b16 %v3479, %v3471
        %v5872 = vpack.c.b16 %v3488, %v3480
        %v5873 = vpack.c.b16 %v3489, %v3481
        %v5874 = vpack.c.b16 %v3490, %v3482
        %v5875 = vpack.c.b16 %v3491, %v3483
        %v5876 = vpack.c.b16 %v3492, %v3484
        %v5877 = vpack.c.b16 %v3493, %v3485
        %v5878 = vpack.c.b16 %v3494, %v3486
        %v5879 = vpack.c.b16 %v3495, %v3487
        %v5880 = vpack.c.b16 %v3504, %v3496
        %v5881 = vpack.c.b16 %v3505, %v3497
        %v5882 = vpack.c.b16 %v3506, %v3498
        %v5883 = vpack.c.b16 %v3507, %v3499
        %v5884 = vpack.c.b16 %v3508, %v3500
        %v5885 = vpack.c.b16 %v3509, %v3501
        %v5886 = vpack.c.b16 %v3510, %v3502
        %v5887 = vpack.c.b16 %v3511, %v3503
        %v5888 = vpack.c.b16 %v3520, %v3512
        %v5889 = vpack.c.b16 %v3521, %v3513
        %v5890 = vpack.c.b16 %v3522, %v3514
        %v5891 = vpack.c.b16 %v3523, %v3515
        %v5892 = vpack.c.b16 %v3524, %v3516
        %v5893 = vpack.c.b16 %v3525, %v3517
        %v5894 = vpack.c.b16 %v3526, %v3518
        %v5895 = vpack.c.b16 %v3527, %v3519
        %v5896 = vpack.c.b16 %v3536, %v3528
        %v5897 = vpack.c.b16 %v3537, %v3529
        %v5898 = vpack.c.b16 %v3538, %v3530
        %v5899 = vpack.c.b16 %v3539, %v3531
        %v5900 = vpack.c.b16 %v3540, %v3532
        %v5901 = vpack.c.b16 %v3541, %v3533
        %v5902 = vpack.c.b16 %v3542, %v3534
        %v5903 = vpack.c.b16 %v3543, %v3535
        %v5904 = vpack.c.b16 %v3552, %v3544
        %v5905 = vpack.c.b16 %v3553, %v3545
        %v5906 = vpack.c.b16 %v3554, %v3546
        %v5907 = vpack.c.b16 %v3555, %v3547
        %v5908 = vpack.c.b16 %v3556, %v3548
        %v5909 = vpack.c.b16 %v3557, %v3549
        %v5910 = vpack.c.b16 %v3558, %v3550
        %v5911 = vpack.c.b16 %v3559, %v3551
        %v5912 = vpack.c.b16 %v3568, %v3560
        %v5913 = vpack.c.b16 %v3569, %v3561
        %v5914 = vpack.c.b16 %v3570, %v3562
        %v5915 = vpack.c.b16 %v3571, %v3563
        %v5916 = vpack.c.b16 %v3572, %v3564
        %v5917 = vpack.c.b16 %v3573, %v3565
        %v5918 = vpack.c.b16 %v3574, %v3566
        %v5919 = vpack.c.b16 %v3575, %v3567
        %v5920 = vpack.c.b16 %v3584, %v3576
        %v5921 = vpack.c.b16 %v3585, %v3577
        %v5922 = vpack.c.b16 %v3586, %v3578
        %v5923 = vpack.c.b16 %v3587, %v3579
        %v5924 = vpack.c.b16 %v3588, %v3580
        %v5925 = vpack.c.b16 %v3589, %v3581
        %v5926 = vpack.c.b16 %v3590, %v3582
        %v5927 = vpack.c.b16 %v3591, %v3583
        %v5928 = vpack.c.b16 %v3600, %v3592
        %v5929 = vpack.c.b16 %v3601, %v3593
        %v5930 = vpack.c.b16 %v3602, %v3594
        %v5931 = vpack.c.b16 %v3603, %v3595
        %v5932 = vpack.c.b16 %v3604, %v3596
        %v5933 = vpack.c.b16 %v3605, %v3597
        %v5934 = vpack.c.b16 %v3606, %v3598
        %v5935 = vpack.c.b16 %v3607, %v3599
        %v5936 = vpack.c.b16 %v3616, %v3608
        %v5937 = vpack.c.b16 %v3617, %v3609
        %v5938 = vpack.c.b16 %v3618, %v3610
        %v5939 = vpack.c.b16 %v3619, %v3611
        %v5940 = vpack.c.b16 %v3620, %v3612
        %v5941 = vpack.c.b16 %v3621, %v3613
        %v5942 = vpack.c.b16 %v3622, %v3614
        %v5943 = vpack.c.b16 %v3623, %v3615
        %v5944 = vpack.c.b16 %v3632, %v3624
        %v5945 = vpack.c.b16 %v3633, %v3625
        %v5946 = vpack.c.b16 %v3634, %v3626
        %v5947 = vpack.c.b16 %v3635, %v3627
        %v5948 = vpack.c.b16 %v3636, %v3628
        %v5949 = vpack.c.b16 %v3637, %v3629
        %v5950 = vpack.c.b16 %v3638, %v3630
        %v5951 = vpack.c.b16 %v3639, %v3631
        %v5952 = vpack.c.b16 %v3648, %v3640
        %v5953 = vpack.c.b16 %v3649, %v3641
        %v5954 = vpack.c.b16 %v3650, %v3642
        %v5955 = vpack.c.b16 %v3651, %v3643
        %v5956 = vpack.c.b16 %v3652, %v3644
        %v5957 = vpack.c.b16 %v3653, %v3645
        %v5958 = vpack.c.b16 %v3654, %v3646
        %v5959 = vpack.c.b16 %v3655, %v3647
        %v5960 = vpack.c.b16 %v3664, %v3656
        %v5961 = vpack.c.b16 %v3665, %v3657
        %v5962 = vpack.c.b16 %v3666, %v3658
        %v5963 = vpack.c.b16 %v3667, %v3659
        %v5964 = vpack.c.b16 %v3668, %v3660
        %v5965 = vpack.c.b16 %v3669, %v3661
        %v5966 = vpack.c.b16 %v3670, %v3662
        %v5967 = vpack.c.b16 %v3671, %v3663
        %v5968 = vpack.c.b16 %v3680, %v3672
        %v5969 = vpack.c.b16 %v3681, %v3673
        %v5970 = vpack.c.b16 %v3682, %v3674
        %v5971 = vpack.c.b16 %v3683, %v3675
        %v5972 = vpack.c.b16 %v3684, %v3676
        %v5973 = vpack.c.b16 %v3685, %v3677
        %v5974 = vpack.c.b16 %v3686, %v3678
        %v5975 = vpack.c.b16 %v3687, %v3679
        %v5976 = vpack.c.b16 %v3696, %v3688
        %v5977 = vpack.c.b16 %v3697, %v3689
        %v5978 = vpack.c.b16 %v3698, %v3690
        %v5979 = vpack.c.b16 %v3699, %v3691
        %v5980 = vpack.c.b16 %v3700, %v3692
        %v5981 = vpack.c.b16 %v3701, %v3693
        %v5982 = vpack.c.b16 %v3702, %v3694
        %v5983 = vpack.c.b16 %v3703, %v3695
        %v5984 = vpack.c.b16 %v3712, %v3704
        %v5985 = vpack.c.b16 %v3713, %v3705
        %v5986 = vpack.c.b16 %v3714, %v3706
        %v5987 = vpack.c.b16 %v3715, %v3707
        %v5988 = vpack.c.b16 %v3716, %v3708
        %v5989 = vpack.c.b16 %v3717, %v3709
        %v5990 = vpack.c.b16 %v3718, %v3710
        %v5991 = vpack.c.b16 %v3719, %v3711
        %v5992 = vpack.c.b16 %v3728, %v3720
        %v5993 = vpack.c.b16 %v3729, %v3721
        %v5994 = vpack.c.b16 %v3730, %v3722
        %v5995 = vpack.c.b16 %v3731, %v3723
        %v5996 = vpack.c.b16 %v3732, %v3724
        %v5997 = vpack.c.b16 %v3733, %v3725
        %v5998 = vpack.c.b16 %v3734, %v3726
        %v5999 = vpack.c.b16 %v3735, %v3727
        %v6000 = vpack.c.b16 %v3744, %v3736
        %v6001 = vpack.c.b16 %v3745, %v3737
        %v6002 = vpack.c.b16 %v3746, %v3738
        %v6003 = vpack.c.b16 %v3747, %v3739
        %v6004 = vpack.c.b16 %v3748, %v3740
        %v6005 = vpack.c.b16 %v3749, %v3741
        %v6006 = vpack.c.b16 %v3750, %v3742
        %v6007 = vpack.c.b16 %v3751, %v3743
        %v6008 = vpack.c.b16 %v3760, %v3752
        %v6009 = vpack.c.b16 %v3761, %v3753
        %v6010 = vpack.c.b16 %v3762, %v3754
        %v6011 = vpack.c.b16 %v3763, %v3755
        %v6012 = vpack.c.b16 %v3764, %v3756
        %v6013 = vpack.c.b16 %v3765, %v3757
        %v6014 = vpack.c.b16 %v3766, %v3758
        %v6015 = vpack.c.b16 %v3767, %v3759
        %v6016 = vpack.c.b16 %v3776, %v3768
        %v6017 = vpack.c.b16 %v3777, %v3769
        %v6018 = vpack.c.b16 %v3778, %v3770
        %v6019 = vpack.c.b16 %v3779, %v3771
        %v6020 = vpack.c.b16 %v3780, %v3772
        %v6021 = vpack.c.b16 %v3781, %v3773
        %v6022 = vpack.c.b16 %v3782, %v3774
        %v6023 = vpack.c.b16 %v3783, %v3775
        %v6024 = vpack.c.b16 %v3792, %v3784
        %v6025 = vpack.c.b16 %v3793, %v3785
        %v6026 = vpack.c.b16 %v3794, %v3786
        %v6027 = vpack.c.b16 %v3795, %v3787
        %v6028 = vpack.c.b16 %v3796, %v3788
        %v6029 = vpack.c.b16 %v3797, %v3789
        %v6030 = vpack.c.b16 %v3798, %v3790
        %v6031 = vpack.c.b16 %v3799, %v3791
        %v6032 = vpack.c.b16 %v3808, %v3800
        %v6033 = vpack.c.b16 %v3809, %v3801
        %v6034 = vpack.c.b16 %v3810, %v3802
        %v6035 = vpack.c.b16 %v3811, %v3803
        %v6036 = vpack.c.b16 %v3812, %v3804
        %v6037 = vpack.c.b16 %v3813, %v3805
        %v6038 = vpack.c.b16 %v3814, %v3806
        %v6039 = vpack.c.b16 %v3815, %v3807
        %v6040 = vpack.c.b16 %v3824, %v3816
        %v6041 = vpack.c.b16 %v3825, %v3817
        %v6042 = vpack.c.b16 %v3826, %v3818
        %v6043 = vpack.c.b16 %v3827, %v3819
        %v6044 = vpack.c.b16 %v3828, %v3820
        %v6045 = vpack.c.b16 %v3829, %v3821
        %v6046 = vpack.c.b16 %v3830, %v3822
        %v6047 = vpack.c.b16 %v3831, %v3823
        %v6048 = vpack.c.b16 %v3840, %v3832
        %v6049 = vpack.c.b16 %v3841, %v3833
        %v6050 = vpack.c.b16 %v3842, %v3834
        %v6051 = vpack.c.b16 %v3843, %v3835
        %v6052 = vpack.c.b16 %v3844, %v3836
        %v6053 = vpack.c.b16 %v3845, %v3837
        %v6054 = vpack.c.b16 %v3846, %v3838
        %v6055 = vpack.c.b16 %v3847, %v3839
        %v6056 = vpack.c.b16 %v3856, %v3848
        %v6057 = vpack.c.b16 %v3857, %v3849
        %v6058 = vpack.c.b16 %v3858, %v3850
        %v6059 = vpack.c.b16 %v3859, %v3851
        %v6060 = vpack.c.b16 %v3860, %v3852
        %v6061 = vpack.c.b16 %v3861, %v3853
        %v6062 = vpack.c.b16 %v3862, %v3854
        %v6063 = vpack.c.b16 %v3863, %v3855
        %v6064 = vpack.c.b16 %v3872, %v3864
        %v6065 = vpack.c.b16 %v3873, %v3865
        %v6066 = vpack.c.b16 %v3874, %v3866
        %v6067 = vpack.c.b16 %v3875, %v3867
        %v6068 = vpack.c.b16 %v3876, %v3868
        %v6069 = vpack.c.b16 %v3877, %v3869
        %v6070 = vpack.c.b16 %v3878, %v3870
        %v6071 = vpack.c.b16 %v3879, %v3871
        %v6072 = vpack.c.b16 %v3888, %v3880
        %v6073 = vpack.c.b16 %v3889, %v3881
        %v6074 = vpack.c.b16 %v3890, %v3882
        %v6075 = vpack.c.b16 %v3891, %v3883
        %v6076 = vpack.c.b16 %v3892, %v3884
        %v6077 = vpack.c.b16 %v3893, %v3885
        %v6078 = vpack.c.b16 %v3894, %v3886
        %v6079 = vpack.c.b16 %v3895, %v3887
        %v6080 = vpack.c.b16 %v3904, %v3896
        %v6081 = vpack.c.b16 %v3905, %v3897
        %v6082 = vpack.c.b16 %v3906, %v3898
        %v6083 = vpack.c.b16 %v3907, %v3899
        %v6084 = vpack.c.b16 %v3908, %v3900
        %v6085 = vpack.c.b16 %v3909, %v3901
        %v6086 = vpack.c.b16 %v3910, %v3902
        %v6087 = vpack.c.b16 %v3911, %v3903
        %v6088 = vpack.c.b16 %v3920, %v3912
        %v6089 = vpack.c.b16 %v3921, %v3913
        %v6090 = vpack.c.b16 %v3922, %v3914
        %v6091 = vpack.c.b16 %v3923, %v3915
        %v6092 = vpack.c.b16 %v3924, %v3916
        %v6093 = vpack.c.b16 %v3925, %v3917
        %v6094 = vpack.c.b16 %v3926, %v3918
        %v6095 = vpack.c.b16 %v3927, %v3919
        %v6096 = vpack.c.b16 %v3936, %v3928
        %v6097 = vpack.c.b16 %v3937, %v3929
        %v6098 = vpack.c.b16 %v3938, %v3930
        %v6099 = vpack.c.b16 %v3939, %v3931
        %v6100 = vpack.c.b16 %v3940, %v3932
        %v6101 = vpack.c.b16 %v3941, %v3933
        %v6102 = vpack.c.b16 %v3942, %v3934
        %v6103 = vpack.c.b16 %v3943, %v3935
        %v6104 = vpack.c.b16 %v3952, %v3944
        %v6105 = vpack.c.b16 %v3953, %v3945
        %v6106 = vpack.c.b16 %v3954, %v3946
        %v6107 = vpack.c.b16 %v3955, %v3947
        %v6108 = vpack.c.b16 %v3956, %v3948
        %v6109 = vpack.c.b16 %v3957, %v3949
        %v6110 = vpack.c.b16 %v3958, %v3950
        %v6111 = vpack.c.b16 %v3959, %v3951
        %v6112 = vpack.c.b16 %v3968, %v3960
        %v6113 = vpack.c.b16 %v3969, %v3961
        %v6114 = vpack.c.b16 %v3970, %v3962
        %v6115 = vpack.c.b16 %v3971, %v3963
        %v6116 = vpack.c.b16 %v3972, %v3964
        %v6117 = vpack.c.b16 %v3973, %v3965
        %v6118 = vpack.c.b16 %v3974, %v3966
        %v6119 = vpack.c.b16 %v3975, %v3967
        %v6120 = vpack.c.b16 %v3984, %v3976
        %v6121 = vpack.c.b16 %v3985, %v3977
        %v6122 = vpack.c.b16 %v3986, %v3978
        %v6123 = vpack.c.b16 %v3987, %v3979
        %v6124 = vpack.c.b16 %v3988, %v3980
        %v6125 = vpack.c.b16 %v3989, %v3981
        %v6126 = vpack.c.b16 %v3990, %v3982
        %v6127 = vpack.c.b16 %v3991, %v3983
        %v6128 = vpack.c.b16 %v4000, %v3992
        %v6129 = vpack.c.b16 %v4001, %v3993
        %v6130 = vpack.c.b16 %v4002, %v3994
        %v6131 = vpack.c.b16 %v4003, %v3995
        %v6132 = vpack.c.b16 %v4004, %v3996
        %v6133 = vpack.c.b16 %v4005, %v3997
        %v6134 = vpack.c.b16 %v4006, %v3998
        %v6135 = vpack.c.b16 %v4007, %v3999
        %v6136 = vpack.c.b16 %v4016, %v4008
        %v6137 = vpack.c.b16 %v4017, %v4009
        %v6138 = vpack.c.b16 %v4018, %v4010
        %v6139 = vpack.c.b16 %v4019, %v4011
        %v6140 = vpack.c.b16 %v4020, %v4012
        %v6141 = vpack.c.b16 %v4021, %v4013
        %v6142 = vpack.c.b16 %v4022, %v4014
        %v6143 = vpack.c.b16 %v4023, %v4015
        %v6144 = vpack.c.b16 %v4032, %v4024
        %v6145 = vpack.c.b16 %v4033, %v4025
        %v6146 = vpack.c.b16 %v4034, %v4026
        %v6147 = vpack.c.b16 %v4035, %v4027
        %v6148 = vpack.c.b16 %v4036, %v4028
        %v6149 = vpack.c.b16 %v4037, %v4029
        %v6150 = vpack.c.b16 %v4038, %v4030
        %v6151 = vpack.c.b16 %v4039, %v4031
        %v6152 = vpack.c.b16 %v4048, %v4040
        %v6153 = vpack.c.b16 %v4049, %v4041
        %v6154 = vpack.c.b16 %v4050, %v4042
        %v6155 = vpack.c.b16 %v4051, %v4043
        %v6156 = vpack.c.b16 %v4052, %v4044
        %v6157 = vpack.c.b16 %v4053, %v4045
        %v6158 = vpack.c.b16 %v4054, %v4046
        %v6159 = vpack.c.b16 %v4055, %v4047
        %v6160 = vpack.c.b16 %v4064, %v4056
        %v6161 = vpack.c.b16 %v4065, %v4057
        %v6162 = vpack.c.b16 %v4066, %v4058
        %v6163 = vpack.c.b16 %v4067, %v4059
        %v6164 = vpack.c.b16 %v4068, %v4060
        %v6165 = vpack.c.b16 %v4069, %v4061
        %v6166 = vpack.c.b16 %v4070, %v4062
        %v6167 = vpack.c.b16 %v4071, %v4063
        %v6168 = vpack.c.b16 %v4080, %v4072
        %v6169 = vpack.c.b16 %v4081, %v4073
        %v6170 = vpack.c.b16 %v4082, %v4074
        %v6171 = vpack.c.b16 %v4083, %v4075
        %v6172 = vpack.c.b16 %v4084, %v4076
        %v6173 = vpack.c.b16 %v4085, %v4077
        %v6174 = vpack.c.b16 %v4086, %v4078
        %v6175 = vpack.c.b16 %v4087, %v4079
        %v6176 = vpack.c.b16 %v4096, %v4088
        %v6177 = vpack.c.b16 %v4097, %v4089
        %v6178 = vpack.c.b16 %v4098, %v4090
        %v6179 = vpack.c.b16 %v4099, %v4091
        %v6180 = vpack.c.b16 %v4100, %v4092
        %v6181 = vpack.c.b16 %v4101, %v4093
        %v6182 = vpack.c.b16 %v4102, %v4094
        %v6183 = vpack.c.b16 %v4103, %v4095
        %v6184 = vpack.c.b16 %v4112, %v4104
        %v6185 = vpack.c.b16 %v4113, %v4105
        %v6186 = vpack.c.b16 %v4114, %v4106
        %v6187 = vpack.c.b16 %v4115, %v4107
        %v6188 = vpack.c.b16 %v4116, %v4108
        %v6189 = vpack.c.b16 %v4117, %v4109
        %v6190 = vpack.c.b16 %v4118, %v4110
        %v6191 = vpack.c.b16 %v4119, %v4111
        %v6192 = vpack.c.b16 %v4128, %v4120
        %v6193 = vpack.c.b16 %v4129, %v4121
        %v6194 = vpack.c.b16 %v4130, %v4122
        %v6195 = vpack.c.b16 %v4131, %v4123
        %v6196 = vpack.c.b16 %v4132, %v4124
        %v6197 = vpack.c.b16 %v4133, %v4125
        %v6198 = vpack.c.b16 %v4134, %v4126
        %v6199 = vpack.c.b16 %v4135, %v4127
        %v6200 = vpack.c.b16 %v4144, %v4136
        %v6201 = vpack.c.b16 %v4145, %v4137
        %v6202 = vpack.c.b16 %v4146, %v4138
        %v6203 = vpack.c.b16 %v4147, %v4139
        %v6204 = vpack.c.b16 %v4148, %v4140
        %v6205 = vpack.c.b16 %v4149, %v4141
        %v6206 = vpack.c.b16 %v4150, %v4142
        %v6207 = vpack.c.b16 %v4151, %v4143
        %v6208 = vpack.c.b16 %v4160, %v4152
        %v6209 = vpack.c.b16 %v4161, %v4153
        %v6210 = vpack.c.b16 %v4162, %v4154
        %v6211 = vpack.c.b16 %v4163, %v4155
        %v6212 = vpack.c.b16 %v4164, %v4156
        %v6213 = vpack.c.b16 %v4165, %v4157
        %v6214 = vpack.c.b16 %v4166, %v4158
        %v6215 = vpack.c.b16 %v4167, %v4159
        %v6216 = vpack.c.b16 %v4176, %v4168
        %v6217 = vpack.c.b16 %v4177, %v4169
        %v6218 = vpack.c.b16 %v4178, %v4170
        %v6219 = vpack.c.b16 %v4179, %v4171
        %v6220 = vpack.c.b16 %v4180, %v4172
        %v6221 = vpack.c.b16 %v4181, %v4173
        %v6222 = vpack.c.b16 %v4182, %v4174
        %v6223 = vpack.c.b16 %v4183, %v4175
        %v6224 = vpack.c.b16 %v4192, %v4184
        %v6225 = vpack.c.b16 %v4193, %v4185
        %v6226 = vpack.c.b16 %v4194, %v4186
        %v6227 = vpack.c.b16 %v4195, %v4187
        %v6228 = vpack.c.b16 %v4196, %v4188
        %v6229 = vpack.c.b16 %v4197, %v4189
        %v6230 = vpack.c.b16 %v4198, %v4190
        %v6231 = vpack.c.b16 %v4199, %v4191
        %v6232 = vpack.c.b16 %v4208, %v4200
        %v6233 = vpack.c.b16 %v4209, %v4201
        %v6234 = vpack.c.b16 %v4210, %v4202
        %v6235 = vpack.c.b16 %v4211, %v4203
        %v6236 = vpack.c.b16 %v4212, %v4204
        %v6237 = vpack.c.b16 %v4213, %v4205
        %v6238 = vpack.c.b16 %v4214, %v4206
        %v6239 = vpack.c.b16 %v4215, %v4207
        %v6240 = vpack.c.b16 %v4224, %v4216
        %v6241 = vpack.c.b16 %v4225, %v4217
        %v6242 = vpack.c.b16 %v4226, %v4218
        %v6243 = vpack.c.b16 %v4227, %v4219
        %v6244 = vpack.c.b16 %v4228, %v4220
        %v6245 = vpack.c.b16 %v4229, %v4221
        %v6246 = vpack.c.b16 %v4230, %v4222
        %v6247 = vpack.c.b16 %v4231, %v4223
        %v6248 = vpack.c.b16 %v4240, %v4232
        %v6249 = vpack.c.b16 %v4241, %v4233
        %v6250 = vpack.c.b16 %v4242, %v4234
        %v6251 = vpack.c.b16 %v4243, %v4235
        %v6252 = vpack.c.b16 %v4244, %v4236
        %v6253 = vpack.c.b16 %v4245, %v4237
        %v6254 = vpack.c.b16 %v4246, %v4238
        %v6255 = vpack.c.b16 %v4247, %v4239
        %v6256 = vpack.c.b16 %v4256, %v4248
        %v6257 = vpack.c.b16 %v4257, %v4249
        %v6258 = vpack.c.b16 %v4258, %v4250
        %v6259 = vpack.c.b16 %v4259, %v4251
        %v6260 = vpack.c.b16 %v4260, %v4252
        %v6261 = vpack.c.b16 %v4261, %v4253
        %v6262 = vpack.c.b16 %v4262, %v4254
        %v6263 = vpack.c.b16 %v4263, %v4255
        %v6264 = vpack.c.b16 %v4272, %v4264
        %v6265 = vpack.c.b16 %v4273, %v4265
        %v6266 = vpack.c.b16 %v4274, %v4266
        %v6267 = vpack.c.b16 %v4275, %v4267
        %v6268 = vpack.c.b16 %v4276, %v4268
        %v6269 = vpack.c.b16 %v4277, %v4269
        %v6270 = vpack.c.b16 %v4278, %v4270
        %v6271 = vpack.c.b16 %v4279, %v4271
        %v6272 = vpack.c.b16 %v4288, %v4280
        %v6273 = vpack.c.b16 %v4289, %v4281
        %v6274 = vpack.c.b16 %v4290, %v4282
        %v6275 = vpack.c.b16 %v4291, %v4283
        %v6276 = vpack.c.b16 %v4292, %v4284
        %v6277 = vpack.c.b16 %v4293, %v4285
        %v6278 = vpack.c.b16 %v4294, %v4286
        %v6279 = vpack.c.b16 %v4295, %v4287
        %v6280 = vpack.c.b16 %v4304, %v4296
        %v6281 = vpack.c.b16 %v4305, %v4297
        %v6282 = vpack.c.b16 %v4306, %v4298
        %v6283 = vpack.c.b16 %v4307, %v4299
        %v6284 = vpack.c.b16 %v4308, %v4300
        %v6285 = vpack.c.b16 %v4309, %v4301
        %v6286 = vpack.c.b16 %v4310, %v4302
        %v6287 = vpack.c.b16 %v4311, %v4303
        %v6288 = vpack.c.b16 %v4320, %v4312
        %v6289 = vpack.c.b16 %v4321, %v4313
        %v6290 = vpack.c.b16 %v4322, %v4314
        %v6291 = vpack.c.b16 %v4323, %v4315
        %v6292 = vpack.c.b16 %v4324, %v4316
        %v6293 = vpack.c.b16 %v4325, %v4317
        %v6294 = vpack.c.b16 %v4326, %v4318
        %v6295 = vpack.c.b16 %v4327, %v4319
        %v6296 = vpack.c.b16 %v4336, %v4328
        %v6297 = vpack.c.b16 %v4337, %v4329
        %v6298 = vpack.c.b16 %v4338, %v4330
        %v6299 = vpack.c.b16 %v4339, %v4331
        %v6300 = vpack.c.b16 %v4340, %v4332
        %v6301 = vpack.c.b16 %v4341, %v4333
        %v6302 = vpack.c.b16 %v4342, %v4334
        %v6303 = vpack.c.b16 %v4343, %v4335
        %v6304 = vpack.c.b16 %v4352, %v4344
        %v6305 = vpack.c.b16 %v4353, %v4345
        %v6306 = vpack.c.b16 %v4354, %v4346
        %v6307 = vpack.c.b16 %v4355, %v4347
        %v6308 = vpack.c.b16 %v4356, %v4348
        %v6309 = vpack.c.b16 %v4357, %v4349
        %v6310 = vpack.c.b16 %v4358, %v4350
        %v6311 = vpack.c.b16 %v4359, %v4351
        %v6312 = vpack.c.b16 %v4368, %v4360
        %v6313 = vpack.c.b16 %v4369, %v4361
        %v6314 = vpack.c.b16 %v4370, %v4362
        %v6315 = vpack.c.b16 %v4371, %v4363
        %v6316 = vpack.c.b16 %v4372, %v4364
        %v6317 = vpack.c.b16 %v4373, %v4365
        %v6318 = vpack.c.b16 %v4374, %v4366
        %v6319 = vpack.c.b16 %v4375, %v4367
        %v6320 = vpack.c.b16 %v4384, %v4376
        %v6321 = vpack.c.b16 %v4385, %v4377
        %v6322 = vpack.c.b16 %v4386, %v4378
        %v6323 = vpack.c.b16 %v4387, %v4379
        %v6324 = vpack.c.b16 %v4388, %v4380
        %v6325 = vpack.c.b16 %v4389, %v4381
        %v6326 = vpack.c.b16 %v4390, %v4382
        %v6327 = vpack.c.b16 %v4391, %v4383
        %v6328 = vpack.c.b16 %v4400, %v4392
        %v6329 = vpack.c.b16 %v4401, %v4393
        %v6330 = vpack.c.b16 %v4402, %v4394
        %v6331 = vpack.c.b16 %v4403, %v4395
        %v6332 = vpack.c.b16 %v4404, %v4396
        %v6333 = vpack.c.b16 %v4405, %v4397
        %v6334 = vpack.c.b16 %v4406, %v4398
        %v6335 = vpack.c.b16 %v4407, %v4399
        %v6336 = vpack.c.b16 %v4416, %v4408
        %v6337 = vpack.c.b16 %v4417, %v4409
        %v6338 = vpack.c.b16 %v4418, %v4410
        %v6339 = vpack.c.b16 %v4419, %v4411
        %v6340 = vpack.c.b16 %v4420, %v4412
        %v6341 = vpack.c.b16 %v4421, %v4413
        %v6342 = vpack.c.b16 %v4422, %v4414
        %v6343 = vpack.c.b16 %v4423, %v4415
        %v6344 = vpack.c.b16 %v4432, %v4424
        %v6345 = vpack.c.b16 %v4433, %v4425
        %v6346 = vpack.c.b16 %v4434, %v4426
        %v6347 = vpack.c.b16 %v4435, %v4427
        %v6348 = vpack.c.b16 %v4436, %v4428
        %v6349 = vpack.c.b16 %v4437, %v4429
        %v6350 = vpack.c.b16 %v4438, %v4430
        %v6351 = vpack.c.b16 %v4439, %v4431
        %v6352 = vpack.c.b16 %v4448, %v4440
        %v6353 = vpack.c.b16 %v4449, %v4441
        %v6354 = vpack.c.b16 %v4450, %v4442
        %v6355 = vpack.c.b16 %v4451, %v4443
        %v6356 = vpack.c.b16 %v4452, %v4444
        %v6357 = vpack.c.b16 %v4453, %v4445
        %v6358 = vpack.c.b16 %v4454, %v4446
        %v6359 = vpack.c.b16 %v4455, %v4447
        %v6360 = vpack.c.b16 %v4464, %v4456
        %v6361 = vpack.c.b16 %v4465, %v4457
        %v6362 = vpack.c.b16 %v4466, %v4458
        %v6363 = vpack.c.b16 %v4467, %v4459
        %v6364 = vpack.c.b16 %v4468, %v4460
        %v6365 = vpack.c.b16 %v4469, %v4461
        %v6366 = vpack.c.b16 %v4470, %v4462
        %v6367 = vpack.c.b16 %v4471, %v4463
        %v6368 = vpack.c.b16 %v4480, %v4472
        %v6369 = vpack.c.b16 %v4481, %v4473
        %v6370 = vpack.c.b16 %v4482, %v4474
        %v6371 = vpack.c.b16 %v4483, %v4475
        %v6372 = vpack.c.b16 %v4484, %v4476
        %v6373 = vpack.c.b16 %v4485, %v4477
        %v6374 = vpack.c.b16 %v4486, %v4478
        %v6375 = vpack.c.b16 %v4487, %v4479
        %v6376 = vpack.c.b16 %v4496, %v4488
        %v6377 = vpack.c.b16 %v4497, %v4489
        %v6378 = vpack.c.b16 %v4498, %v4490
        %v6379 = vpack.c.b16 %v4499, %v4491
        %v6380 = vpack.c.b16 %v4500, %v4492
        %v6381 = vpack.c.b16 %v4501, %v4493
        %v6382 = vpack.c.b16 %v4502, %v4494
        %v6383 = vpack.c.b16 %v4503, %v4495
        %v6384 = vpack.c.b16 %v4512, %v4504
        %v6385 = vpack.c.b16 %v4513, %v4505
        %v6386 = vpack.c.b16 %v4514, %v4506
        %v6387 = vpack.c.b16 %v4515, %v4507
        %v6388 = vpack.c.b16 %v4516, %v4508
        %v6389 = vpack.c.b16 %v4517, %v4509
        %v6390 = vpack.c.b16 %v4518, %v4510
        %v6391 = vpack.c.b16 %v4519, %v4511
        %v6392 = vpack.c.b16 %v4528, %v4520
        %v6393 = vpack.c.b16 %v4529, %v4521
        %v6394 = vpack.c.b16 %v4530, %v4522
        %v6395 = vpack.c.b16 %v4531, %v4523
        %v6396 = vpack.c.b16 %v4532, %v4524
        %v6397 = vpack.c.b16 %v4533, %v4525
        %v6398 = vpack.c.b16 %v4534, %v4526
        %v6399 = vpack.c.b16 %v4535, %v4527
        %v6400 = vpack.c.b16 %v4544, %v4536
        %v6401 = vpack.c.b16 %v4545, %v4537
        %v6402 = vpack.c.b16 %v4546, %v4538
        %v6403 = vpack.c.b16 %v4547, %v4539
        %v6404 = vpack.c.b16 %v4548, %v4540
        %v6405 = vpack.c.b16 %v4549, %v4541
        %v6406 = vpack.c.b16 %v4550, %v4542
        %v6407 = vpack.c.b16 %v4551, %v4543
        %v6408 = vpack.c.b16 %v4560, %v4552
        %v6409 = vpack.c.b16 %v4561, %v4553
        %v6410 = vpack.c.b16 %v4562, %v4554
        %v6411 = vpack.c.b16 %v4563, %v4555
        %v6412 = vpack.c.b16 %v4564, %v4556
        %v6413 = vpack.c.b16 %v4565, %v4557
        %v6414 = vpack.c.b16 %v4566, %v4558
        %v6415 = vpack.c.b16 %v4567, %v4559
        %v6416 = vpack.c.b16 %v4576, %v4568
        %v6417 = vpack.c.b16 %v4577, %v4569
        %v6418 = vpack.c.b16 %v4578, %v4570
        %v6419 = vpack.c.b16 %v4579, %v4571
        %v6420 = vpack.c.b16 %v4580, %v4572
        %v6421 = vpack.c.b16 %v4581, %v4573
        %v6422 = vpack.c.b16 %v4582, %v4574
        %v6423 = vpack.c.b16 %v4583, %v4575
        %v6424 = vpack.c.b16 %v4592, %v4584
        %v6425 = vpack.c.b16 %v4593, %v4585
        %v6426 = vpack.c.b16 %v4594, %v4586
        %v6427 = vpack.c.b16 %v4595, %v4587
        %v6428 = vpack.c.b16 %v4596, %v4588
        %v6429 = vpack.c.b16 %v4597, %v4589
        %v6430 = vpack.c.b16 %v4598, %v4590
        %v6431 = vpack.c.b16 %v4599, %v4591
        %v6432 = vpack.c.b16 %v4608, %v4600
        %v6433 = vpack.c.b16 %v4609, %v4601
        %v6434 = vpack.c.b16 %v4610, %v4602
        %v6435 = vpack.c.b16 %v4611, %v4603
        %v6436 = vpack.c.b16 %v4612, %v4604
        %v6437 = vpack.c.b16 %v4613, %v4605
        %v6438 = vpack.c.b16 %v4614, %v4606
        %v6439 = vpack.c.b16 %v4615, %v4607
        %v6440 = vpack.c.b16 %v4624, %v4616
        %v6441 = vpack.c.b16 %v4625, %v4617
        %v6442 = vpack.c.b16 %v4626, %v4618
        %v6443 = vpack.c.b16 %v4627, %v4619
        %v6444 = vpack.c.b16 %v4628, %v4620
        %v6445 = vpack.c.b16 %v4629, %v4621
        %v6446 = vpack.c.b16 %v4630, %v4622
        %v6447 = vpack.c.b16 %v4631, %v4623
        %v6448 = vpack.c.b16 %v4640, %v4632
        %v6449 = vpack.c.b16 %v4641, %v4633
        %v6450 = vpack.c.b16 %v4642, %v4634
        %v6451 = vpack.c.b16 %v4643, %v4635
        %v6452 = vpack.c.b16 %v4644, %v4636
        %v6453 = vpack.c.b16 %v4645, %v4637
        %v6454 = vpack.c.b16 %v4646, %v4638
        %v6455 = vpack.c.b16 %v4647, %v4639
        %v6456 = vpack.c.b16 %v4656, %v4648
        %v6457 = vpack.c.b16 %v4657, %v4649
        %v6458 = vpack.c.b16 %v4658, %v4650
        %v6459 = vpack.c.b16 %v4659, %v4651
        %v6460 = vpack.c.b16 %v4660, %v4652
        %v6461 = vpack.c.b16 %v4661, %v4653
        %v6462 = vpack.c.b16 %v4662, %v4654
        %v6463 = vpack.c.b16 %v4663, %v4655
        %v6464 = vpack.c.b16 %v4672, %v4664
        %v6465 = vpack.c.b16 %v4673, %v4665
        %v6466 = vpack.c.b16 %v4674, %v4666
        %v6467 = vpack.c.b16 %v4675, %v4667
        %v6468 = vpack.c.b16 %v4676, %v4668
        %v6469 = vpack.c.b16 %v4677, %v4669
        %v6470 = vpack.c.b16 %v4678, %v4670
        %v6471 = vpack.c.b16 %v4679, %v4671
        %v6472 = vpack.c.b16 %v4688, %v4680
        %v6473 = vpack.c.b16 %v4689, %v4681
        %v6474 = vpack.c.b16 %v4690, %v4682
        %v6475 = vpack.c.b16 %v4691, %v4683
        %v6476 = vpack.c.b16 %v4692, %v4684
        %v6477 = vpack.c.b16 %v4693, %v4685
        %v6478 = vpack.c.b16 %v4694, %v4686
        %v6479 = vpack.c.b16 %v4695, %v4687
        %v6480 = vpack.c.b16 %v4704, %v4696
        %v6481 = vpack.c.b16 %v4705, %v4697
        %v6482 = vpack.c.b16 %v4706, %v4698
        %v6483 = vpack.c.b16 %v4707, %v4699
        %v6484 = vpack.c.b16 %v4708, %v4700
        %v6485 = vpack.c.b16 %v4709, %v4701
        %v6486 = vpack.c.b16 %v4710, %v4702
        %v6487 = vpack.c.b16 %v4711, %v4703
        %v6488 = vpack.c.b16 %v4720, %v4712
        %v6489 = vpack.c.b16 %v4721, %v4713
        %v6490 = vpack.c.b16 %v4722, %v4714
        %v6491 = vpack.c.b16 %v4723, %v4715
        %v6492 = vpack.c.b16 %v4724, %v4716
        %v6493 = vpack.c.b16 %v4725, %v4717
        %v6494 = vpack.c.b16 %v4726, %v4718
        %v6495 = vpack.c.b16 %v4727, %v4719
        %v6496 = vpack.c.b16 %v4736, %v4728
        %v6497 = vpack.c.b16 %v4737, %v4729
        %v6498 = vpack.c.b16 %v4738, %v4730
        %v6499 = vpack.c.b16 %v4739, %v4731
        %v6500 = vpack.c.b16 %v4740, %v4732
        %v6501 = vpack.c.b16 %v4741, %v4733
        %v6502 = vpack.c.b16 %v4742, %v4734
        %v6503 = vpack.c.b16 %v4743, %v4735
        %v6504 = vpack.c.b16 %v4752, %v4744
        %v6505 = vpack.c.b16 %v4753, %v4745
        %v6506 = vpack.c.b16 %v4754, %v4746
        %v6507 = vpack.c.b16 %v4755, %v4747
        %v6508 = vpack.c.b16 %v4756, %v4748
        %v6509 = vpack.c.b16 %v4757, %v4749
        %v6510 = vpack.c.b16 %v4758, %v4750
        %v6511 = vpack.c.b16 %v4759, %v4751
        %v6512 = vpack.c.b16 %v4768, %v4760
        %v6513 = vpack.c.b16 %v4769, %v4761
        %v6514 = vpack.c.b16 %v4770, %v4762
        %v6515 = vpack.c.b16 %v4771, %v4763
        %v6516 = vpack.c.b16 %v4772, %v4764
        %v6517 = vpack.c.b16 %v4773, %v4765
        %v6518 = vpack.c.b16 %v4774, %v4766
        %v6519 = vpack.c.b16 %v4775, %v4767
        %v6520 = vpack.c.b16 %v4784, %v4776
        %v6521 = vpack.c.b16 %v4785, %v4777
        %v6522 = vpack.c.b16 %v4786, %v4778
        %v6523 = vpack.c.b16 %v4787, %v4779
        %v6524 = vpack.c.b16 %v4788, %v4780
        %v6525 = vpack.c.b16 %v4789, %v4781
        %v6526 = vpack.c.b16 %v4790, %v4782
        %v6527 = vpack.c.b16 %v4791, %v4783
        %v6528 = vpack.c.b16 %v4800, %v4792
        %v6529 = vpack.c.b16 %v4801, %v4793
        %v6530 = vpack.c.b16 %v4802, %v4794
        %v6531 = vpack.c.b16 %v4803, %v4795
        %v6532 = vpack.c.b16 %v4804, %v4796
        %v6533 = vpack.c.b16 %v4805, %v4797
        %v6534 = vpack.c.b16 %v4806, %v4798
        %v6535 = vpack.c.b16 %v4807, %v4799
        %v6536 = vpack.c.b16 %v4816, %v4808
        %v6537 = vpack.c.b16 %v4817, %v4809
        %v6538 = vpack.c.b16 %v4818, %v4810
        %v6539 = vpack.c.b16 %v4819, %v4811
        %v6540 = vpack.c.b16 %v4820, %v4812
        %v6541 = vpack.c.b16 %v4821, %v4813
        %v6542 = vpack.c.b16 %v4822, %v4814
        %v6543 = vpack.c.b16 %v4823, %v4815
        %v6544 = vpack.c.b16 %v4832, %v4824
        %v6545 = vpack.c.b16 %v4833, %v4825
        %v6546 = vpack.c.b16 %v4834, %v4826
        %v6547 = vpack.c.b16 %v4835, %v4827
        %v6548 = vpack.c.b16 %v4836, %v4828
        %v6549 = vpack.c.b16 %v4837, %v4829
        %v6550 = vpack.c.b16 %v4838, %v4830
        %v6551 = vpack.c.b16 %v4839, %v4831
        %v6552 = vpack.c.b16 %v4848, %v4840
        %v6553 = vpack.c.b16 %v4849, %v4841
        %v6554 = vpack.c.b16 %v4850, %v4842
        %v6555 = vpack.c.b16 %v4851, %v4843
        %v6556 = vpack.c.b16 %v4852, %v4844
        %v6557 = vpack.c.b16 %v4853, %v4845
        %v6558 = vpack.c.b16 %v4854, %v4846
        %v6559 = vpack.c.b16 %v4855, %v4847
        %v6560 = vpack.c.b16 %v4864, %v4856
        %v6561 = vpack.c.b16 %v4865, %v4857
        %v6562 = vpack.c.b16 %v4866, %v4858
        %v6563 = vpack.c.b16 %v4867, %v4859
        %v6564 = vpack.c.b16 %v4868, %v4860
        %v6565 = vpack.c.b16 %v4869, %v4861
        %v6566 = vpack.c.b16 %v4870, %v4862
        %v6567 = vpack.c.b16 %v4871, %v4863
        %v6568 = vpack.c.b16 %v4880, %v4872
        %v6569 = vpack.c.b16 %v4881, %v4873
        %v6570 = vpack.c.b16 %v4882, %v4874
        %v6571 = vpack.c.b16 %v4883, %v4875
        %v6572 = vpack.c.b16 %v4884, %v4876
        %v6573 = vpack.c.b16 %v4885, %v4877
        %v6574 = vpack.c.b16 %v4886, %v4878
        %v6575 = vpack.c.b16 %v4887, %v4879
        %v6576 = vpack.c.b16 %v4896, %v4888
        %v6577 = vpack.c.b16 %v4897, %v4889
        %v6578 = vpack.c.b16 %v4898, %v4890
        %v6579 = vpack.c.b16 %v4899, %v4891
        %v6580 = vpack.c.b16 %v4900, %v4892
        %v6581 = vpack.c.b16 %v4901, %v4893
        %v6582 = vpack.c.b16 %v4902, %v4894
        %v6583 = vpack.c.b16 %v4903, %v4895
        %v6584 = vpack.c.b16 %v4912, %v4904
        %v6585 = vpack.c.b16 %v4913, %v4905
        %v6586 = vpack.c.b16 %v4914, %v4906
        %v6587 = vpack.c.b16 %v4915, %v4907
        %v6588 = vpack.c.b16 %v4916, %v4908
        %v6589 = vpack.c.b16 %v4917, %v4909
        %v6590 = vpack.c.b16 %v4918, %v4910
        %v6591 = vpack.c.b16 %v4919, %v4911
        %v6592 = vpack.c.b16 %v4928, %v4920
        %v6593 = vpack.c.b16 %v4929, %v4921
        %v6594 = vpack.c.b16 %v4930, %v4922
        %v6595 = vpack.c.b16 %v4931, %v4923
        %v6596 = vpack.c.b16 %v4932, %v4924
        %v6597 = vpack.c.b16 %v4933, %v4925
        %v6598 = vpack.c.b16 %v4934, %v4926
        %v6599 = vpack.c.b16 %v4935, %v4927
        %v6600 = vpack.c.b16 %v4944, %v4936
        %v6601 = vpack.c.b16 %v4945, %v4937
        %v6602 = vpack.c.b16 %v4946, %v4938
        %v6603 = vpack.c.b16 %v4947, %v4939
        %v6604 = vpack.c.b16 %v4948, %v4940
        %v6605 = vpack.c.b16 %v4949, %v4941
        %v6606 = vpack.c.b16 %v4950, %v4942
        %v6607 = vpack.c.b16 %v4951, %v4943
        %v6608 = vpack.c.b16 %v4960, %v4952
        %v6609 = vpack.c.b16 %v4961, %v4953
        %v6610 = vpack.c.b16 %v4962, %v4954
        %v6611 = vpack.c.b16 %v4963, %v4955
        %v6612 = vpack.c.b16 %v4964, %v4956
        %v6613 = vpack.c.b16 %v4965, %v4957
        %v6614 = vpack.c.b16 %v4966, %v4958
        %v6615 = vpack.c.b16 %v4967, %v4959
        %v6616 = vpack.c.b16 %v4976, %v4968
        %v6617 = vpack.c.b16 %v4977, %v4969
        %v6618 = vpack.c.b16 %v4978, %v4970
        %v6619 = vpack.c.b16 %v4979, %v4971
        %v6620 = vpack.c.b16 %v4980, %v4972
        %v6621 = vpack.c.b16 %v4981, %v4973
        %v6622 = vpack.c.b16 %v4982, %v4974
        %v6623 = vpack.c.b16 %v4983, %v4975
        %v6624 = vpack.c.b16 %v4992, %v4984
        %v6625 = vpack.c.b16 %v4993, %v4985
        %v6626 = vpack.c.b16 %v4994, %v4986
        %v6627 = vpack.c.b16 %v4995, %v4987
        %v6628 = vpack.c.b16 %v4996, %v4988
        %v6629 = vpack.c.b16 %v4997, %v4989
        %v6630 = vpack.c.b16 %v4998, %v4990
        %v6631 = vpack.c.b16 %v4999, %v4991
        %v6632 = vpack.c.b16 %v5008, %v5000
        %v6633 = vpack.c.b16 %v5009, %v5001
        %v6634 = vpack.c.b16 %v5010, %v5002
        %v6635 = vpack.c.b16 %v5011, %v5003
        %v6636 = vpack.c.b16 %v5012, %v5004
        %v6637 = vpack.c.b16 %v5013, %v5005
        %v6638 = vpack.c.b16 %v5014, %v5006
        %v6639 = vpack.c.b16 %v5015, %v5007
        %v6640 = vpack.c.b16 %v5024, %v5016
        %v6641 = vpack.c.b16 %v5025, %v5017
        %v6642 = vpack.c.b16 %v5026, %v5018
        %v6643 = vpack.c.b16 %v5027, %v5019
        %v6644 = vpack.c.b16 %v5028, %v5020
        %v6645 = vpack.c.b16 %v5029, %v5021
        %v6646 = vpack.c.b16 %v5030, %v5022
        %v6647 = vpack.c.b16 %v5031, %v5023
        %v6648 = vpack.c.b16 %v5040, %v5032
        %v6649 = vpack.c.b16 %v5041, %v5033
        %v6650 = vpack.c.b16 %v5042, %v5034
        %v6651 = vpack.c.b16 %v5043, %v5035
        %v6652 = vpack.c.b16 %v5044, %v5036
        %v6653 = vpack.c.b16 %v5045, %v5037
        %v6654 = vpack.c.b16 %v5046, %v5038
        %v6655 = vpack.c.b16 %v5047, %v5039
        %v6656 = vpack.c.b16 %v5056, %v5048
        %v6657 = vpack.c.b16 %v5057, %v5049
        %v6658 = vpack.c.b16 %v5058, %v5050
        %v6659 = vpack.c.b16 %v5059, %v5051
        %v6660 = vpack.c.b16 %v5060, %v5052
        %v6661 = vpack.c.b16 %v5061, %v5053
        %v6662 = vpack.c.b16 %v5062, %v5054
        %v6663 = vpack.c.b16 %v5063, %v5055
        %v6664 = vpack.c.b16 %v5072, %v5064
        %v6665 = vpack.c.b16 %v5073, %v5065
        %v6666 = vpack.c.b16 %v5074, %v5066
        %v6667 = vpack.c.b16 %v5075, %v5067
        %v6668 = vpack.c.b16 %v5076, %v5068
        %v6669 = vpack.c.b16 %v5077, %v5069
        %v6670 = vpack.c.b16 %v5078, %v5070
        %v6671 = vpack.c.b16 %v5079, %v5071
        %v6672 = vpack.c.b16 %v5088, %v5080
        %v6673 = vpack.c.b16 %v5089, %v5081
        %v6674 = vpack.c.b16 %v5090, %v5082
        %v6675 = vpack.c.b16 %v5091, %v5083
        %v6676 = vpack.c.b16 %v5092, %v5084
        %v6677 = vpack.c.b16 %v5093, %v5085
        %v6678 = vpack.c.b16 %v5094, %v5086
        %v6679 = vpack.c.b16 %v5095, %v5087
        %v6680 = vpack.c.b16 %v5104, %v5096
        %v6681 = vpack.c.b16 %v5105, %v5097
        %v6682 = vpack.c.b16 %v5106, %v5098
        %v6683 = vpack.c.b16 %v5107, %v5099
        %v6684 = vpack.c.b16 %v5108, %v5100
        %v6685 = vpack.c.b16 %v5109, %v5101
        %v6686 = vpack.c.b16 %v5110, %v5102
        %v6687 = vpack.c.b16 %v5111, %v5103
        %v6688 = vpack.c.b16 %v5120, %v5112
        %v6689 = vpack.c.b16 %v5121, %v5113
        %v6690 = vpack.c.b16 %v5122, %v5114
        %v6691 = vpack.c.b16 %v5123, %v5115
        %v6692 = vpack.c.b16 %v5124, %v5116
        %v6693 = vpack.c.b16 %v5125, %v5117
        %v6694 = vpack.c.b16 %v5126, %v5118
        %v6695 = vpack.c.b16 %v5127, %v5119
        %v6696 = vpack.c.b16 %v5136, %v5128
        %v6697 = vpack.c.b16 %v5137, %v5129
        %v6698 = vpack.c.b16 %v5138, %v5130
        %v6699 = vpack.c.b16 %v5139, %v5131
        %v6700 = vpack.c.b16 %v5140, %v5132
        %v6701 = vpack.c.b16 %v5141, %v5133
        %v6702 = vpack.c.b16 %v5142, %v5134
        %v6703 = vpack.c.b16 %v5143, %v5135
        %v6704 = vpack.c.b16 %v5152, %v5144
        %v6705 = vpack.c.b16 %v5153, %v5145
        %v6706 = vpack.c.b16 %v5154, %v5146
        %v6707 = vpack.c.b16 %v5155, %v5147
        %v6708 = vpack.c.b16 %v5156, %v5148
        %v6709 = vpack.c.b16 %v5157, %v5149
        %v6710 = vpack.c.b16 %v5158, %v5150
        %v6711 = vpack.c.b16 %v5159, %v5151
        %v6712 = vpack.c.b16 %v5168, %v5160
        %v6713 = vpack.c.b16 %v5169, %v5161
        %v6714 = vpack.c.b16 %v5170, %v5162
        %v6715 = vpack.c.b16 %v5171, %v5163
        %v6716 = vpack.c.b16 %v5172, %v5164
        %v6717 = vpack.c.b16 %v5173, %v5165
        %v6718 = vpack.c.b16 %v5174, %v5166
        %v6719 = vpack.c.b16 %v5175, %v5167
        %v6720 = vpack.c.b16 %v5184, %v5176
        %v6721 = vpack.c.b16 %v5185, %v5177
        %v6722 = vpack.c.b16 %v5186, %v5178
        %v6723 = vpack.c.b16 %v5187, %v5179
        %v6724 = vpack.c.b16 %v5188, %v5180
        %v6725 = vpack.c.b16 %v5189, %v5181
        %v6726 = vpack.c.b16 %v5190, %v5182
        %v6727 = vpack.c.b16 %v5191, %v5183
        %v6728 = vpack.c.b16 %v5200, %v5192
        %v6729 = vpack.c.b16 %v5201, %v5193
        %v6730 = vpack.c.b16 %v5202, %v5194
        %v6731 = vpack.c.b16 %v5203, %v5195
        %v6732 = vpack.c.b16 %v5204, %v5196
        %v6733 = vpack.c.b16 %v5205, %v5197
        %v6734 = vpack.c.b16 %v5206, %v5198
        %v6735 = vpack.c.b16 %v5207, %v5199
        %v6736 = vpack.c.b16 %v5216, %v5208
        %v6737 = vpack.c.b16 %v5217, %v5209
        %v6738 = vpack.c.b16 %v5218, %v5210
        %v6739 = vpack.c.b16 %v5219, %v5211
        %v6740 = vpack.c.b16 %v5220, %v5212
        %v6741 = vpack.c.b16 %v5221, %v5213
        %v6742 = vpack.c.b16 %v5222, %v5214
        %v6743 = vpack.c.b16 %v5223, %v5215
        %v6744 = vpack.c.b16 %v5232, %v5224
        %v6745 = vpack.c.b16 %v5233, %v5225
        %v6746 = vpack.c.b16 %v5234, %v5226
        %v6747 = vpack.c.b16 %v5235, %v5227
        %v6748 = vpack.c.b16 %v5236, %v5228
        %v6749 = vpack.c.b16 %v5237, %v5229
        %v6750 = vpack.c.b16 %v5238, %v5230
        %v6751 = vpack.c.b16 %v5239, %v5231
        %v6752 = vpack.c.b16 %v5248, %v5240
        %v6753 = vpack.c.b16 %v5249, %v5241
        %v6754 = vpack.c.b16 %v5250, %v5242
        %v6755 = vpack.c.b16 %v5251, %v5243
        %v6756 = vpack.c.b16 %v5252, %v5244
        %v6757 = vpack.c.b16 %v5253, %v5245
        %v6758 = vpack.c.b16 %v5254, %v5246
        %v6759 = vpack.c.b16 %v5255, %v5247
        %v6760 = vpack.c.b16 %v5264, %v5256
        %v6761 = vpack.c.b16 %v5265, %v5257
        %v6762 = vpack.c.b16 %v5266, %v5258
        %v6763 = vpack.c.b16 %v5267, %v5259
        %v6764 = vpack.c.b16 %v5268, %v5260
        %v6765 = vpack.c.b16 %v5269, %v5261
        %v6766 = vpack.c.b16 %v5270, %v5262
        %v6767 = vpack.c.b16 %v5271, %v5263
        %v6768 = vpack.c.b16 %v5280, %v5272
        %v6769 = vpack.c.b16 %v5281, %v5273
        %v6770 = vpack.c.b16 %v5282, %v5274
        %v6771 = vpack.c.b16 %v5283, %v5275
        %v6772 = vpack.c.b16 %v5284, %v5276
        %v6773 = vpack.c.b16 %v5285, %v5277
        %v6774 = vpack.c.b16 %v5286, %v5278
        %v6775 = vpack.c.b16 %v5287, %v5279
        %v6776 = vpack.c.b16 %v5296, %v5288
        %v6777 = vpack.c.b16 %v5297, %v5289
        %v6778 = vpack.c.b16 %v5298, %v5290
        %v6779 = vpack.c.b16 %v5299, %v5291
        %v6780 = vpack.c.b16 %v5300, %v5292
        %v6781 = vpack.c.b16 %v5301, %v5293
        %v6782 = vpack.c.b16 %v5302, %v5294
        %v6783 = vpack.c.b16 %v5303, %v5295
        %v6784 = vpack.c.b16 %v5312, %v5304
        %v6785 = vpack.c.b16 %v5313, %v5305
        %v6786 = vpack.c.b16 %v5314, %v5306
        %v6787 = vpack.c.b16 %v5315, %v5307
        %v6788 = vpack.c.b16 %v5316, %v5308
        %v6789 = vpack.c.b16 %v5317, %v5309
        %v6790 = vpack.c.b16 %v5318, %v5310
        %v6791 = vpack.c.b16 %v5319, %v5311
        %v6792 = vpack.c.b16 %v5328, %v5320
        %v6793 = vpack.c.b16 %v5329, %v5321
        %v6794 = vpack.c.b16 %v5330, %v5322
        %v6795 = vpack.c.b16 %v5331, %v5323
        %v6796 = vpack.c.b16 %v5332, %v5324
        %v6797 = vpack.c.b16 %v5333, %v5325
        %v6798 = vpack.c.b16 %v5334, %v5326
        %v6799 = vpack.c.b16 %v5335, %v5327
        %v6800 = vpack.c.b16 %v5344, %v5336
        %v6801 = vpack.c.b16 %v5345, %v5337
        %v6802 = vpack.c.b16 %v5346, %v5338
        %v6803 = vpack.c.b16 %v5347, %v5339
        %v6804 = vpack.c.b16 %v5348, %v5340
        %v6805 = vpack.c.b16 %v5349, %v5341
        %v6806 = vpack.c.b16 %v5350, %v5342
        %v6807 = vpack.c.b16 %v5351, %v5343
        %v6808 = vpack.c.b16 %v5360, %v5352
        %v6809 = vpack.c.b16 %v5361, %v5353
        %v6810 = vpack.c.b16 %v5362, %v5354
        %v6811 = vpack.c.b16 %v5363, %v5355
        %v6812 = vpack.c.b16 %v5364, %v5356
        %v6813 = vpack.c.b16 %v5365, %v5357
        %v6814 = vpack.c.b16 %v5366, %v5358
        %v6815 = vpack.c.b16 %v5367, %v5359
        %v6816 = vpack.c.b16 %v5376, %v5368
        %v6817 = vpack.c.b16 %v5377, %v5369
        %v6818 = vpack.c.b16 %v5378, %v5370
        %v6819 = vpack.c.b16 %v5379, %v5371
        %v6820 = vpack.c.b16 %v5380, %v5372
        %v6821 = vpack.c.b16 %v5381, %v5373
        %v6822 = vpack.c.b16 %v5382, %v5374
        %v6823 = vpack.c.b16 %v5383, %v5375
        %v6824 = vpack.c.b16 %v5392, %v5384
        %v6825 = vpack.c.b16 %v5393, %v5385
        %v6826 = vpack.c.b16 %v5394, %v5386
        %v6827 = vpack.c.b16 %v5395, %v5387
        %v6828 = vpack.c.b16 %v5396, %v5388
        %v6829 = vpack.c.b16 %v5397, %v5389
        %v6830 = vpack.c.b16 %v5398, %v5390
        %v6831 = vpack.c.b16 %v5399, %v5391
        %v6832 = vpack.c.b16 %v5408, %v5400
        %v6833 = vpack.c.b16 %v5409, %v5401
        %v6834 = vpack.c.b16 %v5410, %v5402
        %v6835 = vpack.c.b16 %v5411, %v5403
        %v6836 = vpack.c.b16 %v5412, %v5404
        %v6837 = vpack.c.b16 %v5413, %v5405
        %v6838 = vpack.c.b16 %v5414, %v5406
        %v6839 = vpack.c.b16 %v5415, %v5407
        %v6840 = vpack.c.b16 %v5424, %v5416
        %v6841 = vpack.c.b16 %v5425, %v5417
        %v6842 = vpack.c.b16 %v5426, %v5418
        %v6843 = vpack.c.b16 %v5427, %v5419
        %v6844 = vpack.c.b16 %v5428, %v5420
        %v6845 = vpack.c.b16 %v5429, %v5421
        %v6846 = vpack.c.b16 %v5430, %v5422
        %v6847 = vpack.c.b16 %v5431, %v5423
        %v6848 = vpack.c.b16 %v5440, %v5432
        %v6849 = vpack.c.b16 %v5441, %v5433
        %v6850 = vpack.c.b16 %v5442, %v5434
        %v6851 = vpack.c.b16 %v5443, %v5435
        %v6852 = vpack.c.b16 %v5444, %v5436
        %v6853 = vpack.c.b16 %v5445, %v5437
        %v6854 = vpack.c.b16 %v5446, %v5438
        %v6855 = vpack.c.b16 %v5447, %v5439
        %v6856 = vpack.c.b16 %v5456, %v5448
        %v6857 = vpack.c.b16 %v5457, %v5449
        %v6858 = vpack.c.b16 %v5458, %v5450
        %v6859 = vpack.c.b16 %v5459, %v5451
        %v6860 = vpack.c.b16 %v5460, %v5452
        %v6861 = vpack.c.b16 %v5461, %v5453
        %v6862 = vpack.c.b16 %v5462, %v5454
        %v6863 = vpack.c.b16 %v5463, %v5455
        %v6864 = vpack.c.b16 %v5472, %v5464
        %v6865 = vpack.c.b16 %v5473, %v5465
        %v6866 = vpack.c.b16 %v5474, %v5466
        %v6867 = vpack.c.b16 %v5475, %v5467
        %v6868 = vpack.c.b16 %v5476, %v5468
        %v6869 = vpack.c.b16 %v5477, %v5469
        %v6870 = vpack.c.b16 %v5478, %v5470
        %v6871 = vpack.c.b16 %v5479, %v5471
        %v6872 = vpack.c.b16 %v5488, %v5480
        %v6873 = vpack.c.b16 %v5489, %v5481
        %v6874 = vpack.c.b16 %v5490, %v5482
        %v6875 = vpack.c.b16 %v5491, %v5483
        %v6876 = vpack.c.b16 %v5492, %v5484
        %v6877 = vpack.c.b16 %v5493, %v5485
        %v6878 = vpack.c.b16 %v5494, %v5486
        %v6879 = vpack.c.b16 %v5495, %v5487
        %v6880 = vpack.c.b16 %v5504, %v5496
        %v6881 = vpack.c.b16 %v5505, %v5497
        %v6882 = vpack.c.b16 %v5506, %v5498
        %v6883 = vpack.c.b16 %v5507, %v5499
        %v6884 = vpack.c.b16 %v5508, %v5500
        %v6885 = vpack.c.b16 %v5509, %v5501
        %v6886 = vpack.c.b16 %v5510, %v5502
        %v6887 = vpack.c.b16 %v5511, %v5503
        %v6888 = vpack.c.b16 %v5520, %v5512
        %v6889 = vpack.c.b16 %v5521, %v5513
        %v6890 = vpack.c.b16 %v5522, %v5514
        %v6891 = vpack.c.b16 %v5523, %v5515
        %v6892 = vpack.c.b16 %v5524, %v5516
        %v6893 = vpack.c.b16 %v5525, %v5517
        %v6894 = vpack.c.b16 %v5526, %v5518
        %v6895 = vpack.c.b16 %v5527, %v5519
        %v6896 = vpack.c.b16 %v5536, %v5528
        %v6897 = vpack.c.b16 %v5537, %v5529
        %v6898 = vpack.c.b16 %v5538, %v5530
        %v6899 = vpack.c.b16 %v5539, %v5531
        %v6900 = vpack.c.b16 %v5540, %v5532
        %v6901 = vpack.c.b16 %v5541, %v5533
        %v6902 = vpack.c.b16 %v5542, %v5534
        %v6903 = vpack.c.b16 %v5543, %v5535
        %v6904 = vpack.c.b16 %v5552, %v5544
        %v6905 = vpack.c.b16 %v5553, %v5545
        %v6906 = vpack.c.b16 %v5554, %v5546
        %v6907 = vpack.c.b16 %v5555, %v5547
        %v6908 = vpack.c.b16 %v5556, %v5548
        %v6909 = vpack.c.b16 %v5557, %v5549
        %v6910 = vpack.c.b16 %v5558, %v5550
        %v6911 = vpack.c.b16 %v5559, %v5551
        %v6912 = vpack.c.b16 %v5568, %v5560
        %v6913 = vpack.c.b16 %v5569, %v5561
        %v6914 = vpack.c.b16 %v5570, %v5562
        %v6915 = vpack.c.b16 %v5571, %v5563
        %v6916 = vpack.c.b16 %v5572, %v5564
        %v6917 = vpack.c.b16 %v5573, %v5565
        %v6918 = vpack.c.b16 %v5574, %v5566
        %v6919 = vpack.c.b16 %v5575, %v5567
        %v6920 = vpack.c.b16 %v5584, %v5576
        %v6921 = vpack.c.b16 %v5585, %v5577
        %v6922 = vpack.c.b16 %v5586, %v5578
        %v6923 = vpack.c.b16 %v5587, %v5579
        %v6924 = vpack.c.b16 %v5588, %v5580
        %v6925 = vpack.c.b16 %v5589, %v5581
        %v6926 = vpack.c.b16 %v5590, %v5582
        %v6927 = vpack.c.b16 %v5591, %v5583
        %v6928 = vpack.c.b16 %v5600, %v5592
        %v6929 = vpack.c.b16 %v5601, %v5593
        %v6930 = vpack.c.b16 %v5602, %v5594
        %v6931 = vpack.c.b16 %v5603, %v5595
        %v6932 = vpack.c.b16 %v5604, %v5596
        %v6933 = vpack.c.b16 %v5605, %v5597
        %v6934 = vpack.c.b16 %v5606, %v5598
        %v6935 = vpack.c.b16 %v5607, %v5599
        %v6936 = vpack.c.b16 %v5616, %v5608
        %v6937 = vpack.c.b16 %v5617, %v5609
        %v6938 = vpack.c.b16 %v5618, %v5610
        %v6939 = vpack.c.b16 %v5619, %v5611
        %v6940 = vpack.c.b16 %v5620, %v5612
        %v6941 = vpack.c.b16 %v5621, %v5613
        %v6942 = vpack.c.b16 %v5622, %v5614
        %v6943 = vpack.c.b16 %v5623, %v5615
        %v6944 = vpack.c.b16 %v5632, %v5624
        %v6945 = vpack.c.b16 %v5633, %v5625
        %v6946 = vpack.c.b16 %v5634, %v5626
        %v6947 = vpack.c.b16 %v5635, %v5627
        %v6948 = vpack.c.b16 %v5636, %v5628
        %v6949 = vpack.c.b16 %v5637, %v5629
        %v6950 = vpack.c.b16 %v5638, %v5630
        %v6951 = vpack.c.b16 %v5639, %v5631
        %v6952 = vpack.c.b16 %v5648, %v5640
        %v6953 = vpack.c.b16 %v5649, %v5641
        %v6954 = vpack.c.b16 %v5650, %v5642
        %v6955 = vpack.c.b16 %v5651, %v5643
        %v6956 = vpack.c.b16 %v5652, %v5644
        %v6957 = vpack.c.b16 %v5653, %v5645
        %v6958 = vpack.c.b16 %v5654, %v5646
        %v6959 = vpack.c.b16 %v5655, %v5647
        %v6960 = vpack.c.b16 %v5664, %v5656
        %v6961 = vpack.c.b16 %v5665, %v5657
        %v6962 = vpack.c.b16 %v5666, %v5658
        %v6963 = vpack.c.b16 %v5667, %v5659
        %v6964 = vpack.c.b16 %v5668, %v5660
        %v6965 = vpack.c.b16 %v5669, %v5661
        %v6966 = vpack.c.b16 %v5670, %v5662
        %v6967 = vpack.c.b16 %v5671, %v5663
        %v6968 = vpack.c.b16 %v5680, %v5672
        %v6969 = vpack.c.b16 %v5681, %v5673
        %v6970 = vpack.c.b16 %v5682, %v5674
        %v6971 = vpack.c.b16 %v5683, %v5675
        %v6972 = vpack.c.b16 %v5684, %v5676
        %v6973 = vpack.c.b16 %v5685, %v5677
        %v6974 = vpack.c.b16 %v5686, %v5678
        %v6975 = vpack.c.b16 %v5687, %v5679
        %v6976 = vpack.c.b16 %v5696, %v5688
        %v6977 = vpack.c.b16 %v5697, %v5689
        %v6978 = vpack.c.b16 %v5698, %v5690
        %v6979 = vpack.c.b16 %v5699, %v5691
        %v6980 = vpack.c.b16 %v5700, %v5692
        %v6981 = vpack.c.b16 %v5701, %v5693
        %v6982 = vpack.c.b16 %v5702, %v5694
        %v6983 = vpack.c.b16 %v5703, %v5695
        %8264 = vmatprep.subr.bf16.mxu0 %v5761
        %8265 = vmatpush1.bf16.msra.mxu0 %v5760
        %8266 = vmatprep.subr.bf16.mxu0 %v5753
        %8267 = vmatpush1.bf16.msra.mxu0 %v5752
        %8268 = vmatprep.subr.bf16.mxu0 %v5745
        %8269 = vmatpush1.bf16.msra.mxu0 %v5744
        %8270 = vmatprep.subr.bf16.mxu0 %v5737
        %8271 = vmatpush1.bf16.msra.mxu0 %v5736
        %8272 = vmatprep.subr.bf16.mxu0 %v5729
        %8273 = vmatpush1.bf16.msra.mxu0 %v5728
        %8274 = vmatprep.subr.bf16.mxu0 %v5721
        %8275 = vmatpush1.bf16.msra.mxu0 %v5720
        %8276 = vmatprep.subr.bf16.mxu0 %v5713
        %8277 = vmatpush1.bf16.msra.mxu0 %v5712
        %8278 = vmatprep.subr.bf16.mxu0 %v5705
        %8279 = vmatpush1.bf16.msra.mxu0 %v5704
        %8280 = vmatprep.subr.bf16.mxu0 %v5825
        %8281 = vmatpush2.bf16.msra.mxu0 %v5824
        %8282 = vmatprep.subr.bf16.mxu0 %v5817
        %8283 = vmatpush2.bf16.msra.mxu0 %v5816
        %8284 = vmatprep.subr.bf16.mxu0 %v5809
        %8285 = vmatpush2.bf16.msra.mxu0 %v5808
        %8286 = vmatprep.subr.bf16.mxu0 %v5801
        %8287 = vmatpush2.bf16.msra.mxu0 %v5800
        %8288 = vmatprep.subr.bf16.mxu0 %v5793
        %8289 = vmatpush2.bf16.msra.mxu0 %v5792
        %8290 = vmatprep.subr.bf16.mxu0 %v5785
        %8291 = vmatpush2.bf16.msra.mxu0 %v5784
        %8292 = vmatprep.subr.bf16.mxu0 %v5777
        %8293 = vmatpush2.bf16.msra.mxu0 %v5776
        %8294 = vmatprep.subr.bf16.mxu0 %v5769
        %8295 = vmatpush2.bf16.msra.mxu0 %v5768
        %8296 = vmatprep.mubr.bf16.mxu0 %v565
        %8297 = vmatmul.mubr.bf16.gmra.mxu0 %v564
        %v8298 = vpop.f32.mrf.mxu0
        %v8299 = vadd.f32 0.0, %v8298
        %v8300 = vpop.f32.mrf.mxu0
        %v8301 = vadd.f32 0.0, %v8300
        %v8302 = vpop.f32.mrf.mxu0
        %v8303 = vpop.f32.mrf.mxu0
        %8304 = vdwg.mxu0
        %8305 = vmatprep.subr.bf16.mxu0 %v5889
        %8306 = vmatpush1.bf16.msra.mxu0 %v5888
        %8307 = vmatprep.subr.bf16.mxu0 %v5881
        %8308 = vmatpush1.bf16.msra.mxu0 %v5880
        %8309 = vmatprep.subr.bf16.mxu0 %v5873
        %8310 = vmatpush1.bf16.msra.mxu0 %v5872
        %8311 = vmatprep.subr.bf16.mxu0 %v5865
        %8312 = vmatpush1.bf16.msra.mxu0 %v5864
        %8313 = vmatprep.subr.bf16.mxu0 %v5857
        %8314 = vmatpush1.bf16.msra.mxu0 %v5856
        %8315 = vmatprep.subr.bf16.mxu0 %v5849
        %8316 = vmatpush1.bf16.msra.mxu0 %v5848
        %8317 = vmatprep.subr.bf16.mxu0 %v5841
        %8318 = vmatpush1.bf16.msra.mxu0 %v5840
        %8319 = vmatprep.subr.bf16.mxu0 %v5833
        %8320 = vmatpush1.bf16.msra.mxu0 %v5832
        %8321 = vmatprep.subr.bf16.mxu0 %v5953
        %8322 = vmatpush2.bf16.msra.mxu0 %v5952
        %8323 = vmatprep.subr.bf16.mxu0 %v5945
        %8324 = vmatpush2.bf16.msra.mxu0 %v5944
        %8325 = vmatprep.subr.bf16.mxu0 %v5937
        %8326 = vmatpush2.bf16.msra.mxu0 %v5936
        %8327 = vmatprep.subr.bf16.mxu0 %v5929
        %8328 = vmatpush2.bf16.msra.mxu0 %v5928
        %8329 = vmatprep.subr.bf16.mxu0 %v5921
        %8330 = vmatpush2.bf16.msra.mxu0 %v5920
        %8331 = vmatprep.subr.bf16.mxu0 %v5913
        %8332 = vmatpush2.bf16.msra.mxu0 %v5912
        %8333 = vmatprep.subr.bf16.mxu0 %v5905
        %8334 = vmatpush2.bf16.msra.mxu0 %v5904
        %8335 = vmatprep.subr.bf16.mxu0 %v5897
        %8336 = vmatpush2.bf16.msra.mxu0 %v5896
        %8337 = vmatprep.mubr.bf16.mxu0 %v567
        %8338 = vmatmul.mubr.bf16.gmra.mxu0 %v566
        %v8339 = vpop.f32.mrf.mxu0
        %v8340 = vadd.f32 %v8299, %v8339
        %v8341 = vpop.f32.mrf.mxu0
        %v8342 = vadd.f32 %v8301, %v8341
        %v8343 = vpop.f32.mrf.mxu0
        %v8344 = vpop.f32.mrf.mxu0
        %8345 = vdwg.mxu0
        %8346 = vmatprep.subr.bf16.mxu0 %v6017
        %8347 = vmatpush1.bf16.msra.mxu0 %v6016
        %8348 = vmatprep.subr.bf16.mxu0 %v6009
        %8349 = vmatpush1.bf16.msra.mxu0 %v6008
        %8350 = vmatprep.subr.bf16.mxu0 %v6001
        %8351 = vmatpush1.bf16.msra.mxu0 %v6000
        %8352 = vmatprep.subr.bf16.mxu0 %v5993
        %8353 = vmatpush1.bf16.msra.mxu0 %v5992
        %8354 = vmatprep.subr.bf16.mxu0 %v5985
        %8355 = vmatpush1.bf16.msra.mxu0 %v5984
        %8356 = vmatprep.subr.bf16.mxu0 %v5977
        %8357 = vmatpush1.bf16.msra.mxu0 %v5976
        %8358 = vmatprep.subr.bf16.mxu0 %v5969
        %8359 = vmatpush1.bf16.msra.mxu0 %v5968
        %8360 = vmatprep.subr.bf16.mxu0 %v5961
        %8361 = vmatpush1.bf16.msra.mxu0 %v5960
        %8362 = vmatprep.subr.bf16.mxu0 %v6081
        %8363 = vmatpush2.bf16.msra.mxu0 %v6080
        %8364 = vmatprep.subr.bf16.mxu0 %v6073
        %8365 = vmatpush2.bf16.msra.mxu0 %v6072
        %8366 = vmatprep.subr.bf16.mxu0 %v6065
        %8367 = vmatpush2.bf16.msra.mxu0 %v6064
        %8368 = vmatprep.subr.bf16.mxu0 %v6057
        %8369 = vmatpush2.bf16.msra.mxu0 %v6056
        %8370 = vmatprep.subr.bf16.mxu0 %v6049
        %8371 = vmatpush2.bf16.msra.mxu0 %v6048
        %8372 = vmatprep.subr.bf16.mxu0 %v6041
        %8373 = vmatpush2.bf16.msra.mxu0 %v6040
        %8374 = vmatprep.subr.bf16.mxu0 %v6033
        %8375 = vmatpush2.bf16.msra.mxu0 %v6032
        %8376 = vmatprep.subr.bf16.mxu0 %v6025
        %8377 = vmatpush2.bf16.msra.mxu0 %v6024
        %8378 = vmatprep.mubr.bf16.mxu0 %v569
        %8379 = vmatmul.mubr.bf16.gmra.mxu0 %v568
        %v8380 = vpop.f32.mrf.mxu0
        %v8381 = vadd.f32 %v8340, %v8380
        %v8382 = vpop.f32.mrf.mxu0
        %v8383 = vadd.f32 %v8342, %v8382
        %v8384 = vpop.f32.mrf.mxu0
        %v8385 = vpop.f32.mrf.mxu0
        %8386 = vdwg.mxu0
        %8387 = vmatprep.subr.bf16.mxu0 %v6145
        %8388 = vmatpush1.bf16.msra.mxu0 %v6144
        %8389 = vmatprep.subr.bf16.mxu0 %v6137
        %8390 = vmatpush1.bf16.msra.mxu0 %v6136
        %8391 = vmatprep.subr.bf16.mxu0 %v6129
        %8392 = vmatpush1.bf16.msra.mxu0 %v6128
        %8393 = vmatprep.subr.bf16.mxu0 %v6121
        %8394 = vmatpush1.bf16.msra.mxu0 %v6120
        %8395 = vmatprep.subr.bf16.mxu0 %v6113
        %8396 = vmatpush1.bf16.msra.mxu0 %v6112
        %8397 = vmatprep.subr.bf16.mxu0 %v6105
        %8398 = vmatpush1.bf16.msra.mxu0 %v6104
        %8399 = vmatprep.subr.bf16.mxu0 %v6097
        %8400 = vmatpush1.bf16.msra.mxu0 %v6096
        %8401 = vmatprep.subr.bf16.mxu0 %v6089
        %8402 = vmatpush1.bf16.msra.mxu0 %v6088
        %8403 = vmatprep.subr.bf16.mxu0 %v6209
        %8404 = vmatpush2.bf16.msra.mxu0 %v6208
        %8405 = vmatprep.subr.bf16.mxu0 %v6201
        %8406 = vmatpush2.bf16.msra.mxu0 %v6200
        %8407 = vmatprep.subr.bf16.mxu0 %v6193
        %8408 = vmatpush2.bf16.msra.mxu0 %v6192
        %8409 = vmatprep.subr.bf16.mxu0 %v6185
        %8410 = vmatpush2.bf16.msra.mxu0 %v6184
        %8411 = vmatprep.subr.bf16.mxu0 %v6177
        %8412 = vmatpush2.bf16.msra.mxu0 %v6176
        %8413 = vmatprep.subr.bf16.mxu0 %v6169
        %8414 = vmatpush2.bf16.msra.mxu0 %v6168
        %8415 = vmatprep.subr.bf16.mxu0 %v6161
        %8416 = vmatpush2.bf16.msra.mxu0 %v6160
        %8417 = vmatprep.subr.bf16.mxu0 %v6153
        %8418 = vmatpush2.bf16.msra.mxu0 %v6152
        %8419 = vmatprep.mubr.bf16.mxu0 %v571
        %8420 = vmatmul.mubr.bf16.gmra.mxu0 %v570
        %v8421 = vpop.f32.mrf.mxu0
        %v8422 = vadd.f32 %v8381, %v8421
        %v8423 = vpop.f32.mrf.mxu0
        %v8424 = vadd.f32 %v8383, %v8423
        %v8425 = vpop.f32.mrf.mxu0
        %v8426 = vpop.f32.mrf.mxu0
        %8427 = vdwg.mxu0
        %8428 = vmatprep.subr.bf16.mxu0 %v6273
        %8429 = vmatpush1.bf16.msra.mxu0 %v6272
        %8430 = vmatprep.subr.bf16.mxu0 %v6265
        %8431 = vmatpush1.bf16.msra.mxu0 %v6264
        %8432 = vmatprep.subr.bf16.mxu0 %v6257
        %8433 = vmatpush1.bf16.msra.mxu0 %v6256
        %8434 = vmatprep.subr.bf16.mxu0 %v6249
        %8435 = vmatpush1.bf16.msra.mxu0 %v6248
        %8436 = vmatprep.subr.bf16.mxu0 %v6241
        %8437 = vmatpush1.bf16.msra.mxu0 %v6240
        %8438 = vmatprep.subr.bf16.mxu0 %v6233
        %8439 = vmatpush1.bf16.msra.mxu0 %v6232
        %8440 = vmatprep.subr.bf16.mxu0 %v6225
        %8441 = vmatpush1.bf16.msra.mxu0 %v6224
        %8442 = vmatprep.subr.bf16.mxu0 %v6217
        %8443 = vmatpush1.bf16.msra.mxu0 %v6216
        %8444 = vmatprep.subr.bf16.mxu0 %v6337
        %8445 = vmatpush2.bf16.msra.mxu0 %v6336
        %8446 = vmatprep.subr.bf16.mxu0 %v6329
        %8447 = vmatpush2.bf16.msra.mxu0 %v6328
        %8448 = vmatprep.subr.bf16.mxu0 %v6321
        %8449 = vmatpush2.bf16.msra.mxu0 %v6320
        %8450 = vmatprep.subr.bf16.mxu0 %v6313
        %8451 = vmatpush2.bf16.msra.mxu0 %v6312
        %8452 = vmatprep.subr.bf16.mxu0 %v6305
        %8453 = vmatpush2.bf16.msra.mxu0 %v6304
        %8454 = vmatprep.subr.bf16.mxu0 %v6297
        %8455 = vmatpush2.bf16.msra.mxu0 %v6296
        %8456 = vmatprep.subr.bf16.mxu0 %v6289
        %8457 = vmatpush2.bf16.msra.mxu0 %v6288
        %8458 = vmatprep.subr.bf16.mxu0 %v6281
        %8459 = vmatpush2.bf16.msra.mxu0 %v6280
        %8460 = vmatprep.mubr.bf16.mxu0 %v573
        %8461 = vmatmul.mubr.bf16.gmra.mxu0 %v572
        %v8462 = vpop.f32.mrf.mxu0
        %v8463 = vadd.f32 %v8422, %v8462
        %v8464 = vpop.f32.mrf.mxu0
        %v8465 = vadd.f32 %v8424, %v8464
        %v8466 = vpop.f32.mrf.mxu0
        %v8467 = vpop.f32.mrf.mxu0
        %8468 = vdwg.mxu0
        %8469 = vmatprep.subr.bf16.mxu0 %v6401
        %8470 = vmatpush1.bf16.msra.mxu0 %v6400
        %8471 = vmatprep.subr.bf16.mxu0 %v6393
        %8472 = vmatpush1.bf16.msra.mxu0 %v6392
        %8473 = vmatprep.subr.bf16.mxu0 %v6385
        %8474 = vmatpush1.bf16.msra.mxu0 %v6384
        %8475 = vmatprep.subr.bf16.mxu0 %v6377
        %8476 = vmatpush1.bf16.msra.mxu0 %v6376
        %8477 = vmatprep.subr.bf16.mxu0 %v6369
        %8478 = vmatpush1.bf16.msra.mxu0 %v6368
        %8479 = vmatprep.subr.bf16.mxu0 %v6361
        %8480 = vmatpush1.bf16.msra.mxu0 %v6360
        %8481 = vmatprep.subr.bf16.mxu0 %v6353
        %8482 = vmatpush1.bf16.msra.mxu0 %v6352
        %8483 = vmatprep.subr.bf16.mxu0 %v6345
        %8484 = vmatpush1.bf16.msra.mxu0 %v6344
        %8485 = vmatprep.subr.bf16.mxu0 %v6465
        %8486 = vmatpush2.bf16.msra.mxu0 %v6464
        %8487 = vmatprep.subr.bf16.mxu0 %v6457
        %8488 = vmatpush2.bf16.msra.mxu0 %v6456
        %8489 = vmatprep.subr.bf16.mxu0 %v6449
        %8490 = vmatpush2.bf16.msra.mxu0 %v6448
        %8491 = vmatprep.subr.bf16.mxu0 %v6441
        %8492 = vmatpush2.bf16.msra.mxu0 %v6440
        %8493 = vmatprep.subr.bf16.mxu0 %v6433
        %8494 = vmatpush2.bf16.msra.mxu0 %v6432
        %8495 = vmatprep.subr.bf16.mxu0 %v6425
        %8496 = vmatpush2.bf16.msra.mxu0 %v6424
        %8497 = vmatprep.subr.bf16.mxu0 %v6417
        %8498 = vmatpush2.bf16.msra.mxu0 %v6416
        %8499 = vmatprep.subr.bf16.mxu0 %v6409
        %8500 = vmatpush2.bf16.msra.mxu0 %v6408
        %8501 = vmatprep.mubr.bf16.mxu0 %v575
        %8502 = vmatmul.mubr.bf16.gmra.mxu0 %v574
        %v8503 = vpop.f32.mrf.mxu0
        %v8504 = vadd.f32 %v8463, %v8503
        %v8505 = vpop.f32.mrf.mxu0
        %v8506 = vadd.f32 %v8465, %v8505
        %v8507 = vpop.f32.mrf.mxu0
        %v8508 = vpop.f32.mrf.mxu0
        %8509 = vdwg.mxu0
        %8510 = vmatprep.subr.bf16.mxu0 %v6529
        %8511 = vmatpush1.bf16.msra.mxu0 %v6528
        %8512 = vmatprep.subr.bf16.mxu0 %v6521
        %8513 = vmatpush1.bf16.msra.mxu0 %v6520
        %8514 = vmatprep.subr.bf16.mxu0 %v6513
        %8515 = vmatpush1.bf16.msra.mxu0 %v6512
        %8516 = vmatprep.subr.bf16.mxu0 %v6505
        %8517 = vmatpush1.bf16.msra.mxu0 %v6504
        %8518 = vmatprep.subr.bf16.mxu0 %v6497
        %8519 = vmatpush1.bf16.msra.mxu0 %v6496
        %8520 = vmatprep.subr.bf16.mxu0 %v6489
        %8521 = vmatpush1.bf16.msra.mxu0 %v6488
        %8522 = vmatprep.subr.bf16.mxu0 %v6481
        %8523 = vmatpush1.bf16.msra.mxu0 %v6480
        %8524 = vmatprep.subr.bf16.mxu0 %v6473
        %8525 = vmatpush1.bf16.msra.mxu0 %v6472
        %8526 = vmatprep.subr.bf16.mxu0 %v6593
        %8527 = vmatpush2.bf16.msra.mxu0 %v6592
        %8528 = vmatprep.subr.bf16.mxu0 %v6585
        %8529 = vmatpush2.bf16.msra.mxu0 %v6584
        %8530 = vmatprep.subr.bf16.mxu0 %v6577
        %8531 = vmatpush2.bf16.msra.mxu0 %v6576
        %8532 = vmatprep.subr.bf16.mxu0 %v6569
        %8533 = vmatpush2.bf16.msra.mxu0 %v6568
        %8534 = vmatprep.subr.bf16.mxu0 %v6561
        %8535 = vmatpush2.bf16.msra.mxu0 %v6560
        %8536 = vmatprep.subr.bf16.mxu0 %v6553
        %8537 = vmatpush2.bf16.msra.mxu0 %v6552
        %8538 = vmatprep.subr.bf16.mxu0 %v6545
        %8539 = vmatpush2.bf16.msra.mxu0 %v6544
        %8540 = vmatprep.subr.bf16.mxu0 %v6537
        %8541 = vmatpush2.bf16.msra.mxu0 %v6536
        %8542 = vmatprep.mubr.bf16.mxu0 %v577
        %8543 = vmatmul.mubr.bf16.gmra.mxu0 %v576
        %v8544 = vpop.f32.mrf.mxu0
        %v8545 = vadd.f32 %v8504, %v8544
        %v8546 = vpop.f32.mrf.mxu0
        %v8547 = vadd.f32 %v8506, %v8546
        %v8548 = vpop.f32.mrf.mxu0
        %v8549 = vpop.f32.mrf.mxu0
        %8550 = vdwg.mxu0
        %8551 = vmatprep.subr.bf16.mxu0 %v6657
        %8552 = vmatpush1.bf16.msra.mxu0 %v6656
        %8553 = vmatprep.subr.bf16.mxu0 %v6649
        %8554 = vmatpush1.bf16.msra.mxu0 %v6648
        %8555 = vmatprep.subr.bf16.mxu0 %v6641
        %8556 = vmatpush1.bf16.msra.mxu0 %v6640
        %8557 = vmatprep.subr.bf16.mxu0 %v6633
        %8558 = vmatpush1.bf16.msra.mxu0 %v6632
        %8559 = vmatprep.subr.bf16.mxu0 %v6625
        %8560 = vmatpush1.bf16.msra.mxu0 %v6624
        %8561 = vmatprep.subr.bf16.mxu0 %v6617
        %8562 = vmatpush1.bf16.msra.mxu0 %v6616
        %8563 = vmatprep.subr.bf16.mxu0 %v6609
        %8564 = vmatpush1.bf16.msra.mxu0 %v6608
        %8565 = vmatprep.subr.bf16.mxu0 %v6601
        %8566 = vmatpush1.bf16.msra.mxu0 %v6600
        %8567 = vmatprep.subr.bf16.mxu0 %v6721
        %8568 = vmatpush2.bf16.msra.mxu0 %v6720
        %8569 = vmatprep.subr.bf16.mxu0 %v6713
        %8570 = vmatpush2.bf16.msra.mxu0 %v6712
        %8571 = vmatprep.subr.bf16.mxu0 %v6705
        %8572 = vmatpush2.bf16.msra.mxu0 %v6704
        %8573 = vmatprep.subr.bf16.mxu0 %v6697
        %8574 = vmatpush2.bf16.msra.mxu0 %v6696
        %8575 = vmatprep.subr.bf16.mxu0 %v6689
        %8576 = vmatpush2.bf16.msra.mxu0 %v6688
        %8577 = vmatprep.subr.bf16.mxu0 %v6681
        %8578 = vmatpush2.bf16.msra.mxu0 %v6680
        %8579 = vmatprep.subr.bf16.mxu0 %v6673
        %8580 = vmatpush2.bf16.msra.mxu0 %v6672
        %8581 = vmatprep.subr.bf16.mxu0 %v6665
        %8582 = vmatpush2.bf16.msra.mxu0 %v6664
        %8583 = vmatprep.mubr.bf16.mxu0 %v579
        %8584 = vmatmul.mubr.bf16.gmra.mxu0 %v578
        %v8585 = vpop.f32.mrf.mxu0
        %v8586 = vadd.f32 %v8545, %v8585
        %v8587 = vpop.f32.mrf.mxu0
        %v8588 = vadd.f32 %v8547, %v8587
        %v8589 = vpop.f32.mrf.mxu0
        %v8590 = vpop.f32.mrf.mxu0
        %8591 = vdwg.mxu0
        %8592 = vmatprep.subr.bf16.mxu0 %v6785
        %8593 = vmatpush1.bf16.msra.mxu0 %v6784
        %8594 = vmatprep.subr.bf16.mxu0 %v6777
        %8595 = vmatpush1.bf16.msra.mxu0 %v6776
        %8596 = vmatprep.subr.bf16.mxu0 %v6769
        %8597 = vmatpush1.bf16.msra.mxu0 %v6768
        %8598 = vmatprep.subr.bf16.mxu0 %v6761
        %8599 = vmatpush1.bf16.msra.mxu0 %v6760
        %8600 = vmatprep.subr.bf16.mxu0 %v6753
        %8601 = vmatpush1.bf16.msra.mxu0 %v6752
        %8602 = vmatprep.subr.bf16.mxu0 %v6745
        %8603 = vmatpush1.bf16.msra.mxu0 %v6744
        %8604 = vmatprep.subr.bf16.mxu0 %v6737
        %8605 = vmatpush1.bf16.msra.mxu0 %v6736
        %8606 = vmatprep.subr.bf16.mxu0 %v6729
        %8607 = vmatpush1.bf16.msra.mxu0 %v6728
        %8608 = vmatprep.subr.bf16.mxu0 %v6849
        %8609 = vmatpush2.bf16.msra.mxu0 %v6848
        %8610 = vmatprep.subr.bf16.mxu0 %v6841
        %8611 = vmatpush2.bf16.msra.mxu0 %v6840
        %8612 = vmatprep.subr.bf16.mxu0 %v6833
        %8613 = vmatpush2.bf16.msra.mxu0 %v6832
        %8614 = vmatprep.subr.bf16.mxu0 %v6825
        %8615 = vmatpush2.bf16.msra.mxu0 %v6824
        %8616 = vmatprep.subr.bf16.mxu0 %v6817
        %8617 = vmatpush2.bf16.msra.mxu0 %v6816
        %8618 = vmatprep.subr.bf16.mxu0 %v6809
        %8619 = vmatpush2.bf16.msra.mxu0 %v6808
        %8620 = vmatprep.subr.bf16.mxu0 %v6801
        %8621 = vmatpush2.bf16.msra.mxu0 %v6800
        %8622 = vmatprep.subr.bf16.mxu0 %v6793
        %8623 = vmatpush2.bf16.msra.mxu0 %v6792
        %8624 = vmatprep.mubr.bf16.mxu0 %v581
        %8625 = vmatmul.mubr.bf16.gmra.mxu0 %v580
        %v8626 = vpop.f32.mrf.mxu0
        %v8627 = vadd.f32 %v8586, %v8626
        %v8628 = vpop.f32.mrf.mxu0
        %v8629 = vadd.f32 %v8588, %v8628
        %v8630 = vpop.f32.mrf.mxu0
        %v8631 = vpop.f32.mrf.mxu0
        %8632 = vdwg.mxu0
        %8633 = vmatprep.subr.bf16.mxu0 %v6913
        %8634 = vmatpush1.bf16.msra.mxu0 %v6912
        %8635 = vmatprep.subr.bf16.mxu0 %v6905
        %8636 = vmatpush1.bf16.msra.mxu0 %v6904
        %8637 = vmatprep.subr.bf16.mxu0 %v6897
        %8638 = vmatpush1.bf16.msra.mxu0 %v6896
        %8639 = vmatprep.subr.bf16.mxu0 %v6889
        %8640 = vmatpush1.bf16.msra.mxu0 %v6888
        %8641 = vmatprep.subr.bf16.mxu0 %v6881
        %8642 = vmatpush1.bf16.msra.mxu0 %v6880
        %8643 = vmatprep.subr.bf16.mxu0 %v6873
        %8644 = vmatpush1.bf16.msra.mxu0 %v6872
        %8645 = vmatprep.subr.bf16.mxu0 %v6865
        %8646 = vmatpush1.bf16.msra.mxu0 %v6864
        %8647 = vmatprep.subr.bf16.mxu0 %v6857
        %8648 = vmatpush1.bf16.msra.mxu0 %v6856
        %8649 = vmatprep.subr.bf16.mxu0 %v6977
        %8650 = vmatpush2.bf16.msra.mxu0 %v6976
        %8651 = vmatprep.subr.bf16.mxu0 %v6969
        %8652 = vmatpush2.bf16.msra.mxu0 %v6968
        %8653 = vmatprep.subr.bf16.mxu0 %v6961
        %8654 = vmatpush2.bf16.msra.mxu0 %v6960
        %8655 = vmatprep.subr.bf16.mxu0 %v6953
        %8656 = vmatpush2.bf16.msra.mxu0 %v6952
        %8657 = vmatprep.subr.bf16.mxu0 %v6945
        %8658 = vmatpush2.bf16.msra.mxu0 %v6944
        %8659 = vmatprep.subr.bf16.mxu0 %v6937
        %8660 = vmatpush2.bf16.msra.mxu0 %v6936
        %8661 = vmatprep.subr.bf16.mxu0 %v6929
        %8662 = vmatpush2.bf16.msra.mxu0 %v6928
        %8663 = vmatprep.subr.bf16.mxu0 %v6921
        %8664 = vmatpush2.bf16.msra.mxu0 %v6920
        %8665 = vmatprep.mubr.bf16.mxu0 %v583
        %8666 = vmatmul.mubr.bf16.gmra.mxu0 %v582
        %v8667 = vpop.f32.mrf.mxu0
        %v8668 = vadd.f32 %v8627, %v8667
        %v8669 = vpop.f32.mrf.mxu0
        %v8670 = vadd.f32 %v8629, %v8669
        %v8671 = vpop.f32.mrf.mxu0
        %v8672 = vpop.f32.mrf.mxu0
        %8673 = vdwg.mxu0
        %8674 = vmatprep.subr.bf16.mxu0 %v5763
        %8675 = vmatpush1.bf16.msra.mxu0 %v5762
        %8676 = vmatprep.subr.bf16.mxu0 %v5755
        %8677 = vmatpush1.bf16.msra.mxu0 %v5754
        %8678 = vmatprep.subr.bf16.mxu0 %v5747
        %8679 = vmatpush1.bf16.msra.mxu0 %v5746
        %8680 = vmatprep.subr.bf16.mxu0 %v5739
        %8681 = vmatpush1.bf16.msra.mxu0 %v5738
        %8682 = vmatprep.subr.bf16.mxu0 %v5731
        %8683 = vmatpush1.bf16.msra.mxu0 %v5730
        %8684 = vmatprep.subr.bf16.mxu0 %v5723
        %8685 = vmatpush1.bf16.msra.mxu0 %v5722
        %8686 = vmatprep.subr.bf16.mxu0 %v5715
        %8687 = vmatpush1.bf16.msra.mxu0 %v5714
        %8688 = vmatprep.subr.bf16.mxu0 %v5707
        %8689 = vmatpush1.bf16.msra.mxu0 %v5706
        %8690 = vmatprep.subr.bf16.mxu0 %v5827
        %8691 = vmatpush2.bf16.msra.mxu0 %v5826
        %8692 = vmatprep.subr.bf16.mxu0 %v5819
        %8693 = vmatpush2.bf16.msra.mxu0 %v5818
        %8694 = vmatprep.subr.bf16.mxu0 %v5811
        %8695 = vmatpush2.bf16.msra.mxu0 %v5810
        %8696 = vmatprep.subr.bf16.mxu0 %v5803
        %8697 = vmatpush2.bf16.msra.mxu0 %v5802
        %8698 = vmatprep.subr.bf16.mxu0 %v5795
        %8699 = vmatpush2.bf16.msra.mxu0 %v5794
        %8700 = vmatprep.subr.bf16.mxu0 %v5787
        %8701 = vmatpush2.bf16.msra.mxu0 %v5786
        %8702 = vmatprep.subr.bf16.mxu0 %v5779
        %8703 = vmatpush2.bf16.msra.mxu0 %v5778
        %8704 = vmatprep.subr.bf16.mxu0 %v5771
        %8705 = vmatpush2.bf16.msra.mxu0 %v5770
        %8706 = vmatprep.mubr.bf16.mxu0 %v565
        %8707 = vmatmul.mubr.bf16.gmra.mxu0 %v564
        %v8708 = vpop.f32.mrf.mxu0
        %v8709 = vadd.f32 0.0, %v8708
        %v8710 = vpop.f32.mrf.mxu0
        %v8711 = vadd.f32 0.0, %v8710
        %v8712 = vpop.f32.mrf.mxu0
        %v8713 = vpop.f32.mrf.mxu0
        %8714 = vdwg.mxu0
        %8715 = vmatprep.subr.bf16.mxu0 %v5891
        %8716 = vmatpush1.bf16.msra.mxu0 %v5890
        %8717 = vmatprep.subr.bf16.mxu0 %v5883
        %8718 = vmatpush1.bf16.msra.mxu0 %v5882
        %8719 = vmatprep.subr.bf16.mxu0 %v5875
        %8720 = vmatpush1.bf16.msra.mxu0 %v5874
        %8721 = vmatprep.subr.bf16.mxu0 %v5867
        %8722 = vmatpush1.bf16.msra.mxu0 %v5866
        %8723 = vmatprep.subr.bf16.mxu0 %v5859
        %8724 = vmatpush1.bf16.msra.mxu0 %v5858
        %8725 = vmatprep.subr.bf16.mxu0 %v5851
        %8726 = vmatpush1.bf16.msra.mxu0 %v5850
        %8727 = vmatprep.subr.bf16.mxu0 %v5843
        %8728 = vmatpush1.bf16.msra.mxu0 %v5842
        %8729 = vmatprep.subr.bf16.mxu0 %v5835
        %8730 = vmatpush1.bf16.msra.mxu0 %v5834
        %8731 = vmatprep.subr.bf16.mxu0 %v5955
        %8732 = vmatpush2.bf16.msra.mxu0 %v5954
        %8733 = vmatprep.subr.bf16.mxu0 %v5947
        %8734 = vmatpush2.bf16.msra.mxu0 %v5946
        %8735 = vmatprep.subr.bf16.mxu0 %v5939
        %8736 = vmatpush2.bf16.msra.mxu0 %v5938
        %8737 = vmatprep.subr.bf16.mxu0 %v5931
        %8738 = vmatpush2.bf16.msra.mxu0 %v5930
        %8739 = vmatprep.subr.bf16.mxu0 %v5923
        %8740 = vmatpush2.bf16.msra.mxu0 %v5922
        %8741 = vmatprep.subr.bf16.mxu0 %v5915
        %8742 = vmatpush2.bf16.msra.mxu0 %v5914
        %8743 = vmatprep.subr.bf16.mxu0 %v5907
        %8744 = vmatpush2.bf16.msra.mxu0 %v5906
        %8745 = vmatprep.subr.bf16.mxu0 %v5899
        %8746 = vmatpush2.bf16.msra.mxu0 %v5898
        %8747 = vmatprep.mubr.bf16.mxu0 %v567
        %8748 = vmatmul.mubr.bf16.gmra.mxu0 %v566
        %v8749 = vpop.f32.mrf.mxu0
        %v8750 = vadd.f32 %v8709, %v8749
        %v8751 = vpop.f32.mrf.mxu0
        %v8752 = vadd.f32 %v8711, %v8751
        %v8753 = vpop.f32.mrf.mxu0
        %v8754 = vpop.f32.mrf.mxu0
        %8755 = vdwg.mxu0
        %8756 = vmatprep.subr.bf16.mxu0 %v6019
        %8757 = vmatpush1.bf16.msra.mxu0 %v6018
        %8758 = vmatprep.subr.bf16.mxu0 %v6011
        %8759 = vmatpush1.bf16.msra.mxu0 %v6010
        %8760 = vmatprep.subr.bf16.mxu0 %v6003
        %8761 = vmatpush1.bf16.msra.mxu0 %v6002
        %8762 = vmatprep.subr.bf16.mxu0 %v5995
        %8763 = vmatpush1.bf16.msra.mxu0 %v5994
        %8764 = vmatprep.subr.bf16.mxu0 %v5987
        %8765 = vmatpush1.bf16.msra.mxu0 %v5986
        %8766 = vmatprep.subr.bf16.mxu0 %v5979
        %8767 = vmatpush1.bf16.msra.mxu0 %v5978
        %8768 = vmatprep.subr.bf16.mxu0 %v5971
        %8769 = vmatpush1.bf16.msra.mxu0 %v5970
        %8770 = vmatprep.subr.bf16.mxu0 %v5963
        %8771 = vmatpush1.bf16.msra.mxu0 %v5962
        %8772 = vmatprep.subr.bf16.mxu0 %v6083
        %8773 = vmatpush2.bf16.msra.mxu0 %v6082
        %8774 = vmatprep.subr.bf16.mxu0 %v6075
        %8775 = vmatpush2.bf16.msra.mxu0 %v6074
        %8776 = vmatprep.subr.bf16.mxu0 %v6067
        %8777 = vmatpush2.bf16.msra.mxu0 %v6066
        %8778 = vmatprep.subr.bf16.mxu0 %v6059
        %8779 = vmatpush2.bf16.msra.mxu0 %v6058
        %8780 = vmatprep.subr.bf16.mxu0 %v6051
        %8781 = vmatpush2.bf16.msra.mxu0 %v6050
        %8782 = vmatprep.subr.bf16.mxu0 %v6043
        %8783 = vmatpush2.bf16.msra.mxu0 %v6042
        %8784 = vmatprep.subr.bf16.mxu0 %v6035
        %8785 = vmatpush2.bf16.msra.mxu0 %v6034
        %8786 = vmatprep.subr.bf16.mxu0 %v6027
        %8787 = vmatpush2.bf16.msra.mxu0 %v6026
        %8788 = vmatprep.mubr.bf16.mxu0 %v569
        %8789 = vmatmul.mubr.bf16.gmra.mxu0 %v568
        %v8790 = vpop.f32.mrf.mxu0
        %v8791 = vadd.f32 %v8750, %v8790
        %v8792 = vpop.f32.mrf.mxu0
        %v8793 = vadd.f32 %v8752, %v8792
        %v8794 = vpop.f32.mrf.mxu0
        %v8795 = vpop.f32.mrf.mxu0
        %8796 = vdwg.mxu0
        %8797 = vmatprep.subr.bf16.mxu0 %v6147
        %8798 = vmatpush1.bf16.msra.mxu0 %v6146
        %8799 = vmatprep.subr.bf16.mxu0 %v6139
        %8800 = vmatpush1.bf16.msra.mxu0 %v6138
        %8801 = vmatprep.subr.bf16.mxu0 %v6131
        %8802 = vmatpush1.bf16.msra.mxu0 %v6130
        %8803 = vmatprep.subr.bf16.mxu0 %v6123
        %8804 = vmatpush1.bf16.msra.mxu0 %v6122
        %8805 = vmatprep.subr.bf16.mxu0 %v6115
        %8806 = vmatpush1.bf16.msra.mxu0 %v6114
        %8807 = vmatprep.subr.bf16.mxu0 %v6107
        %8808 = vmatpush1.bf16.msra.mxu0 %v6106
        %8809 = vmatprep.subr.bf16.mxu0 %v6099
        %8810 = vmatpush1.bf16.msra.mxu0 %v6098
        %8811 = vmatprep.subr.bf16.mxu0 %v6091
        %8812 = vmatpush1.bf16.msra.mxu0 %v6090
        %8813 = vmatprep.subr.bf16.mxu0 %v6211
        %8814 = vmatpush2.bf16.msra.mxu0 %v6210
        %8815 = vmatprep.subr.bf16.mxu0 %v6203
        %8816 = vmatpush2.bf16.msra.mxu0 %v6202
        %8817 = vmatprep.subr.bf16.mxu0 %v6195
        %8818 = vmatpush2.bf16.msra.mxu0 %v6194
        %8819 = vmatprep.subr.bf16.mxu0 %v6187
        %8820 = vmatpush2.bf16.msra.mxu0 %v6186
        %8821 = vmatprep.subr.bf16.mxu0 %v6179
        %8822 = vmatpush2.bf16.msra.mxu0 %v6178
        %8823 = vmatprep.subr.bf16.mxu0 %v6171
        %8824 = vmatpush2.bf16.msra.mxu0 %v6170
        %8825 = vmatprep.subr.bf16.mxu0 %v6163
        %8826 = vmatpush2.bf16.msra.mxu0 %v6162
        %8827 = vmatprep.subr.bf16.mxu0 %v6155
        %8828 = vmatpush2.bf16.msra.mxu0 %v6154
        %8829 = vmatprep.mubr.bf16.mxu0 %v571
        %8830 = vmatmul.mubr.bf16.gmra.mxu0 %v570
        %v8831 = vpop.f32.mrf.mxu0
        %v8832 = vadd.f32 %v8791, %v8831
        %v8833 = vpop.f32.mrf.mxu0
        %v8834 = vadd.f32 %v8793, %v8833
        %v8835 = vpop.f32.mrf.mxu0
        %v8836 = vpop.f32.mrf.mxu0
        %8837 = vdwg.mxu0
        %8838 = vmatprep.subr.bf16.mxu0 %v6275
        %8839 = vmatpush1.bf16.msra.mxu0 %v6274
        %8840 = vmatprep.subr.bf16.mxu0 %v6267
        %8841 = vmatpush1.bf16.msra.mxu0 %v6266
        %8842 = vmatprep.subr.bf16.mxu0 %v6259
        %8843 = vmatpush1.bf16.msra.mxu0 %v6258
        %8844 = vmatprep.subr.bf16.mxu0 %v6251
        %8845 = vmatpush1.bf16.msra.mxu0 %v6250
        %8846 = vmatprep.subr.bf16.mxu0 %v6243
        %8847 = vmatpush1.bf16.msra.mxu0 %v6242
        %8848 = vmatprep.subr.bf16.mxu0 %v6235
        %8849 = vmatpush1.bf16.msra.mxu0 %v6234
        %8850 = vmatprep.subr.bf16.mxu0 %v6227
        %8851 = vmatpush1.bf16.msra.mxu0 %v6226
        %8852 = vmatprep.subr.bf16.mxu0 %v6219
        %8853 = vmatpush1.bf16.msra.mxu0 %v6218
        %8854 = vmatprep.subr.bf16.mxu0 %v6339
        %8855 = vmatpush2.bf16.msra.mxu0 %v6338
        %8856 = vmatprep.subr.bf16.mxu0 %v6331
        %8857 = vmatpush2.bf16.msra.mxu0 %v6330
        %8858 = vmatprep.subr.bf16.mxu0 %v6323
        %8859 = vmatpush2.bf16.msra.mxu0 %v6322
        %8860 = vmatprep.subr.bf16.mxu0 %v6315
        %8861 = vmatpush2.bf16.msra.mxu0 %v6314
        %8862 = vmatprep.subr.bf16.mxu0 %v6307
        %8863 = vmatpush2.bf16.msra.mxu0 %v6306
        %8864 = vmatprep.subr.bf16.mxu0 %v6299
        %8865 = vmatpush2.bf16.msra.mxu0 %v6298
        %8866 = vmatprep.subr.bf16.mxu0 %v6291
        %8867 = vmatpush2.bf16.msra.mxu0 %v6290
        %8868 = vmatprep.subr.bf16.mxu0 %v6283
        %8869 = vmatpush2.bf16.msra.mxu0 %v6282
        %8870 = vmatprep.mubr.bf16.mxu0 %v573
        %8871 = vmatmul.mubr.bf16.gmra.mxu0 %v572
        %v8872 = vpop.f32.mrf.mxu0
        %v8873 = vadd.f32 %v8832, %v8872
        %v8874 = vpop.f32.mrf.mxu0
        %v8875 = vadd.f32 %v8834, %v8874
        %v8876 = vpop.f32.mrf.mxu0
        %v8877 = vpop.f32.mrf.mxu0
        %8878 = vdwg.mxu0
        %8879 = vmatprep.subr.bf16.mxu0 %v6403
        %8880 = vmatpush1.bf16.msra.mxu0 %v6402
        %8881 = vmatprep.subr.bf16.mxu0 %v6395
        %8882 = vmatpush1.bf16.msra.mxu0 %v6394
        %8883 = vmatprep.subr.bf16.mxu0 %v6387
        %8884 = vmatpush1.bf16.msra.mxu0 %v6386
        %8885 = vmatprep.subr.bf16.mxu0 %v6379
        %8886 = vmatpush1.bf16.msra.mxu0 %v6378
        %8887 = vmatprep.subr.bf16.mxu0 %v6371
        %8888 = vmatpush1.bf16.msra.mxu0 %v6370
        %8889 = vmatprep.subr.bf16.mxu0 %v6363
        %8890 = vmatpush1.bf16.msra.mxu0 %v6362
        %8891 = vmatprep.subr.bf16.mxu0 %v6355
        %8892 = vmatpush1.bf16.msra.mxu0 %v6354
        %8893 = vmatprep.subr.bf16.mxu0 %v6347
        %8894 = vmatpush1.bf16.msra.mxu0 %v6346
        %8895 = vmatprep.subr.bf16.mxu0 %v6467
        %8896 = vmatpush2.bf16.msra.mxu0 %v6466
        %8897 = vmatprep.subr.bf16.mxu0 %v6459
        %8898 = vmatpush2.bf16.msra.mxu0 %v6458
        %8899 = vmatprep.subr.bf16.mxu0 %v6451
        %8900 = vmatpush2.bf16.msra.mxu0 %v6450
        %8901 = vmatprep.subr.bf16.mxu0 %v6443
        %8902 = vmatpush2.bf16.msra.mxu0 %v6442
        %8903 = vmatprep.subr.bf16.mxu0 %v6435
        %8904 = vmatpush2.bf16.msra.mxu0 %v6434
        %8905 = vmatprep.subr.bf16.mxu0 %v6427
        %8906 = vmatpush2.bf16.msra.mxu0 %v6426
        %8907 = vmatprep.subr.bf16.mxu0 %v6419
        %8908 = vmatpush2.bf16.msra.mxu0 %v6418
        %8909 = vmatprep.subr.bf16.mxu0 %v6411
        %8910 = vmatpush2.bf16.msra.mxu0 %v6410
        %8911 = vmatprep.mubr.bf16.mxu0 %v575
        %8912 = vmatmul.mubr.bf16.gmra.mxu0 %v574
        %v8913 = vpop.f32.mrf.mxu0
        %v8914 = vadd.f32 %v8873, %v8913
        %v8915 = vpop.f32.mrf.mxu0
        %v8916 = vadd.f32 %v8875, %v8915
        %v8917 = vpop.f32.mrf.mxu0
        %v8918 = vpop.f32.mrf.mxu0
        %8919 = vdwg.mxu0
        %8920 = vmatprep.subr.bf16.mxu0 %v6531
        %8921 = vmatpush1.bf16.msra.mxu0 %v6530
        %8922 = vmatprep.subr.bf16.mxu0 %v6523
        %8923 = vmatpush1.bf16.msra.mxu0 %v6522
        %8924 = vmatprep.subr.bf16.mxu0 %v6515
        %8925 = vmatpush1.bf16.msra.mxu0 %v6514
        %8926 = vmatprep.subr.bf16.mxu0 %v6507
        %8927 = vmatpush1.bf16.msra.mxu0 %v6506
        %8928 = vmatprep.subr.bf16.mxu0 %v6499
        %8929 = vmatpush1.bf16.msra.mxu0 %v6498
        %8930 = vmatprep.subr.bf16.mxu0 %v6491
        %8931 = vmatpush1.bf16.msra.mxu0 %v6490
        %8932 = vmatprep.subr.bf16.mxu0 %v6483
        %8933 = vmatpush1.bf16.msra.mxu0 %v6482
        %8934 = vmatprep.subr.bf16.mxu0 %v6475
        %8935 = vmatpush1.bf16.msra.mxu0 %v6474
        %8936 = vmatprep.subr.bf16.mxu0 %v6595
        %8937 = vmatpush2.bf16.msra.mxu0 %v6594
        %8938 = vmatprep.subr.bf16.mxu0 %v6587
        %8939 = vmatpush2.bf16.msra.mxu0 %v6586
        %8940 = vmatprep.subr.bf16.mxu0 %v6579
        %8941 = vmatpush2.bf16.msra.mxu0 %v6578
        %8942 = vmatprep.subr.bf16.mxu0 %v6571
        %8943 = vmatpush2.bf16.msra.mxu0 %v6570
        %8944 = vmatprep.subr.bf16.mxu0 %v6563
        %8945 = vmatpush2.bf16.msra.mxu0 %v6562
        %8946 = vmatprep.subr.bf16.mxu0 %v6555
        %8947 = vmatpush2.bf16.msra.mxu0 %v6554
        %8948 = vmatprep.subr.bf16.mxu0 %v6547
        %8949 = vmatpush2.bf16.msra.mxu0 %v6546
        %8950 = vmatprep.subr.bf16.mxu0 %v6539
        %8951 = vmatpush2.bf16.msra.mxu0 %v6538
        %8952 = vmatprep.mubr.bf16.mxu0 %v577
        %8953 = vmatmul.mubr.bf16.gmra.mxu0 %v576
        %v8954 = vpop.f32.mrf.mxu0
        %v8955 = vadd.f32 %v8914, %v8954
        %v8956 = vpop.f32.mrf.mxu0
        %v8957 = vadd.f32 %v8916, %v8956
        %v8958 = vpop.f32.mrf.mxu0
        %v8959 = vpop.f32.mrf.mxu0
        %8960 = vdwg.mxu0
        %8961 = vmatprep.subr.bf16.mxu0 %v6659
        %8962 = vmatpush1.bf16.msra.mxu0 %v6658
        %8963 = vmatprep.subr.bf16.mxu0 %v6651
        %8964 = vmatpush1.bf16.msra.mxu0 %v6650
        %8965 = vmatprep.subr.bf16.mxu0 %v6643
        %8966 = vmatpush1.bf16.msra.mxu0 %v6642
        %8967 = vmatprep.subr.bf16.mxu0 %v6635
        %8968 = vmatpush1.bf16.msra.mxu0 %v6634
        %8969 = vmatprep.subr.bf16.mxu0 %v6627
        %8970 = vmatpush1.bf16.msra.mxu0 %v6626
        %8971 = vmatprep.subr.bf16.mxu0 %v6619
        %8972 = vmatpush1.bf16.msra.mxu0 %v6618
        %8973 = vmatprep.subr.bf16.mxu0 %v6611
        %8974 = vmatpush1.bf16.msra.mxu0 %v6610
        %8975 = vmatprep.subr.bf16.mxu0 %v6603
        %8976 = vmatpush1.bf16.msra.mxu0 %v6602
        %8977 = vmatprep.subr.bf16.mxu0 %v6723
        %8978 = vmatpush2.bf16.msra.mxu0 %v6722
        %8979 = vmatprep.subr.bf16.mxu0 %v6715
        %8980 = vmatpush2.bf16.msra.mxu0 %v6714
        %8981 = vmatprep.subr.bf16.mxu0 %v6707
        %8982 = vmatpush2.bf16.msra.mxu0 %v6706
        %8983 = vmatprep.subr.bf16.mxu0 %v6699
        %8984 = vmatpush2.bf16.msra.mxu0 %v6698
        %8985 = vmatprep.subr.bf16.mxu0 %v6691
        %8986 = vmatpush2.bf16.msra.mxu0 %v6690
        %8987 = vmatprep.subr.bf16.mxu0 %v6683
        %8988 = vmatpush2.bf16.msra.mxu0 %v6682
        %8989 = vmatprep.subr.bf16.mxu0 %v6675
        %8990 = vmatpush2.bf16.msra.mxu0 %v6674
        %8991 = vmatprep.subr.bf16.mxu0 %v6667
        %8992 = vmatpush2.bf16.msra.mxu0 %v6666
        %8993 = vmatprep.mubr.bf16.mxu0 %v579
        %8994 = vmatmul.mubr.bf16.gmra.mxu0 %v578
        %v8995 = vpop.f32.mrf.mxu0
        %v8996 = vadd.f32 %v8955, %v8995
        %v8997 = vpop.f32.mrf.mxu0
        %v8998 = vadd.f32 %v8957, %v8997
        %v8999 = vpop.f32.mrf.mxu0
        %v9000 = vpop.f32.mrf.mxu0
        %9001 = vdwg.mxu0
        %9002 = vmatprep.subr.bf16.mxu0 %v6787
        %9003 = vmatpush1.bf16.msra.mxu0 %v6786
        %9004 = vmatprep.subr.bf16.mxu0 %v6779
        %9005 = vmatpush1.bf16.msra.mxu0 %v6778
        %9006 = vmatprep.subr.bf16.mxu0 %v6771
        %9007 = vmatpush1.bf16.msra.mxu0 %v6770
        %9008 = vmatprep.subr.bf16.mxu0 %v6763
        %9009 = vmatpush1.bf16.msra.mxu0 %v6762
        %9010 = vmatprep.subr.bf16.mxu0 %v6755
        %9011 = vmatpush1.bf16.msra.mxu0 %v6754
        %9012 = vmatprep.subr.bf16.mxu0 %v6747
        %9013 = vmatpush1.bf16.msra.mxu0 %v6746
        %9014 = vmatprep.subr.bf16.mxu0 %v6739
        %9015 = vmatpush1.bf16.msra.mxu0 %v6738
        %9016 = vmatprep.subr.bf16.mxu0 %v6731
        %9017 = vmatpush1.bf16.msra.mxu0 %v6730
        %9018 = vmatprep.subr.bf16.mxu0 %v6851
        %9019 = vmatpush2.bf16.msra.mxu0 %v6850
        %9020 = vmatprep.subr.bf16.mxu0 %v6843
        %9021 = vmatpush2.bf16.msra.mxu0 %v6842
        %9022 = vmatprep.subr.bf16.mxu0 %v6835
        %9023 = vmatpush2.bf16.msra.mxu0 %v6834
        %9024 = vmatprep.subr.bf16.mxu0 %v6827
        %9025 = vmatpush2.bf16.msra.mxu0 %v6826
        %9026 = vmatprep.subr.bf16.mxu0 %v6819
        %9027 = vmatpush2.bf16.msra.mxu0 %v6818
        %9028 = vmatprep.subr.bf16.mxu0 %v6811
        %9029 = vmatpush2.bf16.msra.mxu0 %v6810
        %9030 = vmatprep.subr.bf16.mxu0 %v6803
        %9031 = vmatpush2.bf16.msra.mxu0 %v6802
        %9032 = vmatprep.subr.bf16.mxu0 %v6795
        %9033 = vmatpush2.bf16.msra.mxu0 %v6794
        %9034 = vmatprep.mubr.bf16.mxu0 %v581
        %9035 = vmatmul.mubr.bf16.gmra.mxu0 %v580
        %v9036 = vpop.f32.mrf.mxu0
        %v9037 = vadd.f32 %v8996, %v9036
        %v9038 = vpop.f32.mrf.mxu0
        %v9039 = vadd.f32 %v8998, %v9038
        %v9040 = vpop.f32.mrf.mxu0
        %v9041 = vpop.f32.mrf.mxu0
        %9042 = vdwg.mxu0
        %9043 = vmatprep.subr.bf16.mxu0 %v6915
        %9044 = vmatpush1.bf16.msra.mxu0 %v6914
        %9045 = vmatprep.subr.bf16.mxu0 %v6907
        %9046 = vmatpush1.bf16.msra.mxu0 %v6906
        %9047 = vmatprep.subr.bf16.mxu0 %v6899
        %9048 = vmatpush1.bf16.msra.mxu0 %v6898
        %9049 = vmatprep.subr.bf16.mxu0 %v6891
        %9050 = vmatpush1.bf16.msra.mxu0 %v6890
        %9051 = vmatprep.subr.bf16.mxu0 %v6883
        %9052 = vmatpush1.bf16.msra.mxu0 %v6882
        %9053 = vmatprep.subr.bf16.mxu0 %v6875
        %9054 = vmatpush1.bf16.msra.mxu0 %v6874
        %9055 = vmatprep.subr.bf16.mxu0 %v6867
        %9056 = vmatpush1.bf16.msra.mxu0 %v6866
        %9057 = vmatprep.subr.bf16.mxu0 %v6859
        %9058 = vmatpush1.bf16.msra.mxu0 %v6858
        %9059 = vmatprep.subr.bf16.mxu0 %v6979
        %9060 = vmatpush2.bf16.msra.mxu0 %v6978
        %9061 = vmatprep.subr.bf16.mxu0 %v6971
        %9062 = vmatpush2.bf16.msra.mxu0 %v6970
        %9063 = vmatprep.subr.bf16.mxu0 %v6963
        %9064 = vmatpush2.bf16.msra.mxu0 %v6962
        %9065 = vmatprep.subr.bf16.mxu0 %v6955
        %9066 = vmatpush2.bf16.msra.mxu0 %v6954
        %9067 = vmatprep.subr.bf16.mxu0 %v6947
        %9068 = vmatpush2.bf16.msra.mxu0 %v6946
        %9069 = vmatprep.subr.bf16.mxu0 %v6939
        %9070 = vmatpush2.bf16.msra.mxu0 %v6938
        %9071 = vmatprep.subr.bf16.mxu0 %v6931
        %9072 = vmatpush2.bf16.msra.mxu0 %v6930
        %9073 = vmatprep.subr.bf16.mxu0 %v6923
        %9074 = vmatpush2.bf16.msra.mxu0 %v6922
        %9075 = vmatprep.mubr.bf16.mxu0 %v583
        %9076 = vmatmul.mubr.bf16.gmra.mxu0 %v582
        %v9077 = vpop.f32.mrf.mxu0
        %v9078 = vadd.f32 %v9037, %v9077
        %v9079 = vpop.f32.mrf.mxu0
        %v9080 = vadd.f32 %v9039, %v9079
        %v9081 = vpop.f32.mrf.mxu0
        %v9082 = vpop.f32.mrf.mxu0
        %9083 = vdwg.mxu0
        %9084 = vmatprep.subr.bf16.mxu0 %v5765
        %9085 = vmatpush1.bf16.msra.mxu0 %v5764
        %9086 = vmatprep.subr.bf16.mxu0 %v5757
        %9087 = vmatpush1.bf16.msra.mxu0 %v5756
        %9088 = vmatprep.subr.bf16.mxu0 %v5749
        %9089 = vmatpush1.bf16.msra.mxu0 %v5748
        %9090 = vmatprep.subr.bf16.mxu0 %v5741
        %9091 = vmatpush1.bf16.msra.mxu0 %v5740
        %9092 = vmatprep.subr.bf16.mxu0 %v5733
        %9093 = vmatpush1.bf16.msra.mxu0 %v5732
        %9094 = vmatprep.subr.bf16.mxu0 %v5725
        %9095 = vmatpush1.bf16.msra.mxu0 %v5724
        %9096 = vmatprep.subr.bf16.mxu0 %v5717
        %9097 = vmatpush1.bf16.msra.mxu0 %v5716
        %9098 = vmatprep.subr.bf16.mxu0 %v5709
        %9099 = vmatpush1.bf16.msra.mxu0 %v5708
        %9100 = vmatprep.subr.bf16.mxu0 %v5829
        %9101 = vmatpush2.bf16.msra.mxu0 %v5828
        %9102 = vmatprep.subr.bf16.mxu0 %v5821
        %9103 = vmatpush2.bf16.msra.mxu0 %v5820
        %9104 = vmatprep.subr.bf16.mxu0 %v5813
        %9105 = vmatpush2.bf16.msra.mxu0 %v5812
        %9106 = vmatprep.subr.bf16.mxu0 %v5805
        %9107 = vmatpush2.bf16.msra.mxu0 %v5804
        %9108 = vmatprep.subr.bf16.mxu0 %v5797
        %9109 = vmatpush2.bf16.msra.mxu0 %v5796
        %9110 = vmatprep.subr.bf16.mxu0 %v5789
        %9111 = vmatpush2.bf16.msra.mxu0 %v5788
        %9112 = vmatprep.subr.bf16.mxu0 %v5781
        %9113 = vmatpush2.bf16.msra.mxu0 %v5780
        %9114 = vmatprep.subr.bf16.mxu0 %v5773
        %9115 = vmatpush2.bf16.msra.mxu0 %v5772
        %9116 = vmatprep.mubr.bf16.mxu0 %v565
        %9117 = vmatmul.mubr.bf16.gmra.mxu0 %v564
        %v9118 = vpop.f32.mrf.mxu0
        %v9119 = vadd.f32 0.0, %v9118
        %v9120 = vpop.f32.mrf.mxu0
        %v9121 = vadd.f32 0.0, %v9120
        %v9122 = vpop.f32.mrf.mxu0
        %v9123 = vpop.f32.mrf.mxu0
        %9124 = vdwg.mxu0
        %9125 = vmatprep.subr.bf16.mxu0 %v5893
        %9126 = vmatpush1.bf16.msra.mxu0 %v5892
        %9127 = vmatprep.subr.bf16.mxu0 %v5885
        %9128 = vmatpush1.bf16.msra.mxu0 %v5884
        %9129 = vmatprep.subr.bf16.mxu0 %v5877
        %9130 = vmatpush1.bf16.msra.mxu0 %v5876
        %9131 = vmatprep.subr.bf16.mxu0 %v5869
        %9132 = vmatpush1.bf16.msra.mxu0 %v5868
        %9133 = vmatprep.subr.bf16.mxu0 %v5861
        %9134 = vmatpush1.bf16.msra.mxu0 %v5860
        %9135 = vmatprep.subr.bf16.mxu0 %v5853
        %9136 = vmatpush1.bf16.msra.mxu0 %v5852
        %9137 = vmatprep.subr.bf16.mxu0 %v5845
        %9138 = vmatpush1.bf16.msra.mxu0 %v5844
        %9139 = vmatprep.subr.bf16.mxu0 %v5837
        %9140 = vmatpush1.bf16.msra.mxu0 %v5836
        %9141 = vmatprep.subr.bf16.mxu0 %v5957
        %9142 = vmatpush2.bf16.msra.mxu0 %v5956
        %9143 = vmatprep.subr.bf16.mxu0 %v5949
        %9144 = vmatpush2.bf16.msra.mxu0 %v5948
        %9145 = vmatprep.subr.bf16.mxu0 %v5941
        %9146 = vmatpush2.bf16.msra.mxu0 %v5940
        %9147 = vmatprep.subr.bf16.mxu0 %v5933
        %9148 = vmatpush2.bf16.msra.mxu0 %v5932
        %9149 = vmatprep.subr.bf16.mxu0 %v5925
        %9150 = vmatpush2.bf16.msra.mxu0 %v5924
        %9151 = vmatprep.subr.bf16.mxu0 %v5917
        %9152 = vmatpush2.bf16.msra.mxu0 %v5916
        %9153 = vmatprep.subr.bf16.mxu0 %v5909
        %9154 = vmatpush2.bf16.msra.mxu0 %v5908
        %9155 = vmatprep.subr.bf16.mxu0 %v5901
        %9156 = vmatpush2.bf16.msra.mxu0 %v5900
        %9157 = vmatprep.mubr.bf16.mxu0 %v567
        %9158 = vmatmul.mubr.bf16.gmra.mxu0 %v566
        %v9159 = vpop.f32.mrf.mxu0
        %v9160 = vadd.f32 %v9119, %v9159
        %v9161 = vpop.f32.mrf.mxu0
        %v9162 = vadd.f32 %v9121, %v9161
        %v9163 = vpop.f32.mrf.mxu0
        %v9164 = vpop.f32.mrf.mxu0
        %9165 = vdwg.mxu0
        %9166 = vmatprep.subr.bf16.mxu0 %v6021
        %9167 = vmatpush1.bf16.msra.mxu0 %v6020
        %9168 = vmatprep.subr.bf16.mxu0 %v6013
        %9169 = vmatpush1.bf16.msra.mxu0 %v6012
        %9170 = vmatprep.subr.bf16.mxu0 %v6005
        %9171 = vmatpush1.bf16.msra.mxu0 %v6004
        %9172 = vmatprep.subr.bf16.mxu0 %v5997
        %9173 = vmatpush1.bf16.msra.mxu0 %v5996
        %9174 = vmatprep.subr.bf16.mxu0 %v5989
        %9175 = vmatpush1.bf16.msra.mxu0 %v5988
        %9176 = vmatprep.subr.bf16.mxu0 %v5981
        %9177 = vmatpush1.bf16.msra.mxu0 %v5980
        %9178 = vmatprep.subr.bf16.mxu0 %v5973
        %9179 = vmatpush1.bf16.msra.mxu0 %v5972
        %9180 = vmatprep.subr.bf16.mxu0 %v5965
        %9181 = vmatpush1.bf16.msra.mxu0 %v5964
        %9182 = vmatprep.subr.bf16.mxu0 %v6085
        %9183 = vmatpush2.bf16.msra.mxu0 %v6084
        %9184 = vmatprep.subr.bf16.mxu0 %v6077
        %9185 = vmatpush2.bf16.msra.mxu0 %v6076
        %9186 = vmatprep.subr.bf16.mxu0 %v6069
        %9187 = vmatpush2.bf16.msra.mxu0 %v6068
        %9188 = vmatprep.subr.bf16.mxu0 %v6061
        %9189 = vmatpush2.bf16.msra.mxu0 %v6060
        %9190 = vmatprep.subr.bf16.mxu0 %v6053
        %9191 = vmatpush2.bf16.msra.mxu0 %v6052
        %9192 = vmatprep.subr.bf16.mxu0 %v6045
        %9193 = vmatpush2.bf16.msra.mxu0 %v6044
        %9194 = vmatprep.subr.bf16.mxu0 %v6037
        %9195 = vmatpush2.bf16.msra.mxu0 %v6036
        %9196 = vmatprep.subr.bf16.mxu0 %v6029
        %9197 = vmatpush2.bf16.msra.mxu0 %v6028
        %9198 = vmatprep.mubr.bf16.mxu0 %v569
        %9199 = vmatmul.mubr.bf16.gmra.mxu0 %v568
        %v9200 = vpop.f32.mrf.mxu0
        %v9201 = vadd.f32 %v9160, %v9200
        %v9202 = vpop.f32.mrf.mxu0
        %v9203 = vadd.f32 %v9162, %v9202
        %v9204 = vpop.f32.mrf.mxu0
        %v9205 = vpop.f32.mrf.mxu0
        %9206 = vdwg.mxu0
        %9207 = vmatprep.subr.bf16.mxu0 %v6149
        %9208 = vmatpush1.bf16.msra.mxu0 %v6148
        %9209 = vmatprep.subr.bf16.mxu0 %v6141
        %9210 = vmatpush1.bf16.msra.mxu0 %v6140
        %9211 = vmatprep.subr.bf16.mxu0 %v6133
        %9212 = vmatpush1.bf16.msra.mxu0 %v6132
        %9213 = vmatprep.subr.bf16.mxu0 %v6125
        %9214 = vmatpush1.bf16.msra.mxu0 %v6124
        %9215 = vmatprep.subr.bf16.mxu0 %v6117
        %9216 = vmatpush1.bf16.msra.mxu0 %v6116
        %9217 = vmatprep.subr.bf16.mxu0 %v6109
        %9218 = vmatpush1.bf16.msra.mxu0 %v6108
        %9219 = vmatprep.subr.bf16.mxu0 %v6101
        %9220 = vmatpush1.bf16.msra.mxu0 %v6100
        %9221 = vmatprep.subr.bf16.mxu0 %v6093
        %9222 = vmatpush1.bf16.msra.mxu0 %v6092
        %9223 = vmatprep.subr.bf16.mxu0 %v6213
        %9224 = vmatpush2.bf16.msra.mxu0 %v6212
        %9225 = vmatprep.subr.bf16.mxu0 %v6205
        %9226 = vmatpush2.bf16.msra.mxu0 %v6204
        %9227 = vmatprep.subr.bf16.mxu0 %v6197
        %9228 = vmatpush2.bf16.msra.mxu0 %v6196
        %9229 = vmatprep.subr.bf16.mxu0 %v6189
        %9230 = vmatpush2.bf16.msra.mxu0 %v6188
        %9231 = vmatprep.subr.bf16.mxu0 %v6181
        %9232 = vmatpush2.bf16.msra.mxu0 %v6180
        %9233 = vmatprep.subr.bf16.mxu0 %v6173
        %9234 = vmatpush2.bf16.msra.mxu0 %v6172
        %9235 = vmatprep.subr.bf16.mxu0 %v6165
        %9236 = vmatpush2.bf16.msra.mxu0 %v6164
        %9237 = vmatprep.subr.bf16.mxu0 %v6157
        %9238 = vmatpush2.bf16.msra.mxu0 %v6156
        %9239 = vmatprep.mubr.bf16.mxu0 %v571
        %9240 = vmatmul.mubr.bf16.gmra.mxu0 %v570
        %v9241 = vpop.f32.mrf.mxu0
        %v9242 = vadd.f32 %v9201, %v9241
        %v9243 = vpop.f32.mrf.mxu0
        %v9244 = vadd.f32 %v9203, %v9243
        %v9245 = vpop.f32.mrf.mxu0
        %v9246 = vpop.f32.mrf.mxu0
        %9247 = vdwg.mxu0
        %9248 = vmatprep.subr.bf16.mxu0 %v6277
        %9249 = vmatpush1.bf16.msra.mxu0 %v6276
        %9250 = vmatprep.subr.bf16.mxu0 %v6269
        %9251 = vmatpush1.bf16.msra.mxu0 %v6268
        %9252 = vmatprep.subr.bf16.mxu0 %v6261
        %9253 = vmatpush1.bf16.msra.mxu0 %v6260
        %9254 = vmatprep.subr.bf16.mxu0 %v6253
        %9255 = vmatpush1.bf16.msra.mxu0 %v6252
        %9256 = vmatprep.subr.bf16.mxu0 %v6245
        %9257 = vmatpush1.bf16.msra.mxu0 %v6244
        %9258 = vmatprep.subr.bf16.mxu0 %v6237
        %9259 = vmatpush1.bf16.msra.mxu0 %v6236
        %9260 = vmatprep.subr.bf16.mxu0 %v6229
        %9261 = vmatpush1.bf16.msra.mxu0 %v6228
        %9262 = vmatprep.subr.bf16.mxu0 %v6221
        %9263 = vmatpush1.bf16.msra.mxu0 %v6220
        %9264 = vmatprep.subr.bf16.mxu0 %v6341
        %9265 = vmatpush2.bf16.msra.mxu0 %v6340
        %9266 = vmatprep.subr.bf16.mxu0 %v6333
        %9267 = vmatpush2.bf16.msra.mxu0 %v6332
        %9268 = vmatprep.subr.bf16.mxu0 %v6325
        %9269 = vmatpush2.bf16.msra.mxu0 %v6324
        %9270 = vmatprep.subr.bf16.mxu0 %v6317
        %9271 = vmatpush2.bf16.msra.mxu0 %v6316
        %9272 = vmatprep.subr.bf16.mxu0 %v6309
        %9273 = vmatpush2.bf16.msra.mxu0 %v6308
        %9274 = vmatprep.subr.bf16.mxu0 %v6301
        %9275 = vmatpush2.bf16.msra.mxu0 %v6300
        %9276 = vmatprep.subr.bf16.mxu0 %v6293
        %9277 = vmatpush2.bf16.msra.mxu0 %v6292
        %9278 = vmatprep.subr.bf16.mxu0 %v6285
        %9279 = vmatpush2.bf16.msra.mxu0 %v6284
        %9280 = vmatprep.mubr.bf16.mxu0 %v573
        %9281 = vmatmul.mubr.bf16.gmra.mxu0 %v572
        %v9282 = vpop.f32.mrf.mxu0
        %v9283 = vadd.f32 %v9242, %v9282
        %v9284 = vpop.f32.mrf.mxu0
        %v9285 = vadd.f32 %v9244, %v9284
        %v9286 = vpop.f32.mrf.mxu0
        %v9287 = vpop.f32.mrf.mxu0
        %9288 = vdwg.mxu0
        %9289 = vmatprep.subr.bf16.mxu0 %v6405
        %9290 = vmatpush1.bf16.msra.mxu0 %v6404
        %9291 = vmatprep.subr.bf16.mxu0 %v6397
        %9292 = vmatpush1.bf16.msra.mxu0 %v6396
        %9293 = vmatprep.subr.bf16.mxu0 %v6389
        %9294 = vmatpush1.bf16.msra.mxu0 %v6388
        %9295 = vmatprep.subr.bf16.mxu0 %v6381
        %9296 = vmatpush1.bf16.msra.mxu0 %v6380
        %9297 = vmatprep.subr.bf16.mxu0 %v6373
        %9298 = vmatpush1.bf16.msra.mxu0 %v6372
        %9299 = vmatprep.subr.bf16.mxu0 %v6365
        %9300 = vmatpush1.bf16.msra.mxu0 %v6364
        %9301 = vmatprep.subr.bf16.mxu0 %v6357
        %9302 = vmatpush1.bf16.msra.mxu0 %v6356
        %9303 = vmatprep.subr.bf16.mxu0 %v6349
        %9304 = vmatpush1.bf16.msra.mxu0 %v6348
        %9305 = vmatprep.subr.bf16.mxu0 %v6469
        %9306 = vmatpush2.bf16.msra.mxu0 %v6468
        %9307 = vmatprep.subr.bf16.mxu0 %v6461
        %9308 = vmatpush2.bf16.msra.mxu0 %v6460
        %9309 = vmatprep.subr.bf16.mxu0 %v6453
        %9310 = vmatpush2.bf16.msra.mxu0 %v6452
        %9311 = vmatprep.subr.bf16.mxu0 %v6445
        %9312 = vmatpush2.bf16.msra.mxu0 %v6444
        %9313 = vmatprep.subr.bf16.mxu0 %v6437
        %9314 = vmatpush2.bf16.msra.mxu0 %v6436
        %9315 = vmatprep.subr.bf16.mxu0 %v6429
        %9316 = vmatpush2.bf16.msra.mxu0 %v6428
        %9317 = vmatprep.subr.bf16.mxu0 %v6421
        %9318 = vmatpush2.bf16.msra.mxu0 %v6420
        %9319 = vmatprep.subr.bf16.mxu0 %v6413
        %9320 = vmatpush2.bf16.msra.mxu0 %v6412
        %9321 = vmatprep.mubr.bf16.mxu0 %v575
        %9322 = vmatmul.mubr.bf16.gmra.mxu0 %v574
        %v9323 = vpop.f32.mrf.mxu0
        %v9324 = vadd.f32 %v9283, %v9323
        %v9325 = vpop.f32.mrf.mxu0
        %v9326 = vadd.f32 %v9285, %v9325
        %v9327 = vpop.f32.mrf.mxu0
        %v9328 = vpop.f32.mrf.mxu0
        %9329 = vdwg.mxu0
        %9330 = vmatprep.subr.bf16.mxu0 %v6533
        %9331 = vmatpush1.bf16.msra.mxu0 %v6532
        %9332 = vmatprep.subr.bf16.mxu0 %v6525
        %9333 = vmatpush1.bf16.msra.mxu0 %v6524
        %9334 = vmatprep.subr.bf16.mxu0 %v6517
        %9335 = vmatpush1.bf16.msra.mxu0 %v6516
        %9336 = vmatprep.subr.bf16.mxu0 %v6509
        %9337 = vmatpush1.bf16.msra.mxu0 %v6508
        %9338 = vmatprep.subr.bf16.mxu0 %v6501
        %9339 = vmatpush1.bf16.msra.mxu0 %v6500
        %9340 = vmatprep.subr.bf16.mxu0 %v6493
        %9341 = vmatpush1.bf16.msra.mxu0 %v6492
        %9342 = vmatprep.subr.bf16.mxu0 %v6485
        %9343 = vmatpush1.bf16.msra.mxu0 %v6484
        %9344 = vmatprep.subr.bf16.mxu0 %v6477
        %9345 = vmatpush1.bf16.msra.mxu0 %v6476
        %9346 = vmatprep.subr.bf16.mxu0 %v6597
        %9347 = vmatpush2.bf16.msra.mxu0 %v6596
        %9348 = vmatprep.subr.bf16.mxu0 %v6589
        %9349 = vmatpush2.bf16.msra.mxu0 %v6588
        %9350 = vmatprep.subr.bf16.mxu0 %v6581
        %9351 = vmatpush2.bf16.msra.mxu0 %v6580
        %9352 = vmatprep.subr.bf16.mxu0 %v6573
        %9353 = vmatpush2.bf16.msra.mxu0 %v6572
        %9354 = vmatprep.subr.bf16.mxu0 %v6565
        %9355 = vmatpush2.bf16.msra.mxu0 %v6564
        %9356 = vmatprep.subr.bf16.mxu0 %v6557
        %9357 = vmatpush2.bf16.msra.mxu0 %v6556
        %9358 = vmatprep.subr.bf16.mxu0 %v6549
        %9359 = vmatpush2.bf16.msra.mxu0 %v6548
        %9360 = vmatprep.subr.bf16.mxu0 %v6541
        %9361 = vmatpush2.bf16.msra.mxu0 %v6540
        %9362 = vmatprep.mubr.bf16.mxu0 %v577
        %9363 = vmatmul.mubr.bf16.gmra.mxu0 %v576
        %v9364 = vpop.f32.mrf.mxu0
        %v9365 = vadd.f32 %v9324, %v9364
        %v9366 = vpop.f32.mrf.mxu0
        %v9367 = vadd.f32 %v9326, %v9366
        %v9368 = vpop.f32.mrf.mxu0
        %v9369 = vpop.f32.mrf.mxu0
        %9370 = vdwg.mxu0
        %9371 = vmatprep.subr.bf16.mxu0 %v6661
        %9372 = vmatpush1.bf16.msra.mxu0 %v6660
        %9373 = vmatprep.subr.bf16.mxu0 %v6653
        %9374 = vmatpush1.bf16.msra.mxu0 %v6652
        %9375 = vmatprep.subr.bf16.mxu0 %v6645
        %9376 = vmatpush1.bf16.msra.mxu0 %v6644
        %9377 = vmatprep.subr.bf16.mxu0 %v6637
        %9378 = vmatpush1.bf16.msra.mxu0 %v6636
        %9379 = vmatprep.subr.bf16.mxu0 %v6629
        %9380 = vmatpush1.bf16.msra.mxu0 %v6628
        %9381 = vmatprep.subr.bf16.mxu0 %v6621
        %9382 = vmatpush1.bf16.msra.mxu0 %v6620
        %9383 = vmatprep.subr.bf16.mxu0 %v6613
        %9384 = vmatpush1.bf16.msra.mxu0 %v6612
        %9385 = vmatprep.subr.bf16.mxu0 %v6605
        %9386 = vmatpush1.bf16.msra.mxu0 %v6604
        %9387 = vmatprep.subr.bf16.mxu0 %v6725
        %9388 = vmatpush2.bf16.msra.mxu0 %v6724
        %9389 = vmatprep.subr.bf16.mxu0 %v6717
        %9390 = vmatpush2.bf16.msra.mxu0 %v6716
        %9391 = vmatprep.subr.bf16.mxu0 %v6709
        %9392 = vmatpush2.bf16.msra.mxu0 %v6708
        %9393 = vmatprep.subr.bf16.mxu0 %v6701
        %9394 = vmatpush2.bf16.msra.mxu0 %v6700
        %9395 = vmatprep.subr.bf16.mxu0 %v6693
        %9396 = vmatpush2.bf16.msra.mxu0 %v6692
        %9397 = vmatprep.subr.bf16.mxu0 %v6685
        %9398 = vmatpush2.bf16.msra.mxu0 %v6684
        %9399 = vmatprep.subr.bf16.mxu0 %v6677
        %9400 = vmatpush2.bf16.msra.mxu0 %v6676
        %9401 = vmatprep.subr.bf16.mxu0 %v6669
        %9402 = vmatpush2.bf16.msra.mxu0 %v6668
        %9403 = vmatprep.mubr.bf16.mxu0 %v579
        %9404 = vmatmul.mubr.bf16.gmra.mxu0 %v578
        %v9405 = vpop.f32.mrf.mxu0
        %v9406 = vadd.f32 %v9365, %v9405
        %v9407 = vpop.f32.mrf.mxu0
        %v9408 = vadd.f32 %v9367, %v9407
        %v9409 = vpop.f32.mrf.mxu0
        %v9410 = vpop.f32.mrf.mxu0
        %9411 = vdwg.mxu0
        %9412 = vmatprep.subr.bf16.mxu0 %v6789
        %9413 = vmatpush1.bf16.msra.mxu0 %v6788
        %9414 = vmatprep.subr.bf16.mxu0 %v6781
        %9415 = vmatpush1.bf16.msra.mxu0 %v6780
        %9416 = vmatprep.subr.bf16.mxu0 %v6773
        %9417 = vmatpush1.bf16.msra.mxu0 %v6772
        %9418 = vmatprep.subr.bf16.mxu0 %v6765
        %9419 = vmatpush1.bf16.msra.mxu0 %v6764
        %9420 = vmatprep.subr.bf16.mxu0 %v6757
        %9421 = vmatpush1.bf16.msra.mxu0 %v6756
        %9422 = vmatprep.subr.bf16.mxu0 %v6749
        %9423 = vmatpush1.bf16.msra.mxu0 %v6748
        %9424 = vmatprep.subr.bf16.mxu0 %v6741
        %9425 = vmatpush1.bf16.msra.mxu0 %v6740
        %9426 = vmatprep.subr.bf16.mxu0 %v6733
        %9427 = vmatpush1.bf16.msra.mxu0 %v6732
        %9428 = vmatprep.subr.bf16.mxu0 %v6853
        %9429 = vmatpush2.bf16.msra.mxu0 %v6852
        %9430 = vmatprep.subr.bf16.mxu0 %v6845
        %9431 = vmatpush2.bf16.msra.mxu0 %v6844
        %9432 = vmatprep.subr.bf16.mxu0 %v6837
        %9433 = vmatpush2.bf16.msra.mxu0 %v6836
        %9434 = vmatprep.subr.bf16.mxu0 %v6829
        %9435 = vmatpush2.bf16.msra.mxu0 %v6828
        %9436 = vmatprep.subr.bf16.mxu0 %v6821
        %9437 = vmatpush2.bf16.msra.mxu0 %v6820
        %9438 = vmatprep.subr.bf16.mxu0 %v6813
        %9439 = vmatpush2.bf16.msra.mxu0 %v6812
        %9440 = vmatprep.subr.bf16.mxu0 %v6805
        %9441 = vmatpush2.bf16.msra.mxu0 %v6804
        %9442 = vmatprep.subr.bf16.mxu0 %v6797
        %9443 = vmatpush2.bf16.msra.mxu0 %v6796
        %9444 = vmatprep.mubr.bf16.mxu0 %v581
        %9445 = vmatmul.mubr.bf16.gmra.mxu0 %v580
        %v9446 = vpop.f32.mrf.mxu0
        %v9447 = vadd.f32 %v9406, %v9446
        %v9448 = vpop.f32.mrf.mxu0
        %v9449 = vadd.f32 %v9408, %v9448
        %v9450 = vpop.f32.mrf.mxu0
        %v9451 = vpop.f32.mrf.mxu0
        %9452 = vdwg.mxu0
        %9453 = vmatprep.subr.bf16.mxu0 %v6917
        %9454 = vmatpush1.bf16.msra.mxu0 %v6916
        %9455 = vmatprep.subr.bf16.mxu0 %v6909
        %9456 = vmatpush1.bf16.msra.mxu0 %v6908
        %9457 = vmatprep.subr.bf16.mxu0 %v6901
        %9458 = vmatpush1.bf16.msra.mxu0 %v6900
        %9459 = vmatprep.subr.bf16.mxu0 %v6893
        %9460 = vmatpush1.bf16.msra.mxu0 %v6892
        %9461 = vmatprep.subr.bf16.mxu0 %v6885
        %9462 = vmatpush1.bf16.msra.mxu0 %v6884
        %9463 = vmatprep.subr.bf16.mxu0 %v6877
        %9464 = vmatpush1.bf16.msra.mxu0 %v6876
        %9465 = vmatprep.subr.bf16.mxu0 %v6869
        %9466 = vmatpush1.bf16.msra.mxu0 %v6868
        %9467 = vmatprep.subr.bf16.mxu0 %v6861
        %9468 = vmatpush1.bf16.msra.mxu0 %v6860
        %9469 = vmatprep.subr.bf16.mxu0 %v6981
        %9470 = vmatpush2.bf16.msra.mxu0 %v6980
        %9471 = vmatprep.subr.bf16.mxu0 %v6973
        %9472 = vmatpush2.bf16.msra.mxu0 %v6972
        %9473 = vmatprep.subr.bf16.mxu0 %v6965
        %9474 = vmatpush2.bf16.msra.mxu0 %v6964
        %9475 = vmatprep.subr.bf16.mxu0 %v6957
        %9476 = vmatpush2.bf16.msra.mxu0 %v6956
        %9477 = vmatprep.subr.bf16.mxu0 %v6949
        %9478 = vmatpush2.bf16.msra.mxu0 %v6948
        %9479 = vmatprep.subr.bf16.mxu0 %v6941
        %9480 = vmatpush2.bf16.msra.mxu0 %v6940
        %9481 = vmatprep.subr.bf16.mxu0 %v6933
        %9482 = vmatpush2.bf16.msra.mxu0 %v6932
        %9483 = vmatprep.subr.bf16.mxu0 %v6925
        %9484 = vmatpush2.bf16.msra.mxu0 %v6924
        %9485 = vmatprep.mubr.bf16.mxu0 %v583
        %9486 = vmatmul.mubr.bf16.gmra.mxu0 %v582
        %v9487 = vpop.f32.mrf.mxu0
        %v9488 = vadd.f32 %v9447, %v9487
        %v9489 = vpop.f32.mrf.mxu0
        %v9490 = vadd.f32 %v9449, %v9489
        %v9491 = vpop.f32.mrf.mxu0
        %v9492 = vpop.f32.mrf.mxu0
        %9493 = vdwg.mxu0
        %9494 = vmatprep.subr.bf16.mxu0 %v5767
        %9495 = vmatpush1.bf16.msra.mxu0 %v5766
        %9496 = vmatprep.subr.bf16.mxu0 %v5759
        %9497 = vmatpush1.bf16.msra.mxu0 %v5758
        %9498 = vmatprep.subr.bf16.mxu0 %v5751
        %9499 = vmatpush1.bf16.msra.mxu0 %v5750
        %9500 = vmatprep.subr.bf16.mxu0 %v5743
        %9501 = vmatpush1.bf16.msra.mxu0 %v5742
        %9502 = vmatprep.subr.bf16.mxu0 %v5735
        %9503 = vmatpush1.bf16.msra.mxu0 %v5734
        %9504 = vmatprep.subr.bf16.mxu0 %v5727
        %9505 = vmatpush1.bf16.msra.mxu0 %v5726
        %9506 = vmatprep.subr.bf16.mxu0 %v5719
        %9507 = vmatpush1.bf16.msra.mxu0 %v5718
        %9508 = vmatprep.subr.bf16.mxu0 %v5711
        %9509 = vmatpush1.bf16.msra.mxu0 %v5710
        %9510 = vmatprep.subr.bf16.mxu0 %v5831
        %9511 = vmatpush2.bf16.msra.mxu0 %v5830
        %9512 = vmatprep.subr.bf16.mxu0 %v5823
        %9513 = vmatpush2.bf16.msra.mxu0 %v5822
        %9514 = vmatprep.subr.bf16.mxu0 %v5815
        %9515 = vmatpush2.bf16.msra.mxu0 %v5814
        %9516 = vmatprep.subr.bf16.mxu0 %v5807
        %9517 = vmatpush2.bf16.msra.mxu0 %v5806
        %9518 = vmatprep.subr.bf16.mxu0 %v5799
        %9519 = vmatpush2.bf16.msra.mxu0 %v5798
        %9520 = vmatprep.subr.bf16.mxu0 %v5791
        %9521 = vmatpush2.bf16.msra.mxu0 %v5790
        %9522 = vmatprep.subr.bf16.mxu0 %v5783
        %9523 = vmatpush2.bf16.msra.mxu0 %v5782
        %9524 = vmatprep.subr.bf16.mxu0 %v5775
        %9525 = vmatpush2.bf16.msra.mxu0 %v5774
        %9526 = vmatprep.mubr.bf16.mxu0 %v565
        %9527 = vmatmul.mubr.bf16.gmra.mxu0 %v564
        %v9528 = vpop.f32.mrf.mxu0
        %v9529 = vadd.f32 0.0, %v9528
        %v9530 = vpop.f32.mrf.mxu0
        %v9531 = vadd.f32 0.0, %v9530
        %v9532 = vpop.f32.mrf.mxu0
        %v9533 = vpop.f32.mrf.mxu0
        %9534 = vdwg.mxu0
        %9535 = vmatprep.subr.bf16.mxu0 %v5895
        %9536 = vmatpush1.bf16.msra.mxu0 %v5894
        %9537 = vmatprep.subr.bf16.mxu0 %v5887
        %9538 = vmatpush1.bf16.msra.mxu0 %v5886
        %9539 = vmatprep.subr.bf16.mxu0 %v5879
        %9540 = vmatpush1.bf16.msra.mxu0 %v5878
        %9541 = vmatprep.subr.bf16.mxu0 %v5871
        %9542 = vmatpush1.bf16.msra.mxu0 %v5870
        %9543 = vmatprep.subr.bf16.mxu0 %v5863
        %9544 = vmatpush1.bf16.msra.mxu0 %v5862
        %9545 = vmatprep.subr.bf16.mxu0 %v5855
        %9546 = vmatpush1.bf16.msra.mxu0 %v5854
        %9547 = vmatprep.subr.bf16.mxu0 %v5847
        %9548 = vmatpush1.bf16.msra.mxu0 %v5846
        %9549 = vmatprep.subr.bf16.mxu0 %v5839
        %9550 = vmatpush1.bf16.msra.mxu0 %v5838
        %9551 = vmatprep.subr.bf16.mxu0 %v5959
        %9552 = vmatpush2.bf16.msra.mxu0 %v5958
        %9553 = vmatprep.subr.bf16.mxu0 %v5951
        %9554 = vmatpush2.bf16.msra.mxu0 %v5950
        %9555 = vmatprep.subr.bf16.mxu0 %v5943
        %9556 = vmatpush2.bf16.msra.mxu0 %v5942
        %9557 = vmatprep.subr.bf16.mxu0 %v5935
        %9558 = vmatpush2.bf16.msra.mxu0 %v5934
        %9559 = vmatprep.subr.bf16.mxu0 %v5927
        %9560 = vmatpush2.bf16.msra.mxu0 %v5926
        %9561 = vmatprep.subr.bf16.mxu0 %v5919
        %9562 = vmatpush2.bf16.msra.mxu0 %v5918
        %9563 = vmatprep.subr.bf16.mxu0 %v5911
        %9564 = vmatpush2.bf16.msra.mxu0 %v5910
        %9565 = vmatprep.subr.bf16.mxu0 %v5903
        %9566 = vmatpush2.bf16.msra.mxu0 %v5902
        %9567 = vmatprep.mubr.bf16.mxu0 %v567
        %9568 = vmatmul.mubr.bf16.gmra.mxu0 %v566
        %v9569 = vpop.f32.mrf.mxu0
        %v9570 = vadd.f32 %v9529, %v9569
        %v9571 = vpop.f32.mrf.mxu0
        %v9572 = vadd.f32 %v9531, %v9571
        %v9573 = vpop.f32.mrf.mxu0
        %v9574 = vpop.f32.mrf.mxu0
        %9575 = vdwg.mxu0
        %9576 = vmatprep.subr.bf16.mxu0 %v6023
        %9577 = vmatpush1.bf16.msra.mxu0 %v6022
        %9578 = vmatprep.subr.bf16.mxu0 %v6015
        %9579 = vmatpush1.bf16.msra.mxu0 %v6014
        %9580 = vmatprep.subr.bf16.mxu0 %v6007
        %9581 = vmatpush1.bf16.msra.mxu0 %v6006
        %9582 = vmatprep.subr.bf16.mxu0 %v5999
        %9583 = vmatpush1.bf16.msra.mxu0 %v5998
        %9584 = vmatprep.subr.bf16.mxu0 %v5991
        %9585 = vmatpush1.bf16.msra.mxu0 %v5990
        %9586 = vmatprep.subr.bf16.mxu0 %v5983
        %9587 = vmatpush1.bf16.msra.mxu0 %v5982
        %9588 = vmatprep.subr.bf16.mxu0 %v5975
        %9589 = vmatpush1.bf16.msra.mxu0 %v5974
        %9590 = vmatprep.subr.bf16.mxu0 %v5967
        %9591 = vmatpush1.bf16.msra.mxu0 %v5966
        %9592 = vmatprep.subr.bf16.mxu0 %v6087
        %9593 = vmatpush2.bf16.msra.mxu0 %v6086
        %9594 = vmatprep.subr.bf16.mxu0 %v6079
        %9595 = vmatpush2.bf16.msra.mxu0 %v6078
        %9596 = vmatprep.subr.bf16.mxu0 %v6071
        %9597 = vmatpush2.bf16.msra.mxu0 %v6070
        %9598 = vmatprep.subr.bf16.mxu0 %v6063
        %9599 = vmatpush2.bf16.msra.mxu0 %v6062
        %9600 = vmatprep.subr.bf16.mxu0 %v6055
        %9601 = vmatpush2.bf16.msra.mxu0 %v6054
        %9602 = vmatprep.subr.bf16.mxu0 %v6047
        %9603 = vmatpush2.bf16.msra.mxu0 %v6046
        %9604 = vmatprep.subr.bf16.mxu0 %v6039
        %9605 = vmatpush2.bf16.msra.mxu0 %v6038
        %9606 = vmatprep.subr.bf16.mxu0 %v6031
        %9607 = vmatpush2.bf16.msra.mxu0 %v6030
        %9608 = vmatprep.mubr.bf16.mxu0 %v569
        %9609 = vmatmul.mubr.bf16.gmra.mxu0 %v568
        %v9610 = vpop.f32.mrf.mxu0
        %v9611 = vadd.f32 %v9570, %v9610
        %v9612 = vpop.f32.mrf.mxu0
        %v9613 = vadd.f32 %v9572, %v9612
        %v9614 = vpop.f32.mrf.mxu0
        %v9615 = vpop.f32.mrf.mxu0
        %9616 = vdwg.mxu0
        %9617 = vmatprep.subr.bf16.mxu0 %v6151
        %9618 = vmatpush1.bf16.msra.mxu0 %v6150
        %9619 = vmatprep.subr.bf16.mxu0 %v6143
        %9620 = vmatpush1.bf16.msra.mxu0 %v6142
        %9621 = vmatprep.subr.bf16.mxu0 %v6135
        %9622 = vmatpush1.bf16.msra.mxu0 %v6134
        %9623 = vmatprep.subr.bf16.mxu0 %v6127
        %9624 = vmatpush1.bf16.msra.mxu0 %v6126
        %9625 = vmatprep.subr.bf16.mxu0 %v6119
        %9626 = vmatpush1.bf16.msra.mxu0 %v6118
        %9627 = vmatprep.subr.bf16.mxu0 %v6111
        %9628 = vmatpush1.bf16.msra.mxu0 %v6110
        %9629 = vmatprep.subr.bf16.mxu0 %v6103
        %9630 = vmatpush1.bf16.msra.mxu0 %v6102
        %9631 = vmatprep.subr.bf16.mxu0 %v6095
        %9632 = vmatpush1.bf16.msra.mxu0 %v6094
        %9633 = vmatprep.subr.bf16.mxu0 %v6215
        %9634 = vmatpush2.bf16.msra.mxu0 %v6214
        %9635 = vmatprep.subr.bf16.mxu0 %v6207
        %9636 = vmatpush2.bf16.msra.mxu0 %v6206
        %9637 = vmatprep.subr.bf16.mxu0 %v6199
        %9638 = vmatpush2.bf16.msra.mxu0 %v6198
        %9639 = vmatprep.subr.bf16.mxu0 %v6191
        %9640 = vmatpush2.bf16.msra.mxu0 %v6190
        %9641 = vmatprep.subr.bf16.mxu0 %v6183
        %9642 = vmatpush2.bf16.msra.mxu0 %v6182
        %9643 = vmatprep.subr.bf16.mxu0 %v6175
        %9644 = vmatpush2.bf16.msra.mxu0 %v6174
        %9645 = vmatprep.subr.bf16.mxu0 %v6167
        %9646 = vmatpush2.bf16.msra.mxu0 %v6166
        %9647 = vmatprep.subr.bf16.mxu0 %v6159
        %9648 = vmatpush2.bf16.msra.mxu0 %v6158
        %9649 = vmatprep.mubr.bf16.mxu0 %v571
        %9650 = vmatmul.mubr.bf16.gmra.mxu0 %v570
        %v9651 = vpop.f32.mrf.mxu0
        %v9652 = vadd.f32 %v9611, %v9651
        %v9653 = vpop.f32.mrf.mxu0
        %v9654 = vadd.f32 %v9613, %v9653
        %v9655 = vpop.f32.mrf.mxu0
        %v9656 = vpop.f32.mrf.mxu0
        %9657 = vdwg.mxu0
        %9658 = vmatprep.subr.bf16.mxu0 %v6279
        %9659 = vmatpush1.bf16.msra.mxu0 %v6278
        %9660 = vmatprep.subr.bf16.mxu0 %v6271
        %9661 = vmatpush1.bf16.msra.mxu0 %v6270
        %9662 = vmatprep.subr.bf16.mxu0 %v6263
        %9663 = vmatpush1.bf16.msra.mxu0 %v6262
        %9664 = vmatprep.subr.bf16.mxu0 %v6255
        %9665 = vmatpush1.bf16.msra.mxu0 %v6254
        %9666 = vmatprep.subr.bf16.mxu0 %v6247
        %9667 = vmatpush1.bf16.msra.mxu0 %v6246
        %9668 = vmatprep.subr.bf16.mxu0 %v6239
        %9669 = vmatpush1.bf16.msra.mxu0 %v6238
        %9670 = vmatprep.subr.bf16.mxu0 %v6231
        %9671 = vmatpush1.bf16.msra.mxu0 %v6230
        %9672 = vmatprep.subr.bf16.mxu0 %v6223
        %9673 = vmatpush1.bf16.msra.mxu0 %v6222
        %9674 = vmatprep.subr.bf16.mxu0 %v6343
        %9675 = vmatpush2.bf16.msra.mxu0 %v6342
        %9676 = vmatprep.subr.bf16.mxu0 %v6335
        %9677 = vmatpush2.bf16.msra.mxu0 %v6334
        %9678 = vmatprep.subr.bf16.mxu0 %v6327
        %9679 = vmatpush2.bf16.msra.mxu0 %v6326
        %9680 = vmatprep.subr.bf16.mxu0 %v6319
        %9681 = vmatpush2.bf16.msra.mxu0 %v6318
        %9682 = vmatprep.subr.bf16.mxu0 %v6311
        %9683 = vmatpush2.bf16.msra.mxu0 %v6310
        %9684 = vmatprep.subr.bf16.mxu0 %v6303
        %9685 = vmatpush2.bf16.msra.mxu0 %v6302
        %9686 = vmatprep.subr.bf16.mxu0 %v6295
        %9687 = vmatpush2.bf16.msra.mxu0 %v6294
        %9688 = vmatprep.subr.bf16.mxu0 %v6287
        %9689 = vmatpush2.bf16.msra.mxu0 %v6286
        %9690 = vmatprep.mubr.bf16.mxu0 %v573
        %9691 = vmatmul.mubr.bf16.gmra.mxu0 %v572
        %v9692 = vpop.f32.mrf.mxu0
        %v9693 = vadd.f32 %v9652, %v9692
        %v9694 = vpop.f32.mrf.mxu0
        %v9695 = vadd.f32 %v9654, %v9694
        %v9696 = vpop.f32.mrf.mxu0
        %v9697 = vpop.f32.mrf.mxu0
        %9698 = vdwg.mxu0
        %9699 = vmatprep.subr.bf16.mxu0 %v6407
        %9700 = vmatpush1.bf16.msra.mxu0 %v6406
        %9701 = vmatprep.subr.bf16.mxu0 %v6399
        %9702 = vmatpush1.bf16.msra.mxu0 %v6398
        %9703 = vmatprep.subr.bf16.mxu0 %v6391
        %9704 = vmatpush1.bf16.msra.mxu0 %v6390
        %9705 = vmatprep.subr.bf16.mxu0 %v6383
        %9706 = vmatpush1.bf16.msra.mxu0 %v6382
        %9707 = vmatprep.subr.bf16.mxu0 %v6375
        %9708 = vmatpush1.bf16.msra.mxu0 %v6374
        %9709 = vmatprep.subr.bf16.mxu0 %v6367
        %9710 = vmatpush1.bf16.msra.mxu0 %v6366
        %9711 = vmatprep.subr.bf16.mxu0 %v6359
        %9712 = vmatpush1.bf16.msra.mxu0 %v6358
        %9713 = vmatprep.subr.bf16.mxu0 %v6351
        %9714 = vmatpush1.bf16.msra.mxu0 %v6350
        %9715 = vmatprep.subr.bf16.mxu0 %v6471
        %9716 = vmatpush2.bf16.msra.mxu0 %v6470
        %9717 = vmatprep.subr.bf16.mxu0 %v6463
        %9718 = vmatpush2.bf16.msra.mxu0 %v6462
        %9719 = vmatprep.subr.bf16.mxu0 %v6455
        %9720 = vmatpush2.bf16.msra.mxu0 %v6454
        %9721 = vmatprep.subr.bf16.mxu0 %v6447
        %9722 = vmatpush2.bf16.msra.mxu0 %v6446
        %9723 = vmatprep.subr.bf16.mxu0 %v6439
        %9724 = vmatpush2.bf16.msra.mxu0 %v6438
        %9725 = vmatprep.subr.bf16.mxu0 %v6431
        %9726 = vmatpush2.bf16.msra.mxu0 %v6430
        %9727 = vmatprep.subr.bf16.mxu0 %v6423
        %9728 = vmatpush2.bf16.msra.mxu0 %v6422
        %9729 = vmatprep.subr.bf16.mxu0 %v6415
        %9730 = vmatpush2.bf16.msra.mxu0 %v6414
        %9731 = vmatprep.mubr.bf16.mxu0 %v575
        %9732 = vmatmul.mubr.bf16.gmra.mxu0 %v574
        %v9733 = vpop.f32.mrf.mxu0
        %v9734 = vadd.f32 %v9693, %v9733
        %v9735 = vpop.f32.mrf.mxu0
        %v9736 = vadd.f32 %v9695, %v9735
        %v9737 = vpop.f32.mrf.mxu0
        %v9738 = vpop.f32.mrf.mxu0
        %9739 = vdwg.mxu0
        %9740 = vmatprep.subr.bf16.mxu0 %v6535
        %9741 = vmatpush1.bf16.msra.mxu0 %v6534
        %9742 = vmatprep.subr.bf16.mxu0 %v6527
        %9743 = vmatpush1.bf16.msra.mxu0 %v6526
        %9744 = vmatprep.subr.bf16.mxu0 %v6519
        %9745 = vmatpush1.bf16.msra.mxu0 %v6518
        %9746 = vmatprep.subr.bf16.mxu0 %v6511
        %9747 = vmatpush1.bf16.msra.mxu0 %v6510
        %9748 = vmatprep.subr.bf16.mxu0 %v6503
        %9749 = vmatpush1.bf16.msra.mxu0 %v6502
        %9750 = vmatprep.subr.bf16.mxu0 %v6495
        %9751 = vmatpush1.bf16.msra.mxu0 %v6494
        %9752 = vmatprep.subr.bf16.mxu0 %v6487
        %9753 = vmatpush1.bf16.msra.mxu0 %v6486
        %9754 = vmatprep.subr.bf16.mxu0 %v6479
        %9755 = vmatpush1.bf16.msra.mxu0 %v6478
        %9756 = vmatprep.subr.bf16.mxu0 %v6599
        %9757 = vmatpush2.bf16.msra.mxu0 %v6598
        %9758 = vmatprep.subr.bf16.mxu0 %v6591
        %9759 = vmatpush2.bf16.msra.mxu0 %v6590
        %9760 = vmatprep.subr.bf16.mxu0 %v6583
        %9761 = vmatpush2.bf16.msra.mxu0 %v6582
        %9762 = vmatprep.subr.bf16.mxu0 %v6575
        %9763 = vmatpush2.bf16.msra.mxu0 %v6574
        %9764 = vmatprep.subr.bf16.mxu0 %v6567
        %9765 = vmatpush2.bf16.msra.mxu0 %v6566
        %9766 = vmatprep.subr.bf16.mxu0 %v6559
        %9767 = vmatpush2.bf16.msra.mxu0 %v6558
        %9768 = vmatprep.subr.bf16.mxu0 %v6551
        %9769 = vmatpush2.bf16.msra.mxu0 %v6550
        %9770 = vmatprep.subr.bf16.mxu0 %v6543
        %9771 = vmatpush2.bf16.msra.mxu0 %v6542
        %9772 = vmatprep.mubr.bf16.mxu0 %v577
        %9773 = vmatmul.mubr.bf16.gmra.mxu0 %v576
        %v9774 = vpop.f32.mrf.mxu0
        %v9775 = vadd.f32 %v9734, %v9774
        %v9776 = vpop.f32.mrf.mxu0
        %v9777 = vadd.f32 %v9736, %v9776
        %v9778 = vpop.f32.mrf.mxu0
        %v9779 = vpop.f32.mrf.mxu0
        %9780 = vdwg.mxu0
        %9781 = vmatprep.subr.bf16.mxu0 %v6663
        %9782 = vmatpush1.bf16.msra.mxu0 %v6662
        %9783 = vmatprep.subr.bf16.mxu0 %v6655
        %9784 = vmatpush1.bf16.msra.mxu0 %v6654
        %9785 = vmatprep.subr.bf16.mxu0 %v6647
        %9786 = vmatpush1.bf16.msra.mxu0 %v6646
        %9787 = vmatprep.subr.bf16.mxu0 %v6639
        %9788 = vmatpush1.bf16.msra.mxu0 %v6638
        %9789 = vmatprep.subr.bf16.mxu0 %v6631
        %9790 = vmatpush1.bf16.msra.mxu0 %v6630
        %9791 = vmatprep.subr.bf16.mxu0 %v6623
        %9792 = vmatpush1.bf16.msra.mxu0 %v6622
        %9793 = vmatprep.subr.bf16.mxu0 %v6615
        %9794 = vmatpush1.bf16.msra.mxu0 %v6614
        %9795 = vmatprep.subr.bf16.mxu0 %v6607
        %9796 = vmatpush1.bf16.msra.mxu0 %v6606
        %9797 = vmatprep.subr.bf16.mxu0 %v6727
        %9798 = vmatpush2.bf16.msra.mxu0 %v6726
        %9799 = vmatprep.subr.bf16.mxu0 %v6719
        %9800 = vmatpush2.bf16.msra.mxu0 %v6718
        %9801 = vmatprep.subr.bf16.mxu0 %v6711
        %9802 = vmatpush2.bf16.msra.mxu0 %v6710
        %9803 = vmatprep.subr.bf16.mxu0 %v6703
        %9804 = vmatpush2.bf16.msra.mxu0 %v6702
        %9805 = vmatprep.subr.bf16.mxu0 %v6695
        %9806 = vmatpush2.bf16.msra.mxu0 %v6694
        %9807 = vmatprep.subr.bf16.mxu0 %v6687
        %9808 = vmatpush2.bf16.msra.mxu0 %v6686
        %9809 = vmatprep.subr.bf16.mxu0 %v6679
        %9810 = vmatpush2.bf16.msra.mxu0 %v6678
        %9811 = vmatprep.subr.bf16.mxu0 %v6671
        %9812 = vmatpush2.bf16.msra.mxu0 %v6670
        %9813 = vmatprep.mubr.bf16.mxu0 %v579
        %9814 = vmatmul.mubr.bf16.gmra.mxu0 %v578
        %v9815 = vpop.f32.mrf.mxu0
        %v9816 = vadd.f32 %v9775, %v9815
        %v9817 = vpop.f32.mrf.mxu0
        %v9818 = vadd.f32 %v9777, %v9817
        %v9819 = vpop.f32.mrf.mxu0
        %v9820 = vpop.f32.mrf.mxu0
        %9821 = vdwg.mxu0
        %9822 = vmatprep.subr.bf16.mxu0 %v6791
        %9823 = vmatpush1.bf16.msra.mxu0 %v6790
        %9824 = vmatprep.subr.bf16.mxu0 %v6783
        %9825 = vmatpush1.bf16.msra.mxu0 %v6782
        %9826 = vmatprep.subr.bf16.mxu0 %v6775
        %9827 = vmatpush1.bf16.msra.mxu0 %v6774
        %9828 = vmatprep.subr.bf16.mxu0 %v6767
        %9829 = vmatpush1.bf16.msra.mxu0 %v6766
        %9830 = vmatprep.subr.bf16.mxu0 %v6759
        %9831 = vmatpush1.bf16.msra.mxu0 %v6758
        %9832 = vmatprep.subr.bf16.mxu0 %v6751
        %9833 = vmatpush1.bf16.msra.mxu0 %v6750
        %9834 = vmatprep.subr.bf16.mxu0 %v6743
        %9835 = vmatpush1.bf16.msra.mxu0 %v6742
        %9836 = vmatprep.subr.bf16.mxu0 %v6735
        %9837 = vmatpush1.bf16.msra.mxu0 %v6734
        %9838 = vmatprep.subr.bf16.mxu0 %v6855
        %9839 = vmatpush2.bf16.msra.mxu0 %v6854
        %9840 = vmatprep.subr.bf16.mxu0 %v6847
        %9841 = vmatpush2.bf16.msra.mxu0 %v6846
        %9842 = vmatprep.subr.bf16.mxu0 %v6839
        %9843 = vmatpush2.bf16.msra.mxu0 %v6838
        %9844 = vmatprep.subr.bf16.mxu0 %v6831
        %9845 = vmatpush2.bf16.msra.mxu0 %v6830
        %9846 = vmatprep.subr.bf16.mxu0 %v6823
        %9847 = vmatpush2.bf16.msra.mxu0 %v6822
        %9848 = vmatprep.subr.bf16.mxu0 %v6815
        %9849 = vmatpush2.bf16.msra.mxu0 %v6814
        %9850 = vmatprep.subr.bf16.mxu0 %v6807
        %9851 = vmatpush2.bf16.msra.mxu0 %v6806
        %9852 = vmatprep.subr.bf16.mxu0 %v6799
        %9853 = vmatpush2.bf16.msra.mxu0 %v6798
        %9854 = vmatprep.mubr.bf16.mxu0 %v581
        %9855 = vmatmul.mubr.bf16.gmra.mxu0 %v580
        %v9856 = vpop.f32.mrf.mxu0
        %v9857 = vadd.f32 %v9816, %v9856
        %v9858 = vpop.f32.mrf.mxu0
        %v9859 = vadd.f32 %v9818, %v9858
        %v9860 = vpop.f32.mrf.mxu0
        %v9861 = vpop.f32.mrf.mxu0
        %9862 = vdwg.mxu0
        %9863 = vmatprep.subr.bf16.mxu0 %v6919
        %9864 = vmatpush1.bf16.msra.mxu0 %v6918
        %9865 = vmatprep.subr.bf16.mxu0 %v6911
        %9866 = vmatpush1.bf16.msra.mxu0 %v6910
        %9867 = vmatprep.subr.bf16.mxu0 %v6903
        %9868 = vmatpush1.bf16.msra.mxu0 %v6902
        %9869 = vmatprep.subr.bf16.mxu0 %v6895
        %9870 = vmatpush1.bf16.msra.mxu0 %v6894
        %9871 = vmatprep.subr.bf16.mxu0 %v6887
        %9872 = vmatpush1.bf16.msra.mxu0 %v6886
        %9873 = vmatprep.subr.bf16.mxu0 %v6879
        %9874 = vmatpush1.bf16.msra.mxu0 %v6878
        %9875 = vmatprep.subr.bf16.mxu0 %v6871
        %9876 = vmatpush1.bf16.msra.mxu0 %v6870
        %9877 = vmatprep.subr.bf16.mxu0 %v6863
        %9878 = vmatpush1.bf16.msra.mxu0 %v6862
        %9879 = vmatprep.subr.bf16.mxu0 %v6983
        %9880 = vmatpush2.bf16.msra.mxu0 %v6982
        %9881 = vmatprep.subr.bf16.mxu0 %v6975
        %9882 = vmatpush2.bf16.msra.mxu0 %v6974
        %9883 = vmatprep.subr.bf16.mxu0 %v6967
        %9884 = vmatpush2.bf16.msra.mxu0 %v6966
        %9885 = vmatprep.subr.bf16.mxu0 %v6959
        %9886 = vmatpush2.bf16.msra.mxu0 %v6958
        %9887 = vmatprep.subr.bf16.mxu0 %v6951
        %9888 = vmatpush2.bf16.msra.mxu0 %v6950
        %9889 = vmatprep.subr.bf16.mxu0 %v6943
        %9890 = vmatpush2.bf16.msra.mxu0 %v6942
        %9891 = vmatprep.subr.bf16.mxu0 %v6935
        %9892 = vmatpush2.bf16.msra.mxu0 %v6934
        %9893 = vmatprep.subr.bf16.mxu0 %v6927
        %9894 = vmatpush2.bf16.msra.mxu0 %v6926
        %9895 = vmatprep.mubr.bf16.mxu0 %v583
        %9896 = vmatmul.mubr.bf16.gmra.mxu0 %v582
        %v9897 = vpop.f32.mrf.mxu0
        %v9898 = vadd.f32 %v9857, %v9897
        %v9899 = vpop.f32.mrf.mxu0
        %v9900 = vadd.f32 %v9859, %v9899
        %v9901 = vpop.f32.mrf.mxu0
        %v9902 = vpop.f32.mrf.mxu0
        %9903 = vdwg.mxu0
        %v9904 = vadd.f32 %v536, %v8668
        %v9905 = vadd.f32 %v537, %v8670
        %v9906 = vadd.f32 %v538, %v9078
        %v9907 = vadd.f32 %v539, %v9080
        %v9908 = vadd.f32 %v540, %v9488
        %v9909 = vadd.f32 %v541, %v9490
        %v9910 = vadd.f32 %v542, %v9898
        %v9911 = vadd.f32 %v543, %v9900
        %9912 = vst [vmem:[#allocation2] sm:$0xff] %v9904
        %9913 = vst [vmem:[#allocation2 + $0x8] sm:$0xff] %v9905
        %9914 = vst [vmem:[#allocation2 + $0x10] sm:$0xff] %v9906
        %9915 = vst [vmem:[#allocation2 + $0x18] sm:$0xff] %v9907
        %9916 = vst [vmem:[#allocation2 + $0x20] sm:$0xff] %v9908
        %9917 = vst [vmem:[#allocation2 + $0x28] sm:$0xff] %v9909
        %9918 = vst [vmem:[#allocation2 + $0x30] sm:$0xff] %v9910
        %9919 = vst [vmem:[#allocation2 + $0x38] sm:$0xff] %v9911
        %p9920 = scmp.eq.s32.totalorder %s32, 1
        // Predicated region
        $region105: #{_forward_impl.1} parent=63 // pred_check
          %p9921 = pneg %p9920
        $region106: #{_forward_impl.1} parent=63 // pred_check_branch
          %9923 = sbr.rel (%p9921) target = $region108
        $region107: #{_forward_impl.1} parent=63 // pred_region
          %v9924 = vld [vmem:[#allocation2] sm:$0xff]
          %v9925 = vld [vmem:[#allocation2 + $0x8] sm:$0xff]
          %v9926 = vld [vmem:[#allocation2 + $0x10] sm:$0xff]
          %v9927 = vld [vmem:[#allocation2 + $0x18] sm:$0xff]
          %v9928 = vld [vmem:[#allocation2 + $0x20] sm:$0xff]
          %v9929 = vld [vmem:[#allocation2 + $0x28] sm:$0xff]
          %v9930 = vld [vmem:[#allocation2 + $0x30] sm:$0xff]
          %v9931 = vld [vmem:[#allocation2 + $0x38] sm:$0xff]
          %v9932 = vld [vmem:[#allocation8] sm:$0xff]
          %v9934 = vlaneseq
          %v9935 = vshrl.u32 %v9934, 7
          %v9936 = vsub.s32 0, %v9935
          %v9937 = vrot.slane %v9932, %v9936
          %v9938 = vlaneseq
          %v9939 = vshrl.u32 %v9938, 7
          %v9940 = vsub.s32 1, %v9939
          %v9941 = vrot.slane %v9932, %v9940
          %v9942 = vlaneseq
          %v9943 = vshrl.u32 %v9942, 7
          %v9944 = vsub.s32 2, %v9943
          %v9945 = vrot.slane %v9932, %v9944
          %v9946 = vlaneseq
          %v9947 = vshrl.u32 %v9946, 7
          %v9948 = vsub.s32 3, %v9947
          %v9949 = vrot.slane %v9932, %v9948
          %v9950 = vlaneseq
          %v9951 = vshrl.u32 %v9950, 7
          %v9952 = vsub.s32 4, %v9951
          %v9953 = vrot.slane %v9932, %v9952
          %v9954 = vlaneseq
          %v9955 = vshrl.u32 %v9954, 7
          %v9956 = vsub.s32 5, %v9955
          %v9957 = vrot.slane %v9932, %v9956
          %v9958 = vlaneseq
          %v9959 = vshrl.u32 %v9958, 7
          %v9960 = vsub.s32 6, %v9959
          %v9961 = vrot.slane %v9932, %v9960
          %v9962 = vlaneseq
          %v9963 = vshrl.u32 %v9962, 7
          %v9964 = vsub.s32 7, %v9963
          %v9965 = vrot.slane %v9932, %v9964
          %v9974 = vadd.f32 %v9924, %v9937
          %v9975 = vadd.f32 %v9925, %v9941
          %v9976 = vadd.f32 %v9926, %v9945
          %v9977 = vadd.f32 %v9927, %v9949
          %v9978 = vadd.f32 %v9928, %v9953
          %v9979 = vadd.f32 %v9929, %v9957
          %v9980 = vadd.f32 %v9930, %v9961
          %v9981 = vadd.f32 %v9931, %v9965
          %v9982 = vmax.f32 %v9974, 0.0
          %v9983 = vmax.f32 %v9975, 0.0
          %v9984 = vmax.f32 %v9976, 0.0
          %v9985 = vmax.f32 %v9977, 0.0
          %v9986 = vmax.f32 %v9978, 0.0
          %v9987 = vmax.f32 %v9979, 0.0
          %v9988 = vmax.f32 %v9980, 0.0
          %v9989 = vmax.f32 %v9981, 0.0
          %v9990 = vld [vmem:[#allocation9] sm:$0xff]
          %v9991 = vld [vmem:[#allocation11] sm:$0xff]
          %v9992 = vrot.slane %v9982, 4
          %v9993 = vadd.f32 %v9982, %v9992
          %v9994 = vrot.slane %v9993, 2
          %v9995 = vadd.f32 %v9993, %v9994
          %v9996 = vrot.slane %v9995, 1
          %v9997 = vadd.f32 %v9995, %v9996
          %v9998 = vrot.slane %v9983, 4
          %v9999 = vadd.f32 %v9983, %v9998
          %v10000 = vrot.slane %v9999, 2
          %v10001 = vadd.f32 %v9999, %v10000
          %v10002 = vrot.slane %v10001, 1
          %v10003 = vadd.f32 %v10001, %v10002
          %v10004 = vrot.slane %v9984, 4
          %v10005 = vadd.f32 %v9984, %v10004
          %v10006 = vrot.slane %v10005, 2
          %v10007 = vadd.f32 %v10005, %v10006
          %v10008 = vrot.slane %v10007, 1
          %v10009 = vadd.f32 %v10007, %v10008
          %v10010 = vrot.slane %v9985, 4
          %v10011 = vadd.f32 %v9985, %v10010
          %v10012 = vrot.slane %v10011, 2
          %v10013 = vadd.f32 %v10011, %v10012
          %v10014 = vrot.slane %v10013, 1
          %v10015 = vadd.f32 %v10013, %v10014
          %v10016 = vrot.slane %v9986, 4
          %v10017 = vadd.f32 %v9986, %v10016
          %v10018 = vrot.slane %v10017, 2
          %v10019 = vadd.f32 %v10017, %v10018
          %v10020 = vrot.slane %v10019, 1
          %v10021 = vadd.f32 %v10019, %v10020
          %v10022 = vrot.slane %v9987, 4
          %v10023 = vadd.f32 %v9987, %v10022
          %v10024 = vrot.slane %v10023, 2
          %v10025 = vadd.f32 %v10023, %v10024
          %v10026 = vrot.slane %v10025, 1
          %v10027 = vadd.f32 %v10025, %v10026
          %v10028 = vrot.slane %v9988, 4
          %v10029 = vadd.f32 %v9988, %v10028
          %v10030 = vrot.slane %v10029, 2
          %v10031 = vadd.f32 %v10029, %v10030
          %v10032 = vrot.slane %v10031, 1
          %v10033 = vadd.f32 %v10031, %v10032
          %v10034 = vrot.slane %v9989, 4
          %v10035 = vadd.f32 %v9989, %v10034
          %v10036 = vrot.slane %v10035, 2
          %v10037 = vadd.f32 %v10035, %v10036
          %v10038 = vrot.slane %v10037, 1
          %v10039 = vadd.f32 %v10037, %v10038
          %v10040 = vrcp.pop 8.0
          %v10041 = vmul.f32 %v9997, %v10040
          %v10042 = vmul.f32 %v10003, %v10040
          %v10043 = vmul.f32 %v10009, %v10040
          %v10044 = vmul.f32 %v10015, %v10040
          %v10045 = vmul.f32 %v10021, %v10040
          %v10046 = vmul.f32 %v10027, %v10040
          %v10047 = vmul.f32 %v10033, %v10040
          %v10048 = vmul.f32 %v10039, %v10040
          %v10049 = vsub.f32 %v9982, %v10041
          %v10050 = vsub.f32 %v9983, %v10042
          %v10051 = vsub.f32 %v9984, %v10043
          %v10052 = vsub.f32 %v9985, %v10044
          %v10053 = vsub.f32 %v9986, %v10045
          %v10054 = vsub.f32 %v9987, %v10046
          %v10055 = vsub.f32 %v9988, %v10047
          %v10056 = vsub.f32 %v9989, %v10048
          %v10057 = vmul.f32 %v10049, %v10049
          %v10058 = vmul.f32 %v10050, %v10050
          %v10059 = vmul.f32 %v10051, %v10051
          %v10060 = vmul.f32 %v10052, %v10052
          %v10061 = vmul.f32 %v10053, %v10053
          %v10062 = vmul.f32 %v10054, %v10054
          %v10063 = vmul.f32 %v10055, %v10055
          %v10064 = vmul.f32 %v10056, %v10056
          %v10065 = vrot.slane %v10057, 4
          %v10066 = vadd.f32 %v10057, %v10065
          %v10067 = vrot.slane %v10066, 2
          %v10068 = vadd.f32 %v10066, %v10067
          %v10069 = vrot.slane %v10068, 1
          %v10070 = vadd.f32 %v10068, %v10069
          %v10071 = vrot.slane %v10058, 4
          %v10072 = vadd.f32 %v10058, %v10071
          %v10073 = vrot.slane %v10072, 2
          %v10074 = vadd.f32 %v10072, %v10073
          %v10075 = vrot.slane %v10074, 1
          %v10076 = vadd.f32 %v10074, %v10075
          %v10077 = vrot.slane %v10059, 4
          %v10078 = vadd.f32 %v10059, %v10077
          %v10079 = vrot.slane %v10078, 2
          %v10080 = vadd.f32 %v10078, %v10079
          %v10081 = vrot.slane %v10080, 1
          %v10082 = vadd.f32 %v10080, %v10081
          %v10083 = vrot.slane %v10060, 4
          %v10084 = vadd.f32 %v10060, %v10083
          %v10085 = vrot.slane %v10084, 2
          %v10086 = vadd.f32 %v10084, %v10085
          %v10087 = vrot.slane %v10086, 1
          %v10088 = vadd.f32 %v10086, %v10087
          %v10089 = vrot.slane %v10061, 4
          %v10090 = vadd.f32 %v10061, %v10089
          %v10091 = vrot.slane %v10090, 2
          %v10092 = vadd.f32 %v10090, %v10091
          %v10093 = vrot.slane %v10092, 1
          %v10094 = vadd.f32 %v10092, %v10093
          %v10095 = vrot.slane %v10062, 4
          %v10096 = vadd.f32 %v10062, %v10095
          %v10097 = vrot.slane %v10096, 2
          %v10098 = vadd.f32 %v10096, %v10097
          %v10099 = vrot.slane %v10098, 1
          %v10100 = vadd.f32 %v10098, %v10099
          %v10101 = vrot.slane %v10063, 4
          %v10102 = vadd.f32 %v10063, %v10101
          %v10103 = vrot.slane %v10102, 2
          %v10104 = vadd.f32 %v10102, %v10103
          %v10105 = vrot.slane %v10104, 1
          %v10106 = vadd.f32 %v10104, %v10105
          %v10107 = vrot.slane %v10064, 4
          %v10108 = vadd.f32 %v10064, %v10107
          %v10109 = vrot.slane %v10108, 2
          %v10110 = vadd.f32 %v10108, %v10109
          %v10111 = vrot.slane %v10110, 1
          %v10112 = vadd.f32 %v10110, %v10111
          %v10113 = vmul.f32 %v10070, %v10040
          %v10114 = vmul.f32 %v10076, %v10040
          %v10115 = vmul.f32 %v10082, %v10040
          %v10116 = vmul.f32 %v10088, %v10040
          %v10117 = vmul.f32 %v10094, %v10040
          %v10118 = vmul.f32 %v10100, %v10040
          %v10119 = vmul.f32 %v10106, %v10040
          %v10120 = vmul.f32 %v10112, %v10040
          %v10121 = vadd.f32 %v10113, 1e-05
          %v10122 = vadd.f32 %v10114, 1e-05
          %v10123 = vadd.f32 %v10115, 1e-05
          %v10124 = vadd.f32 %v10116, 1e-05
          %v10125 = vadd.f32 %v10117, 1e-05
          %v10126 = vadd.f32 %v10118, 1e-05
          %v10127 = vadd.f32 %v10119, 1e-05
          %v10128 = vadd.f32 %v10120, 1e-05
          %v10129 = vrsqrt.pop %v10121
          %v10130 = vrsqrt.pop %v10122
          %v10131 = vrsqrt.pop %v10123
          %v10132 = vrsqrt.pop %v10124
          %v10133 = vrsqrt.pop %v10125
          %v10134 = vrsqrt.pop %v10126
          %v10135 = vrsqrt.pop %v10127
          %v10136 = vrsqrt.pop %v10128
          %v10145 = vcombine.low %v10129, %v10130
          %v10146 = vcombine.low %v10131, %v10132
          %v10147 = vcombine.low %v10133, %v10134
          %v10148 = vcombine.low %v10135, %v10136
          %v10150 = vunpack.c.l.s4 1966171168
          %v10151 = vunpack.c.0.s8 %v10150
          %v10152 = vlaneseq
          %v10153 = vshrl.u32 %v10152, 7
          %v10154 = vsub.s32 %v10151, %v10153
          %v10155 = vrot.slane %v10145, %v10154
          %v10157 = vunpack.c.l.s4 1966171168
          %v10158 = vunpack.c.0.s8 %v10157
          %v10159 = vlaneseq
          %v10160 = vshrl.u32 %v10159, 7
          %v10161 = vsub.s32 %v10158, %v10160
          %v10162 = vrot.slane %v10146, %v10161
          %v10164 = vunpack.c.l.s4 1966171168
          %v10165 = vunpack.c.0.s8 %v10164
          %v10166 = vlaneseq
          %v10167 = vshrl.u32 %v10166, 7
          %v10168 = vsub.s32 %v10165, %v10167
          %v10169 = vrot.slane %v10147, %v10168
          %v10171 = vunpack.c.l.s4 1966171168
          %v10172 = vunpack.c.0.s8 %v10171
          %v10173 = vlaneseq
          %v10174 = vshrl.u32 %v10173, 7
          %v10175 = vsub.s32 %v10172, %v10174
          %v10176 = vrot.slane %v10148, %v10175
          %v10177 = vcombine.low %v10155, %v10162
          %v10178 = vcombine.low %v10169, %v10176
          %v10180 = vunpack.c.l.s4 1966171168
          %v10181 = vunpack.c.0.s8 %v10180
          %v10182 = vlaneseq
          %v10183 = vshrl.u32 %v10182, 7
          %v10184 = vsub.s32 %v10181, %v10183
          %v10185 = vrot.slane %v10177, %v10184
          %v10187 = vunpack.c.l.s4 1966171168
          %v10188 = vunpack.c.0.s8 %v10187
          %v10189 = vlaneseq
          %v10190 = vshrl.u32 %v10189, 7
          %v10191 = vsub.s32 %v10188, %v10190
          %v10192 = vrot.slane %v10178, %v10191
          %v10193 = vcombine.low %v10185, %v10192
          %v10195 = vmul.f32 %v9990, %v10193
          %v10197 = vlaneseq
          %v10198 = vshrl.u32 %v10197, 7
          %v10199 = vsub.s32 0, %v10198
          %v10200 = vrot.slane %v10195, %v10199
          %v10201 = vlaneseq
          %v10202 = vshrl.u32 %v10201, 7
          %v10203 = vsub.s32 1, %v10202
          %v10204 = vrot.slane %v10195, %v10203
          %v10205 = vlaneseq
          %v10206 = vshrl.u32 %v10205, 7
          %v10207 = vsub.s32 2, %v10206
          %v10208 = vrot.slane %v10195, %v10207
          %v10209 = vlaneseq
          %v10210 = vshrl.u32 %v10209, 7
          %v10211 = vsub.s32 3, %v10210
          %v10212 = vrot.slane %v10195, %v10211
          %v10213 = vlaneseq
          %v10214 = vshrl.u32 %v10213, 7
          %v10215 = vsub.s32 4, %v10214
          %v10216 = vrot.slane %v10195, %v10215
          %v10217 = vlaneseq
          %v10218 = vshrl.u32 %v10217, 7
          %v10219 = vsub.s32 5, %v10218
          %v10220 = vrot.slane %v10195, %v10219
          %v10221 = vlaneseq
          %v10222 = vshrl.u32 %v10221, 7
          %v10223 = vsub.s32 6, %v10222
          %v10224 = vrot.slane %v10195, %v10223
          %v10225 = vlaneseq
          %v10226 = vshrl.u32 %v10225, 7
          %v10227 = vsub.s32 7, %v10226
          %v10228 = vrot.slane %v10195, %v10227
          %v10237 = vmul.f32 %v10041, %v10200
          %v10238 = vmul.f32 %v10042, %v10204
          %v10239 = vmul.f32 %v10043, %v10208
          %v10240 = vmul.f32 %v10044, %v10212
          %v10241 = vmul.f32 %v10045, %v10216
          %v10242 = vmul.f32 %v10046, %v10220
          %v10243 = vmul.f32 %v10047, %v10224
          %v10244 = vmul.f32 %v10048, %v10228
          %v10253 = vcombine.low %v10237, %v10238
          %v10254 = vcombine.low %v10239, %v10240
          %v10255 = vcombine.low %v10241, %v10242
          %v10256 = vcombine.low %v10243, %v10244
          %v10258 = vunpack.c.l.s4 1966171168
          %v10259 = vunpack.c.0.s8 %v10258
          %v10260 = vlaneseq
          %v10261 = vshrl.u32 %v10260, 7
          %v10262 = vsub.s32 %v10259, %v10261
          %v10263 = vrot.slane %v10253, %v10262
          %v10265 = vunpack.c.l.s4 1966171168
          %v10266 = vunpack.c.0.s8 %v10265
          %v10267 = vlaneseq
          %v10268 = vshrl.u32 %v10267, 7
          %v10269 = vsub.s32 %v10266, %v10268
          %v10270 = vrot.slane %v10254, %v10269
          %v10272 = vunpack.c.l.s4 1966171168
          %v10273 = vunpack.c.0.s8 %v10272
          %v10274 = vlaneseq
          %v10275 = vshrl.u32 %v10274, 7
          %v10276 = vsub.s32 %v10273, %v10275
          %v10277 = vrot.slane %v10255, %v10276
          %v10279 = vunpack.c.l.s4 1966171168
          %v10280 = vunpack.c.0.s8 %v10279
          %v10281 = vlaneseq
          %v10282 = vshrl.u32 %v10281, 7
          %v10283 = vsub.s32 %v10280, %v10282
          %v10284 = vrot.slane %v10256, %v10283
          %v10285 = vcombine.low %v10263, %v10270
          %v10286 = vcombine.low %v10277, %v10284
          %v10288 = vunpack.c.l.s4 1966171168
          %v10289 = vunpack.c.0.s8 %v10288
          %v10290 = vlaneseq
          %v10291 = vshrl.u32 %v10290, 7
          %v10292 = vsub.s32 %v10289, %v10291
          %v10293 = vrot.slane %v10285, %v10292
          %v10295 = vunpack.c.l.s4 1966171168
          %v10296 = vunpack.c.0.s8 %v10295
          %v10297 = vlaneseq
          %v10298 = vshrl.u32 %v10297, 7
          %v10299 = vsub.s32 %v10296, %v10298
          %v10300 = vrot.slane %v10286, %v10299
          %v10301 = vcombine.low %v10293, %v10300
          %v10303 = vsub.f32 %v9991, %v10301
          %v10304 = vmul.f32 %v9982, %v10200
          %v10305 = vmul.f32 %v9983, %v10204
          %v10306 = vmul.f32 %v9984, %v10208
          %v10307 = vmul.f32 %v9985, %v10212
          %v10308 = vmul.f32 %v9986, %v10216
          %v10309 = vmul.f32 %v9987, %v10220
          %v10310 = vmul.f32 %v9988, %v10224
          %v10311 = vmul.f32 %v9989, %v10228
          %v10313 = vlaneseq
          %v10314 = vshrl.u32 %v10313, 7
          %v10315 = vsub.s32 0, %v10314
          %v10316 = vrot.slane %v10303, %v10315
          %v10317 = vlaneseq
          %v10318 = vshrl.u32 %v10317, 7
          %v10319 = vsub.s32 1, %v10318
          %v10320 = vrot.slane %v10303, %v10319
          %v10321 = vlaneseq
          %v10322 = vshrl.u32 %v10321, 7
          %v10323 = vsub.s32 2, %v10322
          %v10324 = vrot.slane %v10303, %v10323
          %v10325 = vlaneseq
          %v10326 = vshrl.u32 %v10325, 7
          %v10327 = vsub.s32 3, %v10326
          %v10328 = vrot.slane %v10303, %v10327
          %v10329 = vlaneseq
          %v10330 = vshrl.u32 %v10329, 7
          %v10331 = vsub.s32 4, %v10330
          %v10332 = vrot.slane %v10303, %v10331
          %v10333 = vlaneseq
          %v10334 = vshrl.u32 %v10333, 7
          %v10335 = vsub.s32 5, %v10334
          %v10336 = vrot.slane %v10303, %v10335
          %v10337 = vlaneseq
          %v10338 = vshrl.u32 %v10337, 7
          %v10339 = vsub.s32 6, %v10338
          %v10340 = vrot.slane %v10303, %v10339
          %v10341 = vlaneseq
          %v10342 = vshrl.u32 %v10341, 7
          %v10343 = vsub.s32 7, %v10342
          %v10344 = vrot.slane %v10303, %v10343
          %v10353 = vadd.f32 %v10304, %v10316
          %v10354 = vadd.f32 %v10305, %v10320
          %v10355 = vadd.f32 %v10306, %v10324
          %v10356 = vadd.f32 %v10307, %v10328
          %v10357 = vadd.f32 %v10308, %v10332
          %v10358 = vadd.f32 %v10309, %v10336
          %v10359 = vadd.f32 %v10310, %v10340
          %v10360 = vadd.f32 %v10311, %v10344
          %v10361 = vpack.c.bf16 %v10353, %v10353
          %v10362 = vpack.c.bf16 %v10354, %v10354
          %v10363 = vpack.c.bf16 %v10355, %v10355
          %v10364 = vpack.c.bf16 %v10356, %v10356
          %v10365 = vpack.c.bf16 %v10357, %v10357
          %v10366 = vpack.c.bf16 %v10358, %v10358
          %v10367 = vpack.c.bf16 %v10359, %v10359
          %v10368 = vpack.c.bf16 %v10360, %v10360
          %v10369 = vld [vmem:[#allocation12] sm:$0xff]
          %v10370 = vld [vmem:[#allocation12 + $0x8] sm:$0xff]
          %v10371 = vld [vmem:[#allocation12 + $0x10] sm:$0xff]
          %v10372 = vld [vmem:[#allocation12 + $0x18] sm:$0xff]
          %v10373 = vld [vmem:[#allocation12 + $0x20] sm:$0xff]
          %v10374 = vld [vmem:[#allocation12 + $0x28] sm:$0xff]
          %v10375 = vld [vmem:[#allocation12 + $0x30] sm:$0xff]
          %v10376 = vld [vmem:[#allocation12 + $0x38] sm:$0xff]
          %v10377 = vld [vmem:[#allocation12 + $0x40] sm:$0xff]
          %v10378 = vld [vmem:[#allocation12 + $0x48] sm:$0xff]
          %v10379 = vld [vmem:[#allocation12 + $0x50] sm:$0xff]
          %v10380 = vld [vmem:[#allocation12 + $0x58] sm:$0xff]
          %v10381 = vld [vmem:[#allocation12 + $0x60] sm:$0xff]
          %v10382 = vld [vmem:[#allocation12 + $0x68] sm:$0xff]
          %v10383 = vld [vmem:[#allocation12 + $0x70] sm:$0xff]
          %v10384 = vld [vmem:[#allocation12 + $0x78] sm:$0xff]
          %v10385 = vld [vmem:[#allocation12 + $0x80] sm:$0xff]
          %v10386 = vld [vmem:[#allocation12 + $0x88] sm:$0xff]
          %v10387 = vld [vmem:[#allocation12 + $0x90] sm:$0xff]
          %v10388 = vld [vmem:[#allocation12 + $0x98] sm:$0xff]
          %v10389 = vld [vmem:[#allocation12 + $0xa0] sm:$0xff]
          %v10390 = vld [vmem:[#allocation12 + $0xa8] sm:$0xff]
          %v10391 = vld [vmem:[#allocation12 + $0xb0] sm:$0xff]
          %v10392 = vld [vmem:[#allocation12 + $0xb8] sm:$0xff]
          %v10393 = vld [vmem:[#allocation12 + $0xc0] sm:$0xff]
          %v10394 = vld [vmem:[#allocation12 + $0xc8] sm:$0xff]
          %v10395 = vld [vmem:[#allocation12 + $0xd0] sm:$0xff]
          %v10396 = vld [vmem:[#allocation12 + $0xd8] sm:$0xff]
          %v10397 = vld [vmem:[#allocation12 + $0xe0] sm:$0xff]
          %v10398 = vld [vmem:[#allocation12 + $0xe8] sm:$0xff]
          %v10399 = vld [vmem:[#allocation12 + $0xf0] sm:$0xff]
          %v10400 = vld [vmem:[#allocation12 + $0xf8] sm:$0xff]
          %v10401 = vld [vmem:[#allocation12 + $0x100] sm:$0xff]
          %v10402 = vld [vmem:[#allocation12 + $0x108] sm:$0xff]
          %v10403 = vld [vmem:[#allocation12 + $0x110] sm:$0xff]
          %v10404 = vld [vmem:[#allocation12 + $0x118] sm:$0xff]
          %v10405 = vld [vmem:[#allocation12 + $0x120] sm:$0xff]
          %v10406 = vld [vmem:[#allocation12 + $0x128] sm:$0xff]
          %v10407 = vld [vmem:[#allocation12 + $0x130] sm:$0xff]
          %v10408 = vld [vmem:[#allocation12 + $0x138] sm:$0xff]
          %v10409 = vld [vmem:[#allocation12 + $0x140] sm:$0xff]
          %v10410 = vld [vmem:[#allocation12 + $0x148] sm:$0xff]
          %v10411 = vld [vmem:[#allocation12 + $0x150] sm:$0xff]
          %v10412 = vld [vmem:[#allocation12 + $0x158] sm:$0xff]
          %v10413 = vld [vmem:[#allocation12 + $0x160] sm:$0xff]
          %v10414 = vld [vmem:[#allocation12 + $0x168] sm:$0xff]
          %v10415 = vld [vmem:[#allocation12 + $0x170] sm:$0xff]
          %v10416 = vld [vmem:[#allocation12 + $0x178] sm:$0xff]
          %v10417 = vld [vmem:[#allocation12 + $0x180] sm:$0xff]
          %v10418 = vld [vmem:[#allocation12 + $0x188] sm:$0xff]
          %v10419 = vld [vmem:[#allocation12 + $0x190] sm:$0xff]
          %v10420 = vld [vmem:[#allocation12 + $0x198] sm:$0xff]
          %v10421 = vld [vmem:[#allocation12 + $0x1a0] sm:$0xff]
          %v10422 = vld [vmem:[#allocation12 + $0x1a8] sm:$0xff]
          %v10423 = vld [vmem:[#allocation12 + $0x1b0] sm:$0xff]
          %v10424 = vld [vmem:[#allocation12 + $0x1b8] sm:$0xff]
          %v10425 = vld [vmem:[#allocation12 + $0x1c0] sm:$0xff]
          %v10426 = vld [vmem:[#allocation12 + $0x1c8] sm:$0xff]
          %v10427 = vld [vmem:[#allocation12 + $0x1d0] sm:$0xff]
          %v10428 = vld [vmem:[#allocation12 + $0x1d8] sm:$0xff]
          %v10429 = vld [vmem:[#allocation12 + $0x1e0] sm:$0xff]
          %v10430 = vld [vmem:[#allocation12 + $0x1e8] sm:$0xff]
          %v10431 = vld [vmem:[#allocation12 + $0x1f0] sm:$0xff]
          %v10432 = vld [vmem:[#allocation12 + $0x1f8] sm:$0xff]
          %v10433 = vld [vmem:[#allocation12 + $0x200] sm:$0xff]
          %v10434 = vld [vmem:[#allocation12 + $0x208] sm:$0xff]
          %v10435 = vld [vmem:[#allocation12 + $0x210] sm:$0xff]
          %v10436 = vld [vmem:[#allocation12 + $0x218] sm:$0xff]
          %v10437 = vld [vmem:[#allocation12 + $0x220] sm:$0xff]
          %v10438 = vld [vmem:[#allocation12 + $0x228] sm:$0xff]
          %v10439 = vld [vmem:[#allocation12 + $0x230] sm:$0xff]
          %v10440 = vld [vmem:[#allocation12 + $0x238] sm:$0xff]
          %v10441 = vld [vmem:[#allocation12 + $0x240] sm:$0xff]
          %v10442 = vld [vmem:[#allocation12 + $0x248] sm:$0xff]
          %v10443 = vld [vmem:[#allocation12 + $0x250] sm:$0xff]
          %v10444 = vld [vmem:[#allocation12 + $0x258] sm:$0xff]
          %v10445 = vld [vmem:[#allocation12 + $0x260] sm:$0xff]
          %v10446 = vld [vmem:[#allocation12 + $0x268] sm:$0xff]
          %v10447 = vld [vmem:[#allocation12 + $0x270] sm:$0xff]
          %v10448 = vld [vmem:[#allocation12 + $0x278] sm:$0xff]
          %v10449 = vld [vmem:[#allocation12 + $0x280] sm:$0xff]
          %v10450 = vld [vmem:[#allocation12 + $0x288] sm:$0xff]
          %v10451 = vld [vmem:[#allocation12 + $0x290] sm:$0xff]
          %v10452 = vld [vmem:[#allocation12 + $0x298] sm:$0xff]
          %v10453 = vld [vmem:[#allocation12 + $0x2a0] sm:$0xff]
          %v10454 = vld [vmem:[#allocation12 + $0x2a8] sm:$0xff]
          %v10455 = vld [vmem:[#allocation12 + $0x2b0] sm:$0xff]
          %v10456 = vld [vmem:[#allocation12 + $0x2b8] sm:$0xff]
          %v10457 = vld [vmem:[#allocation12 + $0x2c0] sm:$0xff]
          %v10458 = vld [vmem:[#allocation12 + $0x2c8] sm:$0xff]
          %v10459 = vld [vmem:[#allocation12 + $0x2d0] sm:$0xff]
          %v10460 = vld [vmem:[#allocation12 + $0x2d8] sm:$0xff]
          %v10461 = vld [vmem:[#allocation12 + $0x2e0] sm:$0xff]
          %v10462 = vld [vmem:[#allocation12 + $0x2e8] sm:$0xff]
          %v10463 = vld [vmem:[#allocation12 + $0x2f0] sm:$0xff]
          %v10464 = vld [vmem:[#allocation12 + $0x2f8] sm:$0xff]
          %v10465 = vld [vmem:[#allocation12 + $0x300] sm:$0xff]
          %v10466 = vld [vmem:[#allocation12 + $0x308] sm:$0xff]
          %v10467 = vld [vmem:[#allocation12 + $0x310] sm:$0xff]
          %v10468 = vld [vmem:[#allocation12 + $0x318] sm:$0xff]
          %v10469 = vld [vmem:[#allocation12 + $0x320] sm:$0xff]
          %v10470 = vld [vmem:[#allocation12 + $0x328] sm:$0xff]
          %v10471 = vld [vmem:[#allocation12 + $0x330] sm:$0xff]
          %v10472 = vld [vmem:[#allocation12 + $0x338] sm:$0xff]
          %v10473 = vld [vmem:[#allocation12 + $0x340] sm:$0xff]
          %v10474 = vld [vmem:[#allocation12 + $0x348] sm:$0xff]
          %v10475 = vld [vmem:[#allocation12 + $0x350] sm:$0xff]
          %v10476 = vld [vmem:[#allocation12 + $0x358] sm:$0xff]
          %v10477 = vld [vmem:[#allocation12 + $0x360] sm:$0xff]
          %v10478 = vld [vmem:[#allocation12 + $0x368] sm:$0xff]
          %v10479 = vld [vmem:[#allocation12 + $0x370] sm:$0xff]
          %v10480 = vld [vmem:[#allocation12 + $0x378] sm:$0xff]
          %v10481 = vld [vmem:[#allocation12 + $0x380] sm:$0xff]
          %v10482 = vld [vmem:[#allocation12 + $0x388] sm:$0xff]
          %v10483 = vld [vmem:[#allocation12 + $0x390] sm:$0xff]
          %v10484 = vld [vmem:[#allocation12 + $0x398] sm:$0xff]
          %v10485 = vld [vmem:[#allocation12 + $0x3a0] sm:$0xff]
          %v10486 = vld [vmem:[#allocation12 + $0x3a8] sm:$0xff]
          %v10487 = vld [vmem:[#allocation12 + $0x3b0] sm:$0xff]
          %v10488 = vld [vmem:[#allocation12 + $0x3b8] sm:$0xff]
          %v10489 = vld [vmem:[#allocation12 + $0x3c0] sm:$0xff]
          %v10490 = vld [vmem:[#allocation12 + $0x3c8] sm:$0xff]
          %v10491 = vld [vmem:[#allocation12 + $0x3d0] sm:$0xff]
          %v10492 = vld [vmem:[#allocation12 + $0x3d8] sm:$0xff]
          %v10493 = vld [vmem:[#allocation12 + $0x3e0] sm:$0xff]
          %v10494 = vld [vmem:[#allocation12 + $0x3e8] sm:$0xff]
          %v10495 = vld [vmem:[#allocation12 + $0x3f0] sm:$0xff]
          %v10496 = vld [vmem:[#allocation12 + $0x3f8] sm:$0xff]
          %v10497 = vld [vmem:[#allocation12 + $0x400] sm:$0xff]
          %v10498 = vld [vmem:[#allocation12 + $0x408] sm:$0xff]
          %v10499 = vld [vmem:[#allocation12 + $0x410] sm:$0xff]
          %v10500 = vld [vmem:[#allocation12 + $0x418] sm:$0xff]
          %v10501 = vld [vmem:[#allocation12 + $0x420] sm:$0xff]
          %v10502 = vld [vmem:[#allocation12 + $0x428] sm:$0xff]
          %v10503 = vld [vmem:[#allocation12 + $0x430] sm:$0xff]
          %v10504 = vld [vmem:[#allocation12 + $0x438] sm:$0xff]
          %v10505 = vld [vmem:[#allocation12 + $0x440] sm:$0xff]
          %v10506 = vld [vmem:[#allocation12 + $0x448] sm:$0xff]
          %v10507 = vld [vmem:[#allocation12 + $0x450] sm:$0xff]
          %v10508 = vld [vmem:[#allocation12 + $0x458] sm:$0xff]
          %v10509 = vld [vmem:[#allocation12 + $0x460] sm:$0xff]
          %v10510 = vld [vmem:[#allocation12 + $0x468] sm:$0xff]
          %v10511 = vld [vmem:[#allocation12 + $0x470] sm:$0xff]
          %v10512 = vld [vmem:[#allocation12 + $0x478] sm:$0xff]
          %v10513 = vld [vmem:[#allocation12 + $0x480] sm:$0xff]
          %v10514 = vld [vmem:[#allocation12 + $0x488] sm:$0xff]
          %v10515 = vld [vmem:[#allocation12 + $0x490] sm:$0xff]
          %v10516 = vld [vmem:[#allocation12 + $0x498] sm:$0xff]
          %v10517 = vld [vmem:[#allocation12 + $0x4a0] sm:$0xff]
          %v10518 = vld [vmem:[#allocation12 + $0x4a8] sm:$0xff]
          %v10519 = vld [vmem:[#allocation12 + $0x4b0] sm:$0xff]
          %v10520 = vld [vmem:[#allocation12 + $0x4b8] sm:$0xff]
          %v10521 = vld [vmem:[#allocation12 + $0x4c0] sm:$0xff]
          %v10522 = vld [vmem:[#allocation12 + $0x4c8] sm:$0xff]
          %v10523 = vld [vmem:[#allocation12 + $0x4d0] sm:$0xff]
          %v10524 = vld [vmem:[#allocation12 + $0x4d8] sm:$0xff]
          %v10525 = vld [vmem:[#allocation12 + $0x4e0] sm:$0xff]
          %v10526 = vld [vmem:[#allocation12 + $0x4e8] sm:$0xff]
          %v10527 = vld [vmem:[#allocation12 + $0x4f0] sm:$0xff]
          %v10528 = vld [vmem:[#allocation12 + $0x4f8] sm:$0xff]
          %v10529 = vld [vmem:[#allocation12 + $0x500] sm:$0xff]
          %v10530 = vld [vmem:[#allocation12 + $0x508] sm:$0xff]
          %v10531 = vld [vmem:[#allocation12 + $0x510] sm:$0xff]
          %v10532 = vld [vmem:[#allocation12 + $0x518] sm:$0xff]
          %v10533 = vld [vmem:[#allocation12 + $0x520] sm:$0xff]
          %v10534 = vld [vmem:[#allocation12 + $0x528] sm:$0xff]
          %v10535 = vld [vmem:[#allocation12 + $0x530] sm:$0xff]
          %v10536 = vld [vmem:[#allocation12 + $0x538] sm:$0xff]
          %v10537 = vld [vmem:[#allocation12 + $0x540] sm:$0xff]
          %v10538 = vld [vmem:[#allocation12 + $0x548] sm:$0xff]
          %v10539 = vld [vmem:[#allocation12 + $0x550] sm:$0xff]
          %v10540 = vld [vmem:[#allocation12 + $0x558] sm:$0xff]
          %v10541 = vld [vmem:[#allocation12 + $0x560] sm:$0xff]
          %v10542 = vld [vmem:[#allocation12 + $0x568] sm:$0xff]
          %v10543 = vld [vmem:[#allocation12 + $0x570] sm:$0xff]
          %v10544 = vld [vmem:[#allocation12 + $0x578] sm:$0xff]
          %v10545 = vld [vmem:[#allocation12 + $0x580] sm:$0xff]
          %v10546 = vld [vmem:[#allocation12 + $0x588] sm:$0xff]
          %v10547 = vld [vmem:[#allocation12 + $0x590] sm:$0xff]
          %v10548 = vld [vmem:[#allocation12 + $0x598] sm:$0xff]
          %v10549 = vld [vmem:[#allocation12 + $0x5a0] sm:$0xff]
          %v10550 = vld [vmem:[#allocation12 + $0x5a8] sm:$0xff]
          %v10551 = vld [vmem:[#allocation12 + $0x5b0] sm:$0xff]
          %v10552 = vld [vmem:[#allocation12 + $0x5b8] sm:$0xff]
          %v10553 = vld [vmem:[#allocation12 + $0x5c0] sm:$0xff]
          %v10554 = vld [vmem:[#allocation12 + $0x5c8] sm:$0xff]
          %v10555 = vld [vmem:[#allocation12 + $0x5d0] sm:$0xff]
          %v10556 = vld [vmem:[#allocation12 + $0x5d8] sm:$0xff]
          %v10557 = vld [vmem:[#allocation12 + $0x5e0] sm:$0xff]
          %v10558 = vld [vmem:[#allocation12 + $0x5e8] sm:$0xff]
          %v10559 = vld [vmem:[#allocation12 + $0x5f0] sm:$0xff]
          %v10560 = vld [vmem:[#allocation12 + $0x5f8] sm:$0xff]
          %v10561 = vld [vmem:[#allocation12 + $0x600] sm:$0xff]
          %v10562 = vld [vmem:[#allocation12 + $0x608] sm:$0xff]
          %v10563 = vld [vmem:[#allocation12 + $0x610] sm:$0xff]
          %v10564 = vld [vmem:[#allocation12 + $0x618] sm:$0xff]
          %v10565 = vld [vmem:[#allocation12 + $0x620] sm:$0xff]
          %v10566 = vld [vmem:[#allocation12 + $0x628] sm:$0xff]
          %v10567 = vld [vmem:[#allocation12 + $0x630] sm:$0xff]
          %v10568 = vld [vmem:[#allocation12 + $0x638] sm:$0xff]
          %v10569 = vld [vmem:[#allocation12 + $0x640] sm:$0xff]
          %v10570 = vld [vmem:[#allocation12 + $0x648] sm:$0xff]
          %v10571 = vld [vmem:[#allocation12 + $0x650] sm:$0xff]
          %v10572 = vld [vmem:[#allocation12 + $0x658] sm:$0xff]
          %v10573 = vld [vmem:[#allocation12 + $0x660] sm:$0xff]
          %v10574 = vld [vmem:[#allocation12 + $0x668] sm:$0xff]
          %v10575 = vld [vmem:[#allocation12 + $0x670] sm:$0xff]
          %v10576 = vld [vmem:[#allocation12 + $0x678] sm:$0xff]
          %v10577 = vld [vmem:[#allocation12 + $0x680] sm:$0xff]
          %v10578 = vld [vmem:[#allocation12 + $0x688] sm:$0xff]
          %v10579 = vld [vmem:[#allocation12 + $0x690] sm:$0xff]
          %v10580 = vld [vmem:[#allocation12 + $0x698] sm:$0xff]
          %v10581 = vld [vmem:[#allocation12 + $0x6a0] sm:$0xff]
          %v10582 = vld [vmem:[#allocation12 + $0x6a8] sm:$0xff]
          %v10583 = vld [vmem:[#allocation12 + $0x6b0] sm:$0xff]
          %v10584 = vld [vmem:[#allocation12 + $0x6b8] sm:$0xff]
          %v10585 = vld [vmem:[#allocation12 + $0x6c0] sm:$0xff]
          %v10586 = vld [vmem:[#allocation12 + $0x6c8] sm:$0xff]
          %v10587 = vld [vmem:[#allocation12 + $0x6d0] sm:$0xff]
          %v10588 = vld [vmem:[#allocation12 + $0x6d8] sm:$0xff]
          %v10589 = vld [vmem:[#allocation12 + $0x6e0] sm:$0xff]
          %v10590 = vld [vmem:[#allocation12 + $0x6e8] sm:$0xff]
          %v10591 = vld [vmem:[#allocation12 + $0x6f0] sm:$0xff]
          %v10592 = vld [vmem:[#allocation12 + $0x6f8] sm:$0xff]
          %v10593 = vld [vmem:[#allocation12 + $0x700] sm:$0xff]
          %v10594 = vld [vmem:[#allocation12 + $0x708] sm:$0xff]
          %v10595 = vld [vmem:[#allocation12 + $0x710] sm:$0xff]
          %v10596 = vld [vmem:[#allocation12 + $0x718] sm:$0xff]
          %v10597 = vld [vmem:[#allocation12 + $0x720] sm:$0xff]
          %v10598 = vld [vmem:[#allocation12 + $0x728] sm:$0xff]
          %v10599 = vld [vmem:[#allocation12 + $0x730] sm:$0xff]
          %v10600 = vld [vmem:[#allocation12 + $0x738] sm:$0xff]
          %v10601 = vld [vmem:[#allocation12 + $0x740] sm:$0xff]
          %v10602 = vld [vmem:[#allocation12 + $0x748] sm:$0xff]
          %v10603 = vld [vmem:[#allocation12 + $0x750] sm:$0xff]
          %v10604 = vld [vmem:[#allocation12 + $0x758] sm:$0xff]
          %v10605 = vld [vmem:[#allocation12 + $0x760] sm:$0xff]
          %v10606 = vld [vmem:[#allocation12 + $0x768] sm:$0xff]
          %v10607 = vld [vmem:[#allocation12 + $0x770] sm:$0xff]
          %v10608 = vld [vmem:[#allocation12 + $0x778] sm:$0xff]
          %v10609 = vld [vmem:[#allocation12 + $0x780] sm:$0xff]
          %v10610 = vld [vmem:[#allocation12 + $0x788] sm:$0xff]
          %v10611 = vld [vmem:[#allocation12 + $0x790] sm:$0xff]
          %v10612 = vld [vmem:[#allocation12 + $0x798] sm:$0xff]
          %v10613 = vld [vmem:[#allocation12 + $0x7a0] sm:$0xff]
          %v10614 = vld [vmem:[#allocation12 + $0x7a8] sm:$0xff]
          %v10615 = vld [vmem:[#allocation12 + $0x7b0] sm:$0xff]
          %v10616 = vld [vmem:[#allocation12 + $0x7b8] sm:$0xff]
          %v10617 = vld [vmem:[#allocation12 + $0x7c0] sm:$0xff]
          %v10618 = vld [vmem:[#allocation12 + $0x7c8] sm:$0xff]
          %v10619 = vld [vmem:[#allocation12 + $0x7d0] sm:$0xff]
          %v10620 = vld [vmem:[#allocation12 + $0x7d8] sm:$0xff]
          %v10621 = vld [vmem:[#allocation12 + $0x7e0] sm:$0xff]
          %v10622 = vld [vmem:[#allocation12 + $0x7e8] sm:$0xff]
          %v10623 = vld [vmem:[#allocation12 + $0x7f0] sm:$0xff]
          %v10624 = vld [vmem:[#allocation12 + $0x7f8] sm:$0xff]
          %v10625 = vld [vmem:[#allocation14] sm:$0xf]
          %v10627 = vlaneseq
          %v10628 = vshrl.u32 %v10627, 7
          %v10629 = vsub.s32 0, %v10628
          %v10630 = vrot.slane %v10625, %v10629
          %v10631 = vlaneseq
          %v10632 = vshrl.u32 %v10631, 7
          %v10633 = vsub.s32 1, %v10632
          %v10634 = vrot.slane %v10625, %v10633
          %v10635 = vlaneseq
          %v10636 = vshrl.u32 %v10635, 7
          %v10637 = vsub.s32 2, %v10636
          %v10638 = vrot.slane %v10625, %v10637
          %v10639 = vlaneseq
          %v10640 = vshrl.u32 %v10639, 7
          %v10641 = vsub.s32 3, %v10640
          %v10642 = vrot.slane %v10625, %v10641
          %v10903 = vunpack.c.l.b16 %v10369
          %v10904 = vunpack.c.h.b16 %v10369
          %v10905 = vunpack.c.l.b16 %v10370
          %v10906 = vunpack.c.h.b16 %v10370
          %v10907 = vunpack.c.l.b16 %v10371
          %v10908 = vunpack.c.h.b16 %v10371
          %v10909 = vunpack.c.l.b16 %v10372
          %v10910 = vunpack.c.h.b16 %v10372
          %v10911 = vunpack.c.l.b16 %v10373
          %v10912 = vunpack.c.h.b16 %v10373
          %v10913 = vunpack.c.l.b16 %v10374
          %v10914 = vunpack.c.h.b16 %v10374
          %v10915 = vunpack.c.l.b16 %v10375
          %v10916 = vunpack.c.h.b16 %v10375
          %v10917 = vunpack.c.l.b16 %v10376
          %v10918 = vunpack.c.h.b16 %v10376
          %v10919 = vunpack.c.l.b16 %v10377
          %v10920 = vunpack.c.h.b16 %v10377
          %v10921 = vunpack.c.l.b16 %v10378
          %v10922 = vunpack.c.h.b16 %v10378
          %v10923 = vunpack.c.l.b16 %v10379
          %v10924 = vunpack.c.h.b16 %v10379
          %v10925 = vunpack.c.l.b16 %v10380
          %v10926 = vunpack.c.h.b16 %v10380
          %v10927 = vunpack.c.l.b16 %v10381
          %v10928 = vunpack.c.h.b16 %v10381
          %v10929 = vunpack.c.l.b16 %v10382
          %v10930 = vunpack.c.h.b16 %v10382
          %v10931 = vunpack.c.l.b16 %v10383
          %v10932 = vunpack.c.h.b16 %v10383
          %v10933 = vunpack.c.l.b16 %v10384
          %v10934 = vunpack.c.h.b16 %v10384
          %v10935 = vunpack.c.l.b16 %v10385
          %v10936 = vunpack.c.h.b16 %v10385
          %v10937 = vunpack.c.l.b16 %v10386
          %v10938 = vunpack.c.h.b16 %v10386
          %v10939 = vunpack.c.l.b16 %v10387
          %v10940 = vunpack.c.h.b16 %v10387
          %v10941 = vunpack.c.l.b16 %v10388
          %v10942 = vunpack.c.h.b16 %v10388
          %v10943 = vunpack.c.l.b16 %v10389
          %v10944 = vunpack.c.h.b16 %v10389
          %v10945 = vunpack.c.l.b16 %v10390
          %v10946 = vunpack.c.h.b16 %v10390
          %v10947 = vunpack.c.l.b16 %v10391
          %v10948 = vunpack.c.h.b16 %v10391
          %v10949 = vunpack.c.l.b16 %v10392
          %v10950 = vunpack.c.h.b16 %v10392
          %v10951 = vunpack.c.l.b16 %v10393
          %v10952 = vunpack.c.h.b16 %v10393
          %v10953 = vunpack.c.l.b16 %v10394
          %v10954 = vunpack.c.h.b16 %v10394
          %v10955 = vunpack.c.l.b16 %v10395
          %v10956 = vunpack.c.h.b16 %v10395
          %v10957 = vunpack.c.l.b16 %v10396
          %v10958 = vunpack.c.h.b16 %v10396
          %v10959 = vunpack.c.l.b16 %v10397
          %v10960 = vunpack.c.h.b16 %v10397
          %v10961 = vunpack.c.l.b16 %v10398
          %v10962 = vunpack.c.h.b16 %v10398
          %v10963 = vunpack.c.l.b16 %v10399
          %v10964 = vunpack.c.h.b16 %v10399
          %v10965 = vunpack.c.l.b16 %v10400
          %v10966 = vunpack.c.h.b16 %v10400
          %v10967 = vunpack.c.l.b16 %v10401
          %v10968 = vunpack.c.h.b16 %v10401
          %v10969 = vunpack.c.l.b16 %v10402
          %v10970 = vunpack.c.h.b16 %v10402
          %v10971 = vunpack.c.l.b16 %v10403
          %v10972 = vunpack.c.h.b16 %v10403
          %v10973 = vunpack.c.l.b16 %v10404
          %v10974 = vunpack.c.h.b16 %v10404
          %v10975 = vunpack.c.l.b16 %v10405
          %v10976 = vunpack.c.h.b16 %v10405
          %v10977 = vunpack.c.l.b16 %v10406
          %v10978 = vunpack.c.h.b16 %v10406
          %v10979 = vunpack.c.l.b16 %v10407
          %v10980 = vunpack.c.h.b16 %v10407
          %v10981 = vunpack.c.l.b16 %v10408
          %v10982 = vunpack.c.h.b16 %v10408
          %v10983 = vunpack.c.l.b16 %v10409
          %v10984 = vunpack.c.h.b16 %v10409
          %v10985 = vunpack.c.l.b16 %v10410
          %v10986 = vunpack.c.h.b16 %v10410
          %v10987 = vunpack.c.l.b16 %v10411
          %v10988 = vunpack.c.h.b16 %v10411
          %v10989 = vunpack.c.l.b16 %v10412
          %v10990 = vunpack.c.h.b16 %v10412
          %v10991 = vunpack.c.l.b16 %v10413
          %v10992 = vunpack.c.h.b16 %v10413
          %v10993 = vunpack.c.l.b16 %v10414
          %v10994 = vunpack.c.h.b16 %v10414
          %v10995 = vunpack.c.l.b16 %v10415
          %v10996 = vunpack.c.h.b16 %v10415
          %v10997 = vunpack.c.l.b16 %v10416
          %v10998 = vunpack.c.h.b16 %v10416
          %v10999 = vunpack.c.l.b16 %v10417
          %v11000 = vunpack.c.h.b16 %v10417
          %v11001 = vunpack.c.l.b16 %v10418
          %v11002 = vunpack.c.h.b16 %v10418
          %v11003 = vunpack.c.l.b16 %v10419
          %v11004 = vunpack.c.h.b16 %v10419
          %v11005 = vunpack.c.l.b16 %v10420
          %v11006 = vunpack.c.h.b16 %v10420
          %v11007 = vunpack.c.l.b16 %v10421
          %v11008 = vunpack.c.h.b16 %v10421
          %v11009 = vunpack.c.l.b16 %v10422
          %v11010 = vunpack.c.h.b16 %v10422
          %v11011 = vunpack.c.l.b16 %v10423
          %v11012 = vunpack.c.h.b16 %v10423
          %v11013 = vunpack.c.l.b16 %v10424
          %v11014 = vunpack.c.h.b16 %v10424
          %v11015 = vunpack.c.l.b16 %v10425
          %v11016 = vunpack.c.h.b16 %v10425
          %v11017 = vunpack.c.l.b16 %v10426
          %v11018 = vunpack.c.h.b16 %v10426
          %v11019 = vunpack.c.l.b16 %v10427
          %v11020 = vunpack.c.h.b16 %v10427
          %v11021 = vunpack.c.l.b16 %v10428
          %v11022 = vunpack.c.h.b16 %v10428
          %v11023 = vunpack.c.l.b16 %v10429
          %v11024 = vunpack.c.h.b16 %v10429
          %v11025 = vunpack.c.l.b16 %v10430
          %v11026 = vunpack.c.h.b16 %v10430
          %v11027 = vunpack.c.l.b16 %v10431
          %v11028 = vunpack.c.h.b16 %v10431
          %v11029 = vunpack.c.l.b16 %v10432
          %v11030 = vunpack.c.h.b16 %v10432
          %v11031 = vunpack.c.l.b16 %v10433
          %v11032 = vunpack.c.h.b16 %v10433
          %v11033 = vunpack.c.l.b16 %v10434
          %v11034 = vunpack.c.h.b16 %v10434
          %v11035 = vunpack.c.l.b16 %v10435
          %v11036 = vunpack.c.h.b16 %v10435
          %v11037 = vunpack.c.l.b16 %v10436
          %v11038 = vunpack.c.h.b16 %v10436
          %v11039 = vunpack.c.l.b16 %v10437
          %v11040 = vunpack.c.h.b16 %v10437
          %v11041 = vunpack.c.l.b16 %v10438
          %v11042 = vunpack.c.h.b16 %v10438
          %v11043 = vunpack.c.l.b16 %v10439
          %v11044 = vunpack.c.h.b16 %v10439
          %v11045 = vunpack.c.l.b16 %v10440
          %v11046 = vunpack.c.h.b16 %v10440
          %v11047 = vunpack.c.l.b16 %v10441
          %v11048 = vunpack.c.h.b16 %v10441
          %v11049 = vunpack.c.l.b16 %v10442
          %v11050 = vunpack.c.h.b16 %v10442
          %v11051 = vunpack.c.l.b16 %v10443
          %v11052 = vunpack.c.h.b16 %v10443
          %v11053 = vunpack.c.l.b16 %v10444
          %v11054 = vunpack.c.h.b16 %v10444
          %v11055 = vunpack.c.l.b16 %v10445
          %v11056 = vunpack.c.h.b16 %v10445
          %v11057 = vunpack.c.l.b16 %v10446
          %v11058 = vunpack.c.h.b16 %v10446
          %v11059 = vunpack.c.l.b16 %v10447
          %v11060 = vunpack.c.h.b16 %v10447
          %v11061 = vunpack.c.l.b16 %v10448
          %v11062 = vunpack.c.h.b16 %v10448
          %v11063 = vunpack.c.l.b16 %v10449
          %v11064 = vunpack.c.h.b16 %v10449
          %v11065 = vunpack.c.l.b16 %v10450
          %v11066 = vunpack.c.h.b16 %v10450
          %v11067 = vunpack.c.l.b16 %v10451
          %v11068 = vunpack.c.h.b16 %v10451
          %v11069 = vunpack.c.l.b16 %v10452
          %v11070 = vunpack.c.h.b16 %v10452
          %v11071 = vunpack.c.l.b16 %v10453
          %v11072 = vunpack.c.h.b16 %v10453
          %v11073 = vunpack.c.l.b16 %v10454
          %v11074 = vunpack.c.h.b16 %v10454
          %v11075 = vunpack.c.l.b16 %v10455
          %v11076 = vunpack.c.h.b16 %v10455
          %v11077 = vunpack.c.l.b16 %v10456
          %v11078 = vunpack.c.h.b16 %v10456
          %v11079 = vunpack.c.l.b16 %v10457
          %v11080 = vunpack.c.h.b16 %v10457
          %v11081 = vunpack.c.l.b16 %v10458
          %v11082 = vunpack.c.h.b16 %v10458
          %v11083 = vunpack.c.l.b16 %v10459
          %v11084 = vunpack.c.h.b16 %v10459
          %v11085 = vunpack.c.l.b16 %v10460
          %v11086 = vunpack.c.h.b16 %v10460
          %v11087 = vunpack.c.l.b16 %v10461
          %v11088 = vunpack.c.h.b16 %v10461
          %v11089 = vunpack.c.l.b16 %v10462
          %v11090 = vunpack.c.h.b16 %v10462
          %v11091 = vunpack.c.l.b16 %v10463
          %v11092 = vunpack.c.h.b16 %v10463
          %v11093 = vunpack.c.l.b16 %v10464
          %v11094 = vunpack.c.h.b16 %v10464
          %v11095 = vunpack.c.l.b16 %v10465
          %v11096 = vunpack.c.h.b16 %v10465
          %v11097 = vunpack.c.l.b16 %v10466
          %v11098 = vunpack.c.h.b16 %v10466
          %v11099 = vunpack.c.l.b16 %v10467
          %v11100 = vunpack.c.h.b16 %v10467
          %v11101 = vunpack.c.l.b16 %v10468
          %v11102 = vunpack.c.h.b16 %v10468
          %v11103 = vunpack.c.l.b16 %v10469
          %v11104 = vunpack.c.h.b16 %v10469
          %v11105 = vunpack.c.l.b16 %v10470
          %v11106 = vunpack.c.h.b16 %v10470
          %v11107 = vunpack.c.l.b16 %v10471
          %v11108 = vunpack.c.h.b16 %v10471
          %v11109 = vunpack.c.l.b16 %v10472
          %v11110 = vunpack.c.h.b16 %v10472
          %v11111 = vunpack.c.l.b16 %v10473
          %v11112 = vunpack.c.h.b16 %v10473
          %v11113 = vunpack.c.l.b16 %v10474
          %v11114 = vunpack.c.h.b16 %v10474
          %v11115 = vunpack.c.l.b16 %v10475
          %v11116 = vunpack.c.h.b16 %v10475
          %v11117 = vunpack.c.l.b16 %v10476
          %v11118 = vunpack.c.h.b16 %v10476
          %v11119 = vunpack.c.l.b16 %v10477
          %v11120 = vunpack.c.h.b16 %v10477
          %v11121 = vunpack.c.l.b16 %v10478
          %v11122 = vunpack.c.h.b16 %v10478
          %v11123 = vunpack.c.l.b16 %v10479
          %v11124 = vunpack.c.h.b16 %v10479
          %v11125 = vunpack.c.l.b16 %v10480
          %v11126 = vunpack.c.h.b16 %v10480
          %v11127 = vunpack.c.l.b16 %v10481
          %v11128 = vunpack.c.h.b16 %v10481
          %v11129 = vunpack.c.l.b16 %v10482
          %v11130 = vunpack.c.h.b16 %v10482
          %v11131 = vunpack.c.l.b16 %v10483
          %v11132 = vunpack.c.h.b16 %v10483
          %v11133 = vunpack.c.l.b16 %v10484
          %v11134 = vunpack.c.h.b16 %v10484
          %v11135 = vunpack.c.l.b16 %v10485
          %v11136 = vunpack.c.h.b16 %v10485
          %v11137 = vunpack.c.l.b16 %v10486
          %v11138 = vunpack.c.h.b16 %v10486
          %v11139 = vunpack.c.l.b16 %v10487
          %v11140 = vunpack.c.h.b16 %v10487
          %v11141 = vunpack.c.l.b16 %v10488
          %v11142 = vunpack.c.h.b16 %v10488
          %v11143 = vunpack.c.l.b16 %v10489
          %v11144 = vunpack.c.h.b16 %v10489
          %v11145 = vunpack.c.l.b16 %v10490
          %v11146 = vunpack.c.h.b16 %v10490
          %v11147 = vunpack.c.l.b16 %v10491
          %v11148 = vunpack.c.h.b16 %v10491
          %v11149 = vunpack.c.l.b16 %v10492
          %v11150 = vunpack.c.h.b16 %v10492
          %v11151 = vunpack.c.l.b16 %v10493
          %v11152 = vunpack.c.h.b16 %v10493
          %v11153 = vunpack.c.l.b16 %v10494
          %v11154 = vunpack.c.h.b16 %v10494
          %v11155 = vunpack.c.l.b16 %v10495
          %v11156 = vunpack.c.h.b16 %v10495
          %v11157 = vunpack.c.l.b16 %v10496
          %v11158 = vunpack.c.h.b16 %v10496
          %v11159 = vunpack.c.l.b16 %v10497
          %v11160 = vunpack.c.h.b16 %v10497
          %v11161 = vunpack.c.l.b16 %v10498
          %v11162 = vunpack.c.h.b16 %v10498
          %v11163 = vunpack.c.l.b16 %v10499
          %v11164 = vunpack.c.h.b16 %v10499
          %v11165 = vunpack.c.l.b16 %v10500
          %v11166 = vunpack.c.h.b16 %v10500
          %v11167 = vunpack.c.l.b16 %v10501
          %v11168 = vunpack.c.h.b16 %v10501
          %v11169 = vunpack.c.l.b16 %v10502
          %v11170 = vunpack.c.h.b16 %v10502
          %v11171 = vunpack.c.l.b16 %v10503
          %v11172 = vunpack.c.h.b16 %v10503
          %v11173 = vunpack.c.l.b16 %v10504
          %v11174 = vunpack.c.h.b16 %v10504
          %v11175 = vunpack.c.l.b16 %v10505
          %v11176 = vunpack.c.h.b16 %v10505
          %v11177 = vunpack.c.l.b16 %v10506
          %v11178 = vunpack.c.h.b16 %v10506
          %v11179 = vunpack.c.l.b16 %v10507
          %v11180 = vunpack.c.h.b16 %v10507
          %v11181 = vunpack.c.l.b16 %v10508
          %v11182 = vunpack.c.h.b16 %v10508
          %v11183 = vunpack.c.l.b16 %v10509
          %v11184 = vunpack.c.h.b16 %v10509
          %v11185 = vunpack.c.l.b16 %v10510
          %v11186 = vunpack.c.h.b16 %v10510
          %v11187 = vunpack.c.l.b16 %v10511
          %v11188 = vunpack.c.h.b16 %v10511
          %v11189 = vunpack.c.l.b16 %v10512
          %v11190 = vunpack.c.h.b16 %v10512
          %v11191 = vunpack.c.l.b16 %v10513
          %v11192 = vunpack.c.h.b16 %v10513
          %v11193 = vunpack.c.l.b16 %v10514
          %v11194 = vunpack.c.h.b16 %v10514
          %v11195 = vunpack.c.l.b16 %v10515
          %v11196 = vunpack.c.h.b16 %v10515
          %v11197 = vunpack.c.l.b16 %v10516
          %v11198 = vunpack.c.h.b16 %v10516
          %v11199 = vunpack.c.l.b16 %v10517
          %v11200 = vunpack.c.h.b16 %v10517
          %v11201 = vunpack.c.l.b16 %v10518
          %v11202 = vunpack.c.h.b16 %v10518
          %v11203 = vunpack.c.l.b16 %v10519
          %v11204 = vunpack.c.h.b16 %v10519
          %v11205 = vunpack.c.l.b16 %v10520
          %v11206 = vunpack.c.h.b16 %v10520
          %v11207 = vunpack.c.l.b16 %v10521
          %v11208 = vunpack.c.h.b16 %v10521
          %v11209 = vunpack.c.l.b16 %v10522
          %v11210 = vunpack.c.h.b16 %v10522
          %v11211 = vunpack.c.l.b16 %v10523
          %v11212 = vunpack.c.h.b16 %v10523
          %v11213 = vunpack.c.l.b16 %v10524
          %v11214 = vunpack.c.h.b16 %v10524
          %v11215 = vunpack.c.l.b16 %v10525
          %v11216 = vunpack.c.h.b16 %v10525
          %v11217 = vunpack.c.l.b16 %v10526
          %v11218 = vunpack.c.h.b16 %v10526
          %v11219 = vunpack.c.l.b16 %v10527
          %v11220 = vunpack.c.h.b16 %v10527
          %v11221 = vunpack.c.l.b16 %v10528
          %v11222 = vunpack.c.h.b16 %v10528
          %v11223 = vunpack.c.l.b16 %v10529
          %v11224 = vunpack.c.h.b16 %v10529
          %v11225 = vunpack.c.l.b16 %v10530
          %v11226 = vunpack.c.h.b16 %v10530
          %v11227 = vunpack.c.l.b16 %v10531
          %v11228 = vunpack.c.h.b16 %v10531
          %v11229 = vunpack.c.l.b16 %v10532
          %v11230 = vunpack.c.h.b16 %v10532
          %v11231 = vunpack.c.l.b16 %v10533
          %v11232 = vunpack.c.h.b16 %v10533
          %v11233 = vunpack.c.l.b16 %v10534
          %v11234 = vunpack.c.h.b16 %v10534
          %v11235 = vunpack.c.l.b16 %v10535
          %v11236 = vunpack.c.h.b16 %v10535
          %v11237 = vunpack.c.l.b16 %v10536
          %v11238 = vunpack.c.h.b16 %v10536
          %v11239 = vunpack.c.l.b16 %v10537
          %v11240 = vunpack.c.h.b16 %v10537
          %v11241 = vunpack.c.l.b16 %v10538
          %v11242 = vunpack.c.h.b16 %v10538
          %v11243 = vunpack.c.l.b16 %v10539
          %v11244 = vunpack.c.h.b16 %v10539
          %v11245 = vunpack.c.l.b16 %v10540
          %v11246 = vunpack.c.h.b16 %v10540
          %v11247 = vunpack.c.l.b16 %v10541
          %v11248 = vunpack.c.h.b16 %v10541
          %v11249 = vunpack.c.l.b16 %v10542
          %v11250 = vunpack.c.h.b16 %v10542
          %v11251 = vunpack.c.l.b16 %v10543
          %v11252 = vunpack.c.h.b16 %v10543
          %v11253 = vunpack.c.l.b16 %v10544
          %v11254 = vunpack.c.h.b16 %v10544
          %v11255 = vunpack.c.l.b16 %v10545
          %v11256 = vunpack.c.h.b16 %v10545
          %v11257 = vunpack.c.l.b16 %v10546
          %v11258 = vunpack.c.h.b16 %v10546
          %v11259 = vunpack.c.l.b16 %v10547
          %v11260 = vunpack.c.h.b16 %v10547
          %v11261 = vunpack.c.l.b16 %v10548
          %v11262 = vunpack.c.h.b16 %v10548
          %v11263 = vunpack.c.l.b16 %v10549
          %v11264 = vunpack.c.h.b16 %v10549
          %v11265 = vunpack.c.l.b16 %v10550
          %v11266 = vunpack.c.h.b16 %v10550
          %v11267 = vunpack.c.l.b16 %v10551
          %v11268 = vunpack.c.h.b16 %v10551
          %v11269 = vunpack.c.l.b16 %v10552
          %v11270 = vunpack.c.h.b16 %v10552
          %v11271 = vunpack.c.l.b16 %v10553
          %v11272 = vunpack.c.h.b16 %v10553
          %v11273 = vunpack.c.l.b16 %v10554
          %v11274 = vunpack.c.h.b16 %v10554
          %v11275 = vunpack.c.l.b16 %v10555
          %v11276 = vunpack.c.h.b16 %v10555
          %v11277 = vunpack.c.l.b16 %v10556
          %v11278 = vunpack.c.h.b16 %v10556
          %v11279 = vunpack.c.l.b16 %v10557
          %v11280 = vunpack.c.h.b16 %v10557
          %v11281 = vunpack.c.l.b16 %v10558
          %v11282 = vunpack.c.h.b16 %v10558
          %v11283 = vunpack.c.l.b16 %v10559
          %v11284 = vunpack.c.h.b16 %v10559
          %v11285 = vunpack.c.l.b16 %v10560
          %v11286 = vunpack.c.h.b16 %v10560
          %v11287 = vunpack.c.l.b16 %v10561
          %v11288 = vunpack.c.h.b16 %v10561
          %v11289 = vunpack.c.l.b16 %v10562
          %v11290 = vunpack.c.h.b16 %v10562
          %v11291 = vunpack.c.l.b16 %v10563
          %v11292 = vunpack.c.h.b16 %v10563
          %v11293 = vunpack.c.l.b16 %v10564
          %v11294 = vunpack.c.h.b16 %v10564
          %v11295 = vunpack.c.l.b16 %v10565
          %v11296 = vunpack.c.h.b16 %v10565
          %v11297 = vunpack.c.l.b16 %v10566
          %v11298 = vunpack.c.h.b16 %v10566
          %v11299 = vunpack.c.l.b16 %v10567
          %v11300 = vunpack.c.h.b16 %v10567
          %v11301 = vunpack.c.l.b16 %v10568
          %v11302 = vunpack.c.h.b16 %v10568
          %v11303 = vunpack.c.l.b16 %v10569
          %v11304 = vunpack.c.h.b16 %v10569
          %v11305 = vunpack.c.l.b16 %v10570
          %v11306 = vunpack.c.h.b16 %v10570
          %v11307 = vunpack.c.l.b16 %v10571
          %v11308 = vunpack.c.h.b16 %v10571
          %v11309 = vunpack.c.l.b16 %v10572
          %v11310 = vunpack.c.h.b16 %v10572
          %v11311 = vunpack.c.l.b16 %v10573
          %v11312 = vunpack.c.h.b16 %v10573
          %v11313 = vunpack.c.l.b16 %v10574
          %v11314 = vunpack.c.h.b16 %v10574
          %v11315 = vunpack.c.l.b16 %v10575
          %v11316 = vunpack.c.h.b16 %v10575
          %v11317 = vunpack.c.l.b16 %v10576
          %v11318 = vunpack.c.h.b16 %v10576
          %v11319 = vunpack.c.l.b16 %v10577
          %v11320 = vunpack.c.h.b16 %v10577
          %v11321 = vunpack.c.l.b16 %v10578
          %v11322 = vunpack.c.h.b16 %v10578
          %v11323 = vunpack.c.l.b16 %v10579
          %v11324 = vunpack.c.h.b16 %v10579
          %v11325 = vunpack.c.l.b16 %v10580
          %v11326 = vunpack.c.h.b16 %v10580
          %v11327 = vunpack.c.l.b16 %v10581
          %v11328 = vunpack.c.h.b16 %v10581
          %v11329 = vunpack.c.l.b16 %v10582
          %v11330 = vunpack.c.h.b16 %v10582
          %v11331 = vunpack.c.l.b16 %v10583
          %v11332 = vunpack.c.h.b16 %v10583
          %v11333 = vunpack.c.l.b16 %v10584
          %v11334 = vunpack.c.h.b16 %v10584
          %v11335 = vunpack.c.l.b16 %v10585
          %v11336 = vunpack.c.h.b16 %v10585
          %v11337 = vunpack.c.l.b16 %v10586
          %v11338 = vunpack.c.h.b16 %v10586
          %v11339 = vunpack.c.l.b16 %v10587
          %v11340 = vunpack.c.h.b16 %v10587
          %v11341 = vunpack.c.l.b16 %v10588
          %v11342 = vunpack.c.h.b16 %v10588
          %v11343 = vunpack.c.l.b16 %v10589
          %v11344 = vunpack.c.h.b16 %v10589
          %v11345 = vunpack.c.l.b16 %v10590
          %v11346 = vunpack.c.h.b16 %v10590
          %v11347 = vunpack.c.l.b16 %v10591
          %v11348 = vunpack.c.h.b16 %v10591
          %v11349 = vunpack.c.l.b16 %v10592
          %v11350 = vunpack.c.h.b16 %v10592
          %v11351 = vunpack.c.l.b16 %v10593
          %v11352 = vunpack.c.h.b16 %v10593
          %v11353 = vunpack.c.l.b16 %v10594
          %v11354 = vunpack.c.h.b16 %v10594
          %v11355 = vunpack.c.l.b16 %v10595
          %v11356 = vunpack.c.h.b16 %v10595
          %v11357 = vunpack.c.l.b16 %v10596
          %v11358 = vunpack.c.h.b16 %v10596
          %v11359 = vunpack.c.l.b16 %v10597
          %v11360 = vunpack.c.h.b16 %v10597
          %v11361 = vunpack.c.l.b16 %v10598
          %v11362 = vunpack.c.h.b16 %v10598
          %v11363 = vunpack.c.l.b16 %v10599
          %v11364 = vunpack.c.h.b16 %v10599
          %v11365 = vunpack.c.l.b16 %v10600
          %v11366 = vunpack.c.h.b16 %v10600
          %v11367 = vunpack.c.l.b16 %v10601
          %v11368 = vunpack.c.h.b16 %v10601
          %v11369 = vunpack.c.l.b16 %v10602
          %v11370 = vunpack.c.h.b16 %v10602
          %v11371 = vunpack.c.l.b16 %v10603
          %v11372 = vunpack.c.h.b16 %v10603
          %v11373 = vunpack.c.l.b16 %v10604
          %v11374 = vunpack.c.h.b16 %v10604
          %v11375 = vunpack.c.l.b16 %v10605
          %v11376 = vunpack.c.h.b16 %v10605
          %v11377 = vunpack.c.l.b16 %v10606
          %v11378 = vunpack.c.h.b16 %v10606
          %v11379 = vunpack.c.l.b16 %v10607
          %v11380 = vunpack.c.h.b16 %v10607
          %v11381 = vunpack.c.l.b16 %v10608
          %v11382 = vunpack.c.h.b16 %v10608
          %v11383 = vunpack.c.l.b16 %v10609
          %v11384 = vunpack.c.h.b16 %v10609
          %v11385 = vunpack.c.l.b16 %v10610
          %v11386 = vunpack.c.h.b16 %v10610
          %v11387 = vunpack.c.l.b16 %v10611
          %v11388 = vunpack.c.h.b16 %v10611
          %v11389 = vunpack.c.l.b16 %v10612
          %v11390 = vunpack.c.h.b16 %v10612
          %v11391 = vunpack.c.l.b16 %v10613
          %v11392 = vunpack.c.h.b16 %v10613
          %v11393 = vunpack.c.l.b16 %v10614
          %v11394 = vunpack.c.h.b16 %v10614
          %v11395 = vunpack.c.l.b16 %v10615
          %v11396 = vunpack.c.h.b16 %v10615
          %v11397 = vunpack.c.l.b16 %v10616
          %v11398 = vunpack.c.h.b16 %v10616
          %v11399 = vunpack.c.l.b16 %v10617
          %v11400 = vunpack.c.h.b16 %v10617
          %v11401 = vunpack.c.l.b16 %v10618
          %v11402 = vunpack.c.h.b16 %v10618
          %v11403 = vunpack.c.l.b16 %v10619
          %v11404 = vunpack.c.h.b16 %v10619
          %v11405 = vunpack.c.l.b16 %v10620
          %v11406 = vunpack.c.h.b16 %v10620
          %v11407 = vunpack.c.l.b16 %v10621
          %v11408 = vunpack.c.h.b16 %v10621
          %v11409 = vunpack.c.l.b16 %v10622
          %v11410 = vunpack.c.h.b16 %v10622
          %v11411 = vunpack.c.l.b16 %v10623
          %v11412 = vunpack.c.h.b16 %v10623
          %v11413 = vunpack.c.l.b16 %v10624
          %v11414 = vunpack.c.h.b16 %v10624
          %v11415 = vpack.c.b16 %v10907, %v10903
          %v11416 = vpack.c.b16 %v10908, %v10904
          %v11417 = vpack.c.b16 %v10909, %v10905
          %v11418 = vpack.c.b16 %v10910, %v10906
          %v11419 = vpack.c.b16 %v10915, %v10911
          %v11420 = vpack.c.b16 %v10916, %v10912
          %v11421 = vpack.c.b16 %v10917, %v10913
          %v11422 = vpack.c.b16 %v10918, %v10914
          %v11423 = vpack.c.b16 %v10923, %v10919
          %v11424 = vpack.c.b16 %v10924, %v10920
          %v11425 = vpack.c.b16 %v10925, %v10921
          %v11426 = vpack.c.b16 %v10926, %v10922
          %v11427 = vpack.c.b16 %v10931, %v10927
          %v11428 = vpack.c.b16 %v10932, %v10928
          %v11429 = vpack.c.b16 %v10933, %v10929
          %v11430 = vpack.c.b16 %v10934, %v10930
          %v11431 = vpack.c.b16 %v10939, %v10935
          %v11432 = vpack.c.b16 %v10940, %v10936
          %v11433 = vpack.c.b16 %v10941, %v10937
          %v11434 = vpack.c.b16 %v10942, %v10938
          %v11435 = vpack.c.b16 %v10947, %v10943
          %v11436 = vpack.c.b16 %v10948, %v10944
          %v11437 = vpack.c.b16 %v10949, %v10945
          %v11438 = vpack.c.b16 %v10950, %v10946
          %v11439 = vpack.c.b16 %v10955, %v10951
          %v11440 = vpack.c.b16 %v10956, %v10952
          %v11441 = vpack.c.b16 %v10957, %v10953
          %v11442 = vpack.c.b16 %v10958, %v10954
          %v11443 = vpack.c.b16 %v10963, %v10959
          %v11444 = vpack.c.b16 %v10964, %v10960
          %v11445 = vpack.c.b16 %v10965, %v10961
          %v11446 = vpack.c.b16 %v10966, %v10962
          %v11447 = vpack.c.b16 %v10971, %v10967
          %v11448 = vpack.c.b16 %v10972, %v10968
          %v11449 = vpack.c.b16 %v10973, %v10969
          %v11450 = vpack.c.b16 %v10974, %v10970
          %v11451 = vpack.c.b16 %v10979, %v10975
          %v11452 = vpack.c.b16 %v10980, %v10976
          %v11453 = vpack.c.b16 %v10981, %v10977
          %v11454 = vpack.c.b16 %v10982, %v10978
          %v11455 = vpack.c.b16 %v10987, %v10983
          %v11456 = vpack.c.b16 %v10988, %v10984
          %v11457 = vpack.c.b16 %v10989, %v10985
          %v11458 = vpack.c.b16 %v10990, %v10986
          %v11459 = vpack.c.b16 %v10995, %v10991
          %v11460 = vpack.c.b16 %v10996, %v10992
          %v11461 = vpack.c.b16 %v10997, %v10993
          %v11462 = vpack.c.b16 %v10998, %v10994
          %v11463 = vpack.c.b16 %v11003, %v10999
          %v11464 = vpack.c.b16 %v11004, %v11000
          %v11465 = vpack.c.b16 %v11005, %v11001
          %v11466 = vpack.c.b16 %v11006, %v11002
          %v11467 = vpack.c.b16 %v11011, %v11007
          %v11468 = vpack.c.b16 %v11012, %v11008
          %v11469 = vpack.c.b16 %v11013, %v11009
          %v11470 = vpack.c.b16 %v11014, %v11010
          %v11471 = vpack.c.b16 %v11019, %v11015
          %v11472 = vpack.c.b16 %v11020, %v11016
          %v11473 = vpack.c.b16 %v11021, %v11017
          %v11474 = vpack.c.b16 %v11022, %v11018
          %v11475 = vpack.c.b16 %v11027, %v11023
          %v11476 = vpack.c.b16 %v11028, %v11024
          %v11477 = vpack.c.b16 %v11029, %v11025
          %v11478 = vpack.c.b16 %v11030, %v11026
          %v11479 = vpack.c.b16 %v11035, %v11031
          %v11480 = vpack.c.b16 %v11036, %v11032
          %v11481 = vpack.c.b16 %v11037, %v11033
          %v11482 = vpack.c.b16 %v11038, %v11034
          %v11483 = vpack.c.b16 %v11043, %v11039
          %v11484 = vpack.c.b16 %v11044, %v11040
          %v11485 = vpack.c.b16 %v11045, %v11041
          %v11486 = vpack.c.b16 %v11046, %v11042
          %v11487 = vpack.c.b16 %v11051, %v11047
          %v11488 = vpack.c.b16 %v11052, %v11048
          %v11489 = vpack.c.b16 %v11053, %v11049
          %v11490 = vpack.c.b16 %v11054, %v11050
          %v11491 = vpack.c.b16 %v11059, %v11055
          %v11492 = vpack.c.b16 %v11060, %v11056
          %v11493 = vpack.c.b16 %v11061, %v11057
          %v11494 = vpack.c.b16 %v11062, %v11058
          %v11495 = vpack.c.b16 %v11067, %v11063
          %v11496 = vpack.c.b16 %v11068, %v11064
          %v11497 = vpack.c.b16 %v11069, %v11065
          %v11498 = vpack.c.b16 %v11070, %v11066
          %v11499 = vpack.c.b16 %v11075, %v11071
          %v11500 = vpack.c.b16 %v11076, %v11072
          %v11501 = vpack.c.b16 %v11077, %v11073
          %v11502 = vpack.c.b16 %v11078, %v11074
          %v11503 = vpack.c.b16 %v11083, %v11079
          %v11504 = vpack.c.b16 %v11084, %v11080
          %v11505 = vpack.c.b16 %v11085, %v11081
          %v11506 = vpack.c.b16 %v11086, %v11082
          %v11507 = vpack.c.b16 %v11091, %v11087
          %v11508 = vpack.c.b16 %v11092, %v11088
          %v11509 = vpack.c.b16 %v11093, %v11089
          %v11510 = vpack.c.b16 %v11094, %v11090
          %v11511 = vpack.c.b16 %v11099, %v11095
          %v11512 = vpack.c.b16 %v11100, %v11096
          %v11513 = vpack.c.b16 %v11101, %v11097
          %v11514 = vpack.c.b16 %v11102, %v11098
          %v11515 = vpack.c.b16 %v11107, %v11103
          %v11516 = vpack.c.b16 %v11108, %v11104
          %v11517 = vpack.c.b16 %v11109, %v11105
          %v11518 = vpack.c.b16 %v11110, %v11106
          %v11519 = vpack.c.b16 %v11115, %v11111
          %v11520 = vpack.c.b16 %v11116, %v11112
          %v11521 = vpack.c.b16 %v11117, %v11113
          %v11522 = vpack.c.b16 %v11118, %v11114
          %v11523 = vpack.c.b16 %v11123, %v11119
          %v11524 = vpack.c.b16 %v11124, %v11120
          %v11525 = vpack.c.b16 %v11125, %v11121
          %v11526 = vpack.c.b16 %v11126, %v11122
          %v11527 = vpack.c.b16 %v11131, %v11127
          %v11528 = vpack.c.b16 %v11132, %v11128
          %v11529 = vpack.c.b16 %v11133, %v11129
          %v11530 = vpack.c.b16 %v11134, %v11130
          %v11531 = vpack.c.b16 %v11139, %v11135
          %v11532 = vpack.c.b16 %v11140, %v11136
          %v11533 = vpack.c.b16 %v11141, %v11137
          %v11534 = vpack.c.b16 %v11142, %v11138
          %v11535 = vpack.c.b16 %v11147, %v11143
          %v11536 = vpack.c.b16 %v11148, %v11144
          %v11537 = vpack.c.b16 %v11149, %v11145
          %v11538 = vpack.c.b16 %v11150, %v11146
          %v11539 = vpack.c.b16 %v11155, %v11151
          %v11540 = vpack.c.b16 %v11156, %v11152
          %v11541 = vpack.c.b16 %v11157, %v11153
          %v11542 = vpack.c.b16 %v11158, %v11154
          %v11543 = vpack.c.b16 %v11163, %v11159
          %v11544 = vpack.c.b16 %v11164, %v11160
          %v11545 = vpack.c.b16 %v11165, %v11161
          %v11546 = vpack.c.b16 %v11166, %v11162
          %v11547 = vpack.c.b16 %v11171, %v11167
          %v11548 = vpack.c.b16 %v11172, %v11168
          %v11549 = vpack.c.b16 %v11173, %v11169
          %v11550 = vpack.c.b16 %v11174, %v11170
          %v11551 = vpack.c.b16 %v11179, %v11175
          %v11552 = vpack.c.b16 %v11180, %v11176
          %v11553 = vpack.c.b16 %v11181, %v11177
          %v11554 = vpack.c.b16 %v11182, %v11178
          %v11555 = vpack.c.b16 %v11187, %v11183
          %v11556 = vpack.c.b16 %v11188, %v11184
          %v11557 = vpack.c.b16 %v11189, %v11185
          %v11558 = vpack.c.b16 %v11190, %v11186
          %v11559 = vpack.c.b16 %v11195, %v11191
          %v11560 = vpack.c.b16 %v11196, %v11192
          %v11561 = vpack.c.b16 %v11197, %v11193
          %v11562 = vpack.c.b16 %v11198, %v11194
          %v11563 = vpack.c.b16 %v11203, %v11199
          %v11564 = vpack.c.b16 %v11204, %v11200
          %v11565 = vpack.c.b16 %v11205, %v11201
          %v11566 = vpack.c.b16 %v11206, %v11202
          %v11567 = vpack.c.b16 %v11211, %v11207
          %v11568 = vpack.c.b16 %v11212, %v11208
          %v11569 = vpack.c.b16 %v11213, %v11209
          %v11570 = vpack.c.b16 %v11214, %v11210
          %v11571 = vpack.c.b16 %v11219, %v11215
          %v11572 = vpack.c.b16 %v11220, %v11216
          %v11573 = vpack.c.b16 %v11221, %v11217
          %v11574 = vpack.c.b16 %v11222, %v11218
          %v11575 = vpack.c.b16 %v11227, %v11223
          %v11576 = vpack.c.b16 %v11228, %v11224
          %v11577 = vpack.c.b16 %v11229, %v11225
          %v11578 = vpack.c.b16 %v11230, %v11226
          %v11579 = vpack.c.b16 %v11235, %v11231
          %v11580 = vpack.c.b16 %v11236, %v11232
          %v11581 = vpack.c.b16 %v11237, %v11233
          %v11582 = vpack.c.b16 %v11238, %v11234
          %v11583 = vpack.c.b16 %v11243, %v11239
          %v11584 = vpack.c.b16 %v11244, %v11240
          %v11585 = vpack.c.b16 %v11245, %v11241
          %v11586 = vpack.c.b16 %v11246, %v11242
          %v11587 = vpack.c.b16 %v11251, %v11247
          %v11588 = vpack.c.b16 %v11252, %v11248
          %v11589 = vpack.c.b16 %v11253, %v11249
          %v11590 = vpack.c.b16 %v11254, %v11250
          %v11591 = vpack.c.b16 %v11259, %v11255
          %v11592 = vpack.c.b16 %v11260, %v11256
          %v11593 = vpack.c.b16 %v11261, %v11257
          %v11594 = vpack.c.b16 %v11262, %v11258
          %v11595 = vpack.c.b16 %v11267, %v11263
          %v11596 = vpack.c.b16 %v11268, %v11264
          %v11597 = vpack.c.b16 %v11269, %v11265
          %v11598 = vpack.c.b16 %v11270, %v11266
          %v11599 = vpack.c.b16 %v11275, %v11271
          %v11600 = vpack.c.b16 %v11276, %v11272
          %v11601 = vpack.c.b16 %v11277, %v11273
          %v11602 = vpack.c.b16 %v11278, %v11274
          %v11603 = vpack.c.b16 %v11283, %v11279
          %v11604 = vpack.c.b16 %v11284, %v11280
          %v11605 = vpack.c.b16 %v11285, %v11281
          %v11606 = vpack.c.b16 %v11286, %v11282
          %v11607 = vpack.c.b16 %v11291, %v11287
          %v11608 = vpack.c.b16 %v11292, %v11288
          %v11609 = vpack.c.b16 %v11293, %v11289
          %v11610 = vpack.c.b16 %v11294, %v11290
          %v11611 = vpack.c.b16 %v11299, %v11295
          %v11612 = vpack.c.b16 %v11300, %v11296
          %v11613 = vpack.c.b16 %v11301, %v11297
          %v11614 = vpack.c.b16 %v11302, %v11298
          %v11615 = vpack.c.b16 %v11307, %v11303
          %v11616 = vpack.c.b16 %v11308, %v11304
          %v11617 = vpack.c.b16 %v11309, %v11305
          %v11618 = vpack.c.b16 %v11310, %v11306
          %v11619 = vpack.c.b16 %v11315, %v11311
          %v11620 = vpack.c.b16 %v11316, %v11312
          %v11621 = vpack.c.b16 %v11317, %v11313
          %v11622 = vpack.c.b16 %v11318, %v11314
          %v11623 = vpack.c.b16 %v11323, %v11319
          %v11624 = vpack.c.b16 %v11324, %v11320
          %v11625 = vpack.c.b16 %v11325, %v11321
          %v11626 = vpack.c.b16 %v11326, %v11322
          %v11627 = vpack.c.b16 %v11331, %v11327
          %v11628 = vpack.c.b16 %v11332, %v11328
          %v11629 = vpack.c.b16 %v11333, %v11329
          %v11630 = vpack.c.b16 %v11334, %v11330
          %v11631 = vpack.c.b16 %v11339, %v11335
          %v11632 = vpack.c.b16 %v11340, %v11336
          %v11633 = vpack.c.b16 %v11341, %v11337
          %v11634 = vpack.c.b16 %v11342, %v11338
          %v11635 = vpack.c.b16 %v11347, %v11343
          %v11636 = vpack.c.b16 %v11348, %v11344
          %v11637 = vpack.c.b16 %v11349, %v11345
          %v11638 = vpack.c.b16 %v11350, %v11346
          %v11639 = vpack.c.b16 %v11355, %v11351
          %v11640 = vpack.c.b16 %v11356, %v11352
          %v11641 = vpack.c.b16 %v11357, %v11353
          %v11642 = vpack.c.b16 %v11358, %v11354
          %v11643 = vpack.c.b16 %v11363, %v11359
          %v11644 = vpack.c.b16 %v11364, %v11360
          %v11645 = vpack.c.b16 %v11365, %v11361
          %v11646 = vpack.c.b16 %v11366, %v11362
          %v11647 = vpack.c.b16 %v11371, %v11367
          %v11648 = vpack.c.b16 %v11372, %v11368
          %v11649 = vpack.c.b16 %v11373, %v11369
          %v11650 = vpack.c.b16 %v11374, %v11370
          %v11651 = vpack.c.b16 %v11379, %v11375
          %v11652 = vpack.c.b16 %v11380, %v11376
          %v11653 = vpack.c.b16 %v11381, %v11377
          %v11654 = vpack.c.b16 %v11382, %v11378
          %v11655 = vpack.c.b16 %v11387, %v11383
          %v11656 = vpack.c.b16 %v11388, %v11384
          %v11657 = vpack.c.b16 %v11389, %v11385
          %v11658 = vpack.c.b16 %v11390, %v11386
          %v11659 = vpack.c.b16 %v11395, %v11391
          %v11660 = vpack.c.b16 %v11396, %v11392
          %v11661 = vpack.c.b16 %v11397, %v11393
          %v11662 = vpack.c.b16 %v11398, %v11394
          %v11663 = vpack.c.b16 %v11403, %v11399
          %v11664 = vpack.c.b16 %v11404, %v11400
          %v11665 = vpack.c.b16 %v11405, %v11401
          %v11666 = vpack.c.b16 %v11406, %v11402
          %v11667 = vpack.c.b16 %v11411, %v11407
          %v11668 = vpack.c.b16 %v11412, %v11408
          %v11669 = vpack.c.b16 %v11413, %v11409
          %v11670 = vpack.c.b16 %v11414, %v11410
          %11927 = vmatprep.subr.bf16.mxu0 %v11444
          %11928 = vmatpush1.bf16.msra.mxu0 %v11443
          %11929 = vmatprep.subr.bf16.mxu0 %v11440
          %11930 = vmatpush1.bf16.msra.mxu0 %v11439
          %11931 = vmatprep.subr.bf16.mxu0 %v11436
          %11932 = vmatpush1.bf16.msra.mxu0 %v11435
          %11933 = vmatprep.subr.bf16.mxu0 %v11432
          %11934 = vmatpush1.bf16.msra.mxu0 %v11431
          %11935 = vmatprep.subr.bf16.mxu0 %v11428
          %11936 = vmatpush1.bf16.msra.mxu0 %v11427
          %11937 = vmatprep.subr.bf16.mxu0 %v11424
          %11938 = vmatpush1.bf16.msra.mxu0 %v11423
          %11939 = vmatprep.subr.bf16.mxu0 %v11420
          %11940 = vmatpush1.bf16.msra.mxu0 %v11419
          %11941 = vmatprep.subr.bf16.mxu0 %v11416
          %11942 = vmatpush1.bf16.msra.mxu0 %v11415
          %11943 = vmatprep.subr.bf16.mxu0 %v11476
          %11944 = vmatpush2.bf16.msra.mxu0 %v11475
          %11945 = vmatprep.subr.bf16.mxu0 %v11472
          %11946 = vmatpush2.bf16.msra.mxu0 %v11471
          %11947 = vmatprep.subr.bf16.mxu0 %v11468
          %11948 = vmatpush2.bf16.msra.mxu0 %v11467
          %11949 = vmatprep.subr.bf16.mxu0 %v11464
          %11950 = vmatpush2.bf16.msra.mxu0 %v11463
          %11951 = vmatprep.subr.bf16.mxu0 %v11460
          %11952 = vmatpush2.bf16.msra.mxu0 %v11459
          %11953 = vmatprep.subr.bf16.mxu0 %v11456
          %11954 = vmatpush2.bf16.msra.mxu0 %v11455
          %11955 = vmatprep.subr.bf16.mxu0 %v11452
          %11956 = vmatpush2.bf16.msra.mxu0 %v11451
          %11957 = vmatprep.subr.bf16.mxu0 %v11448
          %11958 = vmatpush2.bf16.msra.mxu0 %v11447
          %11959 = vmatprep.mubr.bf16.mxu0 %v10362
          %11960 = vmatmul.mubr.bf16.gmra.mxu0 %v10361
          %v11961 = vpop.f32.mrf.mxu0
          %v11962 = vadd.f32 %v10630, %v11961
          %v11963 = vpop.f32.mrf.mxu0
          %v11964 = vadd.f32 %v10634, %v11963
          %v11965 = vpop.f32.mrf.mxu0
          %v11966 = vpop.f32.mrf.mxu0
          %11967 = vdwg.mxu0
          %11968 = vmatprep.subr.bf16.mxu0 %v11508
          %11969 = vmatpush1.bf16.msra.mxu0 %v11507
          %11970 = vmatprep.subr.bf16.mxu0 %v11504
          %11971 = vmatpush1.bf16.msra.mxu0 %v11503
          %11972 = vmatprep.subr.bf16.mxu0 %v11500
          %11973 = vmatpush1.bf16.msra.mxu0 %v11499
          %11974 = vmatprep.subr.bf16.mxu0 %v11496
          %11975 = vmatpush1.bf16.msra.mxu0 %v11495
          %11976 = vmatprep.subr.bf16.mxu0 %v11492
          %11977 = vmatpush1.bf16.msra.mxu0 %v11491
          %11978 = vmatprep.subr.bf16.mxu0 %v11488
          %11979 = vmatpush1.bf16.msra.mxu0 %v11487
          %11980 = vmatprep.subr.bf16.mxu0 %v11484
          %11981 = vmatpush1.bf16.msra.mxu0 %v11483
          %11982 = vmatprep.subr.bf16.mxu0 %v11480
          %11983 = vmatpush1.bf16.msra.mxu0 %v11479
          %11984 = vmatprep.subr.bf16.mxu0 %v11540
          %11985 = vmatpush2.bf16.msra.mxu0 %v11539
          %11986 = vmatprep.subr.bf16.mxu0 %v11536
          %11987 = vmatpush2.bf16.msra.mxu0 %v11535
          %11988 = vmatprep.subr.bf16.mxu0 %v11532
          %11989 = vmatpush2.bf16.msra.mxu0 %v11531
          %11990 = vmatprep.subr.bf16.mxu0 %v11528
          %11991 = vmatpush2.bf16.msra.mxu0 %v11527
          %11992 = vmatprep.subr.bf16.mxu0 %v11524
          %11993 = vmatpush2.bf16.msra.mxu0 %v11523
          %11994 = vmatprep.subr.bf16.mxu0 %v11520
          %11995 = vmatpush2.bf16.msra.mxu0 %v11519
          %11996 = vmatprep.subr.bf16.mxu0 %v11516
          %11997 = vmatpush2.bf16.msra.mxu0 %v11515
          %11998 = vmatprep.subr.bf16.mxu0 %v11512
          %11999 = vmatpush2.bf16.msra.mxu0 %v11511
          %12000 = vmatprep.mubr.bf16.mxu0 %v10364
          %12001 = vmatmul.mubr.bf16.gmra.mxu0 %v10363
          %v12002 = vpop.f32.mrf.mxu0
          %v12003 = vadd.f32 %v11962, %v12002
          %v12004 = vpop.f32.mrf.mxu0
          %v12005 = vadd.f32 %v11964, %v12004
          %v12006 = vpop.f32.mrf.mxu0
          %v12007 = vpop.f32.mrf.mxu0
          %12008 = vdwg.mxu0
          %12009 = vmatprep.subr.bf16.mxu0 %v11572
          %12010 = vmatpush1.bf16.msra.mxu0 %v11571
          %12011 = vmatprep.subr.bf16.mxu0 %v11568
          %12012 = vmatpush1.bf16.msra.mxu0 %v11567
          %12013 = vmatprep.subr.bf16.mxu0 %v11564
          %12014 = vmatpush1.bf16.msra.mxu0 %v11563
          %12015 = vmatprep.subr.bf16.mxu0 %v11560
          %12016 = vmatpush1.bf16.msra.mxu0 %v11559
          %12017 = vmatprep.subr.bf16.mxu0 %v11556
          %12018 = vmatpush1.bf16.msra.mxu0 %v11555
          %12019 = vmatprep.subr.bf16.mxu0 %v11552
          %12020 = vmatpush1.bf16.msra.mxu0 %v11551
          %12021 = vmatprep.subr.bf16.mxu0 %v11548
          %12022 = vmatpush1.bf16.msra.mxu0 %v11547
          %12023 = vmatprep.subr.bf16.mxu0 %v11544
          %12024 = vmatpush1.bf16.msra.mxu0 %v11543
          %12025 = vmatprep.subr.bf16.mxu0 %v11604
          %12026 = vmatpush2.bf16.msra.mxu0 %v11603
          %12027 = vmatprep.subr.bf16.mxu0 %v11600
          %12028 = vmatpush2.bf16.msra.mxu0 %v11599
          %12029 = vmatprep.subr.bf16.mxu0 %v11596
          %12030 = vmatpush2.bf16.msra.mxu0 %v11595
          %12031 = vmatprep.subr.bf16.mxu0 %v11592
          %12032 = vmatpush2.bf16.msra.mxu0 %v11591
          %12033 = vmatprep.subr.bf16.mxu0 %v11588
          %12034 = vmatpush2.bf16.msra.mxu0 %v11587
          %12035 = vmatprep.subr.bf16.mxu0 %v11584
          %12036 = vmatpush2.bf16.msra.mxu0 %v11583
          %12037 = vmatprep.subr.bf16.mxu0 %v11580
          %12038 = vmatpush2.bf16.msra.mxu0 %v11579
          %12039 = vmatprep.subr.bf16.mxu0 %v11576
          %12040 = vmatpush2.bf16.msra.mxu0 %v11575
          %12041 = vmatprep.mubr.bf16.mxu0 %v10366
          %12042 = vmatmul.mubr.bf16.gmra.mxu0 %v10365
          %v12043 = vpop.f32.mrf.mxu0
          %v12044 = vadd.f32 %v12003, %v12043
          %v12045 = vpop.f32.mrf.mxu0
          %v12046 = vadd.f32 %v12005, %v12045
          %v12047 = vpop.f32.mrf.mxu0
          %v12048 = vpop.f32.mrf.mxu0
          %12049 = vdwg.mxu0
          %12050 = vmatprep.subr.bf16.mxu0 %v11636
          %12051 = vmatpush1.bf16.msra.mxu0 %v11635
          %12052 = vmatprep.subr.bf16.mxu0 %v11632
          %12053 = vmatpush1.bf16.msra.mxu0 %v11631
          %12054 = vmatprep.subr.bf16.mxu0 %v11628
          %12055 = vmatpush1.bf16.msra.mxu0 %v11627
          %12056 = vmatprep.subr.bf16.mxu0 %v11624
          %12057 = vmatpush1.bf16.msra.mxu0 %v11623
          %12058 = vmatprep.subr.bf16.mxu0 %v11620
          %12059 = vmatpush1.bf16.msra.mxu0 %v11619
          %12060 = vmatprep.subr.bf16.mxu0 %v11616
          %12061 = vmatpush1.bf16.msra.mxu0 %v11615
          %12062 = vmatprep.subr.bf16.mxu0 %v11612
          %12063 = vmatpush1.bf16.msra.mxu0 %v11611
          %12064 = vmatprep.subr.bf16.mxu0 %v11608
          %12065 = vmatpush1.bf16.msra.mxu0 %v11607
          %12066 = vmatprep.subr.bf16.mxu0 %v11668
          %12067 = vmatpush2.bf16.msra.mxu0 %v11667
          %12068 = vmatprep.subr.bf16.mxu0 %v11664
          %12069 = vmatpush2.bf16.msra.mxu0 %v11663
          %12070 = vmatprep.subr.bf16.mxu0 %v11660
          %12071 = vmatpush2.bf16.msra.mxu0 %v11659
          %12072 = vmatprep.subr.bf16.mxu0 %v11656
          %12073 = vmatpush2.bf16.msra.mxu0 %v11655
          %12074 = vmatprep.subr.bf16.mxu0 %v11652
          %12075 = vmatpush2.bf16.msra.mxu0 %v11651
          %12076 = vmatprep.subr.bf16.mxu0 %v11648
          %12077 = vmatpush2.bf16.msra.mxu0 %v11647
          %12078 = vmatprep.subr.bf16.mxu0 %v11644
          %12079 = vmatpush2.bf16.msra.mxu0 %v11643
          %12080 = vmatprep.subr.bf16.mxu0 %v11640
          %12081 = vmatpush2.bf16.msra.mxu0 %v11639
          %12082 = vmatprep.mubr.bf16.mxu0 %v10368
          %12083 = vmatmul.mubr.bf16.gmra.mxu0 %v10367
          %v12084 = vpop.f32.mrf.mxu0
          %v12085 = vadd.f32 %v12044, %v12084
          %v12086 = vpop.f32.mrf.mxu0
          %v12087 = vadd.f32 %v12046, %v12086
          %v12088 = vpop.f32.mrf.mxu0
          %v12089 = vpop.f32.mrf.mxu0
          %12090 = vdwg.mxu0
          %12091 = vmatprep.subr.bf16.mxu0 %v11446
          %12092 = vmatpush1.bf16.msra.mxu0 %v11445
          %12093 = vmatprep.subr.bf16.mxu0 %v11442
          %12094 = vmatpush1.bf16.msra.mxu0 %v11441
          %12095 = vmatprep.subr.bf16.mxu0 %v11438
          %12096 = vmatpush1.bf16.msra.mxu0 %v11437
          %12097 = vmatprep.subr.bf16.mxu0 %v11434
          %12098 = vmatpush1.bf16.msra.mxu0 %v11433
          %12099 = vmatprep.subr.bf16.mxu0 %v11430
          %12100 = vmatpush1.bf16.msra.mxu0 %v11429
          %12101 = vmatprep.subr.bf16.mxu0 %v11426
          %12102 = vmatpush1.bf16.msra.mxu0 %v11425
          %12103 = vmatprep.subr.bf16.mxu0 %v11422
          %12104 = vmatpush1.bf16.msra.mxu0 %v11421
          %12105 = vmatprep.subr.bf16.mxu0 %v11418
          %12106 = vmatpush1.bf16.msra.mxu0 %v11417
          %12107 = vmatprep.subr.bf16.mxu0 %v11478
          %12108 = vmatpush2.bf16.msra.mxu0 %v11477
          %12109 = vmatprep.subr.bf16.mxu0 %v11474
          %12110 = vmatpush2.bf16.msra.mxu0 %v11473
          %12111 = vmatprep.subr.bf16.mxu0 %v11470
          %12112 = vmatpush2.bf16.msra.mxu0 %v11469
          %12113 = vmatprep.subr.bf16.mxu0 %v11466
          %12114 = vmatpush2.bf16.msra.mxu0 %v11465
          %12115 = vmatprep.subr.bf16.mxu0 %v11462
          %12116 = vmatpush2.bf16.msra.mxu0 %v11461
          %12117 = vmatprep.subr.bf16.mxu0 %v11458
          %12118 = vmatpush2.bf16.msra.mxu0 %v11457
          %12119 = vmatprep.subr.bf16.mxu0 %v11454
          %12120 = vmatpush2.bf16.msra.mxu0 %v11453
          %12121 = vmatprep.subr.bf16.mxu0 %v11450
          %12122 = vmatpush2.bf16.msra.mxu0 %v11449
          %12123 = vmatprep.mubr.bf16.mxu0 %v10362
          %12124 = vmatmul.mubr.bf16.gmra.mxu0 %v10361
          %v12125 = vpop.f32.mrf.mxu0
          %v12126 = vadd.f32 %v10638, %v12125
          %v12127 = vpop.f32.mrf.mxu0
          %v12128 = vadd.f32 %v10642, %v12127
          %v12129 = vpop.f32.mrf.mxu0
          %v12130 = vpop.f32.mrf.mxu0
          %12131 = vdwg.mxu0
          %12132 = vmatprep.subr.bf16.mxu0 %v11510
          %12133 = vmatpush1.bf16.msra.mxu0 %v11509
          %12134 = vmatprep.subr.bf16.mxu0 %v11506
          %12135 = vmatpush1.bf16.msra.mxu0 %v11505
          %12136 = vmatprep.subr.bf16.mxu0 %v11502
          %12137 = vmatpush1.bf16.msra.mxu0 %v11501
          %12138 = vmatprep.subr.bf16.mxu0 %v11498
          %12139 = vmatpush1.bf16.msra.mxu0 %v11497
          %12140 = vmatprep.subr.bf16.mxu0 %v11494
          %12141 = vmatpush1.bf16.msra.mxu0 %v11493
          %12142 = vmatprep.subr.bf16.mxu0 %v11490
          %12143 = vmatpush1.bf16.msra.mxu0 %v11489
          %12144 = vmatprep.subr.bf16.mxu0 %v11486
          %12145 = vmatpush1.bf16.msra.mxu0 %v11485
          %12146 = vmatprep.subr.bf16.mxu0 %v11482
          %12147 = vmatpush1.bf16.msra.mxu0 %v11481
          %12148 = vmatprep.subr.bf16.mxu0 %v11542
          %12149 = vmatpush2.bf16.msra.mxu0 %v11541
          %12150 = vmatprep.subr.bf16.mxu0 %v11538
          %12151 = vmatpush2.bf16.msra.mxu0 %v11537
          %12152 = vmatprep.subr.bf16.mxu0 %v11534
          %12153 = vmatpush2.bf16.msra.mxu0 %v11533
          %12154 = vmatprep.subr.bf16.mxu0 %v11530
          %12155 = vmatpush2.bf16.msra.mxu0 %v11529
          %12156 = vmatprep.subr.bf16.mxu0 %v11526
          %12157 = vmatpush2.bf16.msra.mxu0 %v11525
          %12158 = vmatprep.subr.bf16.mxu0 %v11522
          %12159 = vmatpush2.bf16.msra.mxu0 %v11521
          %12160 = vmatprep.subr.bf16.mxu0 %v11518
          %12161 = vmatpush2.bf16.msra.mxu0 %v11517
          %12162 = vmatprep.subr.bf16.mxu0 %v11514
          %12163 = vmatpush2.bf16.msra.mxu0 %v11513
          %12164 = vmatprep.mubr.bf16.mxu0 %v10364
          %12165 = vmatmul.mubr.bf16.gmra.mxu0 %v10363
          %v12166 = vpop.f32.mrf.mxu0
          %v12167 = vadd.f32 %v12126, %v12166
          %v12168 = vpop.f32.mrf.mxu0
          %v12169 = vadd.f32 %v12128, %v12168
          %v12170 = vpop.f32.mrf.mxu0
          %v12171 = vpop.f32.mrf.mxu0
          %12172 = vdwg.mxu0
          %12173 = vmatprep.subr.bf16.mxu0 %v11574
          %12174 = vmatpush1.bf16.msra.mxu0 %v11573
          %12175 = vmatprep.subr.bf16.mxu0 %v11570
          %12176 = vmatpush1.bf16.msra.mxu0 %v11569
          %12177 = vmatprep.subr.bf16.mxu0 %v11566
          %12178 = vmatpush1.bf16.msra.mxu0 %v11565
          %12179 = vmatprep.subr.bf16.mxu0 %v11562
          %12180 = vmatpush1.bf16.msra.mxu0 %v11561
          %12181 = vmatprep.subr.bf16.mxu0 %v11558
          %12182 = vmatpush1.bf16.msra.mxu0 %v11557
          %12183 = vmatprep.subr.bf16.mxu0 %v11554
          %12184 = vmatpush1.bf16.msra.mxu0 %v11553
          %12185 = vmatprep.subr.bf16.mxu0 %v11550
          %12186 = vmatpush1.bf16.msra.mxu0 %v11549
          %12187 = vmatprep.subr.bf16.mxu0 %v11546
          %12188 = vmatpush1.bf16.msra.mxu0 %v11545
          %12189 = vmatprep.subr.bf16.mxu0 %v11606
          %12190 = vmatpush2.bf16.msra.mxu0 %v11605
          %12191 = vmatprep.subr.bf16.mxu0 %v11602
          %12192 = vmatpush2.bf16.msra.mxu0 %v11601
          %12193 = vmatprep.subr.bf16.mxu0 %v11598
          %12194 = vmatpush2.bf16.msra.mxu0 %v11597
          %12195 = vmatprep.subr.bf16.mxu0 %v11594
          %12196 = vmatpush2.bf16.msra.mxu0 %v11593
          %12197 = vmatprep.subr.bf16.mxu0 %v11590
          %12198 = vmatpush2.bf16.msra.mxu0 %v11589
          %12199 = vmatprep.subr.bf16.mxu0 %v11586
          %12200 = vmatpush2.bf16.msra.mxu0 %v11585
          %12201 = vmatprep.subr.bf16.mxu0 %v11582
          %12202 = vmatpush2.bf16.msra.mxu0 %v11581
          %12203 = vmatprep.subr.bf16.mxu0 %v11578
          %12204 = vmatpush2.bf16.msra.mxu0 %v11577
          %12205 = vmatprep.mubr.bf16.mxu0 %v10366
          %12206 = vmatmul.mubr.bf16.gmra.mxu0 %v10365
          %v12207 = vpop.f32.mrf.mxu0
          %v12208 = vadd.f32 %v12167, %v12207
          %v12209 = vpop.f32.mrf.mxu0
          %v12210 = vadd.f32 %v12169, %v12209
          %v12211 = vpop.f32.mrf.mxu0
          %v12212 = vpop.f32.mrf.mxu0
          %12213 = vdwg.mxu0
          %12214 = vmatprep.subr.bf16.mxu0 %v11638
          %12215 = vmatpush1.bf16.msra.mxu0 %v11637
          %12216 = vmatprep.subr.bf16.mxu0 %v11634
          %12217 = vmatpush1.bf16.msra.mxu0 %v11633
          %12218 = vmatprep.subr.bf16.mxu0 %v11630
          %12219 = vmatpush1.bf16.msra.mxu0 %v11629
          %12220 = vmatprep.subr.bf16.mxu0 %v11626
          %12221 = vmatpush1.bf16.msra.mxu0 %v11625
          %12222 = vmatprep.subr.bf16.mxu0 %v11622
          %12223 = vmatpush1.bf16.msra.mxu0 %v11621
          %12224 = vmatprep.subr.bf16.mxu0 %v11618
          %12225 = vmatpush1.bf16.msra.mxu0 %v11617
          %12226 = vmatprep.subr.bf16.mxu0 %v11614
          %12227 = vmatpush1.bf16.msra.mxu0 %v11613
          %12228 = vmatprep.subr.bf16.mxu0 %v11610
          %12229 = vmatpush1.bf16.msra.mxu0 %v11609
          %12230 = vmatprep.subr.bf16.mxu0 %v11670
          %12231 = vmatpush2.bf16.msra.mxu0 %v11669
          %12232 = vmatprep.subr.bf16.mxu0 %v11666
          %12233 = vmatpush2.bf16.msra.mxu0 %v11665
          %12234 = vmatprep.subr.bf16.mxu0 %v11662
          %12235 = vmatpush2.bf16.msra.mxu0 %v11661
          %12236 = vmatprep.subr.bf16.mxu0 %v11658
          %12237 = vmatpush2.bf16.msra.mxu0 %v11657
          %12238 = vmatprep.subr.bf16.mxu0 %v11654
          %12239 = vmatpush2.bf16.msra.mxu0 %v11653
          %12240 = vmatprep.subr.bf16.mxu0 %v11650
          %12241 = vmatpush2.bf16.msra.mxu0 %v11649
          %12242 = vmatprep.subr.bf16.mxu0 %v11646
          %12243 = vmatpush2.bf16.msra.mxu0 %v11645
          %12244 = vmatprep.subr.bf16.mxu0 %v11642
          %12245 = vmatpush2.bf16.msra.mxu0 %v11641
          %12246 = vmatprep.mubr.bf16.mxu0 %v10368
          %12247 = vmatmul.mubr.bf16.gmra.mxu0 %v10367
          %v12248 = vpop.f32.mrf.mxu0
          %v12249 = vadd.f32 %v12208, %v12248
          %v12250 = vpop.f32.mrf.mxu0
          %v12251 = vadd.f32 %v12210, %v12250
          %v12252 = vpop.f32.mrf.mxu0
          %v12253 = vpop.f32.mrf.mxu0
          %12254 = vdwg.mxu0
          %v12255 = vmax.f32 %v12085, 0.0
          %v12256 = vmax.f32 %v12087, 0.0
          %v12257 = vmax.f32 %v12249, 0.0
          %v12258 = vmax.f32 %v12251, 0.0
          %v12259 = vld [vmem:[#allocation15] sm:$0xf]
          %v12260 = vld [vmem:[#allocation17] sm:$0xf]
          %v12261 = vrot.slane %v12255, 4
          %v12262 = vadd.f32 %v12255, %v12261
          %v12263 = vrot.slane %v12262, 2
          %v12264 = vadd.f32 %v12262, %v12263
          %v12265 = vrot.slane %v12264, 1
          %v12266 = vadd.f32 %v12264, %v12265
          %v12267 = vrot.slane %v12256, 4
          %v12268 = vadd.f32 %v12256, %v12267
          %v12269 = vrot.slane %v12268, 2
          %v12270 = vadd.f32 %v12268, %v12269
          %v12271 = vrot.slane %v12270, 1
          %v12272 = vadd.f32 %v12270, %v12271
          %v12273 = vrot.slane %v12257, 4
          %v12274 = vadd.f32 %v12257, %v12273
          %v12275 = vrot.slane %v12274, 2
          %v12276 = vadd.f32 %v12274, %v12275
          %v12277 = vrot.slane %v12276, 1
          %v12278 = vadd.f32 %v12276, %v12277
          %v12279 = vrot.slane %v12258, 4
          %v12280 = vadd.f32 %v12258, %v12279
          %v12281 = vrot.slane %v12280, 2
          %v12282 = vadd.f32 %v12280, %v12281
          %v12283 = vrot.slane %v12282, 1
          %v12284 = vadd.f32 %v12282, %v12283
          %v12285 = vmul.f32 %v12266, %v10040
          %v12286 = vmul.f32 %v12272, %v10040
          %v12287 = vmul.f32 %v12278, %v10040
          %v12288 = vmul.f32 %v12284, %v10040
          %v12289 = vsub.f32 %v12255, %v12285
          %v12290 = vsub.f32 %v12256, %v12286
          %v12291 = vsub.f32 %v12257, %v12287
          %v12292 = vsub.f32 %v12258, %v12288
          %v12293 = vmul.f32 %v12289, %v12289
          %v12294 = vmul.f32 %v12290, %v12290
          %v12295 = vmul.f32 %v12291, %v12291
          %v12296 = vmul.f32 %v12292, %v12292
          %v12297 = vrot.slane %v12293, 4
          %v12298 = vadd.f32 %v12293, %v12297
          %v12299 = vrot.slane %v12298, 2
          %v12300 = vadd.f32 %v12298, %v12299
          %v12301 = vrot.slane %v12300, 1
          %v12302 = vadd.f32 %v12300, %v12301
          %v12303 = vrot.slane %v12294, 4
          %v12304 = vadd.f32 %v12294, %v12303
          %v12305 = vrot.slane %v12304, 2
          %v12306 = vadd.f32 %v12304, %v12305
          %v12307 = vrot.slane %v12306, 1
          %v12308 = vadd.f32 %v12306, %v12307
          %v12309 = vrot.slane %v12295, 4
          %v12310 = vadd.f32 %v12295, %v12309
          %v12311 = vrot.slane %v12310, 2
          %v12312 = vadd.f32 %v12310, %v12311
          %v12313 = vrot.slane %v12312, 1
          %v12314 = vadd.f32 %v12312, %v12313
          %v12315 = vrot.slane %v12296, 4
          %v12316 = vadd.f32 %v12296, %v12315
          %v12317 = vrot.slane %v12316, 2
          %v12318 = vadd.f32 %v12316, %v12317
          %v12319 = vrot.slane %v12318, 1
          %v12320 = vadd.f32 %v12318, %v12319
          %v12321 = vmul.f32 %v12302, %v10040
          %v12322 = vmul.f32 %v12308, %v10040
          %v12323 = vmul.f32 %v12314, %v10040
          %v12324 = vmul.f32 %v12320, %v10040
          %v12325 = vadd.f32 %v12321, 1e-05
          %v12326 = vadd.f32 %v12322, 1e-05
          %v12327 = vadd.f32 %v12323, 1e-05
          %v12328 = vadd.f32 %v12324, 1e-05
          %v12329 = vrsqrt.pop %v12325
          %v12330 = vrsqrt.pop %v12326
          %v12331 = vrsqrt.pop %v12327
          %v12332 = vrsqrt.pop %v12328
          %v12337 = vcombine.low %v12329, %v12330
          %v12338 = vcombine.low %v12331, %v12332
          %v12340 = vunpack.c.l.s4 1966171168
          %v12341 = vunpack.c.0.s8 %v12340
          %v12342 = vlaneseq
          %v12343 = vshrl.u32 %v12342, 7
          %v12344 = vsub.s32 %v12341, %v12343
          %v12345 = vrot.slane %v12337, %v12344
          %v12347 = vunpack.c.l.s4 1966171168
          %v12348 = vunpack.c.0.s8 %v12347
          %v12349 = vlaneseq
          %v12350 = vshrl.u32 %v12349, 7
          %v12351 = vsub.s32 %v12348, %v12350
          %v12352 = vrot.slane %v12338, %v12351
          %v12353 = vcombine.low %v12345, %v12352
          %v12355 = vunpack.c.l.s4 1966171168
          %v12356 = vunpack.c.0.s8 %v12355
          %v12357 = vlaneseq
          %v12358 = vshrl.u32 %v12357, 7
          %v12359 = vsub.s32 %v12356, %v12358
          %v12360 = vrot.slane %v12353, %v12359
          %v12362 = vmul.f32 %v12259, %v12360
          %v12364 = vlaneseq
          %v12365 = vshrl.u32 %v12364, 7
          %v12366 = vsub.s32 0, %v12365
          %v12367 = vrot.slane %v12362, %v12366
          %v12368 = vlaneseq
          %v12369 = vshrl.u32 %v12368, 7
          %v12370 = vsub.s32 1, %v12369
          %v12371 = vrot.slane %v12362, %v12370
          %v12372 = vlaneseq
          %v12373 = vshrl.u32 %v12372, 7
          %v12374 = vsub.s32 2, %v12373
          %v12375 = vrot.slane %v12362, %v12374
          %v12376 = vlaneseq
          %v12377 = vshrl.u32 %v12376, 7
          %v12378 = vsub.s32 3, %v12377
          %v12379 = vrot.slane %v12362, %v12378
          %v12384 = vmul.f32 %v12285, %v12367
          %v12385 = vmul.f32 %v12286, %v12371
          %v12386 = vmul.f32 %v12287, %v12375
          %v12387 = vmul.f32 %v12288, %v12379
          %v12392 = vcombine.low %v12384, %v12385
          %v12393 = vcombine.low %v12386, %v12387
          %v12395 = vunpack.c.l.s4 1966171168
          %v12396 = vunpack.c.0.s8 %v12395
          %v12397 = vlaneseq
          %v12398 = vshrl.u32 %v12397, 7
          %v12399 = vsub.s32 %v12396, %v12398
          %v12400 = vrot.slane %v12392, %v12399
          %v12402 = vunpack.c.l.s4 1966171168
          %v12403 = vunpack.c.0.s8 %v12402
          %v12404 = vlaneseq
          %v12405 = vshrl.u32 %v12404, 7
          %v12406 = vsub.s32 %v12403, %v12405
          %v12407 = vrot.slane %v12393, %v12406
          %v12408 = vcombine.low %v12400, %v12407
          %v12410 = vunpack.c.l.s4 1966171168
          %v12411 = vunpack.c.0.s8 %v12410
          %v12412 = vlaneseq
          %v12413 = vshrl.u32 %v12412, 7
          %v12414 = vsub.s32 %v12411, %v12413
          %v12415 = vrot.slane %v12408, %v12414
          %v12417 = vsub.f32 %v12260, %v12415
          %v12418 = vmul.f32 %v12255, %v12367
          %v12419 = vmul.f32 %v12256, %v12371
          %v12420 = vmul.f32 %v12257, %v12375
          %v12421 = vmul.f32 %v12258, %v12379
          %v12423 = vlaneseq
          %v12424 = vshrl.u32 %v12423, 7
          %v12425 = vsub.s32 0, %v12424
          %v12426 = vrot.slane %v12417, %v12425
          %v12427 = vlaneseq
          %v12428 = vshrl.u32 %v12427, 7
          %v12429 = vsub.s32 1, %v12428
          %v12430 = vrot.slane %v12417, %v12429
          %v12431 = vlaneseq
          %v12432 = vshrl.u32 %v12431, 7
          %v12433 = vsub.s32 2, %v12432
          %v12434 = vrot.slane %v12417, %v12433
          %v12435 = vlaneseq
          %v12436 = vshrl.u32 %v12435, 7
          %v12437 = vsub.s32 3, %v12436
          %v12438 = vrot.slane %v12417, %v12437
          %v12443 = vadd.f32 %v12418, %v12426
          %v12444 = vadd.f32 %v12419, %v12430
          %v12445 = vadd.f32 %v12420, %v12434
          %v12446 = vadd.f32 %v12421, %v12438
          %v12447 = vpack.c.bf16 %v12443, %v12443
          %v12448 = vpack.c.bf16 %v12444, %v12444
          %v12449 = vpack.c.bf16 %v12445, %v12445
          %v12450 = vpack.c.bf16 %v12446, %v12446
          %v12451 = vld [vmem:[%s9] sm:$0xf]
          %v12452 = vld [vmem:[%s9 + $0x4] sm:$0xf]
          %v12453 = vld [vmem:[%s9 + $0x8] sm:$0xf]
          %v12454 = vld [vmem:[%s9 + $0xc] sm:$0xf]
          %v12455 = vld [vmem:[%s9 + $0x10] sm:$0xf]
          %v12456 = vld [vmem:[%s9 + $0x14] sm:$0xf]
          %v12457 = vld [vmem:[%s9 + $0x18] sm:$0xf]
          %v12458 = vld [vmem:[%s9 + $0x1c] sm:$0xf]
          %v12459 = vld [vmem:[%s9 + $0x20] sm:$0xf]
          %v12460 = vld [vmem:[%s9 + $0x24] sm:$0xf]
          %v12461 = vld [vmem:[%s9 + $0x28] sm:$0xf]
          %v12462 = vld [vmem:[%s9 + $0x2c] sm:$0xf]
          %v12463 = vld [vmem:[%s9 + $0x30] sm:$0xf]
          %v12464 = vld [vmem:[%s9 + $0x34] sm:$0xf]
          %v12465 = vld [vmem:[%s9 + $0x38] sm:$0xf]
          %v12466 = vld [vmem:[%s9 + $0x3c] sm:$0xf]
          %v12467 = vld [vmem:[%s9 + $0x40] sm:$0xf]
          %v12468 = vld [vmem:[%s9 + $0x44] sm:$0xf]
          %v12469 = vld [vmem:[%s9 + $0x48] sm:$0xf]
          %v12470 = vld [vmem:[%s9 + $0x4c] sm:$0xf]
          %v12471 = vld [vmem:[%s9 + $0x50] sm:$0xf]
          %v12472 = vld [vmem:[%s9 + $0x54] sm:$0xf]
          %v12473 = vld [vmem:[%s9 + $0x58] sm:$0xf]
          %v12474 = vld [vmem:[%s9 + $0x5c] sm:$0xf]
          %v12475 = vld [vmem:[%s9 + $0x60] sm:$0xf]
          %v12476 = vld [vmem:[%s9 + $0x64] sm:$0xf]
          %v12477 = vld [vmem:[%s9 + $0x68] sm:$0xf]
          %v12478 = vld [vmem:[%s9 + $0x6c] sm:$0xf]
          %v12479 = vld [vmem:[%s9 + $0x70] sm:$0xf]
          %v12480 = vld [vmem:[%s9 + $0x74] sm:$0xf]
          %v12481 = vld [vmem:[%s9 + $0x78] sm:$0xf]
          %v12482 = vld [vmem:[%s9 + $0x7c] sm:$0xf]
          %v12483 = vld [vmem:[%s9 + $0x80] sm:$0xf]
          %v12484 = vld [vmem:[%s9 + $0x84] sm:$0xf]
          %v12485 = vld [vmem:[%s9 + $0x88] sm:$0xf]
          %v12486 = vld [vmem:[%s9 + $0x8c] sm:$0xf]
          %v12487 = vld [vmem:[%s9 + $0x90] sm:$0xf]
          %v12488 = vld [vmem:[%s9 + $0x94] sm:$0xf]
          %v12489 = vld [vmem:[%s9 + $0x98] sm:$0xf]
          %v12490 = vld [vmem:[%s9 + $0x9c] sm:$0xf]
          %v12491 = vld [vmem:[%s9 + $0xa0] sm:$0xf]
          %v12492 = vld [vmem:[%s9 + $0xa4] sm:$0xf]
          %v12493 = vld [vmem:[%s9 + $0xa8] sm:$0xf]
          %v12494 = vld [vmem:[%s9 + $0xac] sm:$0xf]
          %v12495 = vld [vmem:[%s9 + $0xb0] sm:$0xf]
          %v12496 = vld [vmem:[%s9 + $0xb4] sm:$0xf]
          %v12497 = vld [vmem:[%s9 + $0xb8] sm:$0xf]
          %v12498 = vld [vmem:[%s9 + $0xbc] sm:$0xf]
          %v12499 = vld [vmem:[%s9 + $0xc0] sm:$0xf]
          %v12500 = vld [vmem:[%s9 + $0xc4] sm:$0xf]
          %v12501 = vld [vmem:[%s9 + $0xc8] sm:$0xf]
          %v12502 = vld [vmem:[%s9 + $0xcc] sm:$0xf]
          %v12503 = vld [vmem:[%s9 + $0xd0] sm:$0xf]
          %v12504 = vld [vmem:[%s9 + $0xd4] sm:$0xf]
          %v12505 = vld [vmem:[%s9 + $0xd8] sm:$0xf]
          %v12506 = vld [vmem:[%s9 + $0xdc] sm:$0xf]
          %v12507 = vld [vmem:[%s9 + $0xe0] sm:$0xf]
          %v12508 = vld [vmem:[%s9 + $0xe4] sm:$0xf]
          %v12509 = vld [vmem:[%s9 + $0xe8] sm:$0xf]
          %v12510 = vld [vmem:[%s9 + $0xec] sm:$0xf]
          %v12511 = vld [vmem:[%s9 + $0xf0] sm:$0xf]
          %v12512 = vld [vmem:[%s9 + $0xf4] sm:$0xf]
          %v12513 = vld [vmem:[%s9 + $0xf8] sm:$0xf]
          %v12514 = vld [vmem:[%s9 + $0xfc] sm:$0xf]
          %v12515 = vld [vmem:[%s10] sm:$0x1]
          %v12517 = vlaneseq
          %v12518 = vshrl.u32 %v12517, 7
          %v12519 = vsub.s32 0, %v12518
          %v12520 = vrot.slane %v12515, %v12519
          %v12586 = vunpack.c.l.b16 %v12451
          %v12587 = vunpack.c.l.b16 %v12452
          %v12588 = vunpack.c.l.b16 %v12453
          %v12589 = vunpack.c.l.b16 %v12454
          %v12590 = vunpack.c.l.b16 %v12455
          %v12591 = vunpack.c.l.b16 %v12456
          %v12592 = vunpack.c.l.b16 %v12457
          %v12593 = vunpack.c.l.b16 %v12458
          %v12594 = vunpack.c.l.b16 %v12459
          %v12595 = vunpack.c.l.b16 %v12460
          %v12596 = vunpack.c.l.b16 %v12461
          %v12597 = vunpack.c.l.b16 %v12462
          %v12598 = vunpack.c.l.b16 %v12463
          %v12599 = vunpack.c.l.b16 %v12464
          %v12600 = vunpack.c.l.b16 %v12465
          %v12601 = vunpack.c.l.b16 %v12466
          %v12602 = vunpack.c.l.b16 %v12467
          %v12603 = vunpack.c.l.b16 %v12468
          %v12604 = vunpack.c.l.b16 %v12469
          %v12605 = vunpack.c.l.b16 %v12470
          %v12606 = vunpack.c.l.b16 %v12471
          %v12607 = vunpack.c.l.b16 %v12472
          %v12608 = vunpack.c.l.b16 %v12473
          %v12609 = vunpack.c.l.b16 %v12474
          %v12610 = vunpack.c.l.b16 %v12475
          %v12611 = vunpack.c.l.b16 %v12476
          %v12612 = vunpack.c.l.b16 %v12477
          %v12613 = vunpack.c.l.b16 %v12478
          %v12614 = vunpack.c.l.b16 %v12479
          %v12615 = vunpack.c.l.b16 %v12480
          %v12616 = vunpack.c.l.b16 %v12481
          %v12617 = vunpack.c.l.b16 %v12482
          %v12618 = vunpack.c.l.b16 %v12483
          %v12619 = vunpack.c.l.b16 %v12484
          %v12620 = vunpack.c.l.b16 %v12485
          %v12621 = vunpack.c.l.b16 %v12486
          %v12622 = vunpack.c.l.b16 %v12487
          %v12623 = vunpack.c.l.b16 %v12488
          %v12624 = vunpack.c.l.b16 %v12489
          %v12625 = vunpack.c.l.b16 %v12490
          %v12626 = vunpack.c.l.b16 %v12491
          %v12627 = vunpack.c.l.b16 %v12492
          %v12628 = vunpack.c.l.b16 %v12493
          %v12629 = vunpack.c.l.b16 %v12494
          %v12630 = vunpack.c.l.b16 %v12495
          %v12631 = vunpack.c.l.b16 %v12496
          %v12632 = vunpack.c.l.b16 %v12497
          %v12633 = vunpack.c.l.b16 %v12498
          %v12634 = vunpack.c.l.b16 %v12499
          %v12635 = vunpack.c.l.b16 %v12500
          %v12636 = vunpack.c.l.b16 %v12501
          %v12637 = vunpack.c.l.b16 %v12502
          %v12638 = vunpack.c.l.b16 %v12503
          %v12639 = vunpack.c.l.b16 %v12504
          %v12640 = vunpack.c.l.b16 %v12505
          %v12641 = vunpack.c.l.b16 %v12506
          %v12642 = vunpack.c.l.b16 %v12507
          %v12643 = vunpack.c.l.b16 %v12508
          %v12644 = vunpack.c.l.b16 %v12509
          %v12645 = vunpack.c.l.b16 %v12510
          %v12646 = vunpack.c.l.b16 %v12511
          %v12647 = vunpack.c.l.b16 %v12512
          %v12648 = vunpack.c.l.b16 %v12513
          %v12649 = vunpack.c.l.b16 %v12514
          %v12650 = vpack.c.b16 %v12587, %v12586
          %v12651 = vpack.c.b16 %v12589, %v12588
          %v12652 = vpack.c.b16 %v12591, %v12590
          %v12653 = vpack.c.b16 %v12593, %v12592
          %v12654 = vpack.c.b16 %v12595, %v12594
          %v12655 = vpack.c.b16 %v12597, %v12596
          %v12656 = vpack.c.b16 %v12599, %v12598
          %v12657 = vpack.c.b16 %v12601, %v12600
          %v12658 = vpack.c.b16 %v12603, %v12602
          %v12659 = vpack.c.b16 %v12605, %v12604
          %v12660 = vpack.c.b16 %v12607, %v12606
          %v12661 = vpack.c.b16 %v12609, %v12608
          %v12662 = vpack.c.b16 %v12611, %v12610
          %v12663 = vpack.c.b16 %v12613, %v12612
          %v12664 = vpack.c.b16 %v12615, %v12614
          %v12665 = vpack.c.b16 %v12617, %v12616
          %v12666 = vpack.c.b16 %v12619, %v12618
          %v12667 = vpack.c.b16 %v12621, %v12620
          %v12668 = vpack.c.b16 %v12623, %v12622
          %v12669 = vpack.c.b16 %v12625, %v12624
          %v12670 = vpack.c.b16 %v12627, %v12626
          %v12671 = vpack.c.b16 %v12629, %v12628
          %v12672 = vpack.c.b16 %v12631, %v12630
          %v12673 = vpack.c.b16 %v12633, %v12632
          %v12674 = vpack.c.b16 %v12635, %v12634
          %v12675 = vpack.c.b16 %v12637, %v12636
          %v12676 = vpack.c.b16 %v12639, %v12638
          %v12677 = vpack.c.b16 %v12641, %v12640
          %v12678 = vpack.c.b16 %v12643, %v12642
          %v12679 = vpack.c.b16 %v12645, %v12644
          %v12680 = vpack.c.b16 %v12647, %v12646
          %v12681 = vpack.c.b16 %v12649, %v12648
          %12714 = vmatprep.subr.bf16.mxu0 0
          %12715 = vmatpush1.bf16.msra.mxu0 %v12657
          %12716 = vmatprep.subr.bf16.mxu0 0
          %12717 = vmatpush1.bf16.msra.mxu0 %v12656
          %12718 = vmatprep.subr.bf16.mxu0 0
          %12719 = vmatpush1.bf16.msra.mxu0 %v12655
          %12720 = vmatprep.subr.bf16.mxu0 0
          %12721 = vmatpush1.bf16.msra.mxu0 %v12654
          %12722 = vmatprep.subr.bf16.mxu0 0
          %12723 = vmatpush1.bf16.msra.mxu0 %v12653
          %12724 = vmatprep.subr.bf16.mxu0 0
          %12725 = vmatpush1.bf16.msra.mxu0 %v12652
          %12726 = vmatprep.subr.bf16.mxu0 0
          %12727 = vmatpush1.bf16.msra.mxu0 %v12651
          %12728 = vmatprep.subr.bf16.mxu0 0
          %12729 = vmatpush1.bf16.msra.mxu0 %v12650
          %12730 = vmatprep.subr.bf16.mxu0 0
          %12731 = vmatpush2.bf16.msra.mxu0 %v12665
          %12732 = vmatprep.subr.bf16.mxu0 0
          %12733 = vmatpush2.bf16.msra.mxu0 %v12664
          %12734 = vmatprep.subr.bf16.mxu0 0
          %12735 = vmatpush2.bf16.msra.mxu0 %v12663
          %12736 = vmatprep.subr.bf16.mxu0 0
          %12737 = vmatpush2.bf16.msra.mxu0 %v12662
          %12738 = vmatprep.subr.bf16.mxu0 0
          %12739 = vmatpush2.bf16.msra.mxu0 %v12661
          %12740 = vmatprep.subr.bf16.mxu0 0
          %12741 = vmatpush2.bf16.msra.mxu0 %v12660
          %12742 = vmatprep.subr.bf16.mxu0 0
          %12743 = vmatpush2.bf16.msra.mxu0 %v12659
          %12744 = vmatprep.subr.bf16.mxu0 0
          %12745 = vmatpush2.bf16.msra.mxu0 %v12658
          %12746 = vmatprep.mubr.bf16.mxu0 %v12448
          %12747 = vmatmul.mubr.bf16.gmra.mxu0 %v12447
          %v12748 = vpop.f32.mrf.mxu0
          %v12749 = vadd.f32 %v12520, %v12748
          %v12750 = vpop.f32.mrf.mxu0
          %v12751 = vpop.f32.mrf.mxu0
          %v12752 = vpop.f32.mrf.mxu0
          %12753 = vdwg.mxu0
          %12754 = vmatprep.subr.bf16.mxu0 0
          %12755 = vmatpush1.bf16.msra.mxu0 %v12673
          %12756 = vmatprep.subr.bf16.mxu0 0
          %12757 = vmatpush1.bf16.msra.mxu0 %v12672
          %12758 = vmatprep.subr.bf16.mxu0 0
          %12759 = vmatpush1.bf16.msra.mxu0 %v12671
          %12760 = vmatprep.subr.bf16.mxu0 0
          %12761 = vmatpush1.bf16.msra.mxu0 %v12670
          %12762 = vmatprep.subr.bf16.mxu0 0
          %12763 = vmatpush1.bf16.msra.mxu0 %v12669
          %12764 = vmatprep.subr.bf16.mxu0 0
          %12765 = vmatpush1.bf16.msra.mxu0 %v12668
          %12766 = vmatprep.subr.bf16.mxu0 0
          %12767 = vmatpush1.bf16.msra.mxu0 %v12667
          %12768 = vmatprep.subr.bf16.mxu0 0
          %12769 = vmatpush1.bf16.msra.mxu0 %v12666
          %12770 = vmatprep.subr.bf16.mxu0 0
          %12771 = vmatpush2.bf16.msra.mxu0 %v12681
          %12772 = vmatprep.subr.bf16.mxu0 0
          %12773 = vmatpush2.bf16.msra.mxu0 %v12680
          %12774 = vmatprep.subr.bf16.mxu0 0
          %12775 = vmatpush2.bf16.msra.mxu0 %v12679
          %12776 = vmatprep.subr.bf16.mxu0 0
          %12777 = vmatpush2.bf16.msra.mxu0 %v12678
          %12778 = vmatprep.subr.bf16.mxu0 0
          %12779 = vmatpush2.bf16.msra.mxu0 %v12677
          %12780 = vmatprep.subr.bf16.mxu0 0
          %12781 = vmatpush2.bf16.msra.mxu0 %v12676
          %12782 = vmatprep.subr.bf16.mxu0 0
          %12783 = vmatpush2.bf16.msra.mxu0 %v12675
          %12784 = vmatprep.subr.bf16.mxu0 0
          %12785 = vmatpush2.bf16.msra.mxu0 %v12674
          %12786 = vmatprep.mubr.bf16.mxu0 %v12450
          %12787 = vmatmul.mubr.bf16.gmra.mxu0 %v12449
          %v12788 = vpop.f32.mrf.mxu0
          %v12789 = vadd.f32 %v12749, %v12788
          %v12790 = vpop.f32.mrf.mxu0
          %v12791 = vpop.f32.mrf.mxu0
          %v12792 = vpop.f32.mrf.mxu0
          %12793 = vdwg.mxu0
          %12794 = vst [vmem:[#allocation18] sm:$0xff] %v12789
        $region108: #{_forward_impl.1} parent=63 // pred_fallthru
          _
        // Predicated region
        $region109: #{_forward_impl.1} parent=63 // pred_check
          %p12795 = pneg %p286
        $region110: #{_forward_impl.1} parent=63 // pred_check_branch
          %12797 = sbr.rel (%p12795) target = $region112
        $region111: #{_forward_impl.1} parent=63 // pred_region
          %s12799 = ssub.s32 128, 128
          %12800 = vsyncadd [#allocation5], %s12799
          %s12802 = sshll.u32 [#allocation18], 4
          %s12803 = int_to_ptr.vmem [resolvable:$true] %s12802
          %12805 = dma.vmem_to_hbm [thread:$0]  %s12803, 128, %s11, [#allocation5]
        $region112: #{_forward_impl.1} parent=63 // pred_fallthru
          _
        // Predicated region
        $region113: #{_forward_impl.1} parent=63 // pred_check
          %p12806 = pneg %p286
        $region114: #{_forward_impl.1} parent=63 // pred_check_branch
          %12808 = sbr.rel (%p12806) target = $region116
        $region115: #{_forward_impl.1} parent=63 // pred_region
          %12809 = dma.done [#allocation5], 128
        $region116: #{_forward_impl.1} parent=63 // pred_fallthru
          _
      $region64: #{_forward_impl.1} parent=5 // pred_fallthru
        _
      %p12810 = scmp.le.s32.totalorder 2, %s27
      // Predicated region
      $region117: #{_forward_impl.1} parent=5 // pred_check
        %p12811 = pneg %p12810
      $region118: #{_forward_impl.1} parent=5 // pred_check_branch
        %12813 = sbr.rel (%p12811) target = $region120
      $region119: #{_forward_impl.1} parent=5 // pred_region
        %s12814 = ssub.s32 %s27, 2
      $region120: #{_forward_impl.1} parent=5 // pred_fallthru
        _
    $region6: #{_forward_impl.1} parent=1 // loop_footer
      %s31 = sadd.s32 1, %s27
    $region7: #{_forward_impl.1} parent=1 // loop_footer_branch
      %26 = sbr.rel target = $region3
    $region8: #{_forward_impl.1} parent=1 // loop_exit
      _
    %12815 = vsyncpa [#allocation4], 1
    %s12816 = scalar_lea.sflag [#allocation4], 1
    %12817 = vsyncpa %s12816, 1
    %12818 = vsyncpa [#allocation7], 1
    %s12819 = scalar_lea.sflag [#allocation7], 1
    %12820 = vsyncpa %s12819, 1
    %12821 = vsyncpa [#allocation10], 1
    %12822 = vsyncpa [#allocation13], 1
    %12823 = vsyncpa [#allocation16], 1
    %12824 = vsyncpa [#allocation5], 1
    %s12825 = scalar_lea.sflag [#allocation5], 1
    %12826 = vsyncpa %s12825, 1

</llo_original>
